<compile_context>
chip_gen: v6e
topology: v6e:2x2x1
jax: 0.10.0
libtpu: 0.0.40
codegen_flags: <defaults>
</compile_context>

<pallas_src>
import functools

import jax
import jax.numpy as jnp
from jax.experimental import pallas as pl
from jax.experimental.pallas import tpu as pltpu

_NEG = -1e30  # finite "empty max" sentinel


# ----------------------------------------------------------------------------- helpers

def _round_up(x, m):
    return (x + m - 1) // m * m


def _lanes(c):
    return _round_up(c, 128)


def _vmem_budget():
    """Generation-aware (tile budget, vmem_limit_bytes)."""
    try:
        cap = pltpu.get_tpu_info().vmem_capacity_bytes
    except Exception:
        cap = 64 * 1024 * 1024
    if cap >= 96 * 1024 * 1024:                     # v5e / v6e: 128 MiB physical VMEM
        return 40 * 1024 * 1024, 96 * 1024 * 1024
    return 16 * 1024 * 1024, 48 * 1024 * 1024       # v7x: 64 MiB physical VMEM


def _pick_tm(M, K, cx, c1, c2, cout, budget):
    """Largest power-of-two center tile that fits the VMEM budget while keeping >=4 grid
    steps so the BlockSpec pipeline can overlap DMA with compute."""
    per_center = 2 * _lanes(3 * K) * 2                              # bf16 rel block, x2 bufs
    if cx:
        per_center += 2 * K * _lanes(cx) * 2                        # bf16 x_j block, x2 bufs
    per_center += 6 * K * (_lanes(c1) + _lanes(c2) + _lanes(cout))  # live f32/bf16 intermediates
    per_center += 2 * _lanes(cout) * 2                              # bf16 out block, x2 bufs
    cap = max(8, M // 4)                 # keep >= 4 grid steps when the problem allows it
    tm = 8
    while tm * 2 <= min(M, 512, cap) and (tm * 2) * per_center <= budget:
        tm *= 2
    # TODO(synk): keep the step count even on v7x so both TensorCores get equal work.
    return tm


# ----------------------------------------------------------------------------- kernels

def _sa_edge_kernel(*refs, tm, k, has_x):
    """Per-edge 3-layer MLP (ReLU, ReLU, linear) + max over the K grouped neighbors.

    rel block is lane-dense component-major (tm, 3*k) bf16; its layer-1 contribution is three
    VPU broadcast-FMAs (no Cin=3 lane-sparse MXU contraction). x_j (if present) is a
    lane-dense bf16 (tm*k, Cx) block feeding a single MXU matmul. Output is bf16.
    Invalid neighbor slots were pre-filled with a duplicate valid neighbor, so the final max
    needs no mask.
    """
    if has_x:
        (xj_ref, rel_ref, w1x_ref, w1r_ref, b1_ref,
         w2_ref, b2_ref, w3_ref, b3_ref, o_ref) = refs
    else:
        (rel_ref, w1r_ref, b1_ref,
         w2_ref, b2_ref, w3_ref, b3_ref, o_ref) = refs

    c1 = b1_ref.shape[-1]
    rel = rel_ref[...].astype(jnp.float32)                      # (tm, 3k)
    w1r = w1r_ref[...]                                          # (3, c1) f32
    h = (rel[:, 0 * k:1 * k][:, :, None] * w1r[0]
         + rel[:, 1 * k:2 * k][:, :, None] * w1r[1]
         + rel[:, 2 * k:3 * k][:, :, None] * w1r[2])            # (tm, k, c1)
    h = h.reshape(tm * k, c1) + b1_ref[...]
    if has_x:
        h = h + jnp.dot(xj_ref[...], w1x_ref[...],
                        preferred_element_type=jnp.float32)
    h = jnp.maximum(h, 0.0)
    h = jnp.dot(h.astype(jnp.bfloat16), w2_ref[...],
                preferred_element_type=jnp.float32) + b2_ref[...]
    h = jnp.maximum(h, 0.0)
    h = jnp.dot(h.astype(jnp.bfloat16), w3_ref[...],
                preferred_element_type=jnp.float32) + b3_ref[...]
    cout = h.shape[-1]
    o_ref[...] = jnp.max(h.reshape(tm, k, cout), axis=1).astype(o_ref.dtype)


def _sa3_pool_kernel(xp_ref, w1_ref, b1_ref, w2_ref, b2_ref, w3_ref, b3_ref,
                     o_ref, acc_ref):
    """GlobalSetAbstraction: per-point MLP([256+3,256,512,1024]) on a (tg, 259) bf16 block,
    partial max pooled into a per-graph accumulator (grid = (graphs, row tiles))."""
    t = pl.program_id(1)
    h = jnp.dot(xp_ref[0], w1_ref[...],
                preferred_element_type=jnp.float32) + b1_ref[...]
    h = jnp.maximum(h, 0.0)
    h = jnp.dot(h.astype(jnp.bfloat16), w2_ref[...],
                preferred_element_type=jnp.float32) + b2_ref[...]
    h = jnp.maximum(h, 0.0)
    h = jnp.dot(h.astype(jnp.bfloat16), w3_ref[...],
                preferred_element_type=jnp.float32) + b3_ref[...]
    pmax = jnp.max(h, axis=0, keepdims=True)                    # (1, 1024)

    @pl.when(t == 0)
    def _():
        acc_ref[...] = jnp.full_like(acc_ref, _NEG)

    acc_ref[...] = jnp.maximum(acc_ref[...], pmax)

    @pl.when(t == pl.num_programs(1) - 1)
    def _():
        o_ref[...] = acc_ref[...].reshape(o_ref.shape).astype(o_ref.dtype)


def _head_kernel(g_ref, w1_ref, b1_ref, w2_ref, b2_ref, w3_ref, b3_ref, o_ref):
    """Classifier MLP([1024,512,256,10], norm=None) + log_softmax."""
    h = jnp.dot(g_ref[...], w1_ref[...],
                preferred_element_type=jnp.float32) + b1_ref[...]
    h = jnp.maximum(h, 0.0)
    h = jnp.dot(h.astype(jnp.bfloat16), w2_ref[...],
                preferred_element_type=jnp.float32) + b2_ref[...]
    h = jnp.maximum(h, 0.0)
    logits = jnp.dot(h.astype(jnp.bfloat16), w3_ref[...],
                     preferred_element_type=jnp.float32) + b3_ref[...]
    mx = jnp.max(logits, axis=-1, keepdims=True)
    lse = mx + jnp.log(jnp.sum(jnp.exp(logits - mx), axis=-1, keepdims=True))
    o_ref[...] = logits - lse


# ----------------------------------------------------------------------------- wrappers

def sa_edge_mlp_max(xj, rel_cm, k, p):
    """Grouped PointNetConv message MLP + max aggregation.

    xj: [M*K, Cx] bf16 neighbor features (None for SA1)
    rel_cm: [M, 3*K] bf16 component-major (pos_j - pos_i) per center
    returns [M, Cout] bf16.
    """
    M = rel_cm.shape[0]
    cx = 0 if xj is None else xj.shape[-1]
    c1 = p["b1"].shape[-1]
    c2 = p["w2"].shape[-1]
    cout = p["w3"].shape[-1]
    budget, vmem_limit = _vmem_budget()
    tm = _pick_tm(M, k, cx, c1, c2, cout, budget)
    Mp = _round_up(M, tm)
    if Mp > M:
        rel_cm = jnp.pad(rel_cm, ((0, Mp - M), (0, 0)))
        if xj is not None:
            xj = jnp.pad(xj, ((0, (Mp - M) * k), (0, 0)))

    # constant-index weights: single-buffered (no pointless double-buffer VMEM)
    wconst = lambda a: pl.BlockSpec(a.shape, lambda i: (0, 0),
                                    pipeline_mode=pl.Buffered(1))
    rel_spec = pl.BlockSpec((tm, 3 * k), lambda i: (i, 0))

    if xj is None:
        weights = [p["w1r"], p["b1"], p["w2"], p["b2"], p["w3"], p["b3"]]
        args = [rel_cm] + weights
        in_specs = [rel_spec] + [wconst(a) for a in weights]
    else:
        weights = [p["w1x"], p["w1r"], p["b1"], p["w2"], p["b2"], p["w3"], p["b3"]]
        args = [xj, rel_cm] + weights
        in_specs = ([pl.BlockSpec((tm * k, cx), lambda i: (i, 0)), rel_spec]
                    + [wconst(a) for a in weights])

    flops = 2 * M * k * (3 * c1 + cx * c1 + c1 * c2 + c2 * cout)
    bytes_acc = (Mp * _lanes(3 * k) * 2 + Mp * k * cx * 2 + Mp * cout * 2
                 + sum(int(a.size) * a.dtype.itemsize for a in weights))

    out = pl.pallas_call(
        functools.partial(_sa_edge_kernel, tm=tm, k=k, has_x=xj is not None),
        out_shape=jax.ShapeDtypeStruct((Mp, cout), jnp.bfloat16),
        grid_spec=pltpu.PrefetchScalarGridSpec(
            num_scalar_prefetch=0,
            grid=(Mp // tm,),
            in_specs=in_specs,
            out_specs=pl.BlockSpec((tm, cout), lambda i: (i, 0)),
        ),
        compiler_params=pltpu.CompilerParams(
            dimension_semantics=("parallel",),
            vmem_limit_bytes=vmem_limit),
        cost_estimate=pl.CostEstimate(flops=flops, transcendentals=0,
                                      bytes_accessed=bytes_acc),
    )(*args)
    return out[:M]


def global_sa_pool(x, pos, p):
    """GlobalSetAbstraction: per-point MLP + per-graph max pool, tiled over graphs.
    x: [B, m, 256] bf16, pos: [B, m, 3] f32 -> pooled [B, 1024] bf16."""
    B, m, cx = x.shape
    cpack = cx + 3
    xp = jnp.concatenate([x, pos.astype(jnp.bfloat16)], axis=-1)   # [B, m, 259] bf16 lane-dense
    _, vmem_limit = _vmem_budget()

    tg = m
    if m > 256:
        for cand in (256, 128, 64, 32, 16, 8):
            if m % cand == 0:
                tg = cand
                break
    nt = m // tg

    c1, c2, c3 = p["b1"].shape[-1], p["w2"].shape[-1], p["w3"].shape[-1]
    weights = [p["w1"], p["b1"], p["w2"], p["b2"], p["w3"], p["b3"]]
    wconst = lambda a: pl.BlockSpec(a.shape, lambda g, t: (0, 0),
                                    pipeline_mode=pl.Buffered(1))
    flops = 2 * B * m * (cpack * c1 + c1 * c2 + c2 * c3)
    bytes_acc = (B * m * _lanes(cpack) * 2 + B * c3 * 2
                 + sum(int(a.size) * a.dtype.itemsize for a in weights))

    pooled = pl.pallas_call(
        _sa3_pool_kernel,
        out_shape=jax.ShapeDtypeStruct((B, 1, c3), jnp.bfloat16),
        grid_spec=pltpu.PrefetchScalarGridSpec(
            num_scalar_prefetch=0,
            grid=(B, nt),
            in_specs=[pl.BlockSpec((1, tg, cpack), lambda g, t: (g, t, 0))]
                     + [wconst(a) for a in weights],
            out_specs=pl.BlockSpec((1, 1, c3), lambda g, t: (g, 0, 0)),
            scratch_shapes=[pltpu.VMEM((1, c3), jnp.float32)],
        ),
        compiler_params=pltpu.CompilerParams(
            dimension_semantics=("parallel", "arbitrary"),
            vmem_limit_bytes=vmem_limit),
        cost_estimate=pl.CostEstimate(flops=flops, transcendentals=0,
                                      bytes_accessed=bytes_acc),
    )(xp, *weights)
    return pooled.reshape(B, c3)


def classifier_head(g, p):
    """MLP([1024,512,256,10], norm=None) + log_softmax. g: [B, 1024] bf16 -> [B, 10] f32."""
    B, cin = g.shape
    weights = [p["w1"], p["b1"], p["w2"], p["b2"], p["w3"], p["b3"]]
    args = [g] + weights
    ncls = p["w3"].shape[-1]
    c1, c2 = p["b1"].shape[-1], p["w2"].shape[-1]
    return pl.pallas_call(
        _head_kernel,
        out_shape=jax.ShapeDtypeStruct((B, ncls), jnp.float32),
        grid_spec=pltpu.PrefetchScalarGridSpec(
            num_scalar_prefetch=0,
            grid=(1,),
            in_specs=[pl.BlockSpec(a.shape, lambda i: (0, 0)) for a in args],
            out_specs=pl.BlockSpec((B, ncls), lambda i: (0, 0)),
        ),
        compiler_params=pltpu.CompilerParams(dimension_semantics=("arbitrary",)),
        cost_estimate=pl.CostEstimate(
            flops=2 * B * (cin * c1 + c1 * c2 + c2 * ncls),
            transcendentals=B * ncls,
            bytes_accessed=B * cin * 2
            + sum(int(a.size) * a.dtype.itemsize for a in weights)),
    )(*args)


# ----------------------------------------------------------------------------- JAX glue

def farthest_point_sample(pos, m):
    """Deterministic FPS (start index 0).  pos: [N, 3] -> indices [m]."""
    # TODO(synk): torch_cluster fps uses random_start=True; deterministic start used here.
    N = pos.shape[0]

    def body(i, carry):
        sel, dmin, last = carry
        d = jnp.sum((pos - pos[last]) ** 2, axis=-1)
        dmin = jnp.minimum(dmin, d)
        nxt = jnp.argmax(dmin).astype(jnp.int32)
        return sel.at[i].set(nxt), dmin, nxt

    init = (jnp.zeros((m,), jnp.int32),
            jnp.full((N,), jnp.inf, jnp.float32),
            jnp.int32(0))
    sel, _, _ = jax.lax.fori_loop(1, m, body, init)
    return sel


def ball_group(pos, center_idx, radius, k):
    """Ball query (torch_cluster.radius semantics, max_num_neighbors=k): first k in-radius
    neighbors by ascending index. Invalid slots are filled with a duplicate of the first
    valid neighbor (the center itself is always in radius), so no mask is needed later."""
    N = pos.shape[0]
    centers = pos[center_idx]                                            # [m, 3]
    d2 = jnp.sum((centers[:, None, :] - pos[None, :, :]) ** 2, axis=-1)  # [m, N]
    within = d2 <= radius * radius
    key = jnp.where(within, jnp.arange(N), N + jnp.arange(N))
    neg_vals, order = jax.lax.top_k(-key, k)          # k smallest keys = in-radius, by index
    valid = (-neg_vals) < N
    order = jnp.where(valid, order, order[:, 0:1])    # fill empties with a valid duplicate
    rel = pos[order] - centers[:, None, :]                               # [m, k, 3]
    return order, rel


def set_abstraction(pos, x, ratio, radius, k, p):
    """One SetAbstraction module.  pos: [B, N, 3] f32, x: [B, N, C] bf16 or None."""
    B, N, _ = pos.shape
    m = max(int(ratio * N), 1)
    idx = jax.vmap(lambda pp: farthest_point_sample(pp, m))(pos)            # [B, m]
    new_pos = jax.vmap(lambda pp, ii: pp[ii])(pos, idx)                     # [B, m, 3]
    order, rel = jax.vmap(lambda pp, ci: ball_group(pp, ci, radius, k))(pos, idx)
    # lane-dense, component-major rel packing: [B, m, k, 3] -> [B*m, 3*k] bf16
    rel_cm = jnp.transpose(rel, (0, 1, 3, 2)).reshape(B * m, 3 * k).astype(jnp.bfloat16)
    xj = None
    if x is not None:
        # TODO(synk): consider gathering x_j inside the kernel (scalar-prefetched `order` +
        # pl.Element / manual DMA on x kept in pl.ANY) to avoid the [M*K, C] HBM copy.
        xj = jax.vmap(lambda xx, od: xx[od])(x, order).reshape(B * m * k, x.shape[-1])
    out = sa_edge_mlp_max(xj, rel_cm, k, p)                                 # [B*m, Cout] bf16
    return new_pos, out.reshape(B, m, -1)


def pointnet_pp_forward(pos, params,
                        ratio1=0.5, ratio2=0.25, radius1=0.4, radius2=0.8):
    # data.x is None for this classification model (SA1 MLP input dim is 3 = rel-pos only);
    # data.pos is [B, N, 3]; data.batch is implicit in the leading (dense) batch axis.
    # TODO(synk): fps / ball-query glue (serial argmax loop + [m, N] top_k) may dominate at
    # production N; profile and move to a Pallas kernel on a VMEM-resident point set if so.
    B, N, _ = pos.shape
    pos1, x1 = set_abstraction(pos, None, ratio1, radius1, min(64, N), params["sa1"])
    pos2, x2 = set_abstraction(pos1, x1, ratio2, radius2,
                               min(64, pos1.shape[1]), params["sa2"])
    pooled = global_sa_pool(x2, pos2, params["sa3"])
    return classifier_head(pooled, params["head"])


# ----------------------------------------------------------------------------- params

def init_linear(key, cin, cout):
    kw, kb = jax.random.split(key)
    bound = 1.0 / (cin ** 0.5)
    w = jax.random.uniform(kw, (cin, cout), jnp.float32, -bound, bound)
    b = jax.random.uniform(kb, (1, cout), jnp.float32, -bound, bound)
    return w, b


def init_mlp(key, dims):
    keys = jax.random.split(key, len(dims) - 1)
    return [init_linear(kk, a, b) for kk, a, b in zip(keys, dims[:-1], dims[1:])]


def init_sa_params(key, dims, split_x):
    """PointNetConv message MLP. Layer-1 weight is split into a lane-aligned x_j part
    (bf16, MXU) and a 3-wide rel-pos part (f32, VPU broadcast-FMAs)."""
    (w1, b1), (w2, b2), (w3, b3) = init_mlp(key, dims)
    p = {"b1": b1,
         "w2": w2.astype(jnp.bfloat16), "b2": b2,
         "w3": w3.astype(jnp.bfloat16), "b3": b3}
    if split_x:
        p["w1x"] = w1[:split_x].astype(jnp.bfloat16)
        p["w1r"] = w1[split_x:]
    else:
        p["w1r"] = w1
    return p


def init_dense_mlp_params(key, dims):
    (w1, b1), (w2, b2), (w3, b3) = init_mlp(key, dims)
    return {"w1": w1.astype(jnp.bfloat16), "b1": b1,
            "w2": w2.astype(jnp.bfloat16), "b2": b2,
            "w3": w3.astype(jnp.bfloat16), "b3": b3}


def init_params(key):
    k1, k2, k3, k4 = jax.random.split(key, 4)
    return {
        "sa1": init_sa_params(k1, [3, 64, 64, 128], split_x=0),
        "sa2": init_sa_params(k2, [128 + 3, 128, 128, 256], split_x=128),
        "sa3": init_dense_mlp_params(k3, [256 + 3, 256, 512, 1024]),
        "head": init_dense_mlp_params(k4, [1024, 512, 256, 10]),
    }


# ----------------------------------------------------------------------------- main

if __name__ == "__main__":
    key = jax.random.PRNGKey(0)
    kpos, kparam = jax.random.split(key)

    B, N = 2, 64                       # 2 graphs, 64 points each
    pos = jax.random.uniform(kpos, (B, N, 3), jnp.float32)
    params = init_params(kparam)

    fwd = jax.jit(pointnet_pp_forward)
    out = jax.block_until_ready(fwd(pos, params))

    assert out.shape == (B, 10)
    # rows are log-probabilities: exp-sum must be 1
    assert bool(jnp.allclose(jnp.sum(jnp.exp(out), axis=-1), 1.0, atol=1e-3))
    assert bool(jnp.all(jnp.isfinite(out)))
    print("KERNEL_OK")
</pallas_src>

<mosaic_0001>
module attributes {stable_mosaic.version = 11 : i64} {
  func.func @_sa_edge_kernel(%arg0: i32, %arg1: memref<16x192xbf16, #tpu.memory_space<vmem>>, %arg2: memref<3x64xf32, #tpu.memory_space<vmem>>, %arg3: memref<1x64xf32, #tpu.memory_space<vmem>>, %arg4: memref<64x64xbf16, #tpu.memory_space<vmem>>, %arg5: memref<1x64xf32, #tpu.memory_space<vmem>>, %arg6: memref<64x128xbf16, #tpu.memory_space<vmem>>, %arg7: memref<1x128xf32, #tpu.memory_space<vmem>>, %arg8: memref<16x128xbf16, #tpu.memory_space<vmem>>) attributes {dimension_semantics = [#tpu.dimension_semantics<parallel>], iteration_bounds = array<i64: 4>, scalar_prefetch = 0 : i64, scratch_operands = 0 : i64, tpu.core_type = #tpu.core_type<tc>, window_params = [{transform_indices = @transform_0, window_bounds = array<i64: 16, 192>}, {pipeline_mode = #tpu.pipeline_mode<synchronous>, transform_indices = @transform_1, window_bounds = array<i64: 3, 64>}, {pipeline_mode = #tpu.pipeline_mode<synchronous>, transform_indices = @transform_2, window_bounds = array<i64: 1, 64>}, {pipeline_mode = #tpu.pipeline_mode<synchronous>, transform_indices = @transform_3, window_bounds = array<i64: 64, 64>}, {pipeline_mode = #tpu.pipeline_mode<synchronous>, transform_indices = @transform_4, window_bounds = array<i64: 1, 64>}, {pipeline_mode = #tpu.pipeline_mode<synchronous>, transform_indices = @transform_5, window_bounds = array<i64: 64, 128>}, {pipeline_mode = #tpu.pipeline_mode<synchronous>, transform_indices = @transform_6, window_bounds = array<i64: 1, 128>}, {transform_indices = @transform_7, window_bounds = array<i64: 16, 128>}]} {
    %c0 = arith.constant 0 : index
    %c0_0 = arith.constant 0 : index
    %0 = vector.load %arg1[%c0, %c0_0] : memref<16x192xbf16, #tpu.memory_space<vmem>>, vector<16x192xbf16>
    %1 = arith.extf %0 : vector<16x192xbf16> to vector<16x192xf32>
    %c0_1 = arith.constant 0 : index
    %c0_2 = arith.constant 0 : index
    %2 = vector.load %arg2[%c0_1, %c0_2] : memref<3x64xf32, #tpu.memory_space<vmem>>, vector<3x64xf32>
    %3 = vector.extract_strided_slice %1 {offsets = [0, 0], sizes = [16, 64], strides = [1, 1]} : vector<16x192xf32> to vector<16x64xf32>
    %4 = vector.shape_cast %3 : vector<16x64xf32> to vector<16x64x1xf32>
    %5 = vector.extract_strided_slice %2 {offsets = [0, 0], sizes = [1, 64], strides = [1, 1]} : vector<3x64xf32> to vector<1x64xf32>
    %6 = vector.shape_cast %5 : vector<1x64xf32> to vector<64xf32>
    %7 = vector.shape_cast %6 : vector<64xf32> to vector<1x1x64xf32>
    %8 = vector.broadcast %4 : vector<16x64x1xf32> to vector<16x64x64xf32>
    %9 = vector.broadcast %7 : vector<1x1x64xf32> to vector<16x64x64xf32>
    %10 = arith.mulf %8, %9 : vector<16x64x64xf32>
    %11 = vector.extract_strided_slice %1 {offsets = [0, 64], sizes = [16, 64], strides = [1, 1]} : vector<16x192xf32> to vector<16x64xf32>
    %12 = vector.shape_cast %11 : vector<16x64xf32> to vector<16x64x1xf32>
    %13 = vector.extract_strided_slice %2 {offsets = [1, 0], sizes = [1, 64], strides = [1, 1]} : vector<3x64xf32> to vector<1x64xf32>
    %14 = vector.shape_cast %13 : vector<1x64xf32> to vector<64xf32>
    %15 = vector.shape_cast %14 : vector<64xf32> to vector<1x1x64xf32>
    %16 = vector.broadcast %12 : vector<16x64x1xf32> to vector<16x64x64xf32>
    %17 = vector.broadcast %15 : vector<1x1x64xf32> to vector<16x64x64xf32>
    %18 = arith.mulf %16, %17 : vector<16x64x64xf32>
    %19 = arith.addf %10, %18 : vector<16x64x64xf32>
    %20 = vector.extract_strided_slice %1 {offsets = [0, 128], sizes = [16, 64], strides = [1, 1]} : vector<16x192xf32> to vector<16x64xf32>
    %21 = vector.shape_cast %20 : vector<16x64xf32> to vector<16x64x1xf32>
    %22 = vector.extract_strided_slice %2 {offsets = [2, 0], sizes = [1, 64], strides = [1, 1]} : vector<3x64xf32> to vector<1x64xf32>
    %23 = vector.shape_cast %22 : vector<1x64xf32> to vector<64xf32>
    %24 = vector.shape_cast %23 : vector<64xf32> to vector<1x1x64xf32>
    %25 = vector.broadcast %21 : vector<16x64x1xf32> to vector<16x64x64xf32>
    %26 = vector.broadcast %24 : vector<1x1x64xf32> to vector<16x64x64xf32>
    %27 = arith.mulf %25, %26 : vector<16x64x64xf32>
    %28 = arith.addf %19, %27 : vector<16x64x64xf32>
    %29 = vector.shape_cast %28 : vector<16x64x64xf32> to vector<1024x64xf32>
    %c0_3 = arith.constant 0 : index
    %c0_4 = arith.constant 0 : index
    %30 = vector.load %arg3[%c0_3, %c0_4] : memref<1x64xf32, #tpu.memory_space<vmem>>, vector<1x64xf32>
    %31 = vector.broadcast %30 : vector<1x64xf32> to vector<1024x64xf32>
    %32 = arith.addf %29, %31 : vector<1024x64xf32>
    %cst = arith.constant 0.000000e+00 : f32
    %33 = vector.broadcast %cst : f32 to vector<1024x64xf32>
    %34 = arith.maximumf %32, %33 : vector<1024x64xf32>
    %35 = arith.truncf %34 : vector<1024x64xf32> to vector<1024x64xbf16>
    %c0_5 = arith.constant 0 : index
    %c0_6 = arith.constant 0 : index
    %36 = vector.load %arg4[%c0_5, %c0_6] : memref<64x64xbf16, #tpu.memory_space<vmem>>, vector<64x64xbf16>
    %cst_7 = arith.constant dense<0.000000e+00> : vector<1024x64xf32>
    %37 = tpu.matmul %35, %36, %cst_7 {dimension_numbers = #tpu.dot_dimension_numbers<[1], [0], [0], [1], [0, 0, 1, 1], [], []>} : vector<1024x64xbf16>, vector<64x64xbf16>, vector<1024x64xf32> -> vector<1024x64xf32>
    %c0_8 = arith.constant 0 : index
    %c0_9 = arith.constant 0 : index
    %38 = vector.load %arg5[%c0_8, %c0_9] : memref<1x64xf32, #tpu.memory_space<vmem>>, vector<1x64xf32>
    %39 = vector.broadcast %38 : vector<1x64xf32> to vector<1024x64xf32>
    %40 = arith.addf %37, %39 : vector<1024x64xf32>
    %cst_10 = arith.constant 0.000000e+00 : f32
    %41 = vector.broadcast %cst_10 : f32 to vector<1024x64xf32>
    %42 = arith.maximumf %40, %41 : vector<1024x64xf32>
    %43 = arith.truncf %42 : vector<1024x64xf32> to vector<1024x64xbf16>
    %c0_11 = arith.constant 0 : index
    %c0_12 = arith.constant 0 : index
    %44 = vector.load %arg6[%c0_11, %c0_12] : memref<64x128xbf16, #tpu.memory_space<vmem>>, vector<64x128xbf16>
    %cst_13 = arith.constant dense<0.000000e+00> : vector<1024x128xf32>
    %45 = tpu.matmul %43, %44, %cst_13 {dimension_numbers = #tpu.dot_dimension_numbers<[1], [0], [0], [1], [0, 0, 1, 1], [], []>} : vector<1024x64xbf16>, vector<64x128xbf16>, vector<1024x128xf32> -> vector<1024x128xf32>
    %c0_14 = arith.constant 0 : index
    %c0_15 = arith.constant 0 : index
    %46 = vector.load %arg7[%c0_14, %c0_15] : memref<1x128xf32, #tpu.memory_space<vmem>>, vector<1x128xf32>
    %47 = vector.broadcast %46 : vector<1x128xf32> to vector<1024x128xf32>
    %48 = arith.addf %45, %47 : vector<1024x128xf32>
    %49 = vector.shape_cast %48 : vector<1024x128xf32> to vector<16x64x128xf32>
    %cst_16 = arith.constant dense<0xFF800000> : vector<16x128xf32>
    %50 = vector.multi_reduction <maximumf>, %49, %cst_16 [1] : vector<16x64x128xf32> to vector<16x128xf32>
    %51 = arith.truncf %50 : vector<16x128xf32> to vector<16x128xbf16>
    %c0_17 = arith.constant 0 : index
    %c0_18 = arith.constant 0 : index
    %52 = vector.load %arg8[%c0_17, %c0_18] : memref<16x128xbf16, #tpu.memory_space<vmem>>, vector<16x128xbf16>
    tpu.vector_store %arg8[%c0_17, %c0_18], %51 {strides = array<i32>} : memref<16x128xbf16, #tpu.memory_space<vmem>>, vector<16x128xbf16>,
    return
  }
  func.func @transform_0(%arg0: i32) -> (i32, i32) {
    %c0_i32 = arith.constant 0 : i32
    %c0_i32_0 = arith.constant 0 : i32
    return %arg0, %c0_i32 : i32, i32
  }
  func.func @transform_1(%arg0: i32) -> (i32, i32) {
    %c0_i32 = arith.constant 0 : i32
    %c0_i32_0 = arith.constant 0 : i32
    %c0_i32_1 = arith.constant 0 : i32
    return %c0_i32, %c0_i32_0 : i32, i32
  }
  func.func @transform_2(%arg0: i32) -> (i32, i32) {
    %c0_i32 = arith.constant 0 : i32
    %c0_i32_0 = arith.constant 0 : i32
    %c0_i32_1 = arith.constant 0 : i32
    return %c0_i32, %c0_i32_0 : i32, i32
  }
  func.func @transform_3(%arg0: i32) -> (i32, i32) {
    %c0_i32 = arith.constant 0 : i32
    %c0_i32_0 = arith.constant 0 : i32
    %c0_i32_1 = arith.constant 0 : i32
    return %c0_i32, %c0_i32_0 : i32, i32
  }
  func.func @transform_4(%arg0: i32) -> (i32, i32) {
    %c0_i32 = arith.constant 0 : i32
    %c0_i32_0 = arith.constant 0 : i32
    %c0_i32_1 = arith.constant 0 : i32
    return %c0_i32, %c0_i32_0 : i32, i32
  }
  func.func @transform_5(%arg0: i32) -> (i32, i32) {
    %c0_i32 = arith.constant 0 : i32
    %c0_i32_0 = arith.constant 0 : i32
    %c0_i32_1 = arith.constant 0 : i32
    return %c0_i32, %c0_i32_0 : i32, i32
  }
  func.func @transform_6(%arg0: i32) -> (i32, i32) {
    %c0_i32 = arith.constant 0 : i32
    %c0_i32_0 = arith.constant 0 : i32
    %c0_i32_1 = arith.constant 0 : i32
    return %c0_i32, %c0_i32_0 : i32, i32
  }
  func.func @transform_7(%arg0: i32) -> (i32, i32) {
    %c0_i32 = arith.constant 0 : i32
    %c0_i32_0 = arith.constant 0 : i32
    return %arg0, %c0_i32 : i32, i32
  }
}

module attributes {stable_mosaic.version = 11 : i64} {
  func.func @_sa_edge_kernel(%arg0: i32, %arg1: memref<256x128xbf16, #tpu.memory_space<vmem>>, %arg2: memref<8x96xbf16, #tpu.memory_space<vmem>>, %arg3: memref<128x128xbf16, #tpu.memory_space<vmem>>, %arg4: memref<3x128xf32, #tpu.memory_space<vmem>>, %arg5: memref<1x128xf32, #tpu.memory_space<vmem>>, %arg6: memref<128x128xbf16, #tpu.memory_space<vmem>>, %arg7: memref<1x128xf32, #tpu.memory_space<vmem>>, %arg8: memref<128x256xbf16, #tpu.memory_space<vmem>>, %arg9: memref<1x256xf32, #tpu.memory_space<vmem>>, %arg10: memref<8x256xbf16, #tpu.memory_space<vmem>>) attributes {dimension_semantics = [#tpu.dimension_semantics<parallel>], iteration_bounds = array<i64: 2>, scalar_prefetch = 0 : i64, scratch_operands = 0 : i64, tpu.core_type = #tpu.core_type<tc>, window_params = [{transform_indices = @transform_0, window_bounds = array<i64: 256, 128>}, {transform_indices = @transform_1, window_bounds = array<i64: 8, 96>}, {pipeline_mode = #tpu.pipeline_mode<synchronous>, transform_indices = @transform_2, window_bounds = array<i64: 128, 128>}, {pipeline_mode = #tpu.pipeline_mode<synchronous>, transform_indices = @transform_3, window_bounds = array<i64: 3, 128>}, {pipeline_mode = #tpu.pipeline_mode<synchronous>, transform_indices = @transform_4, window_bounds = array<i64: 1, 128>}, {pipeline_mode = #tpu.pipeline_mode<synchronous>, transform_indices = @transform_5, window_bounds = array<i64: 128, 128>}, {pipeline_mode = #tpu.pipeline_mode<synchronous>, transform_indices = @transform_6, window_bounds = array<i64: 1, 128>}, {pipeline_mode = #tpu.pipeline_mode<synchronous>, transform_indices = @transform_7, window_bounds = array<i64: 128, 256>}, {pipeline_mode = #tpu.pipeline_mode<synchronous>, transform_indices = @transform_8, window_bounds = array<i64: 1, 256>}, {transform_indices = @transform_9, window_bounds = array<i64: 8, 256>}]} {
    %c0 = arith.constant 0 : index
    %c0_0 = arith.constant 0 : index
    %0 = vector.load %arg2[%c0, %c0_0] : memref<8x96xbf16, #tpu.memory_space<vmem>>, vector<8x96xbf16>
    %1 = arith.extf %0 : vector<8x96xbf16> to vector<8x96xf32>
    %c0_1 = arith.constant 0 : index
    %c0_2 = arith.constant 0 : index
    %2 = vector.load %arg4[%c0_1, %c0_2] : memref<3x128xf32, #tpu.memory_space<vmem>>, vector<3x128xf32>
    %3 = vector.extract_strided_slice %1 {offsets = [0, 0], sizes = [8, 32], strides = [1, 1]} : vector<8x96xf32> to vector<8x32xf32>
    %4 = vector.shape_cast %3 : vector<8x32xf32> to vector<8x32x1xf32>
    %5 = vector.extract_strided_slice %2 {offsets = [0, 0], sizes = [1, 128], strides = [1, 1]} : vector<3x128xf32> to vector<1x128xf32>
    %6 = vector.shape_cast %5 : vector<1x128xf32> to vector<128xf32>
    %7 = vector.shape_cast %6 : vector<128xf32> to vector<1x1x128xf32>
    %8 = vector.broadcast %4 : vector<8x32x1xf32> to vector<8x32x128xf32>
    %9 = vector.broadcast %7 : vector<1x1x128xf32> to vector<8x32x128xf32>
    %10 = arith.mulf %8, %9 : vector<8x32x128xf32>
    %11 = vector.extract_strided_slice %1 {offsets = [0, 32], sizes = [8, 32], strides = [1, 1]} : vector<8x96xf32> to vector<8x32xf32>
    %12 = vector.shape_cast %11 : vector<8x32xf32> to vector<8x32x1xf32>
    %13 = vector.extract_strided_slice %2 {offsets = [1, 0], sizes = [1, 128], strides = [1, 1]} : vector<3x128xf32> to vector<1x128xf32>
    %14 = vector.shape_cast %13 : vector<1x128xf32> to vector<128xf32>
    %15 = vector.shape_cast %14 : vector<128xf32> to vector<1x1x128xf32>
    %16 = vector.broadcast %12 : vector<8x32x1xf32> to vector<8x32x128xf32>
    %17 = vector.broadcast %15 : vector<1x1x128xf32> to vector<8x32x128xf32>
    %18 = arith.mulf %16, %17 : vector<8x32x128xf32>
    %19 = arith.addf %10, %18 : vector<8x32x128xf32>
    %20 = vector.extract_strided_slice %1 {offsets = [0, 64], sizes = [8, 32], strides = [1, 1]} : vector<8x96xf32> to vector<8x32xf32>
    %21 = vector.shape_cast %20 : vector<8x32xf32> to vector<8x32x1xf32>
    %22 = vector.extract_strided_slice %2 {offsets = [2, 0], sizes = [1, 128], strides = [1, 1]} : vector<3x128xf32> to vector<1x128xf32>
    %23 = vector.shape_cast %22 : vector<1x128xf32> to vector<128xf32>
    %24 = vector.shape_cast %23 : vector<128xf32> to vector<1x1x128xf32>
    %25 = vector.broadcast %21 : vector<8x32x1xf32> to vector<8x32x128xf32>
    %26 = vector.broadcast %24 : vector<1x1x128xf32> to vector<8x32x128xf32>
    %27 = arith.mulf %25, %26 : vector<8x32x128xf32>
    %28 = arith.addf %19, %27 : vector<8x32x128xf32>
    %29 = vector.shape_cast %28 : vector<8x32x128xf32> to vector<256x128xf32>
    %c0_3 = arith.constant 0 : index
    %c0_4 = arith.constant 0 : index
    %30 = vector.load %arg5[%c0_3, %c0_4] : memref<1x128xf32, #tpu.memory_space<vmem>>, vector<1x128xf32>
    %31 = vector.broadcast %30 : vector<1x128xf32> to vector<256x128xf32>
    %32 = arith.addf %29, %31 : vector<256x128xf32>
    %c0_5 = arith.constant 0 : index
    %c0_6 = arith.constant 0 : index
    %33 = vector.load %arg1[%c0_5, %c0_6] : memref<256x128xbf16, #tpu.memory_space<vmem>>, vector<256x128xbf16>
    %c0_7 = arith.constant 0 : index
    %c0_8 = arith.constant 0 : index
    %34 = vector.load %arg3[%c0_7, %c0_8] : memref<128x128xbf16, #tpu.memory_space<vmem>>, vector<128x128xbf16>
    %cst = arith.constant dense<0.000000e+00> : vector<256x128xf32>
    %35 = tpu.matmul %33, %34, %cst {dimension_numbers = #tpu.dot_dimension_numbers<[1], [0], [0], [1], [0, 0, 1, 1], [], []>} : vector<256x128xbf16>, vector<128x128xbf16>, vector<256x128xf32> -> vector<256x128xf32>
    %36 = arith.addf %32, %35 : vector<256x128xf32>
    %cst_9 = arith.constant 0.000000e+00 : f32
    %37 = vector.broadcast %cst_9 : f32 to vector<256x128xf32>
    %38 = arith.maximumf %36, %37 : vector<256x128xf32>
    %39 = arith.truncf %38 : vector<256x128xf32> to vector<256x128xbf16>
    %c0_10 = arith.constant 0 : index
    %c0_11 = arith.constant 0 : index
    %40 = vector.load %arg6[%c0_10, %c0_11] : memref<128x128xbf16, #tpu.memory_space<vmem>>, vector<128x128xbf16>
    %cst_12 = arith.constant dense<0.000000e+00> : vector<256x128xf32>
    %41 = tpu.matmul %39, %40, %cst_12 {dimension_numbers = #tpu.dot_dimension_numbers<[1], [0], [0], [1], [0, 0, 1, 1], [], []>} : vector<256x128xbf16>, vector<128x128xbf16>, vector<256x128xf32> -> vector<256x128xf32>
    %c0_13 = arith.constant 0 : index
    %c0_14 = arith.constant 0 : index
    %42 = vector.load %arg7[%c0_13, %c0_14] : memref<1x128xf32, #tpu.memory_space<vmem>>, vector<1x128xf32>
    %43 = vector.broadcast %42 : vector<1x128xf32> to vector<256x128xf32>
    %44 = arith.addf %41, %43 : vector<256x128xf32>
    %cst_15 = arith.constant 0.000000e+00 : f32
    %45 = vector.broadcast %cst_15 : f32 to vector<256x128xf32>
    %46 = arith.maximumf %44, %45 : vector<256x128xf32>
    %47 = arith.truncf %46 : vector<256x128xf32> to vector<256x128xbf16>
    %c0_16 = arith.constant 0 : index
    %c0_17 = arith.constant 0 : index
    %48 = vector.load %arg8[%c0_16, %c0_17] : memref<128x256xbf16, #tpu.memory_space<vmem>>, vector<128x256xbf16>
    %cst_18 = arith.constant dense<0.000000e+00> : vector<256x256xf32>
    %49 = tpu.matmul %47, %48, %cst_18 {dimension_numbers = #tpu.dot_dimension_numbers<[1], [0], [0], [1], [0, 0, 1, 1], [], []>} : vector<256x128xbf16>, vector<128x256xbf16>, vector<256x256xf32> -> vector<256x256xf32>
    %c0_19 = arith.constant 0 : index
    %c0_20 = arith.constant 0 : index
    %50 = vector.load %arg9[%c0_19, %c0_20] : memref<1x256xf32, #tpu.memory_space<vmem>>, vector<1x256xf32>
    %51 = vector.broadcast %50 : vector<1x256xf32> to vector<256x256xf32>
    %52 = arith.addf %49, %51 : vector<256x256xf32>
    %53 = vector.shape_cast %52 : vector<256x256xf32> to vector<8x32x256xf32>
    %cst_21 = arith.constant dense<0xFF800000> : vector<8x256xf32>
    %54 = vector.multi_reduction <maximumf>, %53, %cst_21 [1] : vector<8x32x256xf32> to vector<8x256xf32>
    %55 = arith.truncf %54 : vector<8x256xf32> to vector<8x256xbf16>
    %c0_22 = arith.constant 0 : index
    %c0_23 = arith.constant 0 : index
    %56 = vector.load %arg10[%c0_22, %c0_23] : memref<8x256xbf16, #tpu.memory_space<vmem>>, vector<8x256xbf16>
    tpu.vector_store %arg10[%c0_22, %c0_23], %55 {strides = array<i32>} : memref<8x256xbf16, #tpu.memory_space<vmem>>, vector<8x256xbf16>,
    return
  }
  func.func @transform_0(%arg0: i32) -> (i32, i32) {
    %c0_i32 = arith.constant 0 : i32
    %c0_i32_0 = arith.constant 0 : i32
    return %arg0, %c0_i32 : i32, i32
  }
  func.func @transform_1(%arg0: i32) -> (i32, i32) {
    %c0_i32 = arith.constant 0 : i32
    %c0_i32_0 = arith.constant 0 : i32
    return %arg0, %c0_i32 : i32, i32
  }
  func.func @transform_2(%arg0: i32) -> (i32, i32) {
    %c0_i32 = arith.constant 0 : i32
    %c0_i32_0 = arith.constant 0 : i32
    %c0_i32_1 = arith.constant 0 : i32
    return %c0_i32, %c0_i32_0 : i32, i32
  }
  func.func @transform_3(%arg0: i32) -> (i32, i32) {
    %c0_i32 = arith.constant 0 : i32
    %c0_i32_0 = arith.constant 0 : i32
    %c0_i32_1 = arith.constant 0 : i32
    return %c0_i32, %c0_i32_0 : i32, i32
  }
  func.func @transform_4(%arg0: i32) -> (i32, i32) {
    %c0_i32 = arith.constant 0 : i32
    %c0_i32_0 = arith.constant 0 : i32
    %c0_i32_1 = arith.constant 0 : i32
    return %c0_i32, %c0_i32_0 : i32, i32
  }
  func.func @transform_5(%arg0: i32) -> (i32, i32) {
    %c0_i32 = arith.constant 0 : i32
    %c0_i32_0 = arith.constant 0 : i32
    %c0_i32_1 = arith.constant 0 : i32
    return %c0_i32, %c0_i32_0 : i32, i32
  }
  func.func @transform_6(%arg0: i32) -> (i32, i32) {
    %c0_i32 = arith.constant 0 : i32
    %c0_i32_0 = arith.constant 0 : i32
    %c0_i32_1 = arith.constant 0 : i32
    return %c0_i32, %c0_i32_0 : i32, i32
  }
  func.func @transform_7(%arg0: i32) -> (i32, i32) {
    %c0_i32 = arith.constant 0 : i32
    %c0_i32_0 = arith.constant 0 : i32
    %c0_i32_1 = arith.constant 0 : i32
    return %c0_i32, %c0_i32_0 : i32, i32
  }
  func.func @transform_8(%arg0: i32) -> (i32, i32) {
    %c0_i32 = arith.constant 0 : i32
    %c0_i32_0 = arith.constant 0 : i32
    %c0_i32_1 = arith.constant 0 : i32
    return %c0_i32, %c0_i32_0 : i32, i32
  }
  func.func @transform_9(%arg0: i32) -> (i32, i32) {
    %c0_i32 = arith.constant 0 : i32
    %c0_i32_0 = arith.constant 0 : i32
    return %arg0, %c0_i32 : i32, i32
  }
}

module attributes {stable_mosaic.version = 11 : i64} {
  func.func @_sa3_pool_kernel(%arg0: i32, %arg1: i32, %arg2: memref<1x8x259xbf16, #tpu.memory_space<vmem>>, %arg3: memref<259x256xbf16, #tpu.memory_space<vmem>>, %arg4: memref<1x256xf32, #tpu.memory_space<vmem>>, %arg5: memref<256x512xbf16, #tpu.memory_space<vmem>>, %arg6: memref<1x512xf32, #tpu.memory_space<vmem>>, %arg7: memref<512x1024xbf16, #tpu.memory_space<vmem>>, %arg8: memref<1x1024xf32, #tpu.memory_space<vmem>>, %arg9: memref<1x1x1024xbf16, #tpu.memory_space<vmem>>, %arg10: memref<1x1024xf32, #tpu.memory_space<vmem>>) attributes {dimension_semantics = [#tpu.dimension_semantics<parallel>, #tpu.dimension_semantics<arbitrary>], iteration_bounds = array<i64: 2, 1>, scalar_prefetch = 0 : i64, scratch_operands = 1 : i64, tpu.core_type = #tpu.core_type<tc>, window_params = [{transform_indices = @transform_0, window_bounds = array<i64: 1, 8, 259>}, {pipeline_mode = #tpu.pipeline_mode<synchronous>, transform_indices = @transform_1, window_bounds = array<i64: 259, 256>}, {pipeline_mode = #tpu.pipeline_mode<synchronous>, transform_indices = @transform_2, window_bounds = array<i64: 1, 256>}, {pipeline_mode = #tpu.pipeline_mode<synchronous>, transform_indices = @transform_3, window_bounds = array<i64: 256, 512>}, {pipeline_mode = #tpu.pipeline_mode<synchronous>, transform_indices = @transform_4, window_bounds = array<i64: 1, 512>}, {pipeline_mode = #tpu.pipeline_mode<synchronous>, transform_indices = @transform_5, window_bounds = array<i64: 512, 1024>}, {pipeline_mode = #tpu.pipeline_mode<synchronous>, transform_indices = @transform_6, window_bounds = array<i64: 1, 1024>}, {transform_indices = @transform_7, window_bounds = array<i64: 1, 1, 1024>}]} {
    %c0 = arith.constant 0 : index
    %c0_0 = arith.constant 0 : index
    %c0_1 = arith.constant 0 : index
    %0 = vector.load %arg2[%c0, %c0_0, %c0_1] : memref<1x8x259xbf16, #tpu.memory_space<vmem>>, vector<1x8x259xbf16>
    %1 = vector.shape_cast %0 : vector<1x8x259xbf16> to vector<8x259xbf16>
    %c0_2 = arith.constant 0 : index
    %c0_3 = arith.constant 0 : index
    %2 = vector.load %arg3[%c0_2, %c0_3] : memref<259x256xbf16, #tpu.memory_space<vmem>>, vector<259x256xbf16>
    %cst = arith.constant dense<0.000000e+00> : vector<8x256xf32>
    %3 = tpu.matmul %1, %2, %cst {dimension_numbers = #tpu.dot_dimension_numbers<[1], [0], [0], [1], [0, 0, 1, 1], [], []>} : vector<8x259xbf16>, vector<259x256xbf16>, vector<8x256xf32> -> vector<8x256xf32>
    %c0_4 = arith.constant 0 : index
    %c0_5 = arith.constant 0 : index
    %4 = vector.load %arg4[%c0_4, %c0_5] : memref<1x256xf32, #tpu.memory_space<vmem>>, vector<1x256xf32>
    %5 = vector.broadcast %4 : vector<1x256xf32> to vector<8x256xf32>
    %6 = arith.addf %3, %5 : vector<8x256xf32>
    %cst_6 = arith.constant 0.000000e+00 : f32
    %7 = vector.broadcast %cst_6 : f32 to vector<8x256xf32>
    %8 = arith.maximumf %6, %7 : vector<8x256xf32>
    %9 = arith.truncf %8 : vector<8x256xf32> to vector<8x256xbf16>
    %c0_7 = arith.constant 0 : index
    %c0_8 = arith.constant 0 : index
    %10 = vector.load %arg5[%c0_7, %c0_8] : memref<256x512xbf16, #tpu.memory_space<vmem>>, vector<256x512xbf16>
    %cst_9 = arith.constant dense<0.000000e+00> : vector<8x512xf32>
    %11 = tpu.matmul %9, %10, %cst_9 {dimension_numbers = #tpu.dot_dimension_numbers<[1], [0], [0], [1], [0, 0, 1, 1], [], []>} : vector<8x256xbf16>, vector<256x512xbf16>, vector<8x512xf32> -> vector<8x512xf32>
    %c0_10 = arith.constant 0 : index
    %c0_11 = arith.constant 0 : index
    %12 = vector.load %arg6[%c0_10, %c0_11] : memref<1x512xf32, #tpu.memory_space<vmem>>, vector<1x512xf32>
    %13 = vector.broadcast %12 : vector<1x512xf32> to vector<8x512xf32>
    %14 = arith.addf %11, %13 : vector<8x512xf32>
    %cst_12 = arith.constant 0.000000e+00 : f32
    %15 = vector.broadcast %cst_12 : f32 to vector<8x512xf32>
    %16 = arith.maximumf %14, %15 : vector<8x512xf32>
    %17 = arith.truncf %16 : vector<8x512xf32> to vector<8x512xbf16>
    %c0_13 = arith.constant 0 : index
    %c0_14 = arith.constant 0 : index
    %18 = vector.load %arg7[%c0_13, %c0_14] : memref<512x1024xbf16, #tpu.memory_space<vmem>>, vector<512x1024xbf16>
    %cst_15 = arith.constant dense<0.000000e+00> : vector<8x1024xf32>
    %19 = tpu.matmul %17, %18, %cst_15 {dimension_numbers = #tpu.dot_dimension_numbers<[1], [0], [0], [1], [0, 0, 1, 1], [], []>} : vector<8x512xbf16>, vector<512x1024xbf16>, vector<8x1024xf32> -> vector<8x1024xf32>
    %c0_16 = arith.constant 0 : index
    %c0_17 = arith.constant 0 : index
    %20 = vector.load %arg8[%c0_16, %c0_17] : memref<1x1024xf32, #tpu.memory_space<vmem>>, vector<1x1024xf32>
    %21 = vector.broadcast %20 : vector<1x1024xf32> to vector<8x1024xf32>
    %22 = arith.addf %19, %21 : vector<8x1024xf32>
    %cst_18 = arith.constant dense<0xFF800000> : vector<1024xf32>
    %23 = vector.multi_reduction <maximumf>, %22, %cst_18 [0] : vector<8x1024xf32> to vector<1024xf32>
    %24 = vector.shape_cast %23 : vector<1024xf32> to vector<1x1024xf32>
    %c0_i32 = arith.constant 0 : i32
    %25 = arith.cmpi eq, %arg1, %c0_i32 : i32
    %26 = arith.extui %25 : i1 to i32
    %c0_i32_19 = arith.constant 0 : i32
    %27 = arith.cmpi ne, %26, %c0_i32_19 : i32
    scf.if %27 {
      %cst_26 = arith.constant -1.000000e+30 : f32
      %34 = vector.broadcast %cst_26 : f32 to vector<1x1024xf32>
      %c0_27 = arith.constant 0 : index
      %c0_28 = arith.constant 0 : index
      %35 = vector.load %arg10[%c0_27, %c0_28] : memref<1x1024xf32, #tpu.memory_space<vmem>>, vector<1x1024xf32>
      tpu.vector_store %arg10[%c0_27, %c0_28], %34 {strides = array<i32>} : memref<1x1024xf32, #tpu.memory_space<vmem>>, vector<1x1024xf32>,
    } else {
    }
    %c0_20 = arith.constant 0 : index
    %c0_21 = arith.constant 0 : index
    %28 = vector.load %arg10[%c0_20, %c0_21] : memref<1x1024xf32, #tpu.memory_space<vmem>>, vector<1x1024xf32>
    %29 = arith.maximumf %28, %24 : vector<1x1024xf32>
    %c0_22 = arith.constant 0 : index
    %c0_23 = arith.constant 0 : index
    %30 = vector.load %arg10[%c0_22, %c0_23] : memref<1x1024xf32, #tpu.memory_space<vmem>>, vector<1x1024xf32>
    tpu.vector_store %arg10[%c0_22, %c0_23], %29 {strides = array<i32>} : memref<1x1024xf32, #tpu.memory_space<vmem>>, vector<1x1024xf32>,
    %c0_i32_24 = arith.constant 0 : i32
    %31 = arith.cmpi eq, %arg1, %c0_i32_24 : i32
    %32 = arith.extui %31 : i1 to i32
    %c0_i32_25 = arith.constant 0 : i32
    %33 = arith.cmpi ne, %32, %c0_i32_25 : i32
    scf.if %33 {
      %c0_26 = arith.constant 0 : index
      %c0_27 = arith.constant 0 : index
      %34 = vector.load %arg10[%c0_26, %c0_27] : memref<1x1024xf32, #tpu.memory_space<vmem>>, vector<1x1024xf32>
      %35 = vector.shape_cast %34 : vector<1x1024xf32> to vector<1x1x1024xf32>
      %36 = arith.truncf %35 : vector<1x1x1024xf32> to vector<1x1x1024xbf16>
      %c0_28 = arith.constant 0 : index
      %c0_29 = arith.constant 0 : index
      %c0_30 = arith.constant 0 : index
      %37 = vector.load %arg9[%c0_28, %c0_29, %c0_30] : memref<1x1x1024xbf16, #tpu.memory_space<vmem>>, vector<1x1x1024xbf16>
      tpu.vector_store %arg9[%c0_28, %c0_29, %c0_30], %36 {strides = array<i32>} : memref<1x1x1024xbf16, #tpu.memory_space<vmem>>, vector<1x1x1024xbf16>,
    } else {
    }
    return
  }
  func.func @transform_0(%arg0: i32, %arg1: i32) -> (i32, i32, i32) {
    %c0_i32 = arith.constant 0 : i32
    %c0_i32_0 = arith.constant 0 : i32
    return %arg0, %arg1, %c0_i32 : i32, i32, i32
  }
  func.func @transform_1(%arg0: i32, %arg1: i32) -> (i32, i32) {
    %c0_i32 = arith.constant 0 : i32
    %c0_i32_0 = arith.constant 0 : i32
    %c0_i32_1 = arith.constant 0 : i32
    return %c0_i32, %c0_i32_0 : i32, i32
  }
  func.func @transform_2(%arg0: i32, %arg1: i32) -> (i32, i32) {
    %c0_i32 = arith.constant 0 : i32
    %c0_i32_0 = arith.constant 0 : i32
    %c0_i32_1 = arith.constant 0 : i32
    return %c0_i32, %c0_i32_0 : i32, i32
  }
  func.func @transform_3(%arg0: i32, %arg1: i32) -> (i32, i32) {
    %c0_i32 = arith.constant 0 : i32
    %c0_i32_0 = arith.constant 0 : i32
    %c0_i32_1 = arith.constant 0 : i32
    return %c0_i32, %c0_i32_0 : i32, i32
  }
  func.func @transform_4(%arg0: i32, %arg1: i32) -> (i32, i32) {
    %c0_i32 = arith.constant 0 : i32
    %c0_i32_0 = arith.constant 0 : i32
    %c0_i32_1 = arith.constant 0 : i32
    return %c0_i32, %c0_i32_0 : i32, i32
  }
  func.func @transform_5(%arg0: i32, %arg1: i32) -> (i32, i32) {
    %c0_i32 = arith.constant 0 : i32
    %c0_i32_0 = arith.constant 0 : i32
    %c0_i32_1 = arith.constant 0 : i32
    return %c0_i32, %c0_i32_0 : i32, i32
  }
  func.func @transform_6(%arg0: i32, %arg1: i32) -> (i32, i32) {
    %c0_i32 = arith.constant 0 : i32
    %c0_i32_0 = arith.constant 0 : i32
    %c0_i32_1 = arith.constant 0 : i32
    return %c0_i32, %c0_i32_0 : i32, i32
  }
  func.func @transform_7(%arg0: i32, %arg1: i32) -> (i32, i32, i32) {
    %c0_i32 = arith.constant 0 : i32
    %c0_i32_0 = arith.constant 0 : i32
    %c0_i32_1 = arith.constant 0 : i32
    return %arg0, %c0_i32, %c0_i32_0 : i32, i32, i32
  }
}

module attributes {stable_mosaic.version = 11 : i64} {
  func.func @_head_kernel(%arg0: i32, %arg1: memref<2x1024xbf16, #tpu.memory_space<vmem>>, %arg2: memref<1024x512xbf16, #tpu.memory_space<vmem>>, %arg3: memref<1x512xf32, #tpu.memory_space<vmem>>, %arg4: memref<512x256xbf16, #tpu.memory_space<vmem>>, %arg5: memref<1x256xf32, #tpu.memory_space<vmem>>, %arg6: memref<256x10xbf16, #tpu.memory_space<vmem>>, %arg7: memref<1x10xf32, #tpu.memory_space<vmem>>, %arg8: memref<2x10xf32, #tpu.memory_space<vmem>>) attributes {dimension_semantics = [#tpu.dimension_semantics<arbitrary>], iteration_bounds = array<i64: 1>, scalar_prefetch = 0 : i64, scratch_operands = 0 : i64, tpu.core_type = #tpu.core_type<tc>, window_params = [{pipeline_mode = #tpu.pipeline_mode<synchronous>, transform_indices = @transform_0, window_bounds = array<i64: 2, 1024>}, {pipeline_mode = #tpu.pipeline_mode<synchronous>, transform_indices = @transform_1, window_bounds = array<i64: 1024, 512>}, {pipeline_mode = #tpu.pipeline_mode<synchronous>, transform_indices = @transform_2, window_bounds = array<i64: 1, 512>}, {pipeline_mode = #tpu.pipeline_mode<synchronous>, transform_indices = @transform_3, window_bounds = array<i64: 512, 256>}, {pipeline_mode = #tpu.pipeline_mode<synchronous>, transform_indices = @transform_4, window_bounds = array<i64: 1, 256>}, {pipeline_mode = #tpu.pipeline_mode<synchronous>, transform_indices = @transform_5, window_bounds = array<i64: 256, 10>}, {pipeline_mode = #tpu.pipeline_mode<synchronous>, transform_indices = @transform_6, window_bounds = array<i64: 1, 10>}, {pipeline_mode = #tpu.pipeline_mode<synchronous>, transform_indices = @transform_7, window_bounds = array<i64: 2, 10>}]} {
    %c0 = arith.constant 0 : index
    %c0_0 = arith.constant 0 : index
    %0 = vector.load %arg1[%c0, %c0_0] : memref<2x1024xbf16, #tpu.memory_space<vmem>>, vector<2x1024xbf16>
    %c0_1 = arith.constant 0 : index
    %c0_2 = arith.constant 0 : index
    %1 = vector.load %arg2[%c0_1, %c0_2] : memref<1024x512xbf16, #tpu.memory_space<vmem>>, vector<1024x512xbf16>
    %cst = arith.constant dense<0.000000e+00> : vector<2x512xf32>
    %2 = tpu.matmul %0, %1, %cst {dimension_numbers = #tpu.dot_dimension_numbers<[1], [0], [0], [1], [0, 0, 1, 1], [], []>} : vector<2x1024xbf16>, vector<1024x512xbf16>, vector<2x512xf32> -> vector<2x512xf32>
    %c0_3 = arith.constant 0 : index
    %c0_4 = arith.constant 0 : index
    %3 = vector.load %arg3[%c0_3, %c0_4] : memref<1x512xf32, #tpu.memory_space<vmem>>, vector<1x512xf32>
    %4 = vector.broadcast %3 : vector<1x512xf32> to vector<2x512xf32>
    %5 = arith.addf %2, %4 : vector<2x512xf32>
    %cst_5 = arith.constant 0.000000e+00 : f32
    %6 = vector.broadcast %cst_5 : f32 to vector<2x512xf32>
    %7 = arith.maximumf %5, %6 : vector<2x512xf32>
    %8 = arith.truncf %7 : vector<2x512xf32> to vector<2x512xbf16>
    %c0_6 = arith.constant 0 : index
    %c0_7 = arith.constant 0 : index
    %9 = vector.load %arg4[%c0_6, %c0_7] : memref<512x256xbf16, #tpu.memory_space<vmem>>, vector<512x256xbf16>
    %cst_8 = arith.constant dense<0.000000e+00> : vector<2x256xf32>
    %10 = tpu.matmul %8, %9, %cst_8 {dimension_numbers = #tpu.dot_dimension_numbers<[1], [0], [0], [1], [0, 0, 1, 1], [], []>} : vector<2x512xbf16>, vector<512x256xbf16>, vector<2x256xf32> -> vector<2x256xf32>
    %c0_9 = arith.constant 0 : index
    %c0_10 = arith.constant 0 : index
    %11 = vector.load %arg5[%c0_9, %c0_10] : memref<1x256xf32, #tpu.memory_space<vmem>>, vector<1x256xf32>
    %12 = vector.broadcast %11 : vector<1x256xf32> to vector<2x256xf32>
    %13 = arith.addf %10, %12 : vector<2x256xf32>
    %cst_11 = arith.constant 0.000000e+00 : f32
    %14 = vector.broadcast %cst_11 : f32 to vector<2x256xf32>
    %15 = arith.maximumf %13, %14 : vector<2x256xf32>
    %16 = arith.truncf %15 : vector<2x256xf32> to vector<2x256xbf16>
    %c0_12 = arith.constant 0 : index
    %c0_13 = arith.constant 0 : index
    %17 = vector.load %arg6[%c0_12, %c0_13] : memref<256x10xbf16, #tpu.memory_space<vmem>>, vector<256x10xbf16>
    %cst_14 = arith.constant dense<0.000000e+00> : vector<2x10xf32>
    %18 = tpu.matmul %16, %17, %cst_14 {dimension_numbers = #tpu.dot_dimension_numbers<[1], [0], [0], [1], [0, 0, 1, 1], [], []>} : vector<2x256xbf16>, vector<256x10xbf16>, vector<2x10xf32> -> vector<2x10xf32>
    %c0_15 = arith.constant 0 : index
    %c0_16 = arith.constant 0 : index
    %19 = vector.load %arg7[%c0_15, %c0_16] : memref<1x10xf32, #tpu.memory_space<vmem>>, vector<1x10xf32>
    %20 = vector.broadcast %19 : vector<1x10xf32> to vector<2x10xf32>
    %21 = arith.addf %18, %20 : vector<2x10xf32>
    %cst_17 = arith.constant dense<0xFF800000> : vector<2xf32>
    %22 = vector.multi_reduction <maximumf>, %21, %cst_17 [1] : vector<2x10xf32> to vector<2xf32>
    %23 = vector.shape_cast %22 : vector<2xf32> to vector<2x1xf32>
    %24 = vector.broadcast %23 : vector<2x1xf32> to vector<2x10xf32>
    %25 = arith.subf %21, %24 : vector<2x10xf32>
    %26 = math.exp %25 : vector<2x10xf32>
    %cst_18 = arith.constant dense<0.000000e+00> : vector<2xf32>
    %27 = vector.multi_reduction <add>, %26, %cst_18 [1] : vector<2x10xf32> to vector<2xf32>
    %28 = vector.shape_cast %27 : vector<2xf32> to vector<2x1xf32>
    %29 = math.log %28 : vector<2x1xf32>
    %30 = arith.addf %23, %29 : vector<2x1xf32>
    %31 = vector.broadcast %30 : vector<2x1xf32> to vector<2x10xf32>
    %32 = arith.subf %21, %31 : vector<2x10xf32>
    %c0_19 = arith.constant 0 : index
    %c0_20 = arith.constant 0 : index
    %33 = vector.load %arg8[%c0_19, %c0_20] : memref<2x10xf32, #tpu.memory_space<vmem>>, vector<2x10xf32>
    tpu.vector_store %arg8[%c0_19, %c0_20], %32 {strides = array<i32>} : memref<2x10xf32, #tpu.memory_space<vmem>>, vector<2x10xf32>,
    return
  }
  func.func @transform_0(%arg0: i32) -> (i32, i32) {
    %c0_i32 = arith.constant 0 : i32
    %c0_i32_0 = arith.constant 0 : i32
    %c0_i32_1 = arith.constant 0 : i32
    return %c0_i32, %c0_i32_0 : i32, i32
  }
  func.func @transform_1(%arg0: i32) -> (i32, i32) {
    %c0_i32 = arith.constant 0 : i32
    %c0_i32_0 = arith.constant 0 : i32
    %c0_i32_1 = arith.constant 0 : i32
    return %c0_i32, %c0_i32_0 : i32, i32
  }
  func.func @transform_2(%arg0: i32) -> (i32, i32) {
    %c0_i32 = arith.constant 0 : i32
    %c0_i32_0 = arith.constant 0 : i32
    %c0_i32_1 = arith.constant 0 : i32
    return %c0_i32, %c0_i32_0 : i32, i32
  }
  func.func @transform_3(%arg0: i32) -> (i32, i32) {
    %c0_i32 = arith.constant 0 : i32
    %c0_i32_0 = arith.constant 0 : i32
    %c0_i32_1 = arith.constant 0 : i32
    return %c0_i32, %c0_i32_0 : i32, i32
  }
  func.func @transform_4(%arg0: i32) -> (i32, i32) {
    %c0_i32 = arith.constant 0 : i32
    %c0_i32_0 = arith.constant 0 : i32
    %c0_i32_1 = arith.constant 0 : i32
    return %c0_i32, %c0_i32_0 : i32, i32
  }
  func.func @transform_5(%arg0: i32) -> (i32, i32) {
    %c0_i32 = arith.constant 0 : i32
    %c0_i32_0 = arith.constant 0 : i32
    %c0_i32_1 = arith.constant 0 : i32
    return %c0_i32, %c0_i32_0 : i32, i32
  }
  func.func @transform_6(%arg0: i32) -> (i32, i32) {
    %c0_i32 = arith.constant 0 : i32
    %c0_i32_0 = arith.constant 0 : i32
    %c0_i32_1 = arith.constant 0 : i32
    return %c0_i32, %c0_i32_0 : i32, i32
  }
  func.func @transform_7(%arg0: i32) -> (i32, i32) {
    %c0_i32 = arith.constant 0 : i32
    %c0_i32_0 = arith.constant 0 : i32
    %c0_i32_1 = arith.constant 0 : i32
    return %c0_i32, %c0_i32_0 : i32, i32
  }
}

</mosaic_0001>

<llo_original>
// kernel: custom-call.14
$region0: #{custom-call.14}
  %s0 = inlined_call_operand.vmem [shape: f32[2,64], index: 0, kind: output, shape index: {}]

// kernel: custom-call.15
$region0: #{custom-call.15}
  %s0 = inlined_call_operand.vmem [shape: f32[2,32], index: 0, kind: output, shape index: {}]

// kernel: pointnet_pp_forward.4
$region0: #{pointnet_pp_forward.4}
  #allocation0 [shape = 'u32[]', space=smem, size = 0x4, offset = 0x4, fixed_abs, tag = 'smem constant byte address 0x4 - core index']
  #allocation1 [shape = 'u32[144,128]{1,0:T(1,128)}', space=vmem, size = 0x12000, scoped, tag = 'internal scratch']
  %s0 = inlined_call_operand.vmem [shape: bf16[64,192], index: 0, kind: input, shape index: {}]
  %s1 = inlined_call_operand.vmem [shape: f32[3,64], index: 1, kind: input, shape index: {}]
  %s2 = inlined_call_operand.vmem [shape: f32[1,64], index: 2, kind: input, shape index: {}]
  %s3 = inlined_call_operand.vmem [shape: bf16[64,64], index: 3, kind: input, shape index: {}]
  %s4 = inlined_call_operand.vmem [shape: f32[1,64], index: 4, kind: input, shape index: {}]
  %s5 = inlined_call_operand.vmem [shape: bf16[64,128], index: 5, kind: input, shape index: {}]
  %s6 = inlined_call_operand.vmem [shape: f32[1,128], index: 6, kind: input, shape index: {}]
  %s7 = inlined_call_operand.vmem [shape: bf16[64,128], index: 7, kind: output, shape index: {}]
  %s8 = sld [smem:[#allocation0]]
  $region61: #{pointnet_pp_forward.4} parent=0
    _
  %s10 = ssub.s32 1, %s8
  %s11 = scalar_select 0, %s10, %s8
  loop: start=0, step=1, limit=6
  $region2: #{pointnet_pp_forward.4} parent=0 // loop_pre_header
    _
  $region3: #{pointnet_pp_forward.4} parent=0 // loop_header
    %s13 = sphi 0, %s17
    %p14 = scmp.ge.s32.totalorder %s13, 6
    %s23 = sphi 0, %s25
    %s26 = sphi 0, %s23
    %s27 = sphi 0, %s26
    %s43 = sphi 0, %s27
    %s47 = sphi 0, %s47
    %s49 = sphi 0, %s47
    %s50 = sphi 0, %s49
    %s64 = sphi 0, %s50
    %s68 = sphi 0, %s68
    %s70 = sphi 0, %s68
    %s71 = sphi 0, %s70
    %s85 = sphi 0, %s71
    %s89 = sphi 0, %s89
    %s91 = sphi 0, %s89
    %s92 = sphi 0, %s91
    %s106 = sphi 0, %s92
    %s110 = sphi 0, %s110
    %s112 = sphi 0, %s110
    %s113 = sphi 0, %s112
    %s127 = sphi 0, %s113
    %s131 = sphi 0, %s131
    %s133 = sphi 0, %s131
    %s134 = sphi 0, %s133
    %s148 = sphi 0, %s134
    %s152 = sphi 0, %s152
    %s154 = sphi 0, %s152
    %s155 = sphi 0, %s154
    %s169 = sphi 0, %s155
    %s175 = sphi 0, %s177
    %s178 = sphi 0, %s175
    %s179 = sphi 0, %s178
    %s195 = sphi 0, %s179
  $region4: #{pointnet_pp_forward.4} parent=0 // loop_header_branch
    %16 = sbr.rel (%p14) target = $region8
  $region5: #{pointnet_pp_forward.4} parent=0 // loop_body
    %s18 = ssub.s32 %s13, 1
    %s19 = ssub.s32 %s13, 2
    %s20 = sadd.s32 %s13, 1
    %s21 = ssub.s32 %s13, %s20
    %p22 = scmp.eq.s32.totalorder %s21, 0
    %s24 = sadd.s32 %s23, 1
    %s25 = scalar_select %p22, %s23, %s24
    %p28 = pneg %p22
    %p29 = scmp.eq.s32.totalorder %s13, 3
    %p30 = por %p28, %p29
    %p31 = scmp.ne.s32.totalorder %s23, %s26
    %p32 = scmp.eq.s32.totalorder %s13, 0
    %p33 = por %p31, %p32
    %p34 = scmp.ne.s32.totalorder %s23, %s26
    %p35 = scmp.eq.s32.totalorder %s18, 3
    %p36 = por %p34, %p35
    %p37 = scmp.ne.s32.totalorder %s26, %s27
    %p38 = scmp.eq.s32.totalorder %s18, 0
    %p39 = por %p37, %p38
    %p40 = scmp.ne.s32.totalorder %s26, %s27
    %p41 = scmp.eq.s32.totalorder %s19, 3
    %p42 = por %p40, %p41
    %p44 = scmp.ne.s32.totalorder %s27, %s43
    %p45 = scmp.eq.s32.totalorder %s19, 0
    %p46 = por %p44, %p45
    %s48 = sadd.s32 %s47, 1
    %p51 = scmp.eq.s32.totalorder %s13, 3
    %p52 = scmp.ne.s32.totalorder %s47, %s49
    %p53 = scmp.eq.s32.totalorder %s13, 0
    %p54 = por %p52, %p53
    %p55 = scmp.ne.s32.totalorder %s47, %s49
    %p56 = scmp.eq.s32.totalorder %s18, 3
    %p57 = por %p55, %p56
    %p58 = scmp.ne.s32.totalorder %s49, %s50
    %p59 = scmp.eq.s32.totalorder %s18, 0
    %p60 = por %p58, %p59
    %p61 = scmp.ne.s32.totalorder %s49, %s50
    %p62 = scmp.eq.s32.totalorder %s19, 3
    %p63 = por %p61, %p62
    %p65 = scmp.ne.s32.totalorder %s50, %s64
    %p66 = scmp.eq.s32.totalorder %s19, 0
    %p67 = por %p65, %p66
    %s69 = sadd.s32 %s68, 1
    %p72 = scmp.eq.s32.totalorder %s13, 3
    %p73 = scmp.ne.s32.totalorder %s68, %s70
    %p74 = scmp.eq.s32.totalorder %s13, 0
    %p75 = por %p73, %p74
    %p76 = scmp.ne.s32.totalorder %s68, %s70
    %p77 = scmp.eq.s32.totalorder %s18, 3
    %p78 = por %p76, %p77
    %p79 = scmp.ne.s32.totalorder %s70, %s71
    %p80 = scmp.eq.s32.totalorder %s18, 0
    %p81 = por %p79, %p80
    %p82 = scmp.ne.s32.totalorder %s70, %s71
    %p83 = scmp.eq.s32.totalorder %s19, 3
    %p84 = por %p82, %p83
    %p86 = scmp.ne.s32.totalorder %s71, %s85
    %p87 = scmp.eq.s32.totalorder %s19, 0
    %p88 = por %p86, %p87
    %s90 = sadd.s32 %s89, 1
    %p93 = scmp.eq.s32.totalorder %s13, 3
    %p94 = scmp.ne.s32.totalorder %s89, %s91
    %p95 = scmp.eq.s32.totalorder %s13, 0
    %p96 = por %p94, %p95
    %p97 = scmp.ne.s32.totalorder %s89, %s91
    %p98 = scmp.eq.s32.totalorder %s18, 3
    %p99 = por %p97, %p98
    %p100 = scmp.ne.s32.totalorder %s91, %s92
    %p101 = scmp.eq.s32.totalorder %s18, 0
    %p102 = por %p100, %p101
    %p103 = scmp.ne.s32.totalorder %s91, %s92
    %p104 = scmp.eq.s32.totalorder %s19, 3
    %p105 = por %p103, %p104
    %p107 = scmp.ne.s32.totalorder %s92, %s106
    %p108 = scmp.eq.s32.totalorder %s19, 0
    %p109 = por %p107, %p108
    %s111 = sadd.s32 %s110, 1
    %p114 = scmp.eq.s32.totalorder %s13, 3
    %p115 = scmp.ne.s32.totalorder %s110, %s112
    %p116 = scmp.eq.s32.totalorder %s13, 0
    %p117 = por %p115, %p116
    %p118 = scmp.ne.s32.totalorder %s110, %s112
    %p119 = scmp.eq.s32.totalorder %s18, 3
    %p120 = por %p118, %p119
    %p121 = scmp.ne.s32.totalorder %s112, %s113
    %p122 = scmp.eq.s32.totalorder %s18, 0
    %p123 = por %p121, %p122
    %p124 = scmp.ne.s32.totalorder %s112, %s113
    %p125 = scmp.eq.s32.totalorder %s19, 3
    %p126 = por %p124, %p125
    %p128 = scmp.ne.s32.totalorder %s113, %s127
    %p129 = scmp.eq.s32.totalorder %s19, 0
    %p130 = por %p128, %p129
    %s132 = sadd.s32 %s131, 1
    %p135 = scmp.eq.s32.totalorder %s13, 3
    %p136 = scmp.ne.s32.totalorder %s131, %s133
    %p137 = scmp.eq.s32.totalorder %s13, 0
    %p138 = por %p136, %p137
    %p139 = scmp.ne.s32.totalorder %s131, %s133
    %p140 = scmp.eq.s32.totalorder %s18, 3
    %p141 = por %p139, %p140
    %p142 = scmp.ne.s32.totalorder %s133, %s134
    %p143 = scmp.eq.s32.totalorder %s18, 0
    %p144 = por %p142, %p143
    %p145 = scmp.ne.s32.totalorder %s133, %s134
    %p146 = scmp.eq.s32.totalorder %s19, 3
    %p147 = por %p145, %p146
    %p149 = scmp.ne.s32.totalorder %s134, %s148
    %p150 = scmp.eq.s32.totalorder %s19, 0
    %p151 = por %p149, %p150
    %s153 = sadd.s32 %s152, 1
    %p156 = scmp.eq.s32.totalorder %s13, 3
    %p157 = scmp.ne.s32.totalorder %s152, %s154
    %p158 = scmp.eq.s32.totalorder %s13, 0
    %p159 = por %p157, %p158
    %p160 = scmp.ne.s32.totalorder %s152, %s154
    %p161 = scmp.eq.s32.totalorder %s18, 3
    %p162 = por %p160, %p161
    %p163 = scmp.ne.s32.totalorder %s154, %s155
    %p164 = scmp.eq.s32.totalorder %s18, 0
    %p165 = por %p163, %p164
    %p166 = scmp.ne.s32.totalorder %s154, %s155
    %p167 = scmp.eq.s32.totalorder %s19, 3
    %p168 = por %p166, %p167
    %p170 = scmp.ne.s32.totalorder %s155, %s169
    %p171 = scmp.eq.s32.totalorder %s19, 0
    %p172 = por %p170, %p171
    %s173 = ssub.s32 %s13, %s20
    %p174 = scmp.eq.s32.totalorder %s173, 0
    %s176 = sadd.s32 %s175, 1
    %s177 = scalar_select %p174, %s175, %s176
    %p180 = pneg %p174
    %p181 = scmp.eq.s32.totalorder %s13, 3
    %p182 = por %p180, %p181
    %p183 = scmp.ne.s32.totalorder %s175, %s178
    %p184 = scmp.eq.s32.totalorder %s13, 0
    %p185 = por %p183, %p184
    %p186 = scmp.ne.s32.totalorder %s175, %s178
    %p187 = scmp.eq.s32.totalorder %s18, 3
    %p188 = por %p186, %p187
    %p189 = scmp.ne.s32.totalorder %s178, %s179
    %p190 = scmp.eq.s32.totalorder %s18, 0
    %p191 = por %p189, %p190
    %p192 = scmp.ne.s32.totalorder %s178, %s179
    %p193 = scmp.eq.s32.totalorder %s19, 3
    %p194 = por %p192, %p193
    %p196 = scmp.ne.s32.totalorder %s179, %s195
    %p197 = scmp.eq.s32.totalorder %s19, 0
    %p198 = por %p196, %p197
    %p199 = scmp.le.s32.totalorder 1, %s13
    %p200 = scmp.lt.s32.totalorder %s13, 5
    %p201 = pnand %p199, %p200
    %p202 = pneg %p201
    // Predicated region
    $region9: #{pointnet_pp_forward.4} parent=5 // pred_check
      _
    $region10: #{pointnet_pp_forward.4} parent=5 // pred_check_branch
      %204 = sbr.rel (%p201) target = $region12
    $region11: #{pointnet_pp_forward.4} parent=5 // pred_region
      %s205 = ssub.s32 %s13, 1
      // Predicated region
      $region13: #{pointnet_pp_forward.4} parent=11 // pred_check
        %p206 = pneg %p60
      $region14: #{pointnet_pp_forward.4} parent=11 // pred_check_branch
        %208 = sbr.rel (%p206) target = $region16
      $region15: #{pointnet_pp_forward.4} parent=11 // pred_region
        _
      $region16: #{pointnet_pp_forward.4} parent=11 // pred_fallthru
        _
      // Predicated region
      $region17: #{pointnet_pp_forward.4} parent=11 // pred_check
        %p209 = pneg %p81
      $region18: #{pointnet_pp_forward.4} parent=11 // pred_check_branch
        %211 = sbr.rel (%p209) target = $region20
      $region19: #{pointnet_pp_forward.4} parent=11 // pred_region
        _
      $region20: #{pointnet_pp_forward.4} parent=11 // pred_fallthru
        _
      // Predicated region
      $region21: #{pointnet_pp_forward.4} parent=11 // pred_check
        %p212 = pneg %p102
      $region22: #{pointnet_pp_forward.4} parent=11 // pred_check_branch
        %214 = sbr.rel (%p212) target = $region24
      $region23: #{pointnet_pp_forward.4} parent=11 // pred_region
        _
      $region24: #{pointnet_pp_forward.4} parent=11 // pred_fallthru
        _
      // Predicated region
      $region25: #{pointnet_pp_forward.4} parent=11 // pred_check
        %p215 = pneg %p123
      $region26: #{pointnet_pp_forward.4} parent=11 // pred_check_branch
        %217 = sbr.rel (%p215) target = $region28
      $region27: #{pointnet_pp_forward.4} parent=11 // pred_region
        _
      $region28: #{pointnet_pp_forward.4} parent=11 // pred_fallthru
        _
      // Predicated region
      $region29: #{pointnet_pp_forward.4} parent=11 // pred_check
        %p218 = pneg %p144
      $region30: #{pointnet_pp_forward.4} parent=11 // pred_check_branch
        %220 = sbr.rel (%p218) target = $region32
      $region31: #{pointnet_pp_forward.4} parent=11 // pred_region
        _
      $region32: #{pointnet_pp_forward.4} parent=11 // pred_fallthru
        _
      // Predicated region
      $region33: #{pointnet_pp_forward.4} parent=11 // pred_check
        %p221 = pneg %p165
      $region34: #{pointnet_pp_forward.4} parent=11 // pred_check_branch
        %223 = sbr.rel (%p221) target = $region36
      $region35: #{pointnet_pp_forward.4} parent=11 // pred_region
        _
      $region36: #{pointnet_pp_forward.4} parent=11 // pred_fallthru
        _
    $region12: #{pointnet_pp_forward.4} parent=5 // pred_fallthru
      _
    %p224 = scmp.lt.s32.totalorder %s13, 4
    // Predicated region
    $region37: #{pointnet_pp_forward.4} parent=5 // pred_check
      %p225 = pneg %p224
    $region38: #{pointnet_pp_forward.4} parent=5 // pred_check_branch
      %227 = sbr.rel (%p225) target = $region40
    $region39: #{pointnet_pp_forward.4} parent=5 // pred_region
      // Predicated region
      $region41: #{pointnet_pp_forward.4} parent=39 // pred_check
        %p228 = pneg %p33
      $region42: #{pointnet_pp_forward.4} parent=39 // pred_check_branch
        %230 = sbr.rel (%p228) target = $region44
      $region43: #{pointnet_pp_forward.4} parent=39 // pred_region
        %s231 = smul.u32 2, %s13
        %p232 = scmp.lt.s32.totalorder %s231, 7
        %s233 = scalar_select %p232, %s231, 7
        %s234 = smul.addr %s233, 2
        %s235 = smul.addr %s234, 4
        %s236 = scalar_lea.vmem %s0, %s235
        %s237 = smul.u32 2, %s13
      $region44: #{pointnet_pp_forward.4} parent=39 // pred_fallthru
        _
    $region40: #{pointnet_pp_forward.4} parent=5 // pred_fallthru
      _
    %p238 = scmp.le.s32.totalorder 1, %s13
    %p239 = scmp.lt.s32.totalorder %s13, 5
    %p240 = pnand %p238, %p239
    %p241 = pneg %p240
    // Predicated region
    $region45: #{pointnet_pp_forward.4} parent=5 // pred_check
      _
    $region46: #{pointnet_pp_forward.4} parent=5 // pred_check_branch
      %243 = sbr.rel (%p240) target = $region48
    $region47: #{pointnet_pp_forward.4} parent=5 // pred_region
      %s244 = ssub.s32 %s13, 1
      %s245 = smul.u32 2, %s18
      %p246 = scmp.lt.s32.totalorder %s245, 7
      %s247 = scalar_select %p246, %s245, 7
      %s248 = smul.addr %s247, 2
      %s249 = smul.addr %s248, 4
      %s250 = scalar_lea.vmem %s0, %s249
      %p251 = pneg %p39
      %p252 = pneg %p36
      %p253 = pneg %p60
      %p254 = pneg %p57
      %p255 = pneg %p81
      %p256 = pneg %p78
      %p257 = pneg %p102
      %p258 = pneg %p99
      %p259 = pneg %p123
      %p260 = pneg %p120
      %p261 = pneg %p144
      %p262 = pneg %p141
      %p263 = pneg %p165
      %p264 = pneg %p162
      %p265 = pneg %p191
      %p266 = pneg %p188
      %s267 = smul.u32 2, %s18
      %p268 = scmp.lt.s32.totalorder %s267, 7
      %s269 = scalar_select %p268, %s267, 7
      %s270 = smul.addr %s269, 4
      %s271 = scalar_lea.vmem %s7, %s270
      %s272 = smul.u32 2, %s18
      %p273 = scmp.lt.s32.totalorder %s272, 7
      %s274 = scalar_select %p273, %s272, 7
      %s275 = smul.addr %s274, 2
      %s276 = smul.addr %s275, 4
      %s277 = scalar_lea.vmem %s0, %s276
      %s278 = smul.u32 2, %s18
      %s279 = smul.u32 2, %s18
      %p280 = scmp.lt.s32.totalorder %s279, 7
      %s281 = scalar_select %p280, %s279, 7
      %s282 = smul.addr %s281, 4
      %s283 = scalar_lea.vmem %s7, %s282
      %s284 = smul.u32 2, %s18
      %v286 = vld [vmem:[%s277] sm:$0xff]
      %v287 = vld [vmem:[%s277 + $0x8] sm:$0xff]
      %v288 = vunpack.c.l.bf16 %v286
      %v289 = vunpack.c.h.bf16 %v286
      %v290 = vunpack.c.l.bf16 %v287
      %v291 = vunpack.c.h.bf16 %v287
      %v292 = vld [vmem:[%s1] sm:$0x7]
      %v293 = vlaneseq
      %v294 = vshrl.u32 %v293, 7
      %v295 = vsub.s32 0, %v294
      %v296 = vrot.slane %v288, %v295
      %298 = vbcast.lane.b32.xlu0 %v296, 256
      %v299 = vpop.permute.xlu0 %298
      %s301 = sor.u32 256, 8
      %302 = vbcast.lane.b32.xlu0 %v296, %s301
      %v303 = vpop.permute.xlu0 %302
      %s305 = sor.u32 256, 16
      %306 = vbcast.lane.b32.xlu0 %v296, %s305
      %v307 = vpop.permute.xlu0 %306
      %s309 = sor.u32 256, 24
      %310 = vbcast.lane.b32.xlu0 %v296, %s309
      %v311 = vpop.permute.xlu0 %310
      %s313 = sor.u32 256, 32
      %314 = vbcast.lane.b32.xlu0 %v296, %s313
      %v315 = vpop.permute.xlu0 %314
      %s317 = sor.u32 256, 40
      %318 = vbcast.lane.b32.xlu0 %v296, %s317
      %v319 = vpop.permute.xlu0 %318
      %s321 = sor.u32 256, 48
      %322 = vbcast.lane.b32.xlu0 %v296, %s321
      %v323 = vpop.permute.xlu0 %322
      %s325 = sor.u32 256, 56
      %326 = vbcast.lane.b32.xlu0 %v296, %s325
      %v327 = vpop.permute.xlu0 %326
      %v328 = vlaneseq
      %v329 = vshrl.u32 %v328, 7
      %v330 = vsub.s32 1, %v329
      %v331 = vrot.slane %v288, %v330
      %333 = vbcast.lane.b32.xlu0 %v331, 256
      %v334 = vpop.permute.xlu0 %333
      %s336 = sor.u32 256, 8
      %337 = vbcast.lane.b32.xlu0 %v331, %s336
      %v338 = vpop.permute.xlu0 %337
      %s340 = sor.u32 256, 16
      %341 = vbcast.lane.b32.xlu0 %v331, %s340
      %v342 = vpop.permute.xlu0 %341
      %s344 = sor.u32 256, 24
      %345 = vbcast.lane.b32.xlu0 %v331, %s344
      %v346 = vpop.permute.xlu0 %345
      %s348 = sor.u32 256, 32
      %349 = vbcast.lane.b32.xlu0 %v331, %s348
      %v350 = vpop.permute.xlu0 %349
      %s352 = sor.u32 256, 40
      %353 = vbcast.lane.b32.xlu0 %v331, %s352
      %v354 = vpop.permute.xlu0 %353
      %s356 = sor.u32 256, 48
      %357 = vbcast.lane.b32.xlu0 %v331, %s356
      %v358 = vpop.permute.xlu0 %357
      %s360 = sor.u32 256, 56
      %361 = vbcast.lane.b32.xlu0 %v331, %s360
      %v362 = vpop.permute.xlu0 %361
      %v363 = vlaneseq
      %v364 = vshrl.u32 %v363, 7
      %v365 = vsub.s32 2, %v364
      %v366 = vrot.slane %v288, %v365
      %368 = vbcast.lane.b32.xlu0 %v366, 256
      %v369 = vpop.permute.xlu0 %368
      %s371 = sor.u32 256, 8
      %372 = vbcast.lane.b32.xlu0 %v366, %s371
      %v373 = vpop.permute.xlu0 %372
      %s375 = sor.u32 256, 16
      %376 = vbcast.lane.b32.xlu0 %v366, %s375
      %v377 = vpop.permute.xlu0 %376
      %s379 = sor.u32 256, 24
      %380 = vbcast.lane.b32.xlu0 %v366, %s379
      %v381 = vpop.permute.xlu0 %380
      %s383 = sor.u32 256, 32
      %384 = vbcast.lane.b32.xlu0 %v366, %s383
      %v385 = vpop.permute.xlu0 %384
      %s387 = sor.u32 256, 40
      %388 = vbcast.lane.b32.xlu0 %v366, %s387
      %v389 = vpop.permute.xlu0 %388
      %s391 = sor.u32 256, 48
      %392 = vbcast.lane.b32.xlu0 %v366, %s391
      %v393 = vpop.permute.xlu0 %392
      %s395 = sor.u32 256, 56
      %396 = vbcast.lane.b32.xlu0 %v366, %s395
      %v397 = vpop.permute.xlu0 %396
      %v398 = vlaneseq
      %v399 = vshrl.u32 %v398, 7
      %v400 = vsub.s32 3, %v399
      %v401 = vrot.slane %v288, %v400
      %403 = vbcast.lane.b32.xlu0 %v401, 256
      %v404 = vpop.permute.xlu0 %403
      %s406 = sor.u32 256, 8
      %407 = vbcast.lane.b32.xlu0 %v401, %s406
      %v408 = vpop.permute.xlu0 %407
      %s410 = sor.u32 256, 16
      %411 = vbcast.lane.b32.xlu0 %v401, %s410
      %v412 = vpop.permute.xlu0 %411
      %s414 = sor.u32 256, 24
      %415 = vbcast.lane.b32.xlu0 %v401, %s414
      %v416 = vpop.permute.xlu0 %415
      %s418 = sor.u32 256, 32
      %419 = vbcast.lane.b32.xlu0 %v401, %s418
      %v420 = vpop.permute.xlu0 %419
      %s422 = sor.u32 256, 40
      %423 = vbcast.lane.b32.xlu0 %v401, %s422
      %v424 = vpop.permute.xlu0 %423
      %s426 = sor.u32 256, 48
      %427 = vbcast.lane.b32.xlu0 %v401, %s426
      %v428 = vpop.permute.xlu0 %427
      %s430 = sor.u32 256, 56
      %431 = vbcast.lane.b32.xlu0 %v401, %s430
      %v432 = vpop.permute.xlu0 %431
      %v433 = vlaneseq
      %v434 = vshrl.u32 %v433, 7
      %v435 = vsub.s32 4, %v434
      %v436 = vrot.slane %v288, %v435
      %438 = vbcast.lane.b32.xlu0 %v436, 256
      %v439 = vpop.permute.xlu0 %438
      %s441 = sor.u32 256, 8
      %442 = vbcast.lane.b32.xlu0 %v436, %s441
      %v443 = vpop.permute.xlu0 %442
      %s445 = sor.u32 256, 16
      %446 = vbcast.lane.b32.xlu0 %v436, %s445
      %v447 = vpop.permute.xlu0 %446
      %s449 = sor.u32 256, 24
      %450 = vbcast.lane.b32.xlu0 %v436, %s449
      %v451 = vpop.permute.xlu0 %450
      %s453 = sor.u32 256, 32
      %454 = vbcast.lane.b32.xlu0 %v436, %s453
      %v455 = vpop.permute.xlu0 %454
      %s457 = sor.u32 256, 40
      %458 = vbcast.lane.b32.xlu0 %v436, %s457
      %v459 = vpop.permute.xlu0 %458
      %s461 = sor.u32 256, 48
      %462 = vbcast.lane.b32.xlu0 %v436, %s461
      %v463 = vpop.permute.xlu0 %462
      %s465 = sor.u32 256, 56
      %466 = vbcast.lane.b32.xlu0 %v436, %s465
      %v467 = vpop.permute.xlu0 %466
      %v468 = vlaneseq
      %v469 = vshrl.u32 %v468, 7
      %v470 = vsub.s32 5, %v469
      %v471 = vrot.slane %v288, %v470
      %473 = vbcast.lane.b32.xlu0 %v471, 256
      %v474 = vpop.permute.xlu0 %473
      %s476 = sor.u32 256, 8
      %477 = vbcast.lane.b32.xlu0 %v471, %s476
      %v478 = vpop.permute.xlu0 %477
      %s480 = sor.u32 256, 16
      %481 = vbcast.lane.b32.xlu0 %v471, %s480
      %v482 = vpop.permute.xlu0 %481
      %s484 = sor.u32 256, 24
      %485 = vbcast.lane.b32.xlu0 %v471, %s484
      %v486 = vpop.permute.xlu0 %485
      %s488 = sor.u32 256, 32
      %489 = vbcast.lane.b32.xlu0 %v471, %s488
      %v490 = vpop.permute.xlu0 %489
      %s492 = sor.u32 256, 40
      %493 = vbcast.lane.b32.xlu0 %v471, %s492
      %v494 = vpop.permute.xlu0 %493
      %s496 = sor.u32 256, 48
      %497 = vbcast.lane.b32.xlu0 %v471, %s496
      %v498 = vpop.permute.xlu0 %497
      %s500 = sor.u32 256, 56
      %501 = vbcast.lane.b32.xlu0 %v471, %s500
      %v502 = vpop.permute.xlu0 %501
      %v503 = vlaneseq
      %v504 = vshrl.u32 %v503, 7
      %v505 = vsub.s32 6, %v504
      %v506 = vrot.slane %v288, %v505
      %508 = vbcast.lane.b32.xlu0 %v506, 256
      %v509 = vpop.permute.xlu0 %508
      %s511 = sor.u32 256, 8
      %512 = vbcast.lane.b32.xlu0 %v506, %s511
      %v513 = vpop.permute.xlu0 %512
      %s515 = sor.u32 256, 16
      %516 = vbcast.lane.b32.xlu0 %v506, %s515
      %v517 = vpop.permute.xlu0 %516
      %s519 = sor.u32 256, 24
      %520 = vbcast.lane.b32.xlu0 %v506, %s519
      %v521 = vpop.permute.xlu0 %520
      %s523 = sor.u32 256, 32
      %524 = vbcast.lane.b32.xlu0 %v506, %s523
      %v525 = vpop.permute.xlu0 %524
      %s527 = sor.u32 256, 40
      %528 = vbcast.lane.b32.xlu0 %v506, %s527
      %v529 = vpop.permute.xlu0 %528
      %s531 = sor.u32 256, 48
      %532 = vbcast.lane.b32.xlu0 %v506, %s531
      %v533 = vpop.permute.xlu0 %532
      %s535 = sor.u32 256, 56
      %536 = vbcast.lane.b32.xlu0 %v506, %s535
      %v537 = vpop.permute.xlu0 %536
      %v538 = vlaneseq
      %v539 = vshrl.u32 %v538, 7
      %v540 = vsub.s32 7, %v539
      %v541 = vrot.slane %v288, %v540
      %543 = vbcast.lane.b32.xlu0 %v541, 256
      %v544 = vpop.permute.xlu0 %543
      %s546 = sor.u32 256, 8
      %547 = vbcast.lane.b32.xlu0 %v541, %s546
      %v548 = vpop.permute.xlu0 %547
      %s550 = sor.u32 256, 16
      %551 = vbcast.lane.b32.xlu0 %v541, %s550
      %v552 = vpop.permute.xlu0 %551
      %s554 = sor.u32 256, 24
      %555 = vbcast.lane.b32.xlu0 %v541, %s554
      %v556 = vpop.permute.xlu0 %555
      %s558 = sor.u32 256, 32
      %559 = vbcast.lane.b32.xlu0 %v541, %s558
      %v560 = vpop.permute.xlu0 %559
      %s562 = sor.u32 256, 40
      %563 = vbcast.lane.b32.xlu0 %v541, %s562
      %v564 = vpop.permute.xlu0 %563
      %s566 = sor.u32 256, 48
      %567 = vbcast.lane.b32.xlu0 %v541, %s566
      %v568 = vpop.permute.xlu0 %567
      %s570 = sor.u32 256, 56
      %571 = vbcast.lane.b32.xlu0 %v541, %s570
      %v572 = vpop.permute.xlu0 %571
      %v573 = vlaneseq
      %v574 = vshrl.u32 %v573, 7
      %v575 = vsub.s32 0, %v574
      %v576 = vrot.slane %v290, %v575
      %578 = vbcast.lane.b32.xlu0 %v576, 256
      %v579 = vpop.permute.xlu0 %578
      %s581 = sor.u32 256, 8
      %582 = vbcast.lane.b32.xlu0 %v576, %s581
      %v583 = vpop.permute.xlu0 %582
      %s585 = sor.u32 256, 16
      %586 = vbcast.lane.b32.xlu0 %v576, %s585
      %v587 = vpop.permute.xlu0 %586
      %s589 = sor.u32 256, 24
      %590 = vbcast.lane.b32.xlu0 %v576, %s589
      %v591 = vpop.permute.xlu0 %590
      %s593 = sor.u32 256, 32
      %594 = vbcast.lane.b32.xlu0 %v576, %s593
      %v595 = vpop.permute.xlu0 %594
      %s597 = sor.u32 256, 40
      %598 = vbcast.lane.b32.xlu0 %v576, %s597
      %v599 = vpop.permute.xlu0 %598
      %s601 = sor.u32 256, 48
      %602 = vbcast.lane.b32.xlu0 %v576, %s601
      %v603 = vpop.permute.xlu0 %602
      %s605 = sor.u32 256, 56
      %606 = vbcast.lane.b32.xlu0 %v576, %s605
      %v607 = vpop.permute.xlu0 %606
      %v608 = vlaneseq
      %v609 = vshrl.u32 %v608, 7
      %v610 = vsub.s32 1, %v609
      %v611 = vrot.slane %v290, %v610
      %613 = vbcast.lane.b32.xlu0 %v611, 256
      %v614 = vpop.permute.xlu0 %613
      %s616 = sor.u32 256, 8
      %617 = vbcast.lane.b32.xlu0 %v611, %s616
      %v618 = vpop.permute.xlu0 %617
      %s620 = sor.u32 256, 16
      %621 = vbcast.lane.b32.xlu0 %v611, %s620
      %v622 = vpop.permute.xlu0 %621
      %s624 = sor.u32 256, 24
      %625 = vbcast.lane.b32.xlu0 %v611, %s624
      %v626 = vpop.permute.xlu0 %625
      %s628 = sor.u32 256, 32
      %629 = vbcast.lane.b32.xlu0 %v611, %s628
      %v630 = vpop.permute.xlu0 %629
      %s632 = sor.u32 256, 40
      %633 = vbcast.lane.b32.xlu0 %v611, %s632
      %v634 = vpop.permute.xlu0 %633
      %s636 = sor.u32 256, 48
      %637 = vbcast.lane.b32.xlu0 %v611, %s636
      %v638 = vpop.permute.xlu0 %637
      %s640 = sor.u32 256, 56
      %641 = vbcast.lane.b32.xlu0 %v611, %s640
      %v642 = vpop.permute.xlu0 %641
      %v643 = vlaneseq
      %v644 = vshrl.u32 %v643, 7
      %v645 = vsub.s32 2, %v644
      %v646 = vrot.slane %v290, %v645
      %648 = vbcast.lane.b32.xlu0 %v646, 256
      %v649 = vpop.permute.xlu0 %648
      %s651 = sor.u32 256, 8
      %652 = vbcast.lane.b32.xlu0 %v646, %s651
      %v653 = vpop.permute.xlu0 %652
      %s655 = sor.u32 256, 16
      %656 = vbcast.lane.b32.xlu0 %v646, %s655
      %v657 = vpop.permute.xlu0 %656
      %s659 = sor.u32 256, 24
      %660 = vbcast.lane.b32.xlu0 %v646, %s659
      %v661 = vpop.permute.xlu0 %660
      %s663 = sor.u32 256, 32
      %664 = vbcast.lane.b32.xlu0 %v646, %s663
      %v665 = vpop.permute.xlu0 %664
      %s667 = sor.u32 256, 40
      %668 = vbcast.lane.b32.xlu0 %v646, %s667
      %v669 = vpop.permute.xlu0 %668
      %s671 = sor.u32 256, 48
      %672 = vbcast.lane.b32.xlu0 %v646, %s671
      %v673 = vpop.permute.xlu0 %672
      %s675 = sor.u32 256, 56
      %676 = vbcast.lane.b32.xlu0 %v646, %s675
      %v677 = vpop.permute.xlu0 %676
      %v678 = vlaneseq
      %v679 = vshrl.u32 %v678, 7
      %v680 = vsub.s32 3, %v679
      %v681 = vrot.slane %v290, %v680
      %683 = vbcast.lane.b32.xlu0 %v681, 256
      %v684 = vpop.permute.xlu0 %683
      %s686 = sor.u32 256, 8
      %687 = vbcast.lane.b32.xlu0 %v681, %s686
      %v688 = vpop.permute.xlu0 %687
      %s690 = sor.u32 256, 16
      %691 = vbcast.lane.b32.xlu0 %v681, %s690
      %v692 = vpop.permute.xlu0 %691
      %s694 = sor.u32 256, 24
      %695 = vbcast.lane.b32.xlu0 %v681, %s694
      %v696 = vpop.permute.xlu0 %695
      %s698 = sor.u32 256, 32
      %699 = vbcast.lane.b32.xlu0 %v681, %s698
      %v700 = vpop.permute.xlu0 %699
      %s702 = sor.u32 256, 40
      %703 = vbcast.lane.b32.xlu0 %v681, %s702
      %v704 = vpop.permute.xlu0 %703
      %s706 = sor.u32 256, 48
      %707 = vbcast.lane.b32.xlu0 %v681, %s706
      %v708 = vpop.permute.xlu0 %707
      %s710 = sor.u32 256, 56
      %711 = vbcast.lane.b32.xlu0 %v681, %s710
      %v712 = vpop.permute.xlu0 %711
      %v713 = vlaneseq
      %v714 = vshrl.u32 %v713, 7
      %v715 = vsub.s32 4, %v714
      %v716 = vrot.slane %v290, %v715
      %718 = vbcast.lane.b32.xlu0 %v716, 256
      %v719 = vpop.permute.xlu0 %718
      %s721 = sor.u32 256, 8
      %722 = vbcast.lane.b32.xlu0 %v716, %s721
      %v723 = vpop.permute.xlu0 %722
      %s725 = sor.u32 256, 16
      %726 = vbcast.lane.b32.xlu0 %v716, %s725
      %v727 = vpop.permute.xlu0 %726
      %s729 = sor.u32 256, 24
      %730 = vbcast.lane.b32.xlu0 %v716, %s729
      %v731 = vpop.permute.xlu0 %730
      %s733 = sor.u32 256, 32
      %734 = vbcast.lane.b32.xlu0 %v716, %s733
      %v735 = vpop.permute.xlu0 %734
      %s737 = sor.u32 256, 40
      %738 = vbcast.lane.b32.xlu0 %v716, %s737
      %v739 = vpop.permute.xlu0 %738
      %s741 = sor.u32 256, 48
      %742 = vbcast.lane.b32.xlu0 %v716, %s741
      %v743 = vpop.permute.xlu0 %742
      %s745 = sor.u32 256, 56
      %746 = vbcast.lane.b32.xlu0 %v716, %s745
      %v747 = vpop.permute.xlu0 %746
      %v748 = vlaneseq
      %v749 = vshrl.u32 %v748, 7
      %v750 = vsub.s32 5, %v749
      %v751 = vrot.slane %v290, %v750
      %753 = vbcast.lane.b32.xlu0 %v751, 256
      %v754 = vpop.permute.xlu0 %753
      %s756 = sor.u32 256, 8
      %757 = vbcast.lane.b32.xlu0 %v751, %s756
      %v758 = vpop.permute.xlu0 %757
      %s760 = sor.u32 256, 16
      %761 = vbcast.lane.b32.xlu0 %v751, %s760
      %v762 = vpop.permute.xlu0 %761
      %s764 = sor.u32 256, 24
      %765 = vbcast.lane.b32.xlu0 %v751, %s764
      %v766 = vpop.permute.xlu0 %765
      %s768 = sor.u32 256, 32
      %769 = vbcast.lane.b32.xlu0 %v751, %s768
      %v770 = vpop.permute.xlu0 %769
      %s772 = sor.u32 256, 40
      %773 = vbcast.lane.b32.xlu0 %v751, %s772
      %v774 = vpop.permute.xlu0 %773
      %s776 = sor.u32 256, 48
      %777 = vbcast.lane.b32.xlu0 %v751, %s776
      %v778 = vpop.permute.xlu0 %777
      %s780 = sor.u32 256, 56
      %781 = vbcast.lane.b32.xlu0 %v751, %s780
      %v782 = vpop.permute.xlu0 %781
      %v783 = vlaneseq
      %v784 = vshrl.u32 %v783, 7
      %v785 = vsub.s32 6, %v784
      %v786 = vrot.slane %v290, %v785
      %788 = vbcast.lane.b32.xlu0 %v786, 256
      %v789 = vpop.permute.xlu0 %788
      %s791 = sor.u32 256, 8
      %792 = vbcast.lane.b32.xlu0 %v786, %s791
      %v793 = vpop.permute.xlu0 %792
      %s795 = sor.u32 256, 16
      %796 = vbcast.lane.b32.xlu0 %v786, %s795
      %v797 = vpop.permute.xlu0 %796
      %s799 = sor.u32 256, 24
      %800 = vbcast.lane.b32.xlu0 %v786, %s799
      %v801 = vpop.permute.xlu0 %800
      %s803 = sor.u32 256, 32
      %804 = vbcast.lane.b32.xlu0 %v786, %s803
      %v805 = vpop.permute.xlu0 %804
      %s807 = sor.u32 256, 40
      %808 = vbcast.lane.b32.xlu0 %v786, %s807
      %v809 = vpop.permute.xlu0 %808
      %s811 = sor.u32 256, 48
      %812 = vbcast.lane.b32.xlu0 %v786, %s811
      %v813 = vpop.permute.xlu0 %812
      %s815 = sor.u32 256, 56
      %816 = vbcast.lane.b32.xlu0 %v786, %s815
      %v817 = vpop.permute.xlu0 %816
      %v818 = vlaneseq
      %v819 = vshrl.u32 %v818, 7
      %v820 = vsub.s32 7, %v819
      %v821 = vrot.slane %v290, %v820
      %823 = vbcast.lane.b32.xlu0 %v821, 256
      %v824 = vpop.permute.xlu0 %823
      %s826 = sor.u32 256, 8
      %827 = vbcast.lane.b32.xlu0 %v821, %s826
      %v828 = vpop.permute.xlu0 %827
      %s830 = sor.u32 256, 16
      %831 = vbcast.lane.b32.xlu0 %v821, %s830
      %v832 = vpop.permute.xlu0 %831
      %s834 = sor.u32 256, 24
      %835 = vbcast.lane.b32.xlu0 %v821, %s834
      %v836 = vpop.permute.xlu0 %835
      %s838 = sor.u32 256, 32
      %839 = vbcast.lane.b32.xlu0 %v821, %s838
      %v840 = vpop.permute.xlu0 %839
      %s842 = sor.u32 256, 40
      %843 = vbcast.lane.b32.xlu0 %v821, %s842
      %v844 = vpop.permute.xlu0 %843
      %s846 = sor.u32 256, 48
      %847 = vbcast.lane.b32.xlu0 %v821, %s846
      %v848 = vpop.permute.xlu0 %847
      %s850 = sor.u32 256, 56
      %851 = vbcast.lane.b32.xlu0 %v821, %s850
      %v852 = vpop.permute.xlu0 %851
      %v853 = vlaneseq
      %v854 = vshrl.u32 %v853, 7
      %v855 = vsub.s32 0, %v854
      %v856 = vrot.slane %v292, %v855
      %v857 = vmul.f32 %v299, %v856
      %v858 = vmul.f32 %v303, %v856
      %v859 = vmul.f32 %v307, %v856
      %v860 = vmul.f32 %v311, %v856
      %v861 = vmul.f32 %v315, %v856
      %v862 = vmul.f32 %v319, %v856
      %v863 = vmul.f32 %v323, %v856
      %v864 = vmul.f32 %v327, %v856
      %v865 = vmul.f32 %v334, %v856
      %v866 = vmul.f32 %v338, %v856
      %v867 = vmul.f32 %v342, %v856
      %v868 = vmul.f32 %v346, %v856
      %v869 = vmul.f32 %v350, %v856
      %v870 = vmul.f32 %v354, %v856
      %v871 = vmul.f32 %v358, %v856
      %v872 = vmul.f32 %v362, %v856
      %v873 = vmul.f32 %v369, %v856
      %v874 = vmul.f32 %v373, %v856
      %v875 = vmul.f32 %v377, %v856
      %v876 = vmul.f32 %v381, %v856
      %v877 = vmul.f32 %v385, %v856
      %v878 = vmul.f32 %v389, %v856
      %v879 = vmul.f32 %v393, %v856
      %v880 = vmul.f32 %v397, %v856
      %v881 = vmul.f32 %v404, %v856
      %v882 = vmul.f32 %v408, %v856
      %v883 = vmul.f32 %v412, %v856
      %v884 = vmul.f32 %v416, %v856
      %v885 = vmul.f32 %v420, %v856
      %v886 = vmul.f32 %v424, %v856
      %v887 = vmul.f32 %v428, %v856
      %v888 = vmul.f32 %v432, %v856
      %v889 = vmul.f32 %v439, %v856
      %v890 = vmul.f32 %v443, %v856
      %v891 = vmul.f32 %v447, %v856
      %v892 = vmul.f32 %v451, %v856
      %v893 = vmul.f32 %v455, %v856
      %v894 = vmul.f32 %v459, %v856
      %v895 = vmul.f32 %v463, %v856
      %v896 = vmul.f32 %v467, %v856
      %v897 = vmul.f32 %v474, %v856
      %v898 = vmul.f32 %v478, %v856
      %v899 = vmul.f32 %v482, %v856
      %v900 = vmul.f32 %v486, %v856
      %v901 = vmul.f32 %v490, %v856
      %v902 = vmul.f32 %v494, %v856
      %v903 = vmul.f32 %v498, %v856
      %v904 = vmul.f32 %v502, %v856
      %v905 = vmul.f32 %v509, %v856
      %v906 = vmul.f32 %v513, %v856
      %v907 = vmul.f32 %v517, %v856
      %v908 = vmul.f32 %v521, %v856
      %v909 = vmul.f32 %v525, %v856
      %v910 = vmul.f32 %v529, %v856
      %v911 = vmul.f32 %v533, %v856
      %v912 = vmul.f32 %v537, %v856
      %v913 = vmul.f32 %v544, %v856
      %v914 = vmul.f32 %v548, %v856
      %v915 = vmul.f32 %v552, %v856
      %v916 = vmul.f32 %v556, %v856
      %v917 = vmul.f32 %v560, %v856
      %v918 = vmul.f32 %v564, %v856
      %v919 = vmul.f32 %v568, %v856
      %v920 = vmul.f32 %v572, %v856
      %v921 = vmul.f32 %v579, %v856
      %v922 = vmul.f32 %v583, %v856
      %v923 = vmul.f32 %v587, %v856
      %v924 = vmul.f32 %v591, %v856
      %v925 = vmul.f32 %v595, %v856
      %v926 = vmul.f32 %v599, %v856
      %v927 = vmul.f32 %v603, %v856
      %v928 = vmul.f32 %v607, %v856
      %v929 = vmul.f32 %v614, %v856
      %v930 = vmul.f32 %v618, %v856
      %v931 = vmul.f32 %v622, %v856
      %v932 = vmul.f32 %v626, %v856
      %v933 = vmul.f32 %v630, %v856
      %v934 = vmul.f32 %v634, %v856
      %v935 = vmul.f32 %v638, %v856
      %v936 = vmul.f32 %v642, %v856
      %v937 = vmul.f32 %v649, %v856
      %v938 = vmul.f32 %v653, %v856
      %v939 = vmul.f32 %v657, %v856
      %v940 = vmul.f32 %v661, %v856
      %v941 = vmul.f32 %v665, %v856
      %v942 = vmul.f32 %v669, %v856
      %v943 = vmul.f32 %v673, %v856
      %v944 = vmul.f32 %v677, %v856
      %v945 = vmul.f32 %v684, %v856
      %v946 = vmul.f32 %v688, %v856
      %v947 = vmul.f32 %v692, %v856
      %v948 = vmul.f32 %v696, %v856
      %v949 = vmul.f32 %v700, %v856
      %v950 = vmul.f32 %v704, %v856
      %v951 = vmul.f32 %v708, %v856
      %v952 = vmul.f32 %v712, %v856
      %v953 = vmul.f32 %v719, %v856
      %v954 = vmul.f32 %v723, %v856
      %v955 = vmul.f32 %v727, %v856
      %v956 = vmul.f32 %v731, %v856
      %v957 = vmul.f32 %v735, %v856
      %v958 = vmul.f32 %v739, %v856
      %v959 = vmul.f32 %v743, %v856
      %v960 = vmul.f32 %v747, %v856
      %v961 = vmul.f32 %v754, %v856
      %v962 = vmul.f32 %v758, %v856
      %v963 = vmul.f32 %v762, %v856
      %v964 = vmul.f32 %v766, %v856
      %v965 = vmul.f32 %v770, %v856
      %v966 = vmul.f32 %v774, %v856
      %v967 = vmul.f32 %v778, %v856
      %v968 = vmul.f32 %v782, %v856
      %v969 = vmul.f32 %v789, %v856
      %v970 = vmul.f32 %v793, %v856
      %v971 = vmul.f32 %v797, %v856
      %v972 = vmul.f32 %v801, %v856
      %v973 = vmul.f32 %v805, %v856
      %v974 = vmul.f32 %v809, %v856
      %v975 = vmul.f32 %v813, %v856
      %v976 = vmul.f32 %v817, %v856
      %v977 = vmul.f32 %v824, %v856
      %v978 = vmul.f32 %v828, %v856
      %v979 = vmul.f32 %v832, %v856
      %v980 = vmul.f32 %v836, %v856
      %v981 = vmul.f32 %v840, %v856
      %v982 = vmul.f32 %v844, %v856
      %v983 = vmul.f32 %v848, %v856
      %v984 = vmul.f32 %v852, %v856
      %s986 = sor.u32 256, 64
      %987 = vbcast.lane.b32.xlu0 %v296, %s986
      %v988 = vpop.permute.xlu0 %987
      %s990 = sor.u32 256, 72
      %991 = vbcast.lane.b32.xlu0 %v296, %s990
      %v992 = vpop.permute.xlu0 %991
      %s994 = sor.u32 256, 80
      %995 = vbcast.lane.b32.xlu0 %v296, %s994
      %v996 = vpop.permute.xlu0 %995
      %s998 = sor.u32 256, 88
      %999 = vbcast.lane.b32.xlu0 %v296, %s998
      %v1000 = vpop.permute.xlu0 %999
      %s1002 = sor.u32 256, 96
      %1003 = vbcast.lane.b32.xlu0 %v296, %s1002
      %v1004 = vpop.permute.xlu0 %1003
      %s1006 = sor.u32 256, 104
      %1007 = vbcast.lane.b32.xlu0 %v296, %s1006
      %v1008 = vpop.permute.xlu0 %1007
      %s1010 = sor.u32 256, 112
      %1011 = vbcast.lane.b32.xlu0 %v296, %s1010
      %v1012 = vpop.permute.xlu0 %1011
      %s1014 = sor.u32 256, 120
      %1015 = vbcast.lane.b32.xlu0 %v296, %s1014
      %v1016 = vpop.permute.xlu0 %1015
      %s1018 = sor.u32 256, 64
      %1019 = vbcast.lane.b32.xlu0 %v331, %s1018
      %v1020 = vpop.permute.xlu0 %1019
      %s1022 = sor.u32 256, 72
      %1023 = vbcast.lane.b32.xlu0 %v331, %s1022
      %v1024 = vpop.permute.xlu0 %1023
      %s1026 = sor.u32 256, 80
      %1027 = vbcast.lane.b32.xlu0 %v331, %s1026
      %v1028 = vpop.permute.xlu0 %1027
      %s1030 = sor.u32 256, 88
      %1031 = vbcast.lane.b32.xlu0 %v331, %s1030
      %v1032 = vpop.permute.xlu0 %1031
      %s1034 = sor.u32 256, 96
      %1035 = vbcast.lane.b32.xlu0 %v331, %s1034
      %v1036 = vpop.permute.xlu0 %1035
      %s1038 = sor.u32 256, 104
      %1039 = vbcast.lane.b32.xlu0 %v331, %s1038
      %v1040 = vpop.permute.xlu0 %1039
      %s1042 = sor.u32 256, 112
      %1043 = vbcast.lane.b32.xlu0 %v331, %s1042
      %v1044 = vpop.permute.xlu0 %1043
      %s1046 = sor.u32 256, 120
      %1047 = vbcast.lane.b32.xlu0 %v331, %s1046
      %v1048 = vpop.permute.xlu0 %1047
      %s1050 = sor.u32 256, 64
      %1051 = vbcast.lane.b32.xlu0 %v366, %s1050
      %v1052 = vpop.permute.xlu0 %1051
      %s1054 = sor.u32 256, 72
      %1055 = vbcast.lane.b32.xlu0 %v366, %s1054
      %v1056 = vpop.permute.xlu0 %1055
      %s1058 = sor.u32 256, 80
      %1059 = vbcast.lane.b32.xlu0 %v366, %s1058
      %v1060 = vpop.permute.xlu0 %1059
      %s1062 = sor.u32 256, 88
      %1063 = vbcast.lane.b32.xlu0 %v366, %s1062
      %v1064 = vpop.permute.xlu0 %1063
      %s1066 = sor.u32 256, 96
      %1067 = vbcast.lane.b32.xlu0 %v366, %s1066
      %v1068 = vpop.permute.xlu0 %1067
      %s1070 = sor.u32 256, 104
      %1071 = vbcast.lane.b32.xlu0 %v366, %s1070
      %v1072 = vpop.permute.xlu0 %1071
      %s1074 = sor.u32 256, 112
      %1075 = vbcast.lane.b32.xlu0 %v366, %s1074
      %v1076 = vpop.permute.xlu0 %1075
      %s1078 = sor.u32 256, 120
      %1079 = vbcast.lane.b32.xlu0 %v366, %s1078
      %v1080 = vpop.permute.xlu0 %1079
      %s1082 = sor.u32 256, 64
      %1083 = vbcast.lane.b32.xlu0 %v401, %s1082
      %v1084 = vpop.permute.xlu0 %1083
      %s1086 = sor.u32 256, 72
      %1087 = vbcast.lane.b32.xlu0 %v401, %s1086
      %v1088 = vpop.permute.xlu0 %1087
      %s1090 = sor.u32 256, 80
      %1091 = vbcast.lane.b32.xlu0 %v401, %s1090
      %v1092 = vpop.permute.xlu0 %1091
      %s1094 = sor.u32 256, 88
      %1095 = vbcast.lane.b32.xlu0 %v401, %s1094
      %v1096 = vpop.permute.xlu0 %1095
      %s1098 = sor.u32 256, 96
      %1099 = vbcast.lane.b32.xlu0 %v401, %s1098
      %v1100 = vpop.permute.xlu0 %1099
      %s1102 = sor.u32 256, 104
      %1103 = vbcast.lane.b32.xlu0 %v401, %s1102
      %v1104 = vpop.permute.xlu0 %1103
      %s1106 = sor.u32 256, 112
      %1107 = vbcast.lane.b32.xlu0 %v401, %s1106
      %v1108 = vpop.permute.xlu0 %1107
      %s1110 = sor.u32 256, 120
      %1111 = vbcast.lane.b32.xlu0 %v401, %s1110
      %v1112 = vpop.permute.xlu0 %1111
      %s1114 = sor.u32 256, 64
      %1115 = vbcast.lane.b32.xlu0 %v436, %s1114
      %v1116 = vpop.permute.xlu0 %1115
      %s1118 = sor.u32 256, 72
      %1119 = vbcast.lane.b32.xlu0 %v436, %s1118
      %v1120 = vpop.permute.xlu0 %1119
      %s1122 = sor.u32 256, 80
      %1123 = vbcast.lane.b32.xlu0 %v436, %s1122
      %v1124 = vpop.permute.xlu0 %1123
      %s1126 = sor.u32 256, 88
      %1127 = vbcast.lane.b32.xlu0 %v436, %s1126
      %v1128 = vpop.permute.xlu0 %1127
      %s1130 = sor.u32 256, 96
      %1131 = vbcast.lane.b32.xlu0 %v436, %s1130
      %v1132 = vpop.permute.xlu0 %1131
      %s1134 = sor.u32 256, 104
      %1135 = vbcast.lane.b32.xlu0 %v436, %s1134
      %v1136 = vpop.permute.xlu0 %1135
      %s1138 = sor.u32 256, 112
      %1139 = vbcast.lane.b32.xlu0 %v436, %s1138
      %v1140 = vpop.permute.xlu0 %1139
      %s1142 = sor.u32 256, 120
      %1143 = vbcast.lane.b32.xlu0 %v436, %s1142
      %v1144 = vpop.permute.xlu0 %1143
      %s1146 = sor.u32 256, 64
      %1147 = vbcast.lane.b32.xlu0 %v471, %s1146
      %v1148 = vpop.permute.xlu0 %1147
      %s1150 = sor.u32 256, 72
      %1151 = vbcast.lane.b32.xlu0 %v471, %s1150
      %v1152 = vpop.permute.xlu0 %1151
      %s1154 = sor.u32 256, 80
      %1155 = vbcast.lane.b32.xlu0 %v471, %s1154
      %v1156 = vpop.permute.xlu0 %1155
      %s1158 = sor.u32 256, 88
      %1159 = vbcast.lane.b32.xlu0 %v471, %s1158
      %v1160 = vpop.permute.xlu0 %1159
      %s1162 = sor.u32 256, 96
      %1163 = vbcast.lane.b32.xlu0 %v471, %s1162
      %v1164 = vpop.permute.xlu0 %1163
      %s1166 = sor.u32 256, 104
      %1167 = vbcast.lane.b32.xlu0 %v471, %s1166
      %v1168 = vpop.permute.xlu0 %1167
      %s1170 = sor.u32 256, 112
      %1171 = vbcast.lane.b32.xlu0 %v471, %s1170
      %v1172 = vpop.permute.xlu0 %1171
      %s1174 = sor.u32 256, 120
      %1175 = vbcast.lane.b32.xlu0 %v471, %s1174
      %v1176 = vpop.permute.xlu0 %1175
      %s1178 = sor.u32 256, 64
      %1179 = vbcast.lane.b32.xlu0 %v506, %s1178
      %v1180 = vpop.permute.xlu0 %1179
      %s1182 = sor.u32 256, 72
      %1183 = vbcast.lane.b32.xlu0 %v506, %s1182
      %v1184 = vpop.permute.xlu0 %1183
      %s1186 = sor.u32 256, 80
      %1187 = vbcast.lane.b32.xlu0 %v506, %s1186
      %v1188 = vpop.permute.xlu0 %1187
      %s1190 = sor.u32 256, 88
      %1191 = vbcast.lane.b32.xlu0 %v506, %s1190
      %v1192 = vpop.permute.xlu0 %1191
      %s1194 = sor.u32 256, 96
      %1195 = vbcast.lane.b32.xlu0 %v506, %s1194
      %v1196 = vpop.permute.xlu0 %1195
      %s1198 = sor.u32 256, 104
      %1199 = vbcast.lane.b32.xlu0 %v506, %s1198
      %v1200 = vpop.permute.xlu0 %1199
      %s1202 = sor.u32 256, 112
      %1203 = vbcast.lane.b32.xlu0 %v506, %s1202
      %v1204 = vpop.permute.xlu0 %1203
      %s1206 = sor.u32 256, 120
      %1207 = vbcast.lane.b32.xlu0 %v506, %s1206
      %v1208 = vpop.permute.xlu0 %1207
      %s1210 = sor.u32 256, 64
      %1211 = vbcast.lane.b32.xlu0 %v541, %s1210
      %v1212 = vpop.permute.xlu0 %1211
      %s1214 = sor.u32 256, 72
      %1215 = vbcast.lane.b32.xlu0 %v541, %s1214
      %v1216 = vpop.permute.xlu0 %1215
      %s1218 = sor.u32 256, 80
      %1219 = vbcast.lane.b32.xlu0 %v541, %s1218
      %v1220 = vpop.permute.xlu0 %1219
      %s1222 = sor.u32 256, 88
      %1223 = vbcast.lane.b32.xlu0 %v541, %s1222
      %v1224 = vpop.permute.xlu0 %1223
      %s1226 = sor.u32 256, 96
      %1227 = vbcast.lane.b32.xlu0 %v541, %s1226
      %v1228 = vpop.permute.xlu0 %1227
      %s1230 = sor.u32 256, 104
      %1231 = vbcast.lane.b32.xlu0 %v541, %s1230
      %v1232 = vpop.permute.xlu0 %1231
      %s1234 = sor.u32 256, 112
      %1235 = vbcast.lane.b32.xlu0 %v541, %s1234
      %v1236 = vpop.permute.xlu0 %1235
      %s1238 = sor.u32 256, 120
      %1239 = vbcast.lane.b32.xlu0 %v541, %s1238
      %v1240 = vpop.permute.xlu0 %1239
      %s1242 = sor.u32 256, 64
      %1243 = vbcast.lane.b32.xlu0 %v576, %s1242
      %v1244 = vpop.permute.xlu0 %1243
      %s1246 = sor.u32 256, 72
      %1247 = vbcast.lane.b32.xlu0 %v576, %s1246
      %v1248 = vpop.permute.xlu0 %1247
      %s1250 = sor.u32 256, 80
      %1251 = vbcast.lane.b32.xlu0 %v576, %s1250
      %v1252 = vpop.permute.xlu0 %1251
      %s1254 = sor.u32 256, 88
      %1255 = vbcast.lane.b32.xlu0 %v576, %s1254
      %v1256 = vpop.permute.xlu0 %1255
      %s1258 = sor.u32 256, 96
      %1259 = vbcast.lane.b32.xlu0 %v576, %s1258
      %v1260 = vpop.permute.xlu0 %1259
      %s1262 = sor.u32 256, 104
      %1263 = vbcast.lane.b32.xlu0 %v576, %s1262
      %v1264 = vpop.permute.xlu0 %1263
      %s1266 = sor.u32 256, 112
      %1267 = vbcast.lane.b32.xlu0 %v576, %s1266
      %v1268 = vpop.permute.xlu0 %1267
      %s1270 = sor.u32 256, 120
      %1271 = vbcast.lane.b32.xlu0 %v576, %s1270
      %v1272 = vpop.permute.xlu0 %1271
      %s1274 = sor.u32 256, 64
      %1275 = vbcast.lane.b32.xlu0 %v611, %s1274
      %v1276 = vpop.permute.xlu0 %1275
      %s1278 = sor.u32 256, 72
      %1279 = vbcast.lane.b32.xlu0 %v611, %s1278
      %v1280 = vpop.permute.xlu0 %1279
      %s1282 = sor.u32 256, 80
      %1283 = vbcast.lane.b32.xlu0 %v611, %s1282
      %v1284 = vpop.permute.xlu0 %1283
      %s1286 = sor.u32 256, 88
      %1287 = vbcast.lane.b32.xlu0 %v611, %s1286
      %v1288 = vpop.permute.xlu0 %1287
      %s1290 = sor.u32 256, 96
      %1291 = vbcast.lane.b32.xlu0 %v611, %s1290
      %v1292 = vpop.permute.xlu0 %1291
      %s1294 = sor.u32 256, 104
      %1295 = vbcast.lane.b32.xlu0 %v611, %s1294
      %v1296 = vpop.permute.xlu0 %1295
      %s1298 = sor.u32 256, 112
      %1299 = vbcast.lane.b32.xlu0 %v611, %s1298
      %v1300 = vpop.permute.xlu0 %1299
      %s1302 = sor.u32 256, 120
      %1303 = vbcast.lane.b32.xlu0 %v611, %s1302
      %v1304 = vpop.permute.xlu0 %1303
      %s1306 = sor.u32 256, 64
      %1307 = vbcast.lane.b32.xlu0 %v646, %s1306
      %v1308 = vpop.permute.xlu0 %1307
      %s1310 = sor.u32 256, 72
      %1311 = vbcast.lane.b32.xlu0 %v646, %s1310
      %v1312 = vpop.permute.xlu0 %1311
      %s1314 = sor.u32 256, 80
      %1315 = vbcast.lane.b32.xlu0 %v646, %s1314
      %v1316 = vpop.permute.xlu0 %1315
      %s1318 = sor.u32 256, 88
      %1319 = vbcast.lane.b32.xlu0 %v646, %s1318
      %v1320 = vpop.permute.xlu0 %1319
      %s1322 = sor.u32 256, 96
      %1323 = vbcast.lane.b32.xlu0 %v646, %s1322
      %v1324 = vpop.permute.xlu0 %1323
      %s1326 = sor.u32 256, 104
      %1327 = vbcast.lane.b32.xlu0 %v646, %s1326
      %v1328 = vpop.permute.xlu0 %1327
      %s1330 = sor.u32 256, 112
      %1331 = vbcast.lane.b32.xlu0 %v646, %s1330
      %v1332 = vpop.permute.xlu0 %1331
      %s1334 = sor.u32 256, 120
      %1335 = vbcast.lane.b32.xlu0 %v646, %s1334
      %v1336 = vpop.permute.xlu0 %1335
      %s1338 = sor.u32 256, 64
      %1339 = vbcast.lane.b32.xlu0 %v681, %s1338
      %v1340 = vpop.permute.xlu0 %1339
      %s1342 = sor.u32 256, 72
      %1343 = vbcast.lane.b32.xlu0 %v681, %s1342
      %v1344 = vpop.permute.xlu0 %1343
      %s1346 = sor.u32 256, 80
      %1347 = vbcast.lane.b32.xlu0 %v681, %s1346
      %v1348 = vpop.permute.xlu0 %1347
      %s1350 = sor.u32 256, 88
      %1351 = vbcast.lane.b32.xlu0 %v681, %s1350
      %v1352 = vpop.permute.xlu0 %1351
      %s1354 = sor.u32 256, 96
      %1355 = vbcast.lane.b32.xlu0 %v681, %s1354
      %v1356 = vpop.permute.xlu0 %1355
      %s1358 = sor.u32 256, 104
      %1359 = vbcast.lane.b32.xlu0 %v681, %s1358
      %v1360 = vpop.permute.xlu0 %1359
      %s1362 = sor.u32 256, 112
      %1363 = vbcast.lane.b32.xlu0 %v681, %s1362
      %v1364 = vpop.permute.xlu0 %1363
      %s1366 = sor.u32 256, 120
      %1367 = vbcast.lane.b32.xlu0 %v681, %s1366
      %v1368 = vpop.permute.xlu0 %1367
      %s1370 = sor.u32 256, 64
      %1371 = vbcast.lane.b32.xlu0 %v716, %s1370
      %v1372 = vpop.permute.xlu0 %1371
      %s1374 = sor.u32 256, 72
      %1375 = vbcast.lane.b32.xlu0 %v716, %s1374
      %v1376 = vpop.permute.xlu0 %1375
      %s1378 = sor.u32 256, 80
      %1379 = vbcast.lane.b32.xlu0 %v716, %s1378
      %v1380 = vpop.permute.xlu0 %1379
      %s1382 = sor.u32 256, 88
      %1383 = vbcast.lane.b32.xlu0 %v716, %s1382
      %v1384 = vpop.permute.xlu0 %1383
      %s1386 = sor.u32 256, 96
      %1387 = vbcast.lane.b32.xlu0 %v716, %s1386
      %v1388 = vpop.permute.xlu0 %1387
      %s1390 = sor.u32 256, 104
      %1391 = vbcast.lane.b32.xlu0 %v716, %s1390
      %v1392 = vpop.permute.xlu0 %1391
      %s1394 = sor.u32 256, 112
      %1395 = vbcast.lane.b32.xlu0 %v716, %s1394
      %v1396 = vpop.permute.xlu0 %1395
      %s1398 = sor.u32 256, 120
      %1399 = vbcast.lane.b32.xlu0 %v716, %s1398
      %v1400 = vpop.permute.xlu0 %1399
      %s1402 = sor.u32 256, 64
      %1403 = vbcast.lane.b32.xlu0 %v751, %s1402
      %v1404 = vpop.permute.xlu0 %1403
      %s1406 = sor.u32 256, 72
      %1407 = vbcast.lane.b32.xlu0 %v751, %s1406
      %v1408 = vpop.permute.xlu0 %1407
      %s1410 = sor.u32 256, 80
      %1411 = vbcast.lane.b32.xlu0 %v751, %s1410
      %v1412 = vpop.permute.xlu0 %1411
      %s1414 = sor.u32 256, 88
      %1415 = vbcast.lane.b32.xlu0 %v751, %s1414
      %v1416 = vpop.permute.xlu0 %1415
      %s1418 = sor.u32 256, 96
      %1419 = vbcast.lane.b32.xlu0 %v751, %s1418
      %v1420 = vpop.permute.xlu0 %1419
      %s1422 = sor.u32 256, 104
      %1423 = vbcast.lane.b32.xlu0 %v751, %s1422
      %v1424 = vpop.permute.xlu0 %1423
      %s1426 = sor.u32 256, 112
      %1427 = vbcast.lane.b32.xlu0 %v751, %s1426
      %v1428 = vpop.permute.xlu0 %1427
      %s1430 = sor.u32 256, 120
      %1431 = vbcast.lane.b32.xlu0 %v751, %s1430
      %v1432 = vpop.permute.xlu0 %1431
      %s1434 = sor.u32 256, 64
      %1435 = vbcast.lane.b32.xlu0 %v786, %s1434
      %v1436 = vpop.permute.xlu0 %1435
      %s1438 = sor.u32 256, 72
      %1439 = vbcast.lane.b32.xlu0 %v786, %s1438
      %v1440 = vpop.permute.xlu0 %1439
      %s1442 = sor.u32 256, 80
      %1443 = vbcast.lane.b32.xlu0 %v786, %s1442
      %v1444 = vpop.permute.xlu0 %1443
      %s1446 = sor.u32 256, 88
      %1447 = vbcast.lane.b32.xlu0 %v786, %s1446
      %v1448 = vpop.permute.xlu0 %1447
      %s1450 = sor.u32 256, 96
      %1451 = vbcast.lane.b32.xlu0 %v786, %s1450
      %v1452 = vpop.permute.xlu0 %1451
      %s1454 = sor.u32 256, 104
      %1455 = vbcast.lane.b32.xlu0 %v786, %s1454
      %v1456 = vpop.permute.xlu0 %1455
      %s1458 = sor.u32 256, 112
      %1459 = vbcast.lane.b32.xlu0 %v786, %s1458
      %v1460 = vpop.permute.xlu0 %1459
      %s1462 = sor.u32 256, 120
      %1463 = vbcast.lane.b32.xlu0 %v786, %s1462
      %v1464 = vpop.permute.xlu0 %1463
      %s1466 = sor.u32 256, 64
      %1467 = vbcast.lane.b32.xlu0 %v821, %s1466
      %v1468 = vpop.permute.xlu0 %1467
      %s1470 = sor.u32 256, 72
      %1471 = vbcast.lane.b32.xlu0 %v821, %s1470
      %v1472 = vpop.permute.xlu0 %1471
      %s1474 = sor.u32 256, 80
      %1475 = vbcast.lane.b32.xlu0 %v821, %s1474
      %v1476 = vpop.permute.xlu0 %1475
      %s1478 = sor.u32 256, 88
      %1479 = vbcast.lane.b32.xlu0 %v821, %s1478
      %v1480 = vpop.permute.xlu0 %1479
      %s1482 = sor.u32 256, 96
      %1483 = vbcast.lane.b32.xlu0 %v821, %s1482
      %v1484 = vpop.permute.xlu0 %1483
      %s1486 = sor.u32 256, 104
      %1487 = vbcast.lane.b32.xlu0 %v821, %s1486
      %v1488 = vpop.permute.xlu0 %1487
      %s1490 = sor.u32 256, 112
      %1491 = vbcast.lane.b32.xlu0 %v821, %s1490
      %v1492 = vpop.permute.xlu0 %1491
      %s1494 = sor.u32 256, 120
      %1495 = vbcast.lane.b32.xlu0 %v821, %s1494
      %v1496 = vpop.permute.xlu0 %1495
      %v1497 = vlaneseq
      %v1498 = vshrl.u32 %v1497, 7
      %v1499 = vsub.s32 1, %v1498
      %v1500 = vrot.slane %v292, %v1499
      %v1501 = vmul.f32 %v988, %v1500
      %v1502 = vmul.f32 %v992, %v1500
      %v1503 = vmul.f32 %v996, %v1500
      %v1504 = vmul.f32 %v1000, %v1500
      %v1505 = vmul.f32 %v1004, %v1500
      %v1506 = vmul.f32 %v1008, %v1500
      %v1507 = vmul.f32 %v1012, %v1500
      %v1508 = vmul.f32 %v1016, %v1500
      %v1509 = vmul.f32 %v1020, %v1500
      %v1510 = vmul.f32 %v1024, %v1500
      %v1511 = vmul.f32 %v1028, %v1500
      %v1512 = vmul.f32 %v1032, %v1500
      %v1513 = vmul.f32 %v1036, %v1500
      %v1514 = vmul.f32 %v1040, %v1500
      %v1515 = vmul.f32 %v1044, %v1500
      %v1516 = vmul.f32 %v1048, %v1500
      %v1517 = vmul.f32 %v1052, %v1500
      %v1518 = vmul.f32 %v1056, %v1500
      %v1519 = vmul.f32 %v1060, %v1500
      %v1520 = vmul.f32 %v1064, %v1500
      %v1521 = vmul.f32 %v1068, %v1500
      %v1522 = vmul.f32 %v1072, %v1500
      %v1523 = vmul.f32 %v1076, %v1500
      %v1524 = vmul.f32 %v1080, %v1500
      %v1525 = vmul.f32 %v1084, %v1500
      %v1526 = vmul.f32 %v1088, %v1500
      %v1527 = vmul.f32 %v1092, %v1500
      %v1528 = vmul.f32 %v1096, %v1500
      %v1529 = vmul.f32 %v1100, %v1500
      %v1530 = vmul.f32 %v1104, %v1500
      %v1531 = vmul.f32 %v1108, %v1500
      %v1532 = vmul.f32 %v1112, %v1500
      %v1533 = vmul.f32 %v1116, %v1500
      %v1534 = vmul.f32 %v1120, %v1500
      %v1535 = vmul.f32 %v1124, %v1500
      %v1536 = vmul.f32 %v1128, %v1500
      %v1537 = vmul.f32 %v1132, %v1500
      %v1538 = vmul.f32 %v1136, %v1500
      %v1539 = vmul.f32 %v1140, %v1500
      %v1540 = vmul.f32 %v1144, %v1500
      %v1541 = vmul.f32 %v1148, %v1500
      %v1542 = vmul.f32 %v1152, %v1500
      %v1543 = vmul.f32 %v1156, %v1500
      %v1544 = vmul.f32 %v1160, %v1500
      %v1545 = vmul.f32 %v1164, %v1500
      %v1546 = vmul.f32 %v1168, %v1500
      %v1547 = vmul.f32 %v1172, %v1500
      %v1548 = vmul.f32 %v1176, %v1500
      %v1549 = vmul.f32 %v1180, %v1500
      %v1550 = vmul.f32 %v1184, %v1500
      %v1551 = vmul.f32 %v1188, %v1500
      %v1552 = vmul.f32 %v1192, %v1500
      %v1553 = vmul.f32 %v1196, %v1500
      %v1554 = vmul.f32 %v1200, %v1500
      %v1555 = vmul.f32 %v1204, %v1500
      %v1556 = vmul.f32 %v1208, %v1500
      %v1557 = vmul.f32 %v1212, %v1500
      %v1558 = vmul.f32 %v1216, %v1500
      %v1559 = vmul.f32 %v1220, %v1500
      %v1560 = vmul.f32 %v1224, %v1500
      %v1561 = vmul.f32 %v1228, %v1500
      %v1562 = vmul.f32 %v1232, %v1500
      %v1563 = vmul.f32 %v1236, %v1500
      %v1564 = vmul.f32 %v1240, %v1500
      %v1565 = vmul.f32 %v1244, %v1500
      %v1566 = vmul.f32 %v1248, %v1500
      %v1567 = vmul.f32 %v1252, %v1500
      %v1568 = vmul.f32 %v1256, %v1500
      %v1569 = vmul.f32 %v1260, %v1500
      %v1570 = vmul.f32 %v1264, %v1500
      %v1571 = vmul.f32 %v1268, %v1500
      %v1572 = vmul.f32 %v1272, %v1500
      %v1573 = vmul.f32 %v1276, %v1500
      %v1574 = vmul.f32 %v1280, %v1500
      %v1575 = vmul.f32 %v1284, %v1500
      %v1576 = vmul.f32 %v1288, %v1500
      %v1577 = vmul.f32 %v1292, %v1500
      %v1578 = vmul.f32 %v1296, %v1500
      %v1579 = vmul.f32 %v1300, %v1500
      %v1580 = vmul.f32 %v1304, %v1500
      %v1581 = vmul.f32 %v1308, %v1500
      %v1582 = vmul.f32 %v1312, %v1500
      %v1583 = vmul.f32 %v1316, %v1500
      %v1584 = vmul.f32 %v1320, %v1500
      %v1585 = vmul.f32 %v1324, %v1500
      %v1586 = vmul.f32 %v1328, %v1500
      %v1587 = vmul.f32 %v1332, %v1500
      %v1588 = vmul.f32 %v1336, %v1500
      %v1589 = vmul.f32 %v1340, %v1500
      %v1590 = vmul.f32 %v1344, %v1500
      %v1591 = vmul.f32 %v1348, %v1500
      %v1592 = vmul.f32 %v1352, %v1500
      %v1593 = vmul.f32 %v1356, %v1500
      %v1594 = vmul.f32 %v1360, %v1500
      %v1595 = vmul.f32 %v1364, %v1500
      %v1596 = vmul.f32 %v1368, %v1500
      %v1597 = vmul.f32 %v1372, %v1500
      %v1598 = vmul.f32 %v1376, %v1500
      %v1599 = vmul.f32 %v1380, %v1500
      %v1600 = vmul.f32 %v1384, %v1500
      %v1601 = vmul.f32 %v1388, %v1500
      %v1602 = vmul.f32 %v1392, %v1500
      %v1603 = vmul.f32 %v1396, %v1500
      %v1604 = vmul.f32 %v1400, %v1500
      %v1605 = vmul.f32 %v1404, %v1500
      %v1606 = vmul.f32 %v1408, %v1500
      %v1607 = vmul.f32 %v1412, %v1500
      %v1608 = vmul.f32 %v1416, %v1500
      %v1609 = vmul.f32 %v1420, %v1500
      %v1610 = vmul.f32 %v1424, %v1500
      %v1611 = vmul.f32 %v1428, %v1500
      %v1612 = vmul.f32 %v1432, %v1500
      %v1613 = vmul.f32 %v1436, %v1500
      %v1614 = vmul.f32 %v1440, %v1500
      %v1615 = vmul.f32 %v1444, %v1500
      %v1616 = vmul.f32 %v1448, %v1500
      %v1617 = vmul.f32 %v1452, %v1500
      %v1618 = vmul.f32 %v1456, %v1500
      %v1619 = vmul.f32 %v1460, %v1500
      %v1620 = vmul.f32 %v1464, %v1500
      %v1621 = vmul.f32 %v1468, %v1500
      %v1622 = vmul.f32 %v1472, %v1500
      %v1623 = vmul.f32 %v1476, %v1500
      %v1624 = vmul.f32 %v1480, %v1500
      %v1625 = vmul.f32 %v1484, %v1500
      %v1626 = vmul.f32 %v1488, %v1500
      %v1627 = vmul.f32 %v1492, %v1500
      %v1628 = vmul.f32 %v1496, %v1500
      %v1629 = vadd.f32 %v857, %v1501
      %v1630 = vadd.f32 %v858, %v1502
      %v1631 = vadd.f32 %v859, %v1503
      %v1632 = vadd.f32 %v860, %v1504
      %v1633 = vadd.f32 %v861, %v1505
      %v1634 = vadd.f32 %v862, %v1506
      %v1635 = vadd.f32 %v863, %v1507
      %v1636 = vadd.f32 %v864, %v1508
      %v1637 = vadd.f32 %v865, %v1509
      %v1638 = vadd.f32 %v866, %v1510
      %v1639 = vadd.f32 %v867, %v1511
      %v1640 = vadd.f32 %v868, %v1512
      %v1641 = vadd.f32 %v869, %v1513
      %v1642 = vadd.f32 %v870, %v1514
      %v1643 = vadd.f32 %v871, %v1515
      %v1644 = vadd.f32 %v872, %v1516
      %v1645 = vadd.f32 %v873, %v1517
      %v1646 = vadd.f32 %v874, %v1518
      %v1647 = vadd.f32 %v875, %v1519
      %v1648 = vadd.f32 %v876, %v1520
      %v1649 = vadd.f32 %v877, %v1521
      %v1650 = vadd.f32 %v878, %v1522
      %v1651 = vadd.f32 %v879, %v1523
      %v1652 = vadd.f32 %v880, %v1524
      %v1653 = vadd.f32 %v881, %v1525
      %v1654 = vadd.f32 %v882, %v1526
      %v1655 = vadd.f32 %v883, %v1527
      %v1656 = vadd.f32 %v884, %v1528
      %v1657 = vadd.f32 %v885, %v1529
      %v1658 = vadd.f32 %v886, %v1530
      %v1659 = vadd.f32 %v887, %v1531
      %v1660 = vadd.f32 %v888, %v1532
      %v1661 = vadd.f32 %v889, %v1533
      %v1662 = vadd.f32 %v890, %v1534
      %v1663 = vadd.f32 %v891, %v1535
      %v1664 = vadd.f32 %v892, %v1536
      %v1665 = vadd.f32 %v893, %v1537
      %v1666 = vadd.f32 %v894, %v1538
      %v1667 = vadd.f32 %v895, %v1539
      %v1668 = vadd.f32 %v896, %v1540
      %v1669 = vadd.f32 %v897, %v1541
      %v1670 = vadd.f32 %v898, %v1542
      %v1671 = vadd.f32 %v899, %v1543
      %v1672 = vadd.f32 %v900, %v1544
      %v1673 = vadd.f32 %v901, %v1545
      %v1674 = vadd.f32 %v902, %v1546
      %v1675 = vadd.f32 %v903, %v1547
      %v1676 = vadd.f32 %v904, %v1548
      %v1677 = vadd.f32 %v905, %v1549
      %v1678 = vadd.f32 %v906, %v1550
      %v1679 = vadd.f32 %v907, %v1551
      %v1680 = vadd.f32 %v908, %v1552
      %v1681 = vadd.f32 %v909, %v1553
      %v1682 = vadd.f32 %v910, %v1554
      %v1683 = vadd.f32 %v911, %v1555
      %v1684 = vadd.f32 %v912, %v1556
      %v1685 = vadd.f32 %v913, %v1557
      %v1686 = vadd.f32 %v914, %v1558
      %v1687 = vadd.f32 %v915, %v1559
      %v1688 = vadd.f32 %v916, %v1560
      %v1689 = vadd.f32 %v917, %v1561
      %v1690 = vadd.f32 %v918, %v1562
      %v1691 = vadd.f32 %v919, %v1563
      %v1692 = vadd.f32 %v920, %v1564
      %v1693 = vadd.f32 %v921, %v1565
      %v1694 = vadd.f32 %v922, %v1566
      %v1695 = vadd.f32 %v923, %v1567
      %v1696 = vadd.f32 %v924, %v1568
      %v1697 = vadd.f32 %v925, %v1569
      %v1698 = vadd.f32 %v926, %v1570
      %v1699 = vadd.f32 %v927, %v1571
      %v1700 = vadd.f32 %v928, %v1572
      %v1701 = vadd.f32 %v929, %v1573
      %v1702 = vadd.f32 %v930, %v1574
      %v1703 = vadd.f32 %v931, %v1575
      %v1704 = vadd.f32 %v932, %v1576
      %v1705 = vadd.f32 %v933, %v1577
      %v1706 = vadd.f32 %v934, %v1578
      %v1707 = vadd.f32 %v935, %v1579
      %v1708 = vadd.f32 %v936, %v1580
      %v1709 = vadd.f32 %v937, %v1581
      %v1710 = vadd.f32 %v938, %v1582
      %v1711 = vadd.f32 %v939, %v1583
      %v1712 = vadd.f32 %v940, %v1584
      %v1713 = vadd.f32 %v941, %v1585
      %v1714 = vadd.f32 %v942, %v1586
      %v1715 = vadd.f32 %v943, %v1587
      %v1716 = vadd.f32 %v944, %v1588
      %v1717 = vadd.f32 %v945, %v1589
      %v1718 = vadd.f32 %v946, %v1590
      %v1719 = vadd.f32 %v947, %v1591
      %v1720 = vadd.f32 %v948, %v1592
      %v1721 = vadd.f32 %v949, %v1593
      %v1722 = vadd.f32 %v950, %v1594
      %v1723 = vadd.f32 %v951, %v1595
      %v1724 = vadd.f32 %v952, %v1596
      %v1725 = vadd.f32 %v953, %v1597
      %v1726 = vadd.f32 %v954, %v1598
      %v1727 = vadd.f32 %v955, %v1599
      %v1728 = vadd.f32 %v956, %v1600
      %v1729 = vadd.f32 %v957, %v1601
      %v1730 = vadd.f32 %v958, %v1602
      %v1731 = vadd.f32 %v959, %v1603
      %v1732 = vadd.f32 %v960, %v1604
      %v1733 = vadd.f32 %v961, %v1605
      %v1734 = vadd.f32 %v962, %v1606
      %v1735 = vadd.f32 %v963, %v1607
      %v1736 = vadd.f32 %v964, %v1608
      %v1737 = vadd.f32 %v965, %v1609
      %v1738 = vadd.f32 %v966, %v1610
      %v1739 = vadd.f32 %v967, %v1611
      %v1740 = vadd.f32 %v968, %v1612
      %v1741 = vadd.f32 %v969, %v1613
      %v1742 = vadd.f32 %v970, %v1614
      %v1743 = vadd.f32 %v971, %v1615
      %v1744 = vadd.f32 %v972, %v1616
      %v1745 = vadd.f32 %v973, %v1617
      %v1746 = vadd.f32 %v974, %v1618
      %v1747 = vadd.f32 %v975, %v1619
      %v1748 = vadd.f32 %v976, %v1620
      %v1749 = vadd.f32 %v977, %v1621
      %v1750 = vadd.f32 %v978, %v1622
      %v1751 = vadd.f32 %v979, %v1623
      %v1752 = vadd.f32 %v980, %v1624
      %v1753 = vadd.f32 %v981, %v1625
      %v1754 = vadd.f32 %v982, %v1626
      %v1755 = vadd.f32 %v983, %v1627
      %v1756 = vadd.f32 %v984, %v1628
      %v1757 = vlaneseq
      %v1758 = vshrl.u32 %v1757, 7
      %v1759 = vsub.s32 0, %v1758
      %v1760 = vrot.slane %v289, %v1759
      %1762 = vbcast.lane.b32.xlu0 %v1760, 256
      %v1763 = vpop.permute.xlu0 %1762
      %s1765 = sor.u32 256, 8
      %1766 = vbcast.lane.b32.xlu0 %v1760, %s1765
      %v1767 = vpop.permute.xlu0 %1766
      %s1769 = sor.u32 256, 16
      %1770 = vbcast.lane.b32.xlu0 %v1760, %s1769
      %v1771 = vpop.permute.xlu0 %1770
      %s1773 = sor.u32 256, 24
      %1774 = vbcast.lane.b32.xlu0 %v1760, %s1773
      %v1775 = vpop.permute.xlu0 %1774
      %s1777 = sor.u32 256, 32
      %1778 = vbcast.lane.b32.xlu0 %v1760, %s1777
      %v1779 = vpop.permute.xlu0 %1778
      %s1781 = sor.u32 256, 40
      %1782 = vbcast.lane.b32.xlu0 %v1760, %s1781
      %v1783 = vpop.permute.xlu0 %1782
      %s1785 = sor.u32 256, 48
      %1786 = vbcast.lane.b32.xlu0 %v1760, %s1785
      %v1787 = vpop.permute.xlu0 %1786
      %s1789 = sor.u32 256, 56
      %1790 = vbcast.lane.b32.xlu0 %v1760, %s1789
      %v1791 = vpop.permute.xlu0 %1790
      %v1792 = vlaneseq
      %v1793 = vshrl.u32 %v1792, 7
      %v1794 = vsub.s32 1, %v1793
      %v1795 = vrot.slane %v289, %v1794
      %1797 = vbcast.lane.b32.xlu0 %v1795, 256
      %v1798 = vpop.permute.xlu0 %1797
      %s1800 = sor.u32 256, 8
      %1801 = vbcast.lane.b32.xlu0 %v1795, %s1800
      %v1802 = vpop.permute.xlu0 %1801
      %s1804 = sor.u32 256, 16
      %1805 = vbcast.lane.b32.xlu0 %v1795, %s1804
      %v1806 = vpop.permute.xlu0 %1805
      %s1808 = sor.u32 256, 24
      %1809 = vbcast.lane.b32.xlu0 %v1795, %s1808
      %v1810 = vpop.permute.xlu0 %1809
      %s1812 = sor.u32 256, 32
      %1813 = vbcast.lane.b32.xlu0 %v1795, %s1812
      %v1814 = vpop.permute.xlu0 %1813
      %s1816 = sor.u32 256, 40
      %1817 = vbcast.lane.b32.xlu0 %v1795, %s1816
      %v1818 = vpop.permute.xlu0 %1817
      %s1820 = sor.u32 256, 48
      %1821 = vbcast.lane.b32.xlu0 %v1795, %s1820
      %v1822 = vpop.permute.xlu0 %1821
      %s1824 = sor.u32 256, 56
      %1825 = vbcast.lane.b32.xlu0 %v1795, %s1824
      %v1826 = vpop.permute.xlu0 %1825
      %v1827 = vlaneseq
      %v1828 = vshrl.u32 %v1827, 7
      %v1829 = vsub.s32 2, %v1828
      %v1830 = vrot.slane %v289, %v1829
      %1832 = vbcast.lane.b32.xlu0 %v1830, 256
      %v1833 = vpop.permute.xlu0 %1832
      %s1835 = sor.u32 256, 8
      %1836 = vbcast.lane.b32.xlu0 %v1830, %s1835
      %v1837 = vpop.permute.xlu0 %1836
      %s1839 = sor.u32 256, 16
      %1840 = vbcast.lane.b32.xlu0 %v1830, %s1839
      %v1841 = vpop.permute.xlu0 %1840
      %s1843 = sor.u32 256, 24
      %1844 = vbcast.lane.b32.xlu0 %v1830, %s1843
      %v1845 = vpop.permute.xlu0 %1844
      %s1847 = sor.u32 256, 32
      %1848 = vbcast.lane.b32.xlu0 %v1830, %s1847
      %v1849 = vpop.permute.xlu0 %1848
      %s1851 = sor.u32 256, 40
      %1852 = vbcast.lane.b32.xlu0 %v1830, %s1851
      %v1853 = vpop.permute.xlu0 %1852
      %s1855 = sor.u32 256, 48
      %1856 = vbcast.lane.b32.xlu0 %v1830, %s1855
      %v1857 = vpop.permute.xlu0 %1856
      %s1859 = sor.u32 256, 56
      %1860 = vbcast.lane.b32.xlu0 %v1830, %s1859
      %v1861 = vpop.permute.xlu0 %1860
      %v1862 = vlaneseq
      %v1863 = vshrl.u32 %v1862, 7
      %v1864 = vsub.s32 3, %v1863
      %v1865 = vrot.slane %v289, %v1864
      %1867 = vbcast.lane.b32.xlu0 %v1865, 256
      %v1868 = vpop.permute.xlu0 %1867
      %s1870 = sor.u32 256, 8
      %1871 = vbcast.lane.b32.xlu0 %v1865, %s1870
      %v1872 = vpop.permute.xlu0 %1871
      %s1874 = sor.u32 256, 16
      %1875 = vbcast.lane.b32.xlu0 %v1865, %s1874
      %v1876 = vpop.permute.xlu0 %1875
      %s1878 = sor.u32 256, 24
      %1879 = vbcast.lane.b32.xlu0 %v1865, %s1878
      %v1880 = vpop.permute.xlu0 %1879
      %s1882 = sor.u32 256, 32
      %1883 = vbcast.lane.b32.xlu0 %v1865, %s1882
      %v1884 = vpop.permute.xlu0 %1883
      %s1886 = sor.u32 256, 40
      %1887 = vbcast.lane.b32.xlu0 %v1865, %s1886
      %v1888 = vpop.permute.xlu0 %1887
      %s1890 = sor.u32 256, 48
      %1891 = vbcast.lane.b32.xlu0 %v1865, %s1890
      %v1892 = vpop.permute.xlu0 %1891
      %s1894 = sor.u32 256, 56
      %1895 = vbcast.lane.b32.xlu0 %v1865, %s1894
      %v1896 = vpop.permute.xlu0 %1895
      %v1897 = vlaneseq
      %v1898 = vshrl.u32 %v1897, 7
      %v1899 = vsub.s32 4, %v1898
      %v1900 = vrot.slane %v289, %v1899
      %1902 = vbcast.lane.b32.xlu0 %v1900, 256
      %v1903 = vpop.permute.xlu0 %1902
      %s1905 = sor.u32 256, 8
      %1906 = vbcast.lane.b32.xlu0 %v1900, %s1905
      %v1907 = vpop.permute.xlu0 %1906
      %s1909 = sor.u32 256, 16
      %1910 = vbcast.lane.b32.xlu0 %v1900, %s1909
      %v1911 = vpop.permute.xlu0 %1910
      %s1913 = sor.u32 256, 24
      %1914 = vbcast.lane.b32.xlu0 %v1900, %s1913
      %v1915 = vpop.permute.xlu0 %1914
      %s1917 = sor.u32 256, 32
      %1918 = vbcast.lane.b32.xlu0 %v1900, %s1917
      %v1919 = vpop.permute.xlu0 %1918
      %s1921 = sor.u32 256, 40
      %1922 = vbcast.lane.b32.xlu0 %v1900, %s1921
      %v1923 = vpop.permute.xlu0 %1922
      %s1925 = sor.u32 256, 48
      %1926 = vbcast.lane.b32.xlu0 %v1900, %s1925
      %v1927 = vpop.permute.xlu0 %1926
      %s1929 = sor.u32 256, 56
      %1930 = vbcast.lane.b32.xlu0 %v1900, %s1929
      %v1931 = vpop.permute.xlu0 %1930
      %v1932 = vlaneseq
      %v1933 = vshrl.u32 %v1932, 7
      %v1934 = vsub.s32 5, %v1933
      %v1935 = vrot.slane %v289, %v1934
      %1937 = vbcast.lane.b32.xlu0 %v1935, 256
      %v1938 = vpop.permute.xlu0 %1937
      %s1940 = sor.u32 256, 8
      %1941 = vbcast.lane.b32.xlu0 %v1935, %s1940
      %v1942 = vpop.permute.xlu0 %1941
      %s1944 = sor.u32 256, 16
      %1945 = vbcast.lane.b32.xlu0 %v1935, %s1944
      %v1946 = vpop.permute.xlu0 %1945
      %s1948 = sor.u32 256, 24
      %1949 = vbcast.lane.b32.xlu0 %v1935, %s1948
      %v1950 = vpop.permute.xlu0 %1949
      %s1952 = sor.u32 256, 32
      %1953 = vbcast.lane.b32.xlu0 %v1935, %s1952
      %v1954 = vpop.permute.xlu0 %1953
      %s1956 = sor.u32 256, 40
      %1957 = vbcast.lane.b32.xlu0 %v1935, %s1956
      %v1958 = vpop.permute.xlu0 %1957
      %s1960 = sor.u32 256, 48
      %1961 = vbcast.lane.b32.xlu0 %v1935, %s1960
      %v1962 = vpop.permute.xlu0 %1961
      %s1964 = sor.u32 256, 56
      %1965 = vbcast.lane.b32.xlu0 %v1935, %s1964
      %v1966 = vpop.permute.xlu0 %1965
      %v1967 = vlaneseq
      %v1968 = vshrl.u32 %v1967, 7
      %v1969 = vsub.s32 6, %v1968
      %v1970 = vrot.slane %v289, %v1969
      %1972 = vbcast.lane.b32.xlu0 %v1970, 256
      %v1973 = vpop.permute.xlu0 %1972
      %s1975 = sor.u32 256, 8
      %1976 = vbcast.lane.b32.xlu0 %v1970, %s1975
      %v1977 = vpop.permute.xlu0 %1976
      %s1979 = sor.u32 256, 16
      %1980 = vbcast.lane.b32.xlu0 %v1970, %s1979
      %v1981 = vpop.permute.xlu0 %1980
      %s1983 = sor.u32 256, 24
      %1984 = vbcast.lane.b32.xlu0 %v1970, %s1983
      %v1985 = vpop.permute.xlu0 %1984
      %s1987 = sor.u32 256, 32
      %1988 = vbcast.lane.b32.xlu0 %v1970, %s1987
      %v1989 = vpop.permute.xlu0 %1988
      %s1991 = sor.u32 256, 40
      %1992 = vbcast.lane.b32.xlu0 %v1970, %s1991
      %v1993 = vpop.permute.xlu0 %1992
      %s1995 = sor.u32 256, 48
      %1996 = vbcast.lane.b32.xlu0 %v1970, %s1995
      %v1997 = vpop.permute.xlu0 %1996
      %s1999 = sor.u32 256, 56
      %2000 = vbcast.lane.b32.xlu0 %v1970, %s1999
      %v2001 = vpop.permute.xlu0 %2000
      %v2002 = vlaneseq
      %v2003 = vshrl.u32 %v2002, 7
      %v2004 = vsub.s32 7, %v2003
      %v2005 = vrot.slane %v289, %v2004
      %2007 = vbcast.lane.b32.xlu0 %v2005, 256
      %v2008 = vpop.permute.xlu0 %2007
      %s2010 = sor.u32 256, 8
      %2011 = vbcast.lane.b32.xlu0 %v2005, %s2010
      %v2012 = vpop.permute.xlu0 %2011
      %s2014 = sor.u32 256, 16
      %2015 = vbcast.lane.b32.xlu0 %v2005, %s2014
      %v2016 = vpop.permute.xlu0 %2015
      %s2018 = sor.u32 256, 24
      %2019 = vbcast.lane.b32.xlu0 %v2005, %s2018
      %v2020 = vpop.permute.xlu0 %2019
      %s2022 = sor.u32 256, 32
      %2023 = vbcast.lane.b32.xlu0 %v2005, %s2022
      %v2024 = vpop.permute.xlu0 %2023
      %s2026 = sor.u32 256, 40
      %2027 = vbcast.lane.b32.xlu0 %v2005, %s2026
      %v2028 = vpop.permute.xlu0 %2027
      %s2030 = sor.u32 256, 48
      %2031 = vbcast.lane.b32.xlu0 %v2005, %s2030
      %v2032 = vpop.permute.xlu0 %2031
      %s2034 = sor.u32 256, 56
      %2035 = vbcast.lane.b32.xlu0 %v2005, %s2034
      %v2036 = vpop.permute.xlu0 %2035
      %v2037 = vlaneseq
      %v2038 = vshrl.u32 %v2037, 7
      %v2039 = vsub.s32 0, %v2038
      %v2040 = vrot.slane %v291, %v2039
      %2042 = vbcast.lane.b32.xlu0 %v2040, 256
      %v2043 = vpop.permute.xlu0 %2042
      %s2045 = sor.u32 256, 8
      %2046 = vbcast.lane.b32.xlu0 %v2040, %s2045
      %v2047 = vpop.permute.xlu0 %2046
      %s2049 = sor.u32 256, 16
      %2050 = vbcast.lane.b32.xlu0 %v2040, %s2049
      %v2051 = vpop.permute.xlu0 %2050
      %s2053 = sor.u32 256, 24
      %2054 = vbcast.lane.b32.xlu0 %v2040, %s2053
      %v2055 = vpop.permute.xlu0 %2054
      %s2057 = sor.u32 256, 32
      %2058 = vbcast.lane.b32.xlu0 %v2040, %s2057
      %v2059 = vpop.permute.xlu0 %2058
      %s2061 = sor.u32 256, 40
      %2062 = vbcast.lane.b32.xlu0 %v2040, %s2061
      %v2063 = vpop.permute.xlu0 %2062
      %s2065 = sor.u32 256, 48
      %2066 = vbcast.lane.b32.xlu0 %v2040, %s2065
      %v2067 = vpop.permute.xlu0 %2066
      %s2069 = sor.u32 256, 56
      %2070 = vbcast.lane.b32.xlu0 %v2040, %s2069
      %v2071 = vpop.permute.xlu0 %2070
      %v2072 = vlaneseq
      %v2073 = vshrl.u32 %v2072, 7
      %v2074 = vsub.s32 1, %v2073
      %v2075 = vrot.slane %v291, %v2074
      %2077 = vbcast.lane.b32.xlu0 %v2075, 256
      %v2078 = vpop.permute.xlu0 %2077
      %s2080 = sor.u32 256, 8
      %2081 = vbcast.lane.b32.xlu0 %v2075, %s2080
      %v2082 = vpop.permute.xlu0 %2081
      %s2084 = sor.u32 256, 16
      %2085 = vbcast.lane.b32.xlu0 %v2075, %s2084
      %v2086 = vpop.permute.xlu0 %2085
      %s2088 = sor.u32 256, 24
      %2089 = vbcast.lane.b32.xlu0 %v2075, %s2088
      %v2090 = vpop.permute.xlu0 %2089
      %s2092 = sor.u32 256, 32
      %2093 = vbcast.lane.b32.xlu0 %v2075, %s2092
      %v2094 = vpop.permute.xlu0 %2093
      %s2096 = sor.u32 256, 40
      %2097 = vbcast.lane.b32.xlu0 %v2075, %s2096
      %v2098 = vpop.permute.xlu0 %2097
      %s2100 = sor.u32 256, 48
      %2101 = vbcast.lane.b32.xlu0 %v2075, %s2100
      %v2102 = vpop.permute.xlu0 %2101
      %s2104 = sor.u32 256, 56
      %2105 = vbcast.lane.b32.xlu0 %v2075, %s2104
      %v2106 = vpop.permute.xlu0 %2105
      %v2107 = vlaneseq
      %v2108 = vshrl.u32 %v2107, 7
      %v2109 = vsub.s32 2, %v2108
      %v2110 = vrot.slane %v291, %v2109
      %2112 = vbcast.lane.b32.xlu0 %v2110, 256
      %v2113 = vpop.permute.xlu0 %2112
      %s2115 = sor.u32 256, 8
      %2116 = vbcast.lane.b32.xlu0 %v2110, %s2115
      %v2117 = vpop.permute.xlu0 %2116
      %s2119 = sor.u32 256, 16
      %2120 = vbcast.lane.b32.xlu0 %v2110, %s2119
      %v2121 = vpop.permute.xlu0 %2120
      %s2123 = sor.u32 256, 24
      %2124 = vbcast.lane.b32.xlu0 %v2110, %s2123
      %v2125 = vpop.permute.xlu0 %2124
      %s2127 = sor.u32 256, 32
      %2128 = vbcast.lane.b32.xlu0 %v2110, %s2127
      %v2129 = vpop.permute.xlu0 %2128
      %s2131 = sor.u32 256, 40
      %2132 = vbcast.lane.b32.xlu0 %v2110, %s2131
      %v2133 = vpop.permute.xlu0 %2132
      %s2135 = sor.u32 256, 48
      %2136 = vbcast.lane.b32.xlu0 %v2110, %s2135
      %v2137 = vpop.permute.xlu0 %2136
      %s2139 = sor.u32 256, 56
      %2140 = vbcast.lane.b32.xlu0 %v2110, %s2139
      %v2141 = vpop.permute.xlu0 %2140
      %v2142 = vlaneseq
      %v2143 = vshrl.u32 %v2142, 7
      %v2144 = vsub.s32 3, %v2143
      %v2145 = vrot.slane %v291, %v2144
      %2147 = vbcast.lane.b32.xlu0 %v2145, 256
      %v2148 = vpop.permute.xlu0 %2147
      %s2150 = sor.u32 256, 8
      %2151 = vbcast.lane.b32.xlu0 %v2145, %s2150
      %v2152 = vpop.permute.xlu0 %2151
      %s2154 = sor.u32 256, 16
      %2155 = vbcast.lane.b32.xlu0 %v2145, %s2154
      %v2156 = vpop.permute.xlu0 %2155
      %s2158 = sor.u32 256, 24
      %2159 = vbcast.lane.b32.xlu0 %v2145, %s2158
      %v2160 = vpop.permute.xlu0 %2159
      %s2162 = sor.u32 256, 32
      %2163 = vbcast.lane.b32.xlu0 %v2145, %s2162
      %v2164 = vpop.permute.xlu0 %2163
      %s2166 = sor.u32 256, 40
      %2167 = vbcast.lane.b32.xlu0 %v2145, %s2166
      %v2168 = vpop.permute.xlu0 %2167
      %s2170 = sor.u32 256, 48
      %2171 = vbcast.lane.b32.xlu0 %v2145, %s2170
      %v2172 = vpop.permute.xlu0 %2171
      %s2174 = sor.u32 256, 56
      %2175 = vbcast.lane.b32.xlu0 %v2145, %s2174
      %v2176 = vpop.permute.xlu0 %2175
      %v2177 = vlaneseq
      %v2178 = vshrl.u32 %v2177, 7
      %v2179 = vsub.s32 4, %v2178
      %v2180 = vrot.slane %v291, %v2179
      %2182 = vbcast.lane.b32.xlu0 %v2180, 256
      %v2183 = vpop.permute.xlu0 %2182
      %s2185 = sor.u32 256, 8
      %2186 = vbcast.lane.b32.xlu0 %v2180, %s2185
      %v2187 = vpop.permute.xlu0 %2186
      %s2189 = sor.u32 256, 16
      %2190 = vbcast.lane.b32.xlu0 %v2180, %s2189
      %v2191 = vpop.permute.xlu0 %2190
      %s2193 = sor.u32 256, 24
      %2194 = vbcast.lane.b32.xlu0 %v2180, %s2193
      %v2195 = vpop.permute.xlu0 %2194
      %s2197 = sor.u32 256, 32
      %2198 = vbcast.lane.b32.xlu0 %v2180, %s2197
      %v2199 = vpop.permute.xlu0 %2198
      %s2201 = sor.u32 256, 40
      %2202 = vbcast.lane.b32.xlu0 %v2180, %s2201
      %v2203 = vpop.permute.xlu0 %2202
      %s2205 = sor.u32 256, 48
      %2206 = vbcast.lane.b32.xlu0 %v2180, %s2205
      %v2207 = vpop.permute.xlu0 %2206
      %s2209 = sor.u32 256, 56
      %2210 = vbcast.lane.b32.xlu0 %v2180, %s2209
      %v2211 = vpop.permute.xlu0 %2210
      %v2212 = vlaneseq
      %v2213 = vshrl.u32 %v2212, 7
      %v2214 = vsub.s32 5, %v2213
      %v2215 = vrot.slane %v291, %v2214
      %2217 = vbcast.lane.b32.xlu0 %v2215, 256
      %v2218 = vpop.permute.xlu0 %2217
      %s2220 = sor.u32 256, 8
      %2221 = vbcast.lane.b32.xlu0 %v2215, %s2220
      %v2222 = vpop.permute.xlu0 %2221
      %s2224 = sor.u32 256, 16
      %2225 = vbcast.lane.b32.xlu0 %v2215, %s2224
      %v2226 = vpop.permute.xlu0 %2225
      %s2228 = sor.u32 256, 24
      %2229 = vbcast.lane.b32.xlu0 %v2215, %s2228
      %v2230 = vpop.permute.xlu0 %2229
      %s2232 = sor.u32 256, 32
      %2233 = vbcast.lane.b32.xlu0 %v2215, %s2232
      %v2234 = vpop.permute.xlu0 %2233
      %s2236 = sor.u32 256, 40
      %2237 = vbcast.lane.b32.xlu0 %v2215, %s2236
      %v2238 = vpop.permute.xlu0 %2237
      %s2240 = sor.u32 256, 48
      %2241 = vbcast.lane.b32.xlu0 %v2215, %s2240
      %v2242 = vpop.permute.xlu0 %2241
      %s2244 = sor.u32 256, 56
      %2245 = vbcast.lane.b32.xlu0 %v2215, %s2244
      %v2246 = vpop.permute.xlu0 %2245
      %v2247 = vlaneseq
      %v2248 = vshrl.u32 %v2247, 7
      %v2249 = vsub.s32 6, %v2248
      %v2250 = vrot.slane %v291, %v2249
      %2252 = vbcast.lane.b32.xlu0 %v2250, 256
      %v2253 = vpop.permute.xlu0 %2252
      %s2255 = sor.u32 256, 8
      %2256 = vbcast.lane.b32.xlu0 %v2250, %s2255
      %v2257 = vpop.permute.xlu0 %2256
      %s2259 = sor.u32 256, 16
      %2260 = vbcast.lane.b32.xlu0 %v2250, %s2259
      %v2261 = vpop.permute.xlu0 %2260
      %s2263 = sor.u32 256, 24
      %2264 = vbcast.lane.b32.xlu0 %v2250, %s2263
      %v2265 = vpop.permute.xlu0 %2264
      %s2267 = sor.u32 256, 32
      %2268 = vbcast.lane.b32.xlu0 %v2250, %s2267
      %v2269 = vpop.permute.xlu0 %2268
      %s2271 = sor.u32 256, 40
      %2272 = vbcast.lane.b32.xlu0 %v2250, %s2271
      %v2273 = vpop.permute.xlu0 %2272
      %s2275 = sor.u32 256, 48
      %2276 = vbcast.lane.b32.xlu0 %v2250, %s2275
      %v2277 = vpop.permute.xlu0 %2276
      %s2279 = sor.u32 256, 56
      %2280 = vbcast.lane.b32.xlu0 %v2250, %s2279
      %v2281 = vpop.permute.xlu0 %2280
      %v2282 = vlaneseq
      %v2283 = vshrl.u32 %v2282, 7
      %v2284 = vsub.s32 7, %v2283
      %v2285 = vrot.slane %v291, %v2284
      %2287 = vbcast.lane.b32.xlu0 %v2285, 256
      %v2288 = vpop.permute.xlu0 %2287
      %s2290 = sor.u32 256, 8
      %2291 = vbcast.lane.b32.xlu0 %v2285, %s2290
      %v2292 = vpop.permute.xlu0 %2291
      %s2294 = sor.u32 256, 16
      %2295 = vbcast.lane.b32.xlu0 %v2285, %s2294
      %v2296 = vpop.permute.xlu0 %2295
      %s2298 = sor.u32 256, 24
      %2299 = vbcast.lane.b32.xlu0 %v2285, %s2298
      %v2300 = vpop.permute.xlu0 %2299
      %s2302 = sor.u32 256, 32
      %2303 = vbcast.lane.b32.xlu0 %v2285, %s2302
      %v2304 = vpop.permute.xlu0 %2303
      %s2306 = sor.u32 256, 40
      %2307 = vbcast.lane.b32.xlu0 %v2285, %s2306
      %v2308 = vpop.permute.xlu0 %2307
      %s2310 = sor.u32 256, 48
      %2311 = vbcast.lane.b32.xlu0 %v2285, %s2310
      %v2312 = vpop.permute.xlu0 %2311
      %s2314 = sor.u32 256, 56
      %2315 = vbcast.lane.b32.xlu0 %v2285, %s2314
      %v2316 = vpop.permute.xlu0 %2315
      %v2317 = vlaneseq
      %v2318 = vshrl.u32 %v2317, 7
      %v2319 = vsub.s32 2, %v2318
      %v2320 = vrot.slane %v292, %v2319
      %v2321 = vmul.f32 %v1763, %v2320
      %v2322 = vmul.f32 %v1767, %v2320
      %v2323 = vmul.f32 %v1771, %v2320
      %v2324 = vmul.f32 %v1775, %v2320
      %v2325 = vmul.f32 %v1779, %v2320
      %v2326 = vmul.f32 %v1783, %v2320
      %v2327 = vmul.f32 %v1787, %v2320
      %v2328 = vmul.f32 %v1791, %v2320
      %v2329 = vmul.f32 %v1798, %v2320
      %v2330 = vmul.f32 %v1802, %v2320
      %v2331 = vmul.f32 %v1806, %v2320
      %v2332 = vmul.f32 %v1810, %v2320
      %v2333 = vmul.f32 %v1814, %v2320
      %v2334 = vmul.f32 %v1818, %v2320
      %v2335 = vmul.f32 %v1822, %v2320
      %v2336 = vmul.f32 %v1826, %v2320
      %v2337 = vmul.f32 %v1833, %v2320
      %v2338 = vmul.f32 %v1837, %v2320
      %v2339 = vmul.f32 %v1841, %v2320
      %v2340 = vmul.f32 %v1845, %v2320
      %v2341 = vmul.f32 %v1849, %v2320
      %v2342 = vmul.f32 %v1853, %v2320
      %v2343 = vmul.f32 %v1857, %v2320
      %v2344 = vmul.f32 %v1861, %v2320
      %v2345 = vmul.f32 %v1868, %v2320
      %v2346 = vmul.f32 %v1872, %v2320
      %v2347 = vmul.f32 %v1876, %v2320
      %v2348 = vmul.f32 %v1880, %v2320
      %v2349 = vmul.f32 %v1884, %v2320
      %v2350 = vmul.f32 %v1888, %v2320
      %v2351 = vmul.f32 %v1892, %v2320
      %v2352 = vmul.f32 %v1896, %v2320
      %v2353 = vmul.f32 %v1903, %v2320
      %v2354 = vmul.f32 %v1907, %v2320
      %v2355 = vmul.f32 %v1911, %v2320
      %v2356 = vmul.f32 %v1915, %v2320
      %v2357 = vmul.f32 %v1919, %v2320
      %v2358 = vmul.f32 %v1923, %v2320
      %v2359 = vmul.f32 %v1927, %v2320
      %v2360 = vmul.f32 %v1931, %v2320
      %v2361 = vmul.f32 %v1938, %v2320
      %v2362 = vmul.f32 %v1942, %v2320
      %v2363 = vmul.f32 %v1946, %v2320
      %v2364 = vmul.f32 %v1950, %v2320
      %v2365 = vmul.f32 %v1954, %v2320
      %v2366 = vmul.f32 %v1958, %v2320
      %v2367 = vmul.f32 %v1962, %v2320
      %v2368 = vmul.f32 %v1966, %v2320
      %v2369 = vmul.f32 %v1973, %v2320
      %v2370 = vmul.f32 %v1977, %v2320
      %v2371 = vmul.f32 %v1981, %v2320
      %v2372 = vmul.f32 %v1985, %v2320
      %v2373 = vmul.f32 %v1989, %v2320
      %v2374 = vmul.f32 %v1993, %v2320
      %v2375 = vmul.f32 %v1997, %v2320
      %v2376 = vmul.f32 %v2001, %v2320
      %v2377 = vmul.f32 %v2008, %v2320
      %v2378 = vmul.f32 %v2012, %v2320
      %v2379 = vmul.f32 %v2016, %v2320
      %v2380 = vmul.f32 %v2020, %v2320
      %v2381 = vmul.f32 %v2024, %v2320
      %v2382 = vmul.f32 %v2028, %v2320
      %v2383 = vmul.f32 %v2032, %v2320
      %v2384 = vmul.f32 %v2036, %v2320
      %v2385 = vmul.f32 %v2043, %v2320
      %v2386 = vmul.f32 %v2047, %v2320
      %v2387 = vmul.f32 %v2051, %v2320
      %v2388 = vmul.f32 %v2055, %v2320
      %v2389 = vmul.f32 %v2059, %v2320
      %v2390 = vmul.f32 %v2063, %v2320
      %v2391 = vmul.f32 %v2067, %v2320
      %v2392 = vmul.f32 %v2071, %v2320
      %v2393 = vmul.f32 %v2078, %v2320
      %v2394 = vmul.f32 %v2082, %v2320
      %v2395 = vmul.f32 %v2086, %v2320
      %v2396 = vmul.f32 %v2090, %v2320
      %v2397 = vmul.f32 %v2094, %v2320
      %v2398 = vmul.f32 %v2098, %v2320
      %v2399 = vmul.f32 %v2102, %v2320
      %v2400 = vmul.f32 %v2106, %v2320
      %v2401 = vmul.f32 %v2113, %v2320
      %v2402 = vmul.f32 %v2117, %v2320
      %v2403 = vmul.f32 %v2121, %v2320
      %v2404 = vmul.f32 %v2125, %v2320
      %v2405 = vmul.f32 %v2129, %v2320
      %v2406 = vmul.f32 %v2133, %v2320
      %v2407 = vmul.f32 %v2137, %v2320
      %v2408 = vmul.f32 %v2141, %v2320
      %v2409 = vmul.f32 %v2148, %v2320
      %v2410 = vmul.f32 %v2152, %v2320
      %v2411 = vmul.f32 %v2156, %v2320
      %v2412 = vmul.f32 %v2160, %v2320
      %v2413 = vmul.f32 %v2164, %v2320
      %v2414 = vmul.f32 %v2168, %v2320
      %v2415 = vmul.f32 %v2172, %v2320
      %v2416 = vmul.f32 %v2176, %v2320
      %v2417 = vmul.f32 %v2183, %v2320
      %v2418 = vmul.f32 %v2187, %v2320
      %v2419 = vmul.f32 %v2191, %v2320
      %v2420 = vmul.f32 %v2195, %v2320
      %v2421 = vmul.f32 %v2199, %v2320
      %v2422 = vmul.f32 %v2203, %v2320
      %v2423 = vmul.f32 %v2207, %v2320
      %v2424 = vmul.f32 %v2211, %v2320
      %v2425 = vmul.f32 %v2218, %v2320
      %v2426 = vmul.f32 %v2222, %v2320
      %v2427 = vmul.f32 %v2226, %v2320
      %v2428 = vmul.f32 %v2230, %v2320
      %v2429 = vmul.f32 %v2234, %v2320
      %v2430 = vmul.f32 %v2238, %v2320
      %v2431 = vmul.f32 %v2242, %v2320
      %v2432 = vmul.f32 %v2246, %v2320
      %v2433 = vmul.f32 %v2253, %v2320
      %v2434 = vmul.f32 %v2257, %v2320
      %v2435 = vmul.f32 %v2261, %v2320
      %v2436 = vmul.f32 %v2265, %v2320
      %v2437 = vmul.f32 %v2269, %v2320
      %v2438 = vmul.f32 %v2273, %v2320
      %v2439 = vmul.f32 %v2277, %v2320
      %v2440 = vmul.f32 %v2281, %v2320
      %v2441 = vmul.f32 %v2288, %v2320
      %v2442 = vmul.f32 %v2292, %v2320
      %v2443 = vmul.f32 %v2296, %v2320
      %v2444 = vmul.f32 %v2300, %v2320
      %v2445 = vmul.f32 %v2304, %v2320
      %v2446 = vmul.f32 %v2308, %v2320
      %v2447 = vmul.f32 %v2312, %v2320
      %v2448 = vmul.f32 %v2316, %v2320
      %v2449 = vadd.f32 %v1629, %v2321
      %v2450 = vadd.f32 %v1630, %v2322
      %v2451 = vadd.f32 %v1631, %v2323
      %v2452 = vadd.f32 %v1632, %v2324
      %v2453 = vadd.f32 %v1633, %v2325
      %v2454 = vadd.f32 %v1634, %v2326
      %v2455 = vadd.f32 %v1635, %v2327
      %v2456 = vadd.f32 %v1636, %v2328
      %v2457 = vadd.f32 %v1637, %v2329
      %v2458 = vadd.f32 %v1638, %v2330
      %v2459 = vadd.f32 %v1639, %v2331
      %v2460 = vadd.f32 %v1640, %v2332
      %v2461 = vadd.f32 %v1641, %v2333
      %v2462 = vadd.f32 %v1642, %v2334
      %v2463 = vadd.f32 %v1643, %v2335
      %v2464 = vadd.f32 %v1644, %v2336
      %v2465 = vadd.f32 %v1645, %v2337
      %v2466 = vadd.f32 %v1646, %v2338
      %v2467 = vadd.f32 %v1647, %v2339
      %v2468 = vadd.f32 %v1648, %v2340
      %v2469 = vadd.f32 %v1649, %v2341
      %v2470 = vadd.f32 %v1650, %v2342
      %v2471 = vadd.f32 %v1651, %v2343
      %v2472 = vadd.f32 %v1652, %v2344
      %v2473 = vadd.f32 %v1653, %v2345
      %v2474 = vadd.f32 %v1654, %v2346
      %v2475 = vadd.f32 %v1655, %v2347
      %v2476 = vadd.f32 %v1656, %v2348
      %v2477 = vadd.f32 %v1657, %v2349
      %v2478 = vadd.f32 %v1658, %v2350
      %v2479 = vadd.f32 %v1659, %v2351
      %v2480 = vadd.f32 %v1660, %v2352
      %v2481 = vadd.f32 %v1661, %v2353
      %v2482 = vadd.f32 %v1662, %v2354
      %v2483 = vadd.f32 %v1663, %v2355
      %v2484 = vadd.f32 %v1664, %v2356
      %v2485 = vadd.f32 %v1665, %v2357
      %v2486 = vadd.f32 %v1666, %v2358
      %v2487 = vadd.f32 %v1667, %v2359
      %v2488 = vadd.f32 %v1668, %v2360
      %v2489 = vadd.f32 %v1669, %v2361
      %v2490 = vadd.f32 %v1670, %v2362
      %v2491 = vadd.f32 %v1671, %v2363
      %v2492 = vadd.f32 %v1672, %v2364
      %v2493 = vadd.f32 %v1673, %v2365
      %v2494 = vadd.f32 %v1674, %v2366
      %v2495 = vadd.f32 %v1675, %v2367
      %v2496 = vadd.f32 %v1676, %v2368
      %v2497 = vadd.f32 %v1677, %v2369
      %v2498 = vadd.f32 %v1678, %v2370
      %v2499 = vadd.f32 %v1679, %v2371
      %v2500 = vadd.f32 %v1680, %v2372
      %v2501 = vadd.f32 %v1681, %v2373
      %v2502 = vadd.f32 %v1682, %v2374
      %v2503 = vadd.f32 %v1683, %v2375
      %v2504 = vadd.f32 %v1684, %v2376
      %v2505 = vadd.f32 %v1685, %v2377
      %v2506 = vadd.f32 %v1686, %v2378
      %v2507 = vadd.f32 %v1687, %v2379
      %v2508 = vadd.f32 %v1688, %v2380
      %v2509 = vadd.f32 %v1689, %v2381
      %v2510 = vadd.f32 %v1690, %v2382
      %v2511 = vadd.f32 %v1691, %v2383
      %v2512 = vadd.f32 %v1692, %v2384
      %v2513 = vadd.f32 %v1693, %v2385
      %v2514 = vadd.f32 %v1694, %v2386
      %v2515 = vadd.f32 %v1695, %v2387
      %v2516 = vadd.f32 %v1696, %v2388
      %v2517 = vadd.f32 %v1697, %v2389
      %v2518 = vadd.f32 %v1698, %v2390
      %v2519 = vadd.f32 %v1699, %v2391
      %v2520 = vadd.f32 %v1700, %v2392
      %v2521 = vadd.f32 %v1701, %v2393
      %v2522 = vadd.f32 %v1702, %v2394
      %v2523 = vadd.f32 %v1703, %v2395
      %v2524 = vadd.f32 %v1704, %v2396
      %v2525 = vadd.f32 %v1705, %v2397
      %v2526 = vadd.f32 %v1706, %v2398
      %v2527 = vadd.f32 %v1707, %v2399
      %v2528 = vadd.f32 %v1708, %v2400
      %v2529 = vadd.f32 %v1709, %v2401
      %v2530 = vadd.f32 %v1710, %v2402
      %v2531 = vadd.f32 %v1711, %v2403
      %v2532 = vadd.f32 %v1712, %v2404
      %v2533 = vadd.f32 %v1713, %v2405
      %v2534 = vadd.f32 %v1714, %v2406
      %v2535 = vadd.f32 %v1715, %v2407
      %v2536 = vadd.f32 %v1716, %v2408
      %v2537 = vadd.f32 %v1717, %v2409
      %v2538 = vadd.f32 %v1718, %v2410
      %v2539 = vadd.f32 %v1719, %v2411
      %v2540 = vadd.f32 %v1720, %v2412
      %v2541 = vadd.f32 %v1721, %v2413
      %v2542 = vadd.f32 %v1722, %v2414
      %v2543 = vadd.f32 %v1723, %v2415
      %v2544 = vadd.f32 %v1724, %v2416
      %v2545 = vadd.f32 %v1725, %v2417
      %v2546 = vadd.f32 %v1726, %v2418
      %v2547 = vadd.f32 %v1727, %v2419
      %v2548 = vadd.f32 %v1728, %v2420
      %v2549 = vadd.f32 %v1729, %v2421
      %v2550 = vadd.f32 %v1730, %v2422
      %v2551 = vadd.f32 %v1731, %v2423
      %v2552 = vadd.f32 %v1732, %v2424
      %v2553 = vadd.f32 %v1733, %v2425
      %v2554 = vadd.f32 %v1734, %v2426
      %v2555 = vadd.f32 %v1735, %v2427
      %v2556 = vadd.f32 %v1736, %v2428
      %v2557 = vadd.f32 %v1737, %v2429
      %v2558 = vadd.f32 %v1738, %v2430
      %v2559 = vadd.f32 %v1739, %v2431
      %v2560 = vadd.f32 %v1740, %v2432
      %v2561 = vadd.f32 %v1741, %v2433
      %v2562 = vadd.f32 %v1742, %v2434
      %v2563 = vadd.f32 %v1743, %v2435
      %v2564 = vadd.f32 %v1744, %v2436
      %v2565 = vadd.f32 %v1745, %v2437
      %v2566 = vadd.f32 %v1746, %v2438
      %v2567 = vadd.f32 %v1747, %v2439
      %v2568 = vadd.f32 %v1748, %v2440
      %v2569 = vadd.f32 %v1749, %v2441
      %v2570 = vadd.f32 %v1750, %v2442
      %v2571 = vadd.f32 %v1751, %v2443
      %v2572 = vadd.f32 %v1752, %v2444
      %v2573 = vadd.f32 %v1753, %v2445
      %v2574 = vadd.f32 %v1754, %v2446
      %v2575 = vadd.f32 %v1755, %v2447
      %v2576 = vadd.f32 %v1756, %v2448
      %v2577 = vld [vmem:[%s2] sm:$0x1]
      %v2579 = vlaneseq
      %v2580 = vshrl.u32 %v2579, 7
      %v2581 = vsub.s32 0, %v2580
      %v2582 = vrot.slane %v2577, %v2581
      %v2584 = vadd.f32 %v2449, %v2582
      %v2585 = vadd.f32 %v2450, %v2582
      %v2586 = vadd.f32 %v2451, %v2582
      %v2587 = vadd.f32 %v2452, %v2582
      %v2588 = vadd.f32 %v2453, %v2582
      %v2589 = vadd.f32 %v2454, %v2582
      %v2590 = vadd.f32 %v2455, %v2582
      %v2591 = vadd.f32 %v2456, %v2582
      %v2592 = vadd.f32 %v2457, %v2582
      %v2593 = vadd.f32 %v2458, %v2582
      %v2594 = vadd.f32 %v2459, %v2582
      %v2595 = vadd.f32 %v2460, %v2582
      %v2596 = vadd.f32 %v2461, %v2582
      %v2597 = vadd.f32 %v2462, %v2582
      %v2598 = vadd.f32 %v2463, %v2582
      %v2599 = vadd.f32 %v2464, %v2582
      %v2600 = vadd.f32 %v2465, %v2582
      %v2601 = vadd.f32 %v2466, %v2582
      %v2602 = vadd.f32 %v2467, %v2582
      %v2603 = vadd.f32 %v2468, %v2582
      %v2604 = vadd.f32 %v2469, %v2582
      %v2605 = vadd.f32 %v2470, %v2582
      %v2606 = vadd.f32 %v2471, %v2582
      %v2607 = vadd.f32 %v2472, %v2582
      %v2608 = vadd.f32 %v2473, %v2582
      %v2609 = vadd.f32 %v2474, %v2582
      %v2610 = vadd.f32 %v2475, %v2582
      %v2611 = vadd.f32 %v2476, %v2582
      %v2612 = vadd.f32 %v2477, %v2582
      %v2613 = vadd.f32 %v2478, %v2582
      %v2614 = vadd.f32 %v2479, %v2582
      %v2615 = vadd.f32 %v2480, %v2582
      %v2616 = vadd.f32 %v2481, %v2582
      %v2617 = vadd.f32 %v2482, %v2582
      %v2618 = vadd.f32 %v2483, %v2582
      %v2619 = vadd.f32 %v2484, %v2582
      %v2620 = vadd.f32 %v2485, %v2582
      %v2621 = vadd.f32 %v2486, %v2582
      %v2622 = vadd.f32 %v2487, %v2582
      %v2623 = vadd.f32 %v2488, %v2582
      %v2624 = vadd.f32 %v2489, %v2582
      %v2625 = vadd.f32 %v2490, %v2582
      %v2626 = vadd.f32 %v2491, %v2582
      %v2627 = vadd.f32 %v2492, %v2582
      %v2628 = vadd.f32 %v2493, %v2582
      %v2629 = vadd.f32 %v2494, %v2582
      %v2630 = vadd.f32 %v2495, %v2582
      %v2631 = vadd.f32 %v2496, %v2582
      %v2632 = vadd.f32 %v2497, %v2582
      %v2633 = vadd.f32 %v2498, %v2582
      %v2634 = vadd.f32 %v2499, %v2582
      %v2635 = vadd.f32 %v2500, %v2582
      %v2636 = vadd.f32 %v2501, %v2582
      %v2637 = vadd.f32 %v2502, %v2582
      %v2638 = vadd.f32 %v2503, %v2582
      %v2639 = vadd.f32 %v2504, %v2582
      %v2640 = vadd.f32 %v2505, %v2582
      %v2641 = vadd.f32 %v2506, %v2582
      %v2642 = vadd.f32 %v2507, %v2582
      %v2643 = vadd.f32 %v2508, %v2582
      %v2644 = vadd.f32 %v2509, %v2582
      %v2645 = vadd.f32 %v2510, %v2582
      %v2646 = vadd.f32 %v2511, %v2582
      %v2647 = vadd.f32 %v2512, %v2582
      %v2648 = vadd.f32 %v2513, %v2582
      %v2649 = vadd.f32 %v2514, %v2582
      %v2650 = vadd.f32 %v2515, %v2582
      %v2651 = vadd.f32 %v2516, %v2582
      %v2652 = vadd.f32 %v2517, %v2582
      %v2653 = vadd.f32 %v2518, %v2582
      %v2654 = vadd.f32 %v2519, %v2582
      %v2655 = vadd.f32 %v2520, %v2582
      %v2656 = vadd.f32 %v2521, %v2582
      %v2657 = vadd.f32 %v2522, %v2582
      %v2658 = vadd.f32 %v2523, %v2582
      %v2659 = vadd.f32 %v2524, %v2582
      %v2660 = vadd.f32 %v2525, %v2582
      %v2661 = vadd.f32 %v2526, %v2582
      %v2662 = vadd.f32 %v2527, %v2582
      %v2663 = vadd.f32 %v2528, %v2582
      %v2664 = vadd.f32 %v2529, %v2582
      %v2665 = vadd.f32 %v2530, %v2582
      %v2666 = vadd.f32 %v2531, %v2582
      %v2667 = vadd.f32 %v2532, %v2582
      %v2668 = vadd.f32 %v2533, %v2582
      %v2669 = vadd.f32 %v2534, %v2582
      %v2670 = vadd.f32 %v2535, %v2582
      %v2671 = vadd.f32 %v2536, %v2582
      %v2672 = vadd.f32 %v2537, %v2582
      %v2673 = vadd.f32 %v2538, %v2582
      %v2674 = vadd.f32 %v2539, %v2582
      %v2675 = vadd.f32 %v2540, %v2582
      %v2676 = vadd.f32 %v2541, %v2582
      %v2677 = vadd.f32 %v2542, %v2582
      %v2678 = vadd.f32 %v2543, %v2582
      %v2679 = vadd.f32 %v2544, %v2582
      %v2680 = vadd.f32 %v2545, %v2582
      %v2681 = vadd.f32 %v2546, %v2582
      %v2682 = vadd.f32 %v2547, %v2582
      %v2683 = vadd.f32 %v2548, %v2582
      %v2684 = vadd.f32 %v2549, %v2582
      %v2685 = vadd.f32 %v2550, %v2582
      %v2686 = vadd.f32 %v2551, %v2582
      %v2687 = vadd.f32 %v2552, %v2582
      %v2688 = vadd.f32 %v2553, %v2582
      %v2689 = vadd.f32 %v2554, %v2582
      %v2690 = vadd.f32 %v2555, %v2582
      %v2691 = vadd.f32 %v2556, %v2582
      %v2692 = vadd.f32 %v2557, %v2582
      %v2693 = vadd.f32 %v2558, %v2582
      %v2694 = vadd.f32 %v2559, %v2582
      %v2695 = vadd.f32 %v2560, %v2582
      %v2696 = vadd.f32 %v2561, %v2582
      %v2697 = vadd.f32 %v2562, %v2582
      %v2698 = vadd.f32 %v2563, %v2582
      %v2699 = vadd.f32 %v2564, %v2582
      %v2700 = vadd.f32 %v2565, %v2582
      %v2701 = vadd.f32 %v2566, %v2582
      %v2702 = vadd.f32 %v2567, %v2582
      %v2703 = vadd.f32 %v2568, %v2582
      %v2704 = vadd.f32 %v2569, %v2582
      %v2705 = vadd.f32 %v2570, %v2582
      %v2706 = vadd.f32 %v2571, %v2582
      %v2707 = vadd.f32 %v2572, %v2582
      %v2708 = vadd.f32 %v2573, %v2582
      %v2709 = vadd.f32 %v2574, %v2582
      %v2710 = vadd.f32 %v2575, %v2582
      %v2711 = vadd.f32 %v2576, %v2582
      %v2712 = vmax.f32 %v2584, 0.0
      %v2713 = vmax.f32 %v2585, 0.0
      %v2714 = vmax.f32 %v2586, 0.0
      %v2715 = vmax.f32 %v2587, 0.0
      %v2716 = vmax.f32 %v2588, 0.0
      %v2717 = vmax.f32 %v2589, 0.0
      %v2718 = vmax.f32 %v2590, 0.0
      %v2719 = vmax.f32 %v2591, 0.0
      %v2720 = vmax.f32 %v2592, 0.0
      %v2721 = vmax.f32 %v2593, 0.0
      %v2722 = vmax.f32 %v2594, 0.0
      %v2723 = vmax.f32 %v2595, 0.0
      %v2724 = vmax.f32 %v2596, 0.0
      %v2725 = vmax.f32 %v2597, 0.0
      %v2726 = vmax.f32 %v2598, 0.0
      %v2727 = vmax.f32 %v2599, 0.0
      %v2728 = vmax.f32 %v2600, 0.0
      %v2729 = vmax.f32 %v2601, 0.0
      %v2730 = vmax.f32 %v2602, 0.0
      %v2731 = vmax.f32 %v2603, 0.0
      %v2732 = vmax.f32 %v2604, 0.0
      %v2733 = vmax.f32 %v2605, 0.0
      %v2734 = vmax.f32 %v2606, 0.0
      %v2735 = vmax.f32 %v2607, 0.0
      %v2736 = vmax.f32 %v2608, 0.0
      %v2737 = vmax.f32 %v2609, 0.0
      %v2738 = vmax.f32 %v2610, 0.0
      %v2739 = vmax.f32 %v2611, 0.0
      %v2740 = vmax.f32 %v2612, 0.0
      %v2741 = vmax.f32 %v2613, 0.0
      %v2742 = vmax.f32 %v2614, 0.0
      %v2743 = vmax.f32 %v2615, 0.0
      %v2744 = vmax.f32 %v2616, 0.0
      %v2745 = vmax.f32 %v2617, 0.0
      %v2746 = vmax.f32 %v2618, 0.0
      %v2747 = vmax.f32 %v2619, 0.0
      %v2748 = vmax.f32 %v2620, 0.0
      %v2749 = vmax.f32 %v2621, 0.0
      %v2750 = vmax.f32 %v2622, 0.0
      %v2751 = vmax.f32 %v2623, 0.0
      %v2752 = vmax.f32 %v2624, 0.0
      %v2753 = vmax.f32 %v2625, 0.0
      %v2754 = vmax.f32 %v2626, 0.0
      %v2755 = vmax.f32 %v2627, 0.0
      %v2756 = vmax.f32 %v2628, 0.0
      %v2757 = vmax.f32 %v2629, 0.0
      %v2758 = vmax.f32 %v2630, 0.0
      %v2759 = vmax.f32 %v2631, 0.0
      %v2760 = vmax.f32 %v2632, 0.0
      %v2761 = vmax.f32 %v2633, 0.0
      %v2762 = vmax.f32 %v2634, 0.0
      %v2763 = vmax.f32 %v2635, 0.0
      %v2764 = vmax.f32 %v2636, 0.0
      %v2765 = vmax.f32 %v2637, 0.0
      %v2766 = vmax.f32 %v2638, 0.0
      %v2767 = vmax.f32 %v2639, 0.0
      %v2768 = vmax.f32 %v2640, 0.0
      %v2769 = vmax.f32 %v2641, 0.0
      %v2770 = vmax.f32 %v2642, 0.0
      %v2771 = vmax.f32 %v2643, 0.0
      %v2772 = vmax.f32 %v2644, 0.0
      %v2773 = vmax.f32 %v2645, 0.0
      %v2774 = vmax.f32 %v2646, 0.0
      %v2775 = vmax.f32 %v2647, 0.0
      %v2776 = vmax.f32 %v2648, 0.0
      %v2777 = vmax.f32 %v2649, 0.0
      %v2778 = vmax.f32 %v2650, 0.0
      %v2779 = vmax.f32 %v2651, 0.0
      %v2780 = vmax.f32 %v2652, 0.0
      %v2781 = vmax.f32 %v2653, 0.0
      %v2782 = vmax.f32 %v2654, 0.0
      %v2783 = vmax.f32 %v2655, 0.0
      %v2784 = vmax.f32 %v2656, 0.0
      %v2785 = vmax.f32 %v2657, 0.0
      %v2786 = vmax.f32 %v2658, 0.0
      %v2787 = vmax.f32 %v2659, 0.0
      %v2788 = vmax.f32 %v2660, 0.0
      %v2789 = vmax.f32 %v2661, 0.0
      %v2790 = vmax.f32 %v2662, 0.0
      %v2791 = vmax.f32 %v2663, 0.0
      %v2792 = vmax.f32 %v2664, 0.0
      %v2793 = vmax.f32 %v2665, 0.0
      %v2794 = vmax.f32 %v2666, 0.0
      %v2795 = vmax.f32 %v2667, 0.0
      %v2796 = vmax.f32 %v2668, 0.0
      %v2797 = vmax.f32 %v2669, 0.0
      %v2798 = vmax.f32 %v2670, 0.0
      %v2799 = vmax.f32 %v2671, 0.0
      %v2800 = vmax.f32 %v2672, 0.0
      %v2801 = vmax.f32 %v2673, 0.0
      %v2802 = vmax.f32 %v2674, 0.0
      %v2803 = vmax.f32 %v2675, 0.0
      %v2804 = vmax.f32 %v2676, 0.0
      %v2805 = vmax.f32 %v2677, 0.0
      %v2806 = vmax.f32 %v2678, 0.0
      %v2807 = vmax.f32 %v2679, 0.0
      %v2808 = vmax.f32 %v2680, 0.0
      %v2809 = vmax.f32 %v2681, 0.0
      %v2810 = vmax.f32 %v2682, 0.0
      %v2811 = vmax.f32 %v2683, 0.0
      %v2812 = vmax.f32 %v2684, 0.0
      %v2813 = vmax.f32 %v2685, 0.0
      %v2814 = vmax.f32 %v2686, 0.0
      %v2815 = vmax.f32 %v2687, 0.0
      %v2816 = vmax.f32 %v2688, 0.0
      %v2817 = vmax.f32 %v2689, 0.0
      %v2818 = vmax.f32 %v2690, 0.0
      %v2819 = vmax.f32 %v2691, 0.0
      %v2820 = vmax.f32 %v2692, 0.0
      %v2821 = vmax.f32 %v2693, 0.0
      %v2822 = vmax.f32 %v2694, 0.0
      %v2823 = vmax.f32 %v2695, 0.0
      %v2824 = vmax.f32 %v2696, 0.0
      %v2825 = vmax.f32 %v2697, 0.0
      %v2826 = vmax.f32 %v2698, 0.0
      %v2827 = vmax.f32 %v2699, 0.0
      %v2828 = vmax.f32 %v2700, 0.0
      %v2829 = vmax.f32 %v2701, 0.0
      %v2830 = vmax.f32 %v2702, 0.0
      %v2831 = vmax.f32 %v2703, 0.0
      %v2832 = vmax.f32 %v2704, 0.0
      %v2833 = vmax.f32 %v2705, 0.0
      %v2834 = vmax.f32 %v2706, 0.0
      %v2835 = vmax.f32 %v2707, 0.0
      %v2836 = vmax.f32 %v2708, 0.0
      %v2837 = vmax.f32 %v2709, 0.0
      %v2838 = vmax.f32 %v2710, 0.0
      %v2839 = vmax.f32 %v2711, 0.0
      %v2840 = vpack.c.bf16 %v2713, %v2712
      %v2841 = vpack.c.bf16 %v2715, %v2714
      %v2842 = vpack.c.bf16 %v2717, %v2716
      %v2843 = vpack.c.bf16 %v2719, %v2718
      %v2844 = vpack.c.bf16 %v2721, %v2720
      %v2845 = vpack.c.bf16 %v2723, %v2722
      %v2846 = vpack.c.bf16 %v2725, %v2724
      %v2847 = vpack.c.bf16 %v2727, %v2726
      %v2848 = vpack.c.bf16 %v2729, %v2728
      %v2849 = vpack.c.bf16 %v2731, %v2730
      %v2850 = vpack.c.bf16 %v2733, %v2732
      %v2851 = vpack.c.bf16 %v2735, %v2734
      %v2852 = vpack.c.bf16 %v2737, %v2736
      %v2853 = vpack.c.bf16 %v2739, %v2738
      %v2854 = vpack.c.bf16 %v2741, %v2740
      %v2855 = vpack.c.bf16 %v2743, %v2742
      %v2856 = vpack.c.bf16 %v2745, %v2744
      %v2857 = vpack.c.bf16 %v2747, %v2746
      %v2858 = vpack.c.bf16 %v2749, %v2748
      %v2859 = vpack.c.bf16 %v2751, %v2750
      %v2860 = vpack.c.bf16 %v2753, %v2752
      %v2861 = vpack.c.bf16 %v2755, %v2754
      %v2862 = vpack.c.bf16 %v2757, %v2756
      %v2863 = vpack.c.bf16 %v2759, %v2758
      %v2864 = vpack.c.bf16 %v2761, %v2760
      %v2865 = vpack.c.bf16 %v2763, %v2762
      %v2866 = vpack.c.bf16 %v2765, %v2764
      %v2867 = vpack.c.bf16 %v2767, %v2766
      %v2868 = vpack.c.bf16 %v2769, %v2768
      %v2869 = vpack.c.bf16 %v2771, %v2770
      %v2870 = vpack.c.bf16 %v2773, %v2772
      %v2871 = vpack.c.bf16 %v2775, %v2774
      %v2872 = vpack.c.bf16 %v2777, %v2776
      %v2873 = vpack.c.bf16 %v2779, %v2778
      %v2874 = vpack.c.bf16 %v2781, %v2780
      %v2875 = vpack.c.bf16 %v2783, %v2782
      %v2876 = vpack.c.bf16 %v2785, %v2784
      %v2877 = vpack.c.bf16 %v2787, %v2786
      %v2878 = vpack.c.bf16 %v2789, %v2788
      %v2879 = vpack.c.bf16 %v2791, %v2790
      %v2880 = vpack.c.bf16 %v2793, %v2792
      %v2881 = vpack.c.bf16 %v2795, %v2794
      %v2882 = vpack.c.bf16 %v2797, %v2796
      %v2883 = vpack.c.bf16 %v2799, %v2798
      %v2884 = vpack.c.bf16 %v2801, %v2800
      %v2885 = vpack.c.bf16 %v2803, %v2802
      %v2886 = vpack.c.bf16 %v2805, %v2804
      %v2887 = vpack.c.bf16 %v2807, %v2806
      %v2888 = vpack.c.bf16 %v2809, %v2808
      %v2889 = vpack.c.bf16 %v2811, %v2810
      %v2890 = vpack.c.bf16 %v2813, %v2812
      %v2891 = vpack.c.bf16 %v2815, %v2814
      %v2892 = vpack.c.bf16 %v2817, %v2816
      %v2893 = vpack.c.bf16 %v2819, %v2818
      %v2894 = vpack.c.bf16 %v2821, %v2820
      %v2895 = vpack.c.bf16 %v2823, %v2822
      %v2896 = vpack.c.bf16 %v2825, %v2824
      %v2897 = vpack.c.bf16 %v2827, %v2826
      %v2898 = vpack.c.bf16 %v2829, %v2828
      %v2899 = vpack.c.bf16 %v2831, %v2830
      %v2900 = vpack.c.bf16 %v2833, %v2832
      %v2901 = vpack.c.bf16 %v2835, %v2834
      %v2902 = vpack.c.bf16 %v2837, %v2836
      %v2903 = vpack.c.bf16 %v2839, %v2838
      %v2904 = vld [vmem:[%s3] sm:$0xf]
      %v2905 = vld [vmem:[%s3 + $0x4] sm:$0xf]
      %v2906 = vld [vmem:[%s3 + $0x8] sm:$0xf]
      %v2907 = vld [vmem:[%s3 + $0xc] sm:$0xf]
      %v2908 = vld [vmem:[%s3 + $0x10] sm:$0xf]
      %v2909 = vld [vmem:[%s3 + $0x14] sm:$0xf]
      %v2910 = vld [vmem:[%s3 + $0x18] sm:$0xf]
      %v2911 = vld [vmem:[%s3 + $0x1c] sm:$0xf]
      %v2912 = vld [vmem:[%s4] sm:$0x1]
      %v2914 = vlaneseq
      %v2915 = vshrl.u32 %v2914, 7
      %v2916 = vsub.s32 0, %v2915
      %v2917 = vrot.slane %v2912, %v2916
      %v2927 = vunpack.c.l.b16 %v2904
      %v2928 = vunpack.c.l.b16 %v2905
      %v2929 = vunpack.c.l.b16 %v2906
      %v2930 = vunpack.c.l.b16 %v2907
      %v2931 = vunpack.c.l.b16 %v2908
      %v2932 = vunpack.c.l.b16 %v2909
      %v2933 = vunpack.c.l.b16 %v2910
      %v2934 = vunpack.c.l.b16 %v2911
      %v2935 = vpack.c.b16 %v2928, %v2927
      %v2936 = vpack.c.b16 %v2930, %v2929
      %v2937 = vpack.c.b16 %v2932, %v2931
      %v2938 = vpack.c.b16 %v2934, %v2933
      %vm2943 = vcmask 523264
      %v2945 = vsel %vm2943, %v2840, 0
      %v2948 = vsel %vm2943, %v2841, 0
      %v2951 = vsel %vm2943, %v2842, 0
      %v2954 = vsel %vm2943, %v2843, 0
      %v2957 = vsel %vm2943, %v2844, 0
      %v2960 = vsel %vm2943, %v2845, 0
      %v2963 = vsel %vm2943, %v2846, 0
      %v2966 = vsel %vm2943, %v2847, 0
      %v2969 = vsel %vm2943, %v2848, 0
      %v2972 = vsel %vm2943, %v2849, 0
      %v2975 = vsel %vm2943, %v2850, 0
      %v2978 = vsel %vm2943, %v2851, 0
      %v2981 = vsel %vm2943, %v2852, 0
      %v2984 = vsel %vm2943, %v2853, 0
      %v2987 = vsel %vm2943, %v2854, 0
      %v2990 = vsel %vm2943, %v2855, 0
      %v2993 = vsel %vm2943, %v2856, 0
      %v2996 = vsel %vm2943, %v2857, 0
      %v2999 = vsel %vm2943, %v2858, 0
      %v3002 = vsel %vm2943, %v2859, 0
      %v3005 = vsel %vm2943, %v2860, 0
      %v3008 = vsel %vm2943, %v2861, 0
      %v3011 = vsel %vm2943, %v2862, 0
      %v3014 = vsel %vm2943, %v2863, 0
      %v3017 = vsel %vm2943, %v2864, 0
      %v3020 = vsel %vm2943, %v2865, 0
      %v3023 = vsel %vm2943, %v2866, 0
      %v3026 = vsel %vm2943, %v2867, 0
      %v3029 = vsel %vm2943, %v2868, 0
      %v3032 = vsel %vm2943, %v2869, 0
      %v3035 = vsel %vm2943, %v2870, 0
      %v3038 = vsel %vm2943, %v2871, 0
      %v3041 = vsel %vm2943, %v2872, 0
      %v3044 = vsel %vm2943, %v2873, 0
      %v3047 = vsel %vm2943, %v2874, 0
      %v3050 = vsel %vm2943, %v2875, 0
      %v3053 = vsel %vm2943, %v2876, 0
      %v3056 = vsel %vm2943, %v2877, 0
      %v3059 = vsel %vm2943, %v2878, 0
      %v3062 = vsel %vm2943, %v2879, 0
      %v3065 = vsel %vm2943, %v2880, 0
      %v3068 = vsel %vm2943, %v2881, 0
      %v3071 = vsel %vm2943, %v2882, 0
      %v3074 = vsel %vm2943, %v2883, 0
      %v3077 = vsel %vm2943, %v2884, 0
      %v3080 = vsel %vm2943, %v2885, 0
      %v3083 = vsel %vm2943, %v2886, 0
      %v3086 = vsel %vm2943, %v2887, 0
      %v3089 = vsel %vm2943, %v2888, 0
      %v3092 = vsel %vm2943, %v2889, 0
      %v3095 = vsel %vm2943, %v2890, 0
      %v3098 = vsel %vm2943, %v2891, 0
      %v3101 = vsel %vm2943, %v2892, 0
      %v3104 = vsel %vm2943, %v2893, 0
      %v3107 = vsel %vm2943, %v2894, 0
      %v3110 = vsel %vm2943, %v2895, 0
      %v3113 = vsel %vm2943, %v2896, 0
      %v3116 = vsel %vm2943, %v2897, 0
      %v3119 = vsel %vm2943, %v2898, 0
      %v3122 = vsel %vm2943, %v2899, 0
      %v3125 = vsel %vm2943, %v2900, 0
      %v3128 = vsel %vm2943, %v2901, 0
      %v3131 = vsel %vm2943, %v2902, 0
      %v3134 = vsel %vm2943, %v2903, 0
      %3136 = vmatprep.subr.bf16.mxu0 0
      %3137 = vmatpush1.bf16.msra.mxu0 0
      %3138 = vmatprep.subr.bf16.mxu0 0
      %3139 = vmatpush1.bf16.msra.mxu0 0
      %3140 = vmatprep.subr.bf16.mxu0 0
      %3141 = vmatpush1.bf16.msra.mxu0 0
      %3142 = vmatprep.subr.bf16.mxu0 0
      %3143 = vmatpush1.bf16.msra.mxu0 0
      %3144 = vmatprep.subr.bf16.mxu0 0
      %3145 = vmatpush1.bf16.msra.mxu0 %v2938
      %3146 = vmatprep.subr.bf16.mxu0 0
      %3147 = vmatpush1.bf16.msra.mxu0 %v2937
      %3148 = vmatprep.subr.bf16.mxu0 0
      %3149 = vmatpush1.bf16.msra.mxu0 %v2936
      %3150 = vmatprep.subr.bf16.mxu0 0
      %3151 = vmatpush1.bf16.msra.mxu0 %v2935
      %3152 = vmatprep.subr.bf16.mxu0 0
      %3153 = vmatpush2.bf16.msra.mxu0 0
      %3154 = vmatprep.subr.bf16.mxu0 0
      %3155 = vmatpush2.bf16.msra.mxu0 0
      %3156 = vmatprep.subr.bf16.mxu0 0
      %3157 = vmatpush2.bf16.msra.mxu0 0
      %3158 = vmatprep.subr.bf16.mxu0 0
      %3159 = vmatpush2.bf16.msra.mxu0 0
      %3160 = vmatprep.subr.bf16.mxu0 0
      %3161 = vmatpush2.bf16.msra.mxu0 0
      %3162 = vmatprep.subr.bf16.mxu0 0
      %3163 = vmatpush2.bf16.msra.mxu0 0
      %3164 = vmatprep.subr.bf16.mxu0 0
      %3165 = vmatpush2.bf16.msra.mxu0 0
      %3166 = vmatprep.subr.bf16.mxu0 0
      %3167 = vmatpush2.bf16.msra.mxu0 0
      %3168 = vmatprep.mubr.bf16.mxu0 0
      %3169 = vmatmul.mubr.bf16.gmra.mxu0 %v2945
      %v3170 = vpop.f32.mrf.mxu0
      %v3171 = vadd.f32 %v2917, %v3170
      %v3172 = vpop.f32.mrf.mxu0
      %v3173 = vpop.f32.mrf.mxu0
      %v3174 = vadd.f32 %v2917, %v3173
      %v3175 = vpop.f32.mrf.mxu0
      %3176 = vmatprep.mubr.bf16.mxu0 0
      %3177 = vmatmul.mubr.bf16.gmra.mxu0 %v2948
      %v3178 = vpop.f32.mrf.mxu0
      %v3179 = vadd.f32 %v2917, %v3178
      %v3180 = vpop.f32.mrf.mxu0
      %v3181 = vpop.f32.mrf.mxu0
      %v3182 = vadd.f32 %v2917, %v3181
      %v3183 = vpop.f32.mrf.mxu0
      %3184 = vmatprep.mubr.bf16.mxu0 0
      %3185 = vmatmul.mubr.bf16.gmra.mxu0 %v2951
      %v3186 = vpop.f32.mrf.mxu0
      %v3187 = vadd.f32 %v2917, %v3186
      %v3188 = vpop.f32.mrf.mxu0
      %v3189 = vpop.f32.mrf.mxu0
      %v3190 = vadd.f32 %v2917, %v3189
      %v3191 = vpop.f32.mrf.mxu0
      %3192 = vmatprep.mubr.bf16.mxu0 0
      %3193 = vmatmul.mubr.bf16.gmra.mxu0 %v2954
      %v3194 = vpop.f32.mrf.mxu0
      %v3195 = vadd.f32 %v2917, %v3194
      %v3196 = vpop.f32.mrf.mxu0
      %v3197 = vpop.f32.mrf.mxu0
      %v3198 = vadd.f32 %v2917, %v3197
      %v3199 = vpop.f32.mrf.mxu0
      %3200 = vmatprep.mubr.bf16.mxu0 0
      %3201 = vmatmul.mubr.bf16.gmra.mxu0 %v2957
      %v3202 = vpop.f32.mrf.mxu0
      %v3203 = vadd.f32 %v2917, %v3202
      %v3204 = vpop.f32.mrf.mxu0
      %v3205 = vpop.f32.mrf.mxu0
      %v3206 = vadd.f32 %v2917, %v3205
      %v3207 = vpop.f32.mrf.mxu0
      %3208 = vmatprep.mubr.bf16.mxu0 0
      %3209 = vmatmul.mubr.bf16.gmra.mxu0 %v2960
      %v3210 = vpop.f32.mrf.mxu0
      %v3211 = vadd.f32 %v2917, %v3210
      %v3212 = vpop.f32.mrf.mxu0
      %v3213 = vpop.f32.mrf.mxu0
      %v3214 = vadd.f32 %v2917, %v3213
      %v3215 = vpop.f32.mrf.mxu0
      %3216 = vmatprep.mubr.bf16.mxu0 0
      %3217 = vmatmul.mubr.bf16.gmra.mxu0 %v2963
      %v3218 = vpop.f32.mrf.mxu0
      %v3219 = vadd.f32 %v2917, %v3218
      %v3220 = vpop.f32.mrf.mxu0
      %v3221 = vpop.f32.mrf.mxu0
      %v3222 = vadd.f32 %v2917, %v3221
      %v3223 = vpop.f32.mrf.mxu0
      %3224 = vmatprep.mubr.bf16.mxu0 0
      %3225 = vmatmul.mubr.bf16.gmra.mxu0 %v2966
      %v3226 = vpop.f32.mrf.mxu0
      %v3227 = vadd.f32 %v2917, %v3226
      %v3228 = vpop.f32.mrf.mxu0
      %v3229 = vpop.f32.mrf.mxu0
      %v3230 = vadd.f32 %v2917, %v3229
      %v3231 = vpop.f32.mrf.mxu0
      %3232 = vmatprep.mubr.bf16.mxu0 0
      %3233 = vmatmul.mubr.bf16.gmra.mxu0 %v2969
      %v3234 = vpop.f32.mrf.mxu0
      %v3235 = vadd.f32 %v2917, %v3234
      %v3236 = vpop.f32.mrf.mxu0
      %v3237 = vpop.f32.mrf.mxu0
      %v3238 = vadd.f32 %v2917, %v3237
      %v3239 = vpop.f32.mrf.mxu0
      %3240 = vmatprep.mubr.bf16.mxu0 0
      %3241 = vmatmul.mubr.bf16.gmra.mxu0 %v2972
      %v3242 = vpop.f32.mrf.mxu0
      %v3243 = vadd.f32 %v2917, %v3242
      %v3244 = vpop.f32.mrf.mxu0
      %v3245 = vpop.f32.mrf.mxu0
      %v3246 = vadd.f32 %v2917, %v3245
      %v3247 = vpop.f32.mrf.mxu0
      %3248 = vmatprep.mubr.bf16.mxu0 0
      %3249 = vmatmul.mubr.bf16.gmra.mxu0 %v2975
      %v3250 = vpop.f32.mrf.mxu0
      %v3251 = vadd.f32 %v2917, %v3250
      %v3252 = vpop.f32.mrf.mxu0
      %v3253 = vpop.f32.mrf.mxu0
      %v3254 = vadd.f32 %v2917, %v3253
      %v3255 = vpop.f32.mrf.mxu0
      %3256 = vmatprep.mubr.bf16.mxu0 0
      %3257 = vmatmul.mubr.bf16.gmra.mxu0 %v2978
      %v3258 = vpop.f32.mrf.mxu0
      %v3259 = vadd.f32 %v2917, %v3258
      %v3260 = vpop.f32.mrf.mxu0
      %v3261 = vpop.f32.mrf.mxu0
      %v3262 = vadd.f32 %v2917, %v3261
      %v3263 = vpop.f32.mrf.mxu0
      %3264 = vmatprep.mubr.bf16.mxu0 0
      %3265 = vmatmul.mubr.bf16.gmra.mxu0 %v2981
      %v3266 = vpop.f32.mrf.mxu0
      %v3267 = vadd.f32 %v2917, %v3266
      %v3268 = vpop.f32.mrf.mxu0
      %v3269 = vpop.f32.mrf.mxu0
      %v3270 = vadd.f32 %v2917, %v3269
      %v3271 = vpop.f32.mrf.mxu0
      %3272 = vmatprep.mubr.bf16.mxu0 0
      %3273 = vmatmul.mubr.bf16.gmra.mxu0 %v2984
      %v3274 = vpop.f32.mrf.mxu0
      %v3275 = vadd.f32 %v2917, %v3274
      %v3276 = vpop.f32.mrf.mxu0
      %v3277 = vpop.f32.mrf.mxu0
      %v3278 = vadd.f32 %v2917, %v3277
      %v3279 = vpop.f32.mrf.mxu0
      %3280 = vmatprep.mubr.bf16.mxu0 0
      %3281 = vmatmul.mubr.bf16.gmra.mxu0 %v2987
      %v3282 = vpop.f32.mrf.mxu0
      %v3283 = vadd.f32 %v2917, %v3282
      %v3284 = vpop.f32.mrf.mxu0
      %v3285 = vpop.f32.mrf.mxu0
      %v3286 = vadd.f32 %v2917, %v3285
      %v3287 = vpop.f32.mrf.mxu0
      %3288 = vmatprep.mubr.bf16.mxu0 0
      %3289 = vmatmul.mubr.bf16.gmra.mxu0 %v2990
      %v3290 = vpop.f32.mrf.mxu0
      %v3291 = vadd.f32 %v2917, %v3290
      %v3292 = vpop.f32.mrf.mxu0
      %v3293 = vpop.f32.mrf.mxu0
      %v3294 = vadd.f32 %v2917, %v3293
      %v3295 = vpop.f32.mrf.mxu0
      %3296 = vmatprep.mubr.bf16.mxu0 0
      %3297 = vmatmul.mubr.bf16.gmra.mxu0 %v2993
      %v3298 = vpop.f32.mrf.mxu0
      %v3299 = vadd.f32 %v2917, %v3298
      %v3300 = vpop.f32.mrf.mxu0
      %v3301 = vpop.f32.mrf.mxu0
      %v3302 = vadd.f32 %v2917, %v3301
      %v3303 = vpop.f32.mrf.mxu0
      %3304 = vmatprep.mubr.bf16.mxu0 0
      %3305 = vmatmul.mubr.bf16.gmra.mxu0 %v2996
      %v3306 = vpop.f32.mrf.mxu0
      %v3307 = vadd.f32 %v2917, %v3306
      %v3308 = vpop.f32.mrf.mxu0
      %v3309 = vpop.f32.mrf.mxu0
      %v3310 = vadd.f32 %v2917, %v3309
      %v3311 = vpop.f32.mrf.mxu0
      %3312 = vmatprep.mubr.bf16.mxu0 0
      %3313 = vmatmul.mubr.bf16.gmra.mxu0 %v2999
      %v3314 = vpop.f32.mrf.mxu0
      %v3315 = vadd.f32 %v2917, %v3314
      %v3316 = vpop.f32.mrf.mxu0
      %v3317 = vpop.f32.mrf.mxu0
      %v3318 = vadd.f32 %v2917, %v3317
      %v3319 = vpop.f32.mrf.mxu0
      %3320 = vmatprep.mubr.bf16.mxu0 0
      %3321 = vmatmul.mubr.bf16.gmra.mxu0 %v3002
      %v3322 = vpop.f32.mrf.mxu0
      %v3323 = vadd.f32 %v2917, %v3322
      %v3324 = vpop.f32.mrf.mxu0
      %v3325 = vpop.f32.mrf.mxu0
      %v3326 = vadd.f32 %v2917, %v3325
      %v3327 = vpop.f32.mrf.mxu0
      %3328 = vmatprep.mubr.bf16.mxu0 0
      %3329 = vmatmul.mubr.bf16.gmra.mxu0 %v3005
      %v3330 = vpop.f32.mrf.mxu0
      %v3331 = vadd.f32 %v2917, %v3330
      %v3332 = vpop.f32.mrf.mxu0
      %v3333 = vpop.f32.mrf.mxu0
      %v3334 = vadd.f32 %v2917, %v3333
      %v3335 = vpop.f32.mrf.mxu0
      %3336 = vmatprep.mubr.bf16.mxu0 0
      %3337 = vmatmul.mubr.bf16.gmra.mxu0 %v3008
      %v3338 = vpop.f32.mrf.mxu0
      %v3339 = vadd.f32 %v2917, %v3338
      %v3340 = vpop.f32.mrf.mxu0
      %v3341 = vpop.f32.mrf.mxu0
      %v3342 = vadd.f32 %v2917, %v3341
      %v3343 = vpop.f32.mrf.mxu0
      %3344 = vmatprep.mubr.bf16.mxu0 0
      %3345 = vmatmul.mubr.bf16.gmra.mxu0 %v3011
      %v3346 = vpop.f32.mrf.mxu0
      %v3347 = vadd.f32 %v2917, %v3346
      %v3348 = vpop.f32.mrf.mxu0
      %v3349 = vpop.f32.mrf.mxu0
      %v3350 = vadd.f32 %v2917, %v3349
      %v3351 = vpop.f32.mrf.mxu0
      %3352 = vmatprep.mubr.bf16.mxu0 0
      %3353 = vmatmul.mubr.bf16.gmra.mxu0 %v3014
      %v3354 = vpop.f32.mrf.mxu0
      %v3355 = vadd.f32 %v2917, %v3354
      %v3356 = vpop.f32.mrf.mxu0
      %v3357 = vpop.f32.mrf.mxu0
      %v3358 = vadd.f32 %v2917, %v3357
      %v3359 = vpop.f32.mrf.mxu0
      %3360 = vmatprep.mubr.bf16.mxu0 0
      %3361 = vmatmul.mubr.bf16.gmra.mxu0 %v3017
      %v3362 = vpop.f32.mrf.mxu0
      %v3363 = vadd.f32 %v2917, %v3362
      %v3364 = vpop.f32.mrf.mxu0
      %v3365 = vpop.f32.mrf.mxu0
      %v3366 = vadd.f32 %v2917, %v3365
      %v3367 = vpop.f32.mrf.mxu0
      %3368 = vmatprep.mubr.bf16.mxu0 0
      %3369 = vmatmul.mubr.bf16.gmra.mxu0 %v3020
      %v3370 = vpop.f32.mrf.mxu0
      %v3371 = vadd.f32 %v2917, %v3370
      %v3372 = vpop.f32.mrf.mxu0
      %v3373 = vpop.f32.mrf.mxu0
      %v3374 = vadd.f32 %v2917, %v3373
      %v3375 = vpop.f32.mrf.mxu0
      %3376 = vmatprep.mubr.bf16.mxu0 0
      %3377 = vmatmul.mubr.bf16.gmra.mxu0 %v3023
      %v3378 = vpop.f32.mrf.mxu0
      %v3379 = vadd.f32 %v2917, %v3378
      %v3380 = vpop.f32.mrf.mxu0
      %v3381 = vpop.f32.mrf.mxu0
      %v3382 = vadd.f32 %v2917, %v3381
      %v3383 = vpop.f32.mrf.mxu0
      %3384 = vmatprep.mubr.bf16.mxu0 0
      %3385 = vmatmul.mubr.bf16.gmra.mxu0 %v3026
      %v3386 = vpop.f32.mrf.mxu0
      %v3387 = vadd.f32 %v2917, %v3386
      %v3388 = vpop.f32.mrf.mxu0
      %v3389 = vpop.f32.mrf.mxu0
      %v3390 = vadd.f32 %v2917, %v3389
      %v3391 = vpop.f32.mrf.mxu0
      %3392 = vmatprep.mubr.bf16.mxu0 0
      %3393 = vmatmul.mubr.bf16.gmra.mxu0 %v3029
      %v3394 = vpop.f32.mrf.mxu0
      %v3395 = vadd.f32 %v2917, %v3394
      %v3396 = vpop.f32.mrf.mxu0
      %v3397 = vpop.f32.mrf.mxu0
      %v3398 = vadd.f32 %v2917, %v3397
      %v3399 = vpop.f32.mrf.mxu0
      %3400 = vmatprep.mubr.bf16.mxu0 0
      %3401 = vmatmul.mubr.bf16.gmra.mxu0 %v3032
      %v3402 = vpop.f32.mrf.mxu0
      %v3403 = vadd.f32 %v2917, %v3402
      %v3404 = vpop.f32.mrf.mxu0
      %v3405 = vpop.f32.mrf.mxu0
      %v3406 = vadd.f32 %v2917, %v3405
      %v3407 = vpop.f32.mrf.mxu0
      %3408 = vmatprep.mubr.bf16.mxu0 0
      %3409 = vmatmul.mubr.bf16.gmra.mxu0 %v3035
      %v3410 = vpop.f32.mrf.mxu0
      %v3411 = vadd.f32 %v2917, %v3410
      %v3412 = vpop.f32.mrf.mxu0
      %v3413 = vpop.f32.mrf.mxu0
      %v3414 = vadd.f32 %v2917, %v3413
      %v3415 = vpop.f32.mrf.mxu0
      %3416 = vmatprep.mubr.bf16.mxu0 0
      %3417 = vmatmul.mubr.bf16.gmra.mxu0 %v3038
      %v3418 = vpop.f32.mrf.mxu0
      %v3419 = vadd.f32 %v2917, %v3418
      %v3420 = vpop.f32.mrf.mxu0
      %v3421 = vpop.f32.mrf.mxu0
      %v3422 = vadd.f32 %v2917, %v3421
      %v3423 = vpop.f32.mrf.mxu0
      %3424 = vmatprep.mubr.bf16.mxu0 0
      %3425 = vmatmul.mubr.bf16.gmra.mxu0 %v3041
      %v3426 = vpop.f32.mrf.mxu0
      %v3427 = vadd.f32 %v2917, %v3426
      %v3428 = vpop.f32.mrf.mxu0
      %v3429 = vpop.f32.mrf.mxu0
      %v3430 = vadd.f32 %v2917, %v3429
      %v3431 = vpop.f32.mrf.mxu0
      %3432 = vmatprep.mubr.bf16.mxu0 0
      %3433 = vmatmul.mubr.bf16.gmra.mxu0 %v3044
      %v3434 = vpop.f32.mrf.mxu0
      %v3435 = vadd.f32 %v2917, %v3434
      %v3436 = vpop.f32.mrf.mxu0
      %v3437 = vpop.f32.mrf.mxu0
      %v3438 = vadd.f32 %v2917, %v3437
      %v3439 = vpop.f32.mrf.mxu0
      %3440 = vmatprep.mubr.bf16.mxu0 0
      %3441 = vmatmul.mubr.bf16.gmra.mxu0 %v3047
      %v3442 = vpop.f32.mrf.mxu0
      %v3443 = vadd.f32 %v2917, %v3442
      %v3444 = vpop.f32.mrf.mxu0
      %v3445 = vpop.f32.mrf.mxu0
      %v3446 = vadd.f32 %v2917, %v3445
      %v3447 = vpop.f32.mrf.mxu0
      %3448 = vmatprep.mubr.bf16.mxu0 0
      %3449 = vmatmul.mubr.bf16.gmra.mxu0 %v3050
      %v3450 = vpop.f32.mrf.mxu0
      %v3451 = vadd.f32 %v2917, %v3450
      %v3452 = vpop.f32.mrf.mxu0
      %v3453 = vpop.f32.mrf.mxu0
      %v3454 = vadd.f32 %v2917, %v3453
      %v3455 = vpop.f32.mrf.mxu0
      %3456 = vmatprep.mubr.bf16.mxu0 0
      %3457 = vmatmul.mubr.bf16.gmra.mxu0 %v3053
      %v3458 = vpop.f32.mrf.mxu0
      %v3459 = vadd.f32 %v2917, %v3458
      %v3460 = vpop.f32.mrf.mxu0
      %v3461 = vpop.f32.mrf.mxu0
      %v3462 = vadd.f32 %v2917, %v3461
      %v3463 = vpop.f32.mrf.mxu0
      %3464 = vmatprep.mubr.bf16.mxu0 0
      %3465 = vmatmul.mubr.bf16.gmra.mxu0 %v3056
      %v3466 = vpop.f32.mrf.mxu0
      %v3467 = vadd.f32 %v2917, %v3466
      %v3468 = vpop.f32.mrf.mxu0
      %v3469 = vpop.f32.mrf.mxu0
      %v3470 = vadd.f32 %v2917, %v3469
      %v3471 = vpop.f32.mrf.mxu0
      %3472 = vmatprep.mubr.bf16.mxu0 0
      %3473 = vmatmul.mubr.bf16.gmra.mxu0 %v3059
      %v3474 = vpop.f32.mrf.mxu0
      %v3475 = vadd.f32 %v2917, %v3474
      %v3476 = vpop.f32.mrf.mxu0
      %v3477 = vpop.f32.mrf.mxu0
      %v3478 = vadd.f32 %v2917, %v3477
      %v3479 = vpop.f32.mrf.mxu0
      %3480 = vmatprep.mubr.bf16.mxu0 0
      %3481 = vmatmul.mubr.bf16.gmra.mxu0 %v3062
      %v3482 = vpop.f32.mrf.mxu0
      %v3483 = vadd.f32 %v2917, %v3482
      %v3484 = vpop.f32.mrf.mxu0
      %v3485 = vpop.f32.mrf.mxu0
      %v3486 = vadd.f32 %v2917, %v3485
      %v3487 = vpop.f32.mrf.mxu0
      %3488 = vmatprep.mubr.bf16.mxu0 0
      %3489 = vmatmul.mubr.bf16.gmra.mxu0 %v3065
      %v3490 = vpop.f32.mrf.mxu0
      %v3491 = vadd.f32 %v2917, %v3490
      %v3492 = vpop.f32.mrf.mxu0
      %v3493 = vpop.f32.mrf.mxu0
      %v3494 = vadd.f32 %v2917, %v3493
      %v3495 = vpop.f32.mrf.mxu0
      %3496 = vmatprep.mubr.bf16.mxu0 0
      %3497 = vmatmul.mubr.bf16.gmra.mxu0 %v3068
      %v3498 = vpop.f32.mrf.mxu0
      %v3499 = vadd.f32 %v2917, %v3498
      %v3500 = vpop.f32.mrf.mxu0
      %v3501 = vpop.f32.mrf.mxu0
      %v3502 = vadd.f32 %v2917, %v3501
      %v3503 = vpop.f32.mrf.mxu0
      %3504 = vmatprep.mubr.bf16.mxu0 0
      %3505 = vmatmul.mubr.bf16.gmra.mxu0 %v3071
      %v3506 = vpop.f32.mrf.mxu0
      %v3507 = vadd.f32 %v2917, %v3506
      %v3508 = vpop.f32.mrf.mxu0
      %v3509 = vpop.f32.mrf.mxu0
      %v3510 = vadd.f32 %v2917, %v3509
      %v3511 = vpop.f32.mrf.mxu0
      %3512 = vmatprep.mubr.bf16.mxu0 0
      %3513 = vmatmul.mubr.bf16.gmra.mxu0 %v3074
      %v3514 = vpop.f32.mrf.mxu0
      %v3515 = vadd.f32 %v2917, %v3514
      %v3516 = vpop.f32.mrf.mxu0
      %v3517 = vpop.f32.mrf.mxu0
      %v3518 = vadd.f32 %v2917, %v3517
      %v3519 = vpop.f32.mrf.mxu0
      %3520 = vmatprep.mubr.bf16.mxu0 0
      %3521 = vmatmul.mubr.bf16.gmra.mxu0 %v3077
      %v3522 = vpop.f32.mrf.mxu0
      %v3523 = vadd.f32 %v2917, %v3522
      %v3524 = vpop.f32.mrf.mxu0
      %v3525 = vpop.f32.mrf.mxu0
      %v3526 = vadd.f32 %v2917, %v3525
      %v3527 = vpop.f32.mrf.mxu0
      %3528 = vmatprep.mubr.bf16.mxu0 0
      %3529 = vmatmul.mubr.bf16.gmra.mxu0 %v3080
      %v3530 = vpop.f32.mrf.mxu0
      %v3531 = vadd.f32 %v2917, %v3530
      %v3532 = vpop.f32.mrf.mxu0
      %v3533 = vpop.f32.mrf.mxu0
      %v3534 = vadd.f32 %v2917, %v3533
      %v3535 = vpop.f32.mrf.mxu0
      %3536 = vmatprep.mubr.bf16.mxu0 0
      %3537 = vmatmul.mubr.bf16.gmra.mxu0 %v3083
      %v3538 = vpop.f32.mrf.mxu0
      %v3539 = vadd.f32 %v2917, %v3538
      %v3540 = vpop.f32.mrf.mxu0
      %v3541 = vpop.f32.mrf.mxu0
      %v3542 = vadd.f32 %v2917, %v3541
      %v3543 = vpop.f32.mrf.mxu0
      %3544 = vmatprep.mubr.bf16.mxu0 0
      %3545 = vmatmul.mubr.bf16.gmra.mxu0 %v3086
      %v3546 = vpop.f32.mrf.mxu0
      %v3547 = vadd.f32 %v2917, %v3546
      %v3548 = vpop.f32.mrf.mxu0
      %v3549 = vpop.f32.mrf.mxu0
      %v3550 = vadd.f32 %v2917, %v3549
      %v3551 = vpop.f32.mrf.mxu0
      %3552 = vmatprep.mubr.bf16.mxu0 0
      %3553 = vmatmul.mubr.bf16.gmra.mxu0 %v3089
      %v3554 = vpop.f32.mrf.mxu0
      %v3555 = vadd.f32 %v2917, %v3554
      %v3556 = vpop.f32.mrf.mxu0
      %v3557 = vpop.f32.mrf.mxu0
      %v3558 = vadd.f32 %v2917, %v3557
      %v3559 = vpop.f32.mrf.mxu0
      %3560 = vmatprep.mubr.bf16.mxu0 0
      %3561 = vmatmul.mubr.bf16.gmra.mxu0 %v3092
      %v3562 = vpop.f32.mrf.mxu0
      %v3563 = vadd.f32 %v2917, %v3562
      %v3564 = vpop.f32.mrf.mxu0
      %v3565 = vpop.f32.mrf.mxu0
      %v3566 = vadd.f32 %v2917, %v3565
      %v3567 = vpop.f32.mrf.mxu0
      %3568 = vmatprep.mubr.bf16.mxu0 0
      %3569 = vmatmul.mubr.bf16.gmra.mxu0 %v3095
      %v3570 = vpop.f32.mrf.mxu0
      %v3571 = vadd.f32 %v2917, %v3570
      %v3572 = vpop.f32.mrf.mxu0
      %v3573 = vpop.f32.mrf.mxu0
      %v3574 = vadd.f32 %v2917, %v3573
      %v3575 = vpop.f32.mrf.mxu0
      %3576 = vmatprep.mubr.bf16.mxu0 0
      %3577 = vmatmul.mubr.bf16.gmra.mxu0 %v3098
      %v3578 = vpop.f32.mrf.mxu0
      %v3579 = vadd.f32 %v2917, %v3578
      %v3580 = vpop.f32.mrf.mxu0
      %v3581 = vpop.f32.mrf.mxu0
      %v3582 = vadd.f32 %v2917, %v3581
      %v3583 = vpop.f32.mrf.mxu0
      %3584 = vmatprep.mubr.bf16.mxu0 0
      %3585 = vmatmul.mubr.bf16.gmra.mxu0 %v3101
      %v3586 = vpop.f32.mrf.mxu0
      %v3587 = vadd.f32 %v2917, %v3586
      %v3588 = vpop.f32.mrf.mxu0
      %v3589 = vpop.f32.mrf.mxu0
      %v3590 = vadd.f32 %v2917, %v3589
      %v3591 = vpop.f32.mrf.mxu0
      %3592 = vmatprep.mubr.bf16.mxu0 0
      %3593 = vmatmul.mubr.bf16.gmra.mxu0 %v3104
      %v3594 = vpop.f32.mrf.mxu0
      %v3595 = vadd.f32 %v2917, %v3594
      %v3596 = vpop.f32.mrf.mxu0
      %v3597 = vpop.f32.mrf.mxu0
      %v3598 = vadd.f32 %v2917, %v3597
      %v3599 = vpop.f32.mrf.mxu0
      %3600 = vmatprep.mubr.bf16.mxu0 0
      %3601 = vmatmul.mubr.bf16.gmra.mxu0 %v3107
      %v3602 = vpop.f32.mrf.mxu0
      %v3603 = vadd.f32 %v2917, %v3602
      %v3604 = vpop.f32.mrf.mxu0
      %v3605 = vpop.f32.mrf.mxu0
      %v3606 = vadd.f32 %v2917, %v3605
      %v3607 = vpop.f32.mrf.mxu0
      %3608 = vmatprep.mubr.bf16.mxu0 0
      %3609 = vmatmul.mubr.bf16.gmra.mxu0 %v3110
      %v3610 = vpop.f32.mrf.mxu0
      %v3611 = vadd.f32 %v2917, %v3610
      %v3612 = vpop.f32.mrf.mxu0
      %v3613 = vpop.f32.mrf.mxu0
      %v3614 = vadd.f32 %v2917, %v3613
      %v3615 = vpop.f32.mrf.mxu0
      %3616 = vmatprep.mubr.bf16.mxu0 0
      %3617 = vmatmul.mubr.bf16.gmra.mxu0 %v3113
      %v3618 = vpop.f32.mrf.mxu0
      %v3619 = vadd.f32 %v2917, %v3618
      %v3620 = vpop.f32.mrf.mxu0
      %v3621 = vpop.f32.mrf.mxu0
      %v3622 = vadd.f32 %v2917, %v3621
      %v3623 = vpop.f32.mrf.mxu0
      %3624 = vmatprep.mubr.bf16.mxu0 0
      %3625 = vmatmul.mubr.bf16.gmra.mxu0 %v3116
      %v3626 = vpop.f32.mrf.mxu0
      %v3627 = vadd.f32 %v2917, %v3626
      %v3628 = vpop.f32.mrf.mxu0
      %v3629 = vpop.f32.mrf.mxu0
      %v3630 = vadd.f32 %v2917, %v3629
      %v3631 = vpop.f32.mrf.mxu0
      %3632 = vmatprep.mubr.bf16.mxu0 0
      %3633 = vmatmul.mubr.bf16.gmra.mxu0 %v3119
      %v3634 = vpop.f32.mrf.mxu0
      %v3635 = vadd.f32 %v2917, %v3634
      %v3636 = vpop.f32.mrf.mxu0
      %v3637 = vpop.f32.mrf.mxu0
      %v3638 = vadd.f32 %v2917, %v3637
      %v3639 = vpop.f32.mrf.mxu0
      %3640 = vmatprep.mubr.bf16.mxu0 0
      %3641 = vmatmul.mubr.bf16.gmra.mxu0 %v3122
      %v3642 = vpop.f32.mrf.mxu0
      %v3643 = vadd.f32 %v2917, %v3642
      %v3644 = vpop.f32.mrf.mxu0
      %v3645 = vpop.f32.mrf.mxu0
      %v3646 = vadd.f32 %v2917, %v3645
      %v3647 = vpop.f32.mrf.mxu0
      %3648 = vmatprep.mubr.bf16.mxu0 0
      %3649 = vmatmul.mubr.bf16.gmra.mxu0 %v3125
      %v3650 = vpop.f32.mrf.mxu0
      %v3651 = vadd.f32 %v2917, %v3650
      %v3652 = vpop.f32.mrf.mxu0
      %v3653 = vpop.f32.mrf.mxu0
      %v3654 = vadd.f32 %v2917, %v3653
      %v3655 = vpop.f32.mrf.mxu0
      %3656 = vmatprep.mubr.bf16.mxu0 0
      %3657 = vmatmul.mubr.bf16.gmra.mxu0 %v3128
      %v3658 = vpop.f32.mrf.mxu0
      %v3659 = vadd.f32 %v2917, %v3658
      %v3660 = vpop.f32.mrf.mxu0
      %v3661 = vpop.f32.mrf.mxu0
      %v3662 = vadd.f32 %v2917, %v3661
      %v3663 = vpop.f32.mrf.mxu0
      %3664 = vmatprep.mubr.bf16.mxu0 0
      %3665 = vmatmul.mubr.bf16.gmra.mxu0 %v3131
      %v3666 = vpop.f32.mrf.mxu0
      %v3667 = vadd.f32 %v2917, %v3666
      %v3668 = vpop.f32.mrf.mxu0
      %v3669 = vpop.f32.mrf.mxu0
      %v3670 = vadd.f32 %v2917, %v3669
      %v3671 = vpop.f32.mrf.mxu0
      %3672 = vmatprep.mubr.bf16.mxu0 0
      %3673 = vmatmul.mubr.bf16.gmra.mxu0 %v3134
      %v3674 = vpop.f32.mrf.mxu0
      %v3675 = vadd.f32 %v2917, %v3674
      %v3676 = vpop.f32.mrf.mxu0
      %v3677 = vpop.f32.mrf.mxu0
      %v3678 = vadd.f32 %v2917, %v3677
      %v3679 = vpop.f32.mrf.mxu0
      %3680 = vdwg.mxu0
      %v3681 = vmax.f32 %v3171, 0.0
      %v3682 = vmax.f32 %v3174, 0.0
      %v3683 = vmax.f32 %v3179, 0.0
      %v3684 = vmax.f32 %v3182, 0.0
      %v3685 = vmax.f32 %v3187, 0.0
      %v3686 = vmax.f32 %v3190, 0.0
      %v3687 = vmax.f32 %v3195, 0.0
      %v3688 = vmax.f32 %v3198, 0.0
      %v3689 = vmax.f32 %v3203, 0.0
      %v3690 = vmax.f32 %v3206, 0.0
      %v3691 = vmax.f32 %v3211, 0.0
      %v3692 = vmax.f32 %v3214, 0.0
      %v3693 = vmax.f32 %v3219, 0.0
      %v3694 = vmax.f32 %v3222, 0.0
      %v3695 = vmax.f32 %v3227, 0.0
      %v3696 = vmax.f32 %v3230, 0.0
      %v3697 = vmax.f32 %v3235, 0.0
      %v3698 = vmax.f32 %v3238, 0.0
      %v3699 = vmax.f32 %v3243, 0.0
      %v3700 = vmax.f32 %v3246, 0.0
      %v3701 = vmax.f32 %v3251, 0.0
      %v3702 = vmax.f32 %v3254, 0.0
      %v3703 = vmax.f32 %v3259, 0.0
      %v3704 = vmax.f32 %v3262, 0.0
      %v3705 = vmax.f32 %v3267, 0.0
      %v3706 = vmax.f32 %v3270, 0.0
      %v3707 = vmax.f32 %v3275, 0.0
      %v3708 = vmax.f32 %v3278, 0.0
      %v3709 = vmax.f32 %v3283, 0.0
      %v3710 = vmax.f32 %v3286, 0.0
      %v3711 = vmax.f32 %v3291, 0.0
      %v3712 = vmax.f32 %v3294, 0.0
      %v3713 = vmax.f32 %v3299, 0.0
      %v3714 = vmax.f32 %v3302, 0.0
      %v3715 = vmax.f32 %v3307, 0.0
      %v3716 = vmax.f32 %v3310, 0.0
      %v3717 = vmax.f32 %v3315, 0.0
      %v3718 = vmax.f32 %v3318, 0.0
      %v3719 = vmax.f32 %v3323, 0.0
      %v3720 = vmax.f32 %v3326, 0.0
      %v3721 = vmax.f32 %v3331, 0.0
      %v3722 = vmax.f32 %v3334, 0.0
      %v3723 = vmax.f32 %v3339, 0.0
      %v3724 = vmax.f32 %v3342, 0.0
      %v3725 = vmax.f32 %v3347, 0.0
      %v3726 = vmax.f32 %v3350, 0.0
      %v3727 = vmax.f32 %v3355, 0.0
      %v3728 = vmax.f32 %v3358, 0.0
      %v3729 = vmax.f32 %v3363, 0.0
      %v3730 = vmax.f32 %v3366, 0.0
      %v3731 = vmax.f32 %v3371, 0.0
      %v3732 = vmax.f32 %v3374, 0.0
      %v3733 = vmax.f32 %v3379, 0.0
      %v3734 = vmax.f32 %v3382, 0.0
      %v3735 = vmax.f32 %v3387, 0.0
      %v3736 = vmax.f32 %v3390, 0.0
      %v3737 = vmax.f32 %v3395, 0.0
      %v3738 = vmax.f32 %v3398, 0.0
      %v3739 = vmax.f32 %v3403, 0.0
      %v3740 = vmax.f32 %v3406, 0.0
      %v3741 = vmax.f32 %v3411, 0.0
      %v3742 = vmax.f32 %v3414, 0.0
      %v3743 = vmax.f32 %v3419, 0.0
      %v3744 = vmax.f32 %v3422, 0.0
      %v3745 = vmax.f32 %v3427, 0.0
      %v3746 = vmax.f32 %v3430, 0.0
      %v3747 = vmax.f32 %v3435, 0.0
      %v3748 = vmax.f32 %v3438, 0.0
      %v3749 = vmax.f32 %v3443, 0.0
      %v3750 = vmax.f32 %v3446, 0.0
      %v3751 = vmax.f32 %v3451, 0.0
      %v3752 = vmax.f32 %v3454, 0.0
      %v3753 = vmax.f32 %v3459, 0.0
      %v3754 = vmax.f32 %v3462, 0.0
      %v3755 = vmax.f32 %v3467, 0.0
      %v3756 = vmax.f32 %v3470, 0.0
      %v3757 = vmax.f32 %v3475, 0.0
      %v3758 = vmax.f32 %v3478, 0.0
      %v3759 = vmax.f32 %v3483, 0.0
      %v3760 = vmax.f32 %v3486, 0.0
      %v3761 = vmax.f32 %v3491, 0.0
      %v3762 = vmax.f32 %v3494, 0.0
      %v3763 = vmax.f32 %v3499, 0.0
      %v3764 = vmax.f32 %v3502, 0.0
      %v3765 = vmax.f32 %v3507, 0.0
      %v3766 = vmax.f32 %v3510, 0.0
      %v3767 = vmax.f32 %v3515, 0.0
      %v3768 = vmax.f32 %v3518, 0.0
      %v3769 = vmax.f32 %v3523, 0.0
      %v3770 = vmax.f32 %v3526, 0.0
      %v3771 = vmax.f32 %v3531, 0.0
      %v3772 = vmax.f32 %v3534, 0.0
      %v3773 = vmax.f32 %v3539, 0.0
      %v3774 = vmax.f32 %v3542, 0.0
      %v3775 = vmax.f32 %v3547, 0.0
      %v3776 = vmax.f32 %v3550, 0.0
      %v3777 = vmax.f32 %v3555, 0.0
      %v3778 = vmax.f32 %v3558, 0.0
      %v3779 = vmax.f32 %v3563, 0.0
      %v3780 = vmax.f32 %v3566, 0.0
      %v3781 = vmax.f32 %v3571, 0.0
      %v3782 = vmax.f32 %v3574, 0.0
      %v3783 = vmax.f32 %v3579, 0.0
      %v3784 = vmax.f32 %v3582, 0.0
      %v3785 = vmax.f32 %v3587, 0.0
      %v3786 = vmax.f32 %v3590, 0.0
      %v3787 = vmax.f32 %v3595, 0.0
      %v3788 = vmax.f32 %v3598, 0.0
      %v3789 = vmax.f32 %v3603, 0.0
      %v3790 = vmax.f32 %v3606, 0.0
      %v3791 = vmax.f32 %v3611, 0.0
      %v3792 = vmax.f32 %v3614, 0.0
      %v3793 = vmax.f32 %v3619, 0.0
      %v3794 = vmax.f32 %v3622, 0.0
      %v3795 = vmax.f32 %v3627, 0.0
      %v3796 = vmax.f32 %v3630, 0.0
      %v3797 = vmax.f32 %v3635, 0.0
      %v3798 = vmax.f32 %v3638, 0.0
      %v3799 = vmax.f32 %v3643, 0.0
      %v3800 = vmax.f32 %v3646, 0.0
      %v3801 = vmax.f32 %v3651, 0.0
      %v3802 = vmax.f32 %v3654, 0.0
      %v3803 = vmax.f32 %v3659, 0.0
      %v3804 = vmax.f32 %v3662, 0.0
      %v3805 = vmax.f32 %v3667, 0.0
      %v3806 = vmax.f32 %v3670, 0.0
      %v3807 = vmax.f32 %v3675, 0.0
      %v3808 = vmax.f32 %v3678, 0.0
      %v3809 = vpack.c.bf16 %v3682, %v3681
      %v3810 = vpack.c.bf16 %v3684, %v3683
      %v3811 = vpack.c.bf16 %v3686, %v3685
      %v3812 = vpack.c.bf16 %v3688, %v3687
      %v3813 = vpack.c.bf16 %v3690, %v3689
      %v3814 = vpack.c.bf16 %v3692, %v3691
      %v3815 = vpack.c.bf16 %v3694, %v3693
      %v3816 = vpack.c.bf16 %v3696, %v3695
      %v3817 = vpack.c.bf16 %v3698, %v3697
      %v3818 = vpack.c.bf16 %v3700, %v3699
      %v3819 = vpack.c.bf16 %v3702, %v3701
      %v3820 = vpack.c.bf16 %v3704, %v3703
      %v3821 = vpack.c.bf16 %v3706, %v3705
      %v3822 = vpack.c.bf16 %v3708, %v3707
      %v3823 = vpack.c.bf16 %v3710, %v3709
      %v3824 = vpack.c.bf16 %v3712, %v3711
      %v3825 = vpack.c.bf16 %v3714, %v3713
      %v3826 = vpack.c.bf16 %v3716, %v3715
      %v3827 = vpack.c.bf16 %v3718, %v3717
      %v3828 = vpack.c.bf16 %v3720, %v3719
      %v3829 = vpack.c.bf16 %v3722, %v3721
      %v3830 = vpack.c.bf16 %v3724, %v3723
      %v3831 = vpack.c.bf16 %v3726, %v3725
      %v3832 = vpack.c.bf16 %v3728, %v3727
      %v3833 = vpack.c.bf16 %v3730, %v3729
      %v3834 = vpack.c.bf16 %v3732, %v3731
      %v3835 = vpack.c.bf16 %v3734, %v3733
      %v3836 = vpack.c.bf16 %v3736, %v3735
      %v3837 = vpack.c.bf16 %v3738, %v3737
      %v3838 = vpack.c.bf16 %v3740, %v3739
      %v3839 = vpack.c.bf16 %v3742, %v3741
      %v3840 = vpack.c.bf16 %v3744, %v3743
      %v3841 = vpack.c.bf16 %v3746, %v3745
      %v3842 = vpack.c.bf16 %v3748, %v3747
      %v3843 = vpack.c.bf16 %v3750, %v3749
      %v3844 = vpack.c.bf16 %v3752, %v3751
      %v3845 = vpack.c.bf16 %v3754, %v3753
      %v3846 = vpack.c.bf16 %v3756, %v3755
      %v3847 = vpack.c.bf16 %v3758, %v3757
      %v3848 = vpack.c.bf16 %v3760, %v3759
      %v3849 = vpack.c.bf16 %v3762, %v3761
      %v3850 = vpack.c.bf16 %v3764, %v3763
      %v3851 = vpack.c.bf16 %v3766, %v3765
      %v3852 = vpack.c.bf16 %v3768, %v3767
      %v3853 = vpack.c.bf16 %v3770, %v3769
      %v3854 = vpack.c.bf16 %v3772, %v3771
      %v3855 = vpack.c.bf16 %v3774, %v3773
      %v3856 = vpack.c.bf16 %v3776, %v3775
      %v3857 = vpack.c.bf16 %v3778, %v3777
      %v3858 = vpack.c.bf16 %v3780, %v3779
      %v3859 = vpack.c.bf16 %v3782, %v3781
      %v3860 = vpack.c.bf16 %v3784, %v3783
      %v3861 = vpack.c.bf16 %v3786, %v3785
      %v3862 = vpack.c.bf16 %v3788, %v3787
      %v3863 = vpack.c.bf16 %v3790, %v3789
      %v3864 = vpack.c.bf16 %v3792, %v3791
      %v3865 = vpack.c.bf16 %v3794, %v3793
      %v3866 = vpack.c.bf16 %v3796, %v3795
      %v3867 = vpack.c.bf16 %v3798, %v3797
      %v3868 = vpack.c.bf16 %v3800, %v3799
      %v3869 = vpack.c.bf16 %v3802, %v3801
      %v3870 = vpack.c.bf16 %v3804, %v3803
      %v3871 = vpack.c.bf16 %v3806, %v3805
      %v3872 = vpack.c.bf16 %v3808, %v3807
      %v3873 = vld [vmem:[%s5] sm:$0xf]
      %v3874 = vld [vmem:[%s5 + $0x4] sm:$0xf]
      %v3875 = vld [vmem:[%s5 + $0x8] sm:$0xf]
      %v3876 = vld [vmem:[%s5 + $0xc] sm:$0xf]
      %v3877 = vld [vmem:[%s5 + $0x10] sm:$0xf]
      %v3878 = vld [vmem:[%s5 + $0x14] sm:$0xf]
      %v3879 = vld [vmem:[%s5 + $0x18] sm:$0xf]
      %v3880 = vld [vmem:[%s5 + $0x1c] sm:$0xf]
      %v3881 = vld [vmem:[%s6] sm:$0x1]
      %v3883 = vlaneseq
      %v3884 = vshrl.u32 %v3883, 7
      %v3885 = vsub.s32 0, %v3884
      %v3886 = vrot.slane %v3881, %v3885
      %v3896 = vunpack.c.l.b16 %v3873
      %v3897 = vunpack.c.l.b16 %v3874
      %v3898 = vunpack.c.l.b16 %v3875
      %v3899 = vunpack.c.l.b16 %v3876
      %v3900 = vunpack.c.l.b16 %v3877
      %v3901 = vunpack.c.l.b16 %v3878
      %v3902 = vunpack.c.l.b16 %v3879
      %v3903 = vunpack.c.l.b16 %v3880
      %v3904 = vpack.c.b16 %v3897, %v3896
      %v3905 = vpack.c.b16 %v3899, %v3898
      %v3906 = vpack.c.b16 %v3901, %v3900
      %v3907 = vpack.c.b16 %v3903, %v3902
      %v3913 = vsel %vm2943, %v3809, 0
      %v3916 = vsel %vm2943, %v3810, 0
      %v3919 = vsel %vm2943, %v3811, 0
      %v3922 = vsel %vm2943, %v3812, 0
      %v3925 = vsel %vm2943, %v3813, 0
      %v3928 = vsel %vm2943, %v3814, 0
      %v3931 = vsel %vm2943, %v3815, 0
      %v3934 = vsel %vm2943, %v3816, 0
      %v3937 = vsel %vm2943, %v3817, 0
      %v3940 = vsel %vm2943, %v3818, 0
      %v3943 = vsel %vm2943, %v3819, 0
      %v3946 = vsel %vm2943, %v3820, 0
      %v3949 = vsel %vm2943, %v3821, 0
      %v3952 = vsel %vm2943, %v3822, 0
      %v3955 = vsel %vm2943, %v3823, 0
      %v3958 = vsel %vm2943, %v3824, 0
      %v3961 = vsel %vm2943, %v3825, 0
      %v3964 = vsel %vm2943, %v3826, 0
      %v3967 = vsel %vm2943, %v3827, 0
      %v3970 = vsel %vm2943, %v3828, 0
      %v3973 = vsel %vm2943, %v3829, 0
      %v3976 = vsel %vm2943, %v3830, 0
      %v3979 = vsel %vm2943, %v3831, 0
      %v3982 = vsel %vm2943, %v3832, 0
      %v3985 = vsel %vm2943, %v3833, 0
      %v3988 = vsel %vm2943, %v3834, 0
      %v3991 = vsel %vm2943, %v3835, 0
      %v3994 = vsel %vm2943, %v3836, 0
      %v3997 = vsel %vm2943, %v3837, 0
      %v4000 = vsel %vm2943, %v3838, 0
      %v4003 = vsel %vm2943, %v3839, 0
      %v4006 = vsel %vm2943, %v3840, 0
      %v4009 = vsel %vm2943, %v3841, 0
      %v4012 = vsel %vm2943, %v3842, 0
      %v4015 = vsel %vm2943, %v3843, 0
      %v4018 = vsel %vm2943, %v3844, 0
      %v4021 = vsel %vm2943, %v3845, 0
      %v4024 = vsel %vm2943, %v3846, 0
      %v4027 = vsel %vm2943, %v3847, 0
      %v4030 = vsel %vm2943, %v3848, 0
      %v4033 = vsel %vm2943, %v3849, 0
      %v4036 = vsel %vm2943, %v3850, 0
      %v4039 = vsel %vm2943, %v3851, 0
      %v4042 = vsel %vm2943, %v3852, 0
      %v4045 = vsel %vm2943, %v3853, 0
      %v4048 = vsel %vm2943, %v3854, 0
      %v4051 = vsel %vm2943, %v3855, 0
      %v4054 = vsel %vm2943, %v3856, 0
      %v4057 = vsel %vm2943, %v3857, 0
      %v4060 = vsel %vm2943, %v3858, 0
      %v4063 = vsel %vm2943, %v3859, 0
      %v4066 = vsel %vm2943, %v3860, 0
      %v4069 = vsel %vm2943, %v3861, 0
      %v4072 = vsel %vm2943, %v3862, 0
      %v4075 = vsel %vm2943, %v3863, 0
      %v4078 = vsel %vm2943, %v3864, 0
      %v4081 = vsel %vm2943, %v3865, 0
      %v4084 = vsel %vm2943, %v3866, 0
      %v4087 = vsel %vm2943, %v3867, 0
      %v4090 = vsel %vm2943, %v3868, 0
      %v4093 = vsel %vm2943, %v3869, 0
      %v4096 = vsel %vm2943, %v3870, 0
      %v4099 = vsel %vm2943, %v3871, 0
      %v4102 = vsel %vm2943, %v3872, 0
      %4104 = vmatprep.subr.bf16.mxu0 0
      %4105 = vmatpush1.bf16.msra.mxu0 0
      %4106 = vmatprep.subr.bf16.mxu0 0
      %4107 = vmatpush1.bf16.msra.mxu0 0
      %4108 = vmatprep.subr.bf16.mxu0 0
      %4109 = vmatpush1.bf16.msra.mxu0 0
      %4110 = vmatprep.subr.bf16.mxu0 0
      %4111 = vmatpush1.bf16.msra.mxu0 0
      %4112 = vmatprep.subr.bf16.mxu0 0
      %4113 = vmatpush1.bf16.msra.mxu0 %v3907
      %4114 = vmatprep.subr.bf16.mxu0 0
      %4115 = vmatpush1.bf16.msra.mxu0 %v3906
      %4116 = vmatprep.subr.bf16.mxu0 0
      %4117 = vmatpush1.bf16.msra.mxu0 %v3905
      %4118 = vmatprep.subr.bf16.mxu0 0
      %4119 = vmatpush1.bf16.msra.mxu0 %v3904
      %4120 = vmatprep.subr.bf16.mxu0 0
      %4121 = vmatpush2.bf16.msra.mxu0 0
      %4122 = vmatprep.subr.bf16.mxu0 0
      %4123 = vmatpush2.bf16.msra.mxu0 0
      %4124 = vmatprep.subr.bf16.mxu0 0
      %4125 = vmatpush2.bf16.msra.mxu0 0
      %4126 = vmatprep.subr.bf16.mxu0 0
      %4127 = vmatpush2.bf16.msra.mxu0 0
      %4128 = vmatprep.subr.bf16.mxu0 0
      %4129 = vmatpush2.bf16.msra.mxu0 0
      %4130 = vmatprep.subr.bf16.mxu0 0
      %4131 = vmatpush2.bf16.msra.mxu0 0
      %4132 = vmatprep.subr.bf16.mxu0 0
      %4133 = vmatpush2.bf16.msra.mxu0 0
      %4134 = vmatprep.subr.bf16.mxu0 0
      %4135 = vmatpush2.bf16.msra.mxu0 0
      %4136 = vmatprep.mubr.bf16.mxu0 0
      %4137 = vmatmul.mubr.bf16.gmra.mxu0 %v3913
      %v4138 = vpop.f32.mrf.mxu0
      %v4139 = vadd.f32 %v3886, %v4138
      %v4140 = vpop.f32.mrf.mxu0
      %v4141 = vpop.f32.mrf.mxu0
      %v4142 = vadd.f32 %v3886, %v4141
      %v4143 = vpop.f32.mrf.mxu0
      %4144 = vmatprep.mubr.bf16.mxu0 0
      %4145 = vmatmul.mubr.bf16.gmra.mxu0 %v3916
      %v4146 = vpop.f32.mrf.mxu0
      %v4147 = vadd.f32 %v3886, %v4146
      %v4148 = vpop.f32.mrf.mxu0
      %v4149 = vpop.f32.mrf.mxu0
      %v4150 = vadd.f32 %v3886, %v4149
      %v4151 = vpop.f32.mrf.mxu0
      %4152 = vmatprep.mubr.bf16.mxu0 0
      %4153 = vmatmul.mubr.bf16.gmra.mxu0 %v3919
      %v4154 = vpop.f32.mrf.mxu0
      %v4155 = vadd.f32 %v3886, %v4154
      %v4156 = vpop.f32.mrf.mxu0
      %v4157 = vpop.f32.mrf.mxu0
      %v4158 = vadd.f32 %v3886, %v4157
      %v4159 = vpop.f32.mrf.mxu0
      %4160 = vmatprep.mubr.bf16.mxu0 0
      %4161 = vmatmul.mubr.bf16.gmra.mxu0 %v3922
      %v4162 = vpop.f32.mrf.mxu0
      %v4163 = vadd.f32 %v3886, %v4162
      %v4164 = vpop.f32.mrf.mxu0
      %v4165 = vpop.f32.mrf.mxu0
      %v4166 = vadd.f32 %v3886, %v4165
      %v4167 = vpop.f32.mrf.mxu0
      %4168 = vmatprep.mubr.bf16.mxu0 0
      %4169 = vmatmul.mubr.bf16.gmra.mxu0 %v3925
      %v4170 = vpop.f32.mrf.mxu0
      %v4171 = vadd.f32 %v3886, %v4170
      %v4172 = vpop.f32.mrf.mxu0
      %v4173 = vpop.f32.mrf.mxu0
      %v4174 = vadd.f32 %v3886, %v4173
      %v4175 = vpop.f32.mrf.mxu0
      %4176 = vmatprep.mubr.bf16.mxu0 0
      %4177 = vmatmul.mubr.bf16.gmra.mxu0 %v3928
      %v4178 = vpop.f32.mrf.mxu0
      %v4179 = vadd.f32 %v3886, %v4178
      %v4180 = vpop.f32.mrf.mxu0
      %v4181 = vpop.f32.mrf.mxu0
      %v4182 = vadd.f32 %v3886, %v4181
      %v4183 = vpop.f32.mrf.mxu0
      %4184 = vmatprep.mubr.bf16.mxu0 0
      %4185 = vmatmul.mubr.bf16.gmra.mxu0 %v3931
      %v4186 = vpop.f32.mrf.mxu0
      %v4187 = vadd.f32 %v3886, %v4186
      %v4188 = vpop.f32.mrf.mxu0
      %v4189 = vpop.f32.mrf.mxu0
      %v4190 = vadd.f32 %v3886, %v4189
      %v4191 = vpop.f32.mrf.mxu0
      %4192 = vmatprep.mubr.bf16.mxu0 0
      %4193 = vmatmul.mubr.bf16.gmra.mxu0 %v3934
      %v4194 = vpop.f32.mrf.mxu0
      %v4195 = vadd.f32 %v3886, %v4194
      %v4196 = vpop.f32.mrf.mxu0
      %v4197 = vpop.f32.mrf.mxu0
      %v4198 = vadd.f32 %v3886, %v4197
      %v4199 = vpop.f32.mrf.mxu0
      %4200 = vmatprep.mubr.bf16.mxu0 0
      %4201 = vmatmul.mubr.bf16.gmra.mxu0 %v3937
      %v4202 = vpop.f32.mrf.mxu0
      %v4203 = vadd.f32 %v3886, %v4202
      %v4204 = vpop.f32.mrf.mxu0
      %v4205 = vpop.f32.mrf.mxu0
      %v4206 = vadd.f32 %v3886, %v4205
      %v4207 = vpop.f32.mrf.mxu0
      %4208 = vmatprep.mubr.bf16.mxu0 0
      %4209 = vmatmul.mubr.bf16.gmra.mxu0 %v3940
      %v4210 = vpop.f32.mrf.mxu0
      %v4211 = vadd.f32 %v3886, %v4210
      %v4212 = vpop.f32.mrf.mxu0
      %v4213 = vpop.f32.mrf.mxu0
      %v4214 = vadd.f32 %v3886, %v4213
      %v4215 = vpop.f32.mrf.mxu0
      %4216 = vmatprep.mubr.bf16.mxu0 0
      %4217 = vmatmul.mubr.bf16.gmra.mxu0 %v3943
      %v4218 = vpop.f32.mrf.mxu0
      %v4219 = vadd.f32 %v3886, %v4218
      %v4220 = vpop.f32.mrf.mxu0
      %v4221 = vpop.f32.mrf.mxu0
      %v4222 = vadd.f32 %v3886, %v4221
      %v4223 = vpop.f32.mrf.mxu0
      %4224 = vmatprep.mubr.bf16.mxu0 0
      %4225 = vmatmul.mubr.bf16.gmra.mxu0 %v3946
      %v4226 = vpop.f32.mrf.mxu0
      %v4227 = vadd.f32 %v3886, %v4226
      %v4228 = vpop.f32.mrf.mxu0
      %v4229 = vpop.f32.mrf.mxu0
      %v4230 = vadd.f32 %v3886, %v4229
      %v4231 = vpop.f32.mrf.mxu0
      %4232 = vmatprep.mubr.bf16.mxu0 0
      %4233 = vmatmul.mubr.bf16.gmra.mxu0 %v3949
      %v4234 = vpop.f32.mrf.mxu0
      %v4235 = vadd.f32 %v3886, %v4234
      %v4236 = vpop.f32.mrf.mxu0
      %v4237 = vpop.f32.mrf.mxu0
      %v4238 = vadd.f32 %v3886, %v4237
      %v4239 = vpop.f32.mrf.mxu0
      %4240 = vmatprep.mubr.bf16.mxu0 0
      %4241 = vmatmul.mubr.bf16.gmra.mxu0 %v3952
      %v4242 = vpop.f32.mrf.mxu0
      %v4243 = vadd.f32 %v3886, %v4242
      %v4244 = vpop.f32.mrf.mxu0
      %v4245 = vpop.f32.mrf.mxu0
      %v4246 = vadd.f32 %v3886, %v4245
      %v4247 = vpop.f32.mrf.mxu0
      %4248 = vmatprep.mubr.bf16.mxu0 0
      %4249 = vmatmul.mubr.bf16.gmra.mxu0 %v3955
      %v4250 = vpop.f32.mrf.mxu0
      %v4251 = vadd.f32 %v3886, %v4250
      %v4252 = vpop.f32.mrf.mxu0
      %v4253 = vpop.f32.mrf.mxu0
      %v4254 = vadd.f32 %v3886, %v4253
      %v4255 = vpop.f32.mrf.mxu0
      %4256 = vmatprep.mubr.bf16.mxu0 0
      %4257 = vmatmul.mubr.bf16.gmra.mxu0 %v3958
      %v4258 = vpop.f32.mrf.mxu0
      %v4259 = vadd.f32 %v3886, %v4258
      %v4260 = vpop.f32.mrf.mxu0
      %v4261 = vpop.f32.mrf.mxu0
      %v4262 = vadd.f32 %v3886, %v4261
      %v4263 = vpop.f32.mrf.mxu0
      %4264 = vmatprep.mubr.bf16.mxu0 0
      %4265 = vmatmul.mubr.bf16.gmra.mxu0 %v3961
      %v4266 = vpop.f32.mrf.mxu0
      %v4267 = vadd.f32 %v3886, %v4266
      %v4268 = vpop.f32.mrf.mxu0
      %v4269 = vpop.f32.mrf.mxu0
      %v4270 = vadd.f32 %v3886, %v4269
      %v4271 = vpop.f32.mrf.mxu0
      %4272 = vmatprep.mubr.bf16.mxu0 0
      %4273 = vmatmul.mubr.bf16.gmra.mxu0 %v3964
      %v4274 = vpop.f32.mrf.mxu0
      %v4275 = vadd.f32 %v3886, %v4274
      %v4276 = vpop.f32.mrf.mxu0
      %v4277 = vpop.f32.mrf.mxu0
      %v4278 = vadd.f32 %v3886, %v4277
      %v4279 = vpop.f32.mrf.mxu0
      %4280 = vmatprep.mubr.bf16.mxu0 0
      %4281 = vmatmul.mubr.bf16.gmra.mxu0 %v3967
      %v4282 = vpop.f32.mrf.mxu0
      %v4283 = vadd.f32 %v3886, %v4282
      %v4284 = vpop.f32.mrf.mxu0
      %v4285 = vpop.f32.mrf.mxu0
      %v4286 = vadd.f32 %v3886, %v4285
      %v4287 = vpop.f32.mrf.mxu0
      %4288 = vmatprep.mubr.bf16.mxu0 0
      %4289 = vmatmul.mubr.bf16.gmra.mxu0 %v3970
      %v4290 = vpop.f32.mrf.mxu0
      %v4291 = vadd.f32 %v3886, %v4290
      %v4292 = vpop.f32.mrf.mxu0
      %v4293 = vpop.f32.mrf.mxu0
      %v4294 = vadd.f32 %v3886, %v4293
      %v4295 = vpop.f32.mrf.mxu0
      %4296 = vmatprep.mubr.bf16.mxu0 0
      %4297 = vmatmul.mubr.bf16.gmra.mxu0 %v3973
      %v4298 = vpop.f32.mrf.mxu0
      %v4299 = vadd.f32 %v3886, %v4298
      %v4300 = vpop.f32.mrf.mxu0
      %v4301 = vpop.f32.mrf.mxu0
      %v4302 = vadd.f32 %v3886, %v4301
      %v4303 = vpop.f32.mrf.mxu0
      %4304 = vmatprep.mubr.bf16.mxu0 0
      %4305 = vmatmul.mubr.bf16.gmra.mxu0 %v3976
      %v4306 = vpop.f32.mrf.mxu0
      %v4307 = vadd.f32 %v3886, %v4306
      %v4308 = vpop.f32.mrf.mxu0
      %v4309 = vpop.f32.mrf.mxu0
      %v4310 = vadd.f32 %v3886, %v4309
      %v4311 = vpop.f32.mrf.mxu0
      %4312 = vmatprep.mubr.bf16.mxu0 0
      %4313 = vmatmul.mubr.bf16.gmra.mxu0 %v3979
      %v4314 = vpop.f32.mrf.mxu0
      %v4315 = vadd.f32 %v3886, %v4314
      %v4316 = vpop.f32.mrf.mxu0
      %v4317 = vpop.f32.mrf.mxu0
      %v4318 = vadd.f32 %v3886, %v4317
      %v4319 = vpop.f32.mrf.mxu0
      %4320 = vmatprep.mubr.bf16.mxu0 0
      %4321 = vmatmul.mubr.bf16.gmra.mxu0 %v3982
      %v4322 = vpop.f32.mrf.mxu0
      %v4323 = vadd.f32 %v3886, %v4322
      %v4324 = vpop.f32.mrf.mxu0
      %v4325 = vpop.f32.mrf.mxu0
      %v4326 = vadd.f32 %v3886, %v4325
      %v4327 = vpop.f32.mrf.mxu0
      %4328 = vmatprep.mubr.bf16.mxu0 0
      %4329 = vmatmul.mubr.bf16.gmra.mxu0 %v3985
      %v4330 = vpop.f32.mrf.mxu0
      %v4331 = vadd.f32 %v3886, %v4330
      %v4332 = vpop.f32.mrf.mxu0
      %v4333 = vpop.f32.mrf.mxu0
      %v4334 = vadd.f32 %v3886, %v4333
      %v4335 = vpop.f32.mrf.mxu0
      %4336 = vmatprep.mubr.bf16.mxu0 0
      %4337 = vmatmul.mubr.bf16.gmra.mxu0 %v3988
      %v4338 = vpop.f32.mrf.mxu0
      %v4339 = vadd.f32 %v3886, %v4338
      %v4340 = vpop.f32.mrf.mxu0
      %v4341 = vpop.f32.mrf.mxu0
      %v4342 = vadd.f32 %v3886, %v4341
      %v4343 = vpop.f32.mrf.mxu0
      %4344 = vmatprep.mubr.bf16.mxu0 0
      %4345 = vmatmul.mubr.bf16.gmra.mxu0 %v3991
      %v4346 = vpop.f32.mrf.mxu0
      %v4347 = vadd.f32 %v3886, %v4346
      %v4348 = vpop.f32.mrf.mxu0
      %v4349 = vpop.f32.mrf.mxu0
      %v4350 = vadd.f32 %v3886, %v4349
      %v4351 = vpop.f32.mrf.mxu0
      %4352 = vmatprep.mubr.bf16.mxu0 0
      %4353 = vmatmul.mubr.bf16.gmra.mxu0 %v3994
      %v4354 = vpop.f32.mrf.mxu0
      %v4355 = vadd.f32 %v3886, %v4354
      %v4356 = vpop.f32.mrf.mxu0
      %v4357 = vpop.f32.mrf.mxu0
      %v4358 = vadd.f32 %v3886, %v4357
      %v4359 = vpop.f32.mrf.mxu0
      %4360 = vmatprep.mubr.bf16.mxu0 0
      %4361 = vmatmul.mubr.bf16.gmra.mxu0 %v3997
      %v4362 = vpop.f32.mrf.mxu0
      %v4363 = vadd.f32 %v3886, %v4362
      %v4364 = vpop.f32.mrf.mxu0
      %v4365 = vpop.f32.mrf.mxu0
      %v4366 = vadd.f32 %v3886, %v4365
      %v4367 = vpop.f32.mrf.mxu0
      %4368 = vmatprep.mubr.bf16.mxu0 0
      %4369 = vmatmul.mubr.bf16.gmra.mxu0 %v4000
      %v4370 = vpop.f32.mrf.mxu0
      %v4371 = vadd.f32 %v3886, %v4370
      %v4372 = vpop.f32.mrf.mxu0
      %v4373 = vpop.f32.mrf.mxu0
      %v4374 = vadd.f32 %v3886, %v4373
      %v4375 = vpop.f32.mrf.mxu0
      %4376 = vmatprep.mubr.bf16.mxu0 0
      %4377 = vmatmul.mubr.bf16.gmra.mxu0 %v4003
      %v4378 = vpop.f32.mrf.mxu0
      %v4379 = vadd.f32 %v3886, %v4378
      %v4380 = vpop.f32.mrf.mxu0
      %v4381 = vpop.f32.mrf.mxu0
      %v4382 = vadd.f32 %v3886, %v4381
      %v4383 = vpop.f32.mrf.mxu0
      %4384 = vmatprep.mubr.bf16.mxu0 0
      %4385 = vmatmul.mubr.bf16.gmra.mxu0 %v4006
      %v4386 = vpop.f32.mrf.mxu0
      %v4387 = vadd.f32 %v3886, %v4386
      %v4388 = vpop.f32.mrf.mxu0
      %v4389 = vpop.f32.mrf.mxu0
      %v4390 = vadd.f32 %v3886, %v4389
      %v4391 = vpop.f32.mrf.mxu0
      %4392 = vmatprep.mubr.bf16.mxu0 0
      %4393 = vmatmul.mubr.bf16.gmra.mxu0 %v4009
      %v4394 = vpop.f32.mrf.mxu0
      %v4395 = vadd.f32 %v3886, %v4394
      %v4396 = vpop.f32.mrf.mxu0
      %v4397 = vpop.f32.mrf.mxu0
      %v4398 = vadd.f32 %v3886, %v4397
      %v4399 = vpop.f32.mrf.mxu0
      %4400 = vmatprep.mubr.bf16.mxu0 0
      %4401 = vmatmul.mubr.bf16.gmra.mxu0 %v4012
      %v4402 = vpop.f32.mrf.mxu0
      %v4403 = vadd.f32 %v3886, %v4402
      %v4404 = vpop.f32.mrf.mxu0
      %v4405 = vpop.f32.mrf.mxu0
      %v4406 = vadd.f32 %v3886, %v4405
      %v4407 = vpop.f32.mrf.mxu0
      %4408 = vmatprep.mubr.bf16.mxu0 0
      %4409 = vmatmul.mubr.bf16.gmra.mxu0 %v4015
      %v4410 = vpop.f32.mrf.mxu0
      %v4411 = vadd.f32 %v3886, %v4410
      %v4412 = vpop.f32.mrf.mxu0
      %v4413 = vpop.f32.mrf.mxu0
      %v4414 = vadd.f32 %v3886, %v4413
      %v4415 = vpop.f32.mrf.mxu0
      %4416 = vmatprep.mubr.bf16.mxu0 0
      %4417 = vmatmul.mubr.bf16.gmra.mxu0 %v4018
      %v4418 = vpop.f32.mrf.mxu0
      %v4419 = vadd.f32 %v3886, %v4418
      %v4420 = vpop.f32.mrf.mxu0
      %v4421 = vpop.f32.mrf.mxu0
      %v4422 = vadd.f32 %v3886, %v4421
      %v4423 = vpop.f32.mrf.mxu0
      %4424 = vmatprep.mubr.bf16.mxu0 0
      %4425 = vmatmul.mubr.bf16.gmra.mxu0 %v4021
      %v4426 = vpop.f32.mrf.mxu0
      %v4427 = vadd.f32 %v3886, %v4426
      %v4428 = vpop.f32.mrf.mxu0
      %v4429 = vpop.f32.mrf.mxu0
      %v4430 = vadd.f32 %v3886, %v4429
      %v4431 = vpop.f32.mrf.mxu0
      %4432 = vmatprep.mubr.bf16.mxu0 0
      %4433 = vmatmul.mubr.bf16.gmra.mxu0 %v4024
      %v4434 = vpop.f32.mrf.mxu0
      %v4435 = vadd.f32 %v3886, %v4434
      %v4436 = vpop.f32.mrf.mxu0
      %v4437 = vpop.f32.mrf.mxu0
      %v4438 = vadd.f32 %v3886, %v4437
      %v4439 = vpop.f32.mrf.mxu0
      %4440 = vmatprep.mubr.bf16.mxu0 0
      %4441 = vmatmul.mubr.bf16.gmra.mxu0 %v4027
      %v4442 = vpop.f32.mrf.mxu0
      %v4443 = vadd.f32 %v3886, %v4442
      %v4444 = vpop.f32.mrf.mxu0
      %v4445 = vpop.f32.mrf.mxu0
      %v4446 = vadd.f32 %v3886, %v4445
      %v4447 = vpop.f32.mrf.mxu0
      %4448 = vmatprep.mubr.bf16.mxu0 0
      %4449 = vmatmul.mubr.bf16.gmra.mxu0 %v4030
      %v4450 = vpop.f32.mrf.mxu0
      %v4451 = vadd.f32 %v3886, %v4450
      %v4452 = vpop.f32.mrf.mxu0
      %v4453 = vpop.f32.mrf.mxu0
      %v4454 = vadd.f32 %v3886, %v4453
      %v4455 = vpop.f32.mrf.mxu0
      %4456 = vmatprep.mubr.bf16.mxu0 0
      %4457 = vmatmul.mubr.bf16.gmra.mxu0 %v4033
      %v4458 = vpop.f32.mrf.mxu0
      %v4459 = vadd.f32 %v3886, %v4458
      %v4460 = vpop.f32.mrf.mxu0
      %v4461 = vpop.f32.mrf.mxu0
      %v4462 = vadd.f32 %v3886, %v4461
      %v4463 = vpop.f32.mrf.mxu0
      %4464 = vmatprep.mubr.bf16.mxu0 0
      %4465 = vmatmul.mubr.bf16.gmra.mxu0 %v4036
      %v4466 = vpop.f32.mrf.mxu0
      %v4467 = vadd.f32 %v3886, %v4466
      %v4468 = vpop.f32.mrf.mxu0
      %v4469 = vpop.f32.mrf.mxu0
      %v4470 = vadd.f32 %v3886, %v4469
      %v4471 = vpop.f32.mrf.mxu0
      %4472 = vmatprep.mubr.bf16.mxu0 0
      %4473 = vmatmul.mubr.bf16.gmra.mxu0 %v4039
      %v4474 = vpop.f32.mrf.mxu0
      %v4475 = vadd.f32 %v3886, %v4474
      %v4476 = vpop.f32.mrf.mxu0
      %v4477 = vpop.f32.mrf.mxu0
      %v4478 = vadd.f32 %v3886, %v4477
      %v4479 = vpop.f32.mrf.mxu0
      %4480 = vmatprep.mubr.bf16.mxu0 0
      %4481 = vmatmul.mubr.bf16.gmra.mxu0 %v4042
      %v4482 = vpop.f32.mrf.mxu0
      %v4483 = vadd.f32 %v3886, %v4482
      %v4484 = vpop.f32.mrf.mxu0
      %v4485 = vpop.f32.mrf.mxu0
      %v4486 = vadd.f32 %v3886, %v4485
      %v4487 = vpop.f32.mrf.mxu0
      %4488 = vmatprep.mubr.bf16.mxu0 0
      %4489 = vmatmul.mubr.bf16.gmra.mxu0 %v4045
      %v4490 = vpop.f32.mrf.mxu0
      %v4491 = vadd.f32 %v3886, %v4490
      %v4492 = vpop.f32.mrf.mxu0
      %v4493 = vpop.f32.mrf.mxu0
      %v4494 = vadd.f32 %v3886, %v4493
      %v4495 = vpop.f32.mrf.mxu0
      %4496 = vmatprep.mubr.bf16.mxu0 0
      %4497 = vmatmul.mubr.bf16.gmra.mxu0 %v4048
      %v4498 = vpop.f32.mrf.mxu0
      %v4499 = vadd.f32 %v3886, %v4498
      %v4500 = vpop.f32.mrf.mxu0
      %v4501 = vpop.f32.mrf.mxu0
      %v4502 = vadd.f32 %v3886, %v4501
      %v4503 = vpop.f32.mrf.mxu0
      %4504 = vmatprep.mubr.bf16.mxu0 0
      %4505 = vmatmul.mubr.bf16.gmra.mxu0 %v4051
      %v4506 = vpop.f32.mrf.mxu0
      %v4507 = vadd.f32 %v3886, %v4506
      %v4508 = vpop.f32.mrf.mxu0
      %v4509 = vpop.f32.mrf.mxu0
      %v4510 = vadd.f32 %v3886, %v4509
      %v4511 = vpop.f32.mrf.mxu0
      %4512 = vmatprep.mubr.bf16.mxu0 0
      %4513 = vmatmul.mubr.bf16.gmra.mxu0 %v4054
      %v4514 = vpop.f32.mrf.mxu0
      %v4515 = vadd.f32 %v3886, %v4514
      %v4516 = vpop.f32.mrf.mxu0
      %v4517 = vpop.f32.mrf.mxu0
      %v4518 = vadd.f32 %v3886, %v4517
      %v4519 = vpop.f32.mrf.mxu0
      %4520 = vmatprep.mubr.bf16.mxu0 0
      %4521 = vmatmul.mubr.bf16.gmra.mxu0 %v4057
      %v4522 = vpop.f32.mrf.mxu0
      %v4523 = vadd.f32 %v3886, %v4522
      %v4524 = vpop.f32.mrf.mxu0
      %v4525 = vpop.f32.mrf.mxu0
      %v4526 = vadd.f32 %v3886, %v4525
      %v4527 = vpop.f32.mrf.mxu0
      %4528 = vmatprep.mubr.bf16.mxu0 0
      %4529 = vmatmul.mubr.bf16.gmra.mxu0 %v4060
      %v4530 = vpop.f32.mrf.mxu0
      %v4531 = vadd.f32 %v3886, %v4530
      %v4532 = vpop.f32.mrf.mxu0
      %v4533 = vpop.f32.mrf.mxu0
      %v4534 = vadd.f32 %v3886, %v4533
      %v4535 = vpop.f32.mrf.mxu0
      %4536 = vmatprep.mubr.bf16.mxu0 0
      %4537 = vmatmul.mubr.bf16.gmra.mxu0 %v4063
      %v4538 = vpop.f32.mrf.mxu0
      %v4539 = vadd.f32 %v3886, %v4538
      %v4540 = vpop.f32.mrf.mxu0
      %v4541 = vpop.f32.mrf.mxu0
      %v4542 = vadd.f32 %v3886, %v4541
      %v4543 = vpop.f32.mrf.mxu0
      %4544 = vmatprep.mubr.bf16.mxu0 0
      %4545 = vmatmul.mubr.bf16.gmra.mxu0 %v4066
      %v4546 = vpop.f32.mrf.mxu0
      %v4547 = vadd.f32 %v3886, %v4546
      %v4548 = vpop.f32.mrf.mxu0
      %v4549 = vpop.f32.mrf.mxu0
      %v4550 = vadd.f32 %v3886, %v4549
      %v4551 = vpop.f32.mrf.mxu0
      %4552 = vmatprep.mubr.bf16.mxu0 0
      %4553 = vmatmul.mubr.bf16.gmra.mxu0 %v4069
      %v4554 = vpop.f32.mrf.mxu0
      %v4555 = vadd.f32 %v3886, %v4554
      %v4556 = vpop.f32.mrf.mxu0
      %v4557 = vpop.f32.mrf.mxu0
      %v4558 = vadd.f32 %v3886, %v4557
      %v4559 = vpop.f32.mrf.mxu0
      %4560 = vmatprep.mubr.bf16.mxu0 0
      %4561 = vmatmul.mubr.bf16.gmra.mxu0 %v4072
      %v4562 = vpop.f32.mrf.mxu0
      %v4563 = vadd.f32 %v3886, %v4562
      %v4564 = vpop.f32.mrf.mxu0
      %v4565 = vpop.f32.mrf.mxu0
      %v4566 = vadd.f32 %v3886, %v4565
      %v4567 = vpop.f32.mrf.mxu0
      %4568 = vmatprep.mubr.bf16.mxu0 0
      %4569 = vmatmul.mubr.bf16.gmra.mxu0 %v4075
      %v4570 = vpop.f32.mrf.mxu0
      %v4571 = vadd.f32 %v3886, %v4570
      %v4572 = vpop.f32.mrf.mxu0
      %v4573 = vpop.f32.mrf.mxu0
      %v4574 = vadd.f32 %v3886, %v4573
      %v4575 = vpop.f32.mrf.mxu0
      %4576 = vmatprep.mubr.bf16.mxu0 0
      %4577 = vmatmul.mubr.bf16.gmra.mxu0 %v4078
      %v4578 = vpop.f32.mrf.mxu0
      %v4579 = vadd.f32 %v3886, %v4578
      %v4580 = vpop.f32.mrf.mxu0
      %v4581 = vpop.f32.mrf.mxu0
      %v4582 = vadd.f32 %v3886, %v4581
      %v4583 = vpop.f32.mrf.mxu0
      %4584 = vmatprep.mubr.bf16.mxu0 0
      %4585 = vmatmul.mubr.bf16.gmra.mxu0 %v4081
      %v4586 = vpop.f32.mrf.mxu0
      %v4587 = vadd.f32 %v3886, %v4586
      %v4588 = vpop.f32.mrf.mxu0
      %v4589 = vpop.f32.mrf.mxu0
      %v4590 = vadd.f32 %v3886, %v4589
      %v4591 = vpop.f32.mrf.mxu0
      %4592 = vmatprep.mubr.bf16.mxu0 0
      %4593 = vmatmul.mubr.bf16.gmra.mxu0 %v4084
      %v4594 = vpop.f32.mrf.mxu0
      %v4595 = vadd.f32 %v3886, %v4594
      %v4596 = vpop.f32.mrf.mxu0
      %v4597 = vpop.f32.mrf.mxu0
      %v4598 = vadd.f32 %v3886, %v4597
      %v4599 = vpop.f32.mrf.mxu0
      %4600 = vmatprep.mubr.bf16.mxu0 0
      %4601 = vmatmul.mubr.bf16.gmra.mxu0 %v4087
      %v4602 = vpop.f32.mrf.mxu0
      %v4603 = vadd.f32 %v3886, %v4602
      %v4604 = vpop.f32.mrf.mxu0
      %v4605 = vpop.f32.mrf.mxu0
      %v4606 = vadd.f32 %v3886, %v4605
      %v4607 = vpop.f32.mrf.mxu0
      %4608 = vmatprep.mubr.bf16.mxu0 0
      %4609 = vmatmul.mubr.bf16.gmra.mxu0 %v4090
      %v4610 = vpop.f32.mrf.mxu0
      %v4611 = vadd.f32 %v3886, %v4610
      %v4612 = vpop.f32.mrf.mxu0
      %v4613 = vpop.f32.mrf.mxu0
      %v4614 = vadd.f32 %v3886, %v4613
      %v4615 = vpop.f32.mrf.mxu0
      %4616 = vmatprep.mubr.bf16.mxu0 0
      %4617 = vmatmul.mubr.bf16.gmra.mxu0 %v4093
      %v4618 = vpop.f32.mrf.mxu0
      %v4619 = vadd.f32 %v3886, %v4618
      %v4620 = vpop.f32.mrf.mxu0
      %v4621 = vpop.f32.mrf.mxu0
      %v4622 = vadd.f32 %v3886, %v4621
      %v4623 = vpop.f32.mrf.mxu0
      %4624 = vmatprep.mubr.bf16.mxu0 0
      %4625 = vmatmul.mubr.bf16.gmra.mxu0 %v4096
      %v4626 = vpop.f32.mrf.mxu0
      %v4627 = vadd.f32 %v3886, %v4626
      %v4628 = vpop.f32.mrf.mxu0
      %v4629 = vpop.f32.mrf.mxu0
      %v4630 = vadd.f32 %v3886, %v4629
      %v4631 = vpop.f32.mrf.mxu0
      %4632 = vmatprep.mubr.bf16.mxu0 0
      %4633 = vmatmul.mubr.bf16.gmra.mxu0 %v4099
      %v4634 = vpop.f32.mrf.mxu0
      %v4635 = vadd.f32 %v3886, %v4634
      %v4636 = vpop.f32.mrf.mxu0
      %v4637 = vpop.f32.mrf.mxu0
      %v4638 = vadd.f32 %v3886, %v4637
      %v4639 = vpop.f32.mrf.mxu0
      %4640 = vmatprep.mubr.bf16.mxu0 0
      %4641 = vmatmul.mubr.bf16.gmra.mxu0 %v4102
      %v4642 = vpop.f32.mrf.mxu0
      %v4643 = vadd.f32 %v3886, %v4642
      %v4644 = vpop.f32.mrf.mxu0
      %v4645 = vpop.f32.mrf.mxu0
      %v4646 = vadd.f32 %v3886, %v4645
      %v4647 = vpop.f32.mrf.mxu0
      %4648 = vdwg.mxu0
      %v4649 = vmax.f32 %v4139, %v4142
      %v4650 = vmax.f32 %v4649, %v4147
      %v4651 = vmax.f32 %v4650, %v4150
      %v4652 = vmax.f32 %v4651, %v4155
      %v4653 = vmax.f32 %v4652, %v4158
      %v4654 = vmax.f32 %v4653, %v4163
      %v4655 = vmax.f32 %v4654, %v4166
      %v4656 = vrot.slane %v4655, 4
      %v4657 = vmax.f32 %v4655, %v4656
      %v4658 = vrot.slane %v4657, 2
      %v4659 = vmax.f32 %v4657, %v4658
      %v4660 = vrot.slane %v4659, 1
      %v4661 = vmax.f32 %v4659, %v4660
      %v4662 = vmax.f32 %v4171, %v4174
      %v4663 = vmax.f32 %v4662, %v4179
      %v4664 = vmax.f32 %v4663, %v4182
      %v4665 = vmax.f32 %v4664, %v4187
      %v4666 = vmax.f32 %v4665, %v4190
      %v4667 = vmax.f32 %v4666, %v4195
      %v4668 = vmax.f32 %v4667, %v4198
      %v4669 = vrot.slane %v4668, 4
      %v4670 = vmax.f32 %v4668, %v4669
      %v4671 = vrot.slane %v4670, 2
      %v4672 = vmax.f32 %v4670, %v4671
      %v4673 = vrot.slane %v4672, 1
      %v4674 = vmax.f32 %v4672, %v4673
      %v4675 = vmax.f32 %v4203, %v4206
      %v4676 = vmax.f32 %v4675, %v4211
      %v4677 = vmax.f32 %v4676, %v4214
      %v4678 = vmax.f32 %v4677, %v4219
      %v4679 = vmax.f32 %v4678, %v4222
      %v4680 = vmax.f32 %v4679, %v4227
      %v4681 = vmax.f32 %v4680, %v4230
      %v4682 = vrot.slane %v4681, 4
      %v4683 = vmax.f32 %v4681, %v4682
      %v4684 = vrot.slane %v4683, 2
      %v4685 = vmax.f32 %v4683, %v4684
      %v4686 = vrot.slane %v4685, 1
      %v4687 = vmax.f32 %v4685, %v4686
      %v4688 = vmax.f32 %v4235, %v4238
      %v4689 = vmax.f32 %v4688, %v4243
      %v4690 = vmax.f32 %v4689, %v4246
      %v4691 = vmax.f32 %v4690, %v4251
      %v4692 = vmax.f32 %v4691, %v4254
      %v4693 = vmax.f32 %v4692, %v4259
      %v4694 = vmax.f32 %v4693, %v4262
      %v4695 = vrot.slane %v4694, 4
      %v4696 = vmax.f32 %v4694, %v4695
      %v4697 = vrot.slane %v4696, 2
      %v4698 = vmax.f32 %v4696, %v4697
      %v4699 = vrot.slane %v4698, 1
      %v4700 = vmax.f32 %v4698, %v4699
      %v4701 = vmax.f32 %v4267, %v4270
      %v4702 = vmax.f32 %v4701, %v4275
      %v4703 = vmax.f32 %v4702, %v4278
      %v4704 = vmax.f32 %v4703, %v4283
      %v4705 = vmax.f32 %v4704, %v4286
      %v4706 = vmax.f32 %v4705, %v4291
      %v4707 = vmax.f32 %v4706, %v4294
      %v4708 = vrot.slane %v4707, 4
      %v4709 = vmax.f32 %v4707, %v4708
      %v4710 = vrot.slane %v4709, 2
      %v4711 = vmax.f32 %v4709, %v4710
      %v4712 = vrot.slane %v4711, 1
      %v4713 = vmax.f32 %v4711, %v4712
      %v4714 = vmax.f32 %v4299, %v4302
      %v4715 = vmax.f32 %v4714, %v4307
      %v4716 = vmax.f32 %v4715, %v4310
      %v4717 = vmax.f32 %v4716, %v4315
      %v4718 = vmax.f32 %v4717, %v4318
      %v4719 = vmax.f32 %v4718, %v4323
      %v4720 = vmax.f32 %v4719, %v4326
      %v4721 = vrot.slane %v4720, 4
      %v4722 = vmax.f32 %v4720, %v4721
      %v4723 = vrot.slane %v4722, 2
      %v4724 = vmax.f32 %v4722, %v4723
      %v4725 = vrot.slane %v4724, 1
      %v4726 = vmax.f32 %v4724, %v4725
      %v4727 = vmax.f32 %v4331, %v4334
      %v4728 = vmax.f32 %v4727, %v4339
      %v4729 = vmax.f32 %v4728, %v4342
      %v4730 = vmax.f32 %v4729, %v4347
      %v4731 = vmax.f32 %v4730, %v4350
      %v4732 = vmax.f32 %v4731, %v4355
      %v4733 = vmax.f32 %v4732, %v4358
      %v4734 = vrot.slane %v4733, 4
      %v4735 = vmax.f32 %v4733, %v4734
      %v4736 = vrot.slane %v4735, 2
      %v4737 = vmax.f32 %v4735, %v4736
      %v4738 = vrot.slane %v4737, 1
      %v4739 = vmax.f32 %v4737, %v4738
      %v4740 = vmax.f32 %v4363, %v4366
      %v4741 = vmax.f32 %v4740, %v4371
      %v4742 = vmax.f32 %v4741, %v4374
      %v4743 = vmax.f32 %v4742, %v4379
      %v4744 = vmax.f32 %v4743, %v4382
      %v4745 = vmax.f32 %v4744, %v4387
      %v4746 = vmax.f32 %v4745, %v4390
      %v4747 = vrot.slane %v4746, 4
      %v4748 = vmax.f32 %v4746, %v4747
      %v4749 = vrot.slane %v4748, 2
      %v4750 = vmax.f32 %v4748, %v4749
      %v4751 = vrot.slane %v4750, 1
      %v4752 = vmax.f32 %v4750, %v4751
      %v4753 = vmax.f32 %v4395, %v4398
      %v4754 = vmax.f32 %v4753, %v4403
      %v4755 = vmax.f32 %v4754, %v4406
      %v4756 = vmax.f32 %v4755, %v4411
      %v4757 = vmax.f32 %v4756, %v4414
      %v4758 = vmax.f32 %v4757, %v4419
      %v4759 = vmax.f32 %v4758, %v4422
      %v4760 = vrot.slane %v4759, 4
      %v4761 = vmax.f32 %v4759, %v4760
      %v4762 = vrot.slane %v4761, 2
      %v4763 = vmax.f32 %v4761, %v4762
      %v4764 = vrot.slane %v4763, 1
      %v4765 = vmax.f32 %v4763, %v4764
      %v4766 = vmax.f32 %v4427, %v4430
      %v4767 = vmax.f32 %v4766, %v4435
      %v4768 = vmax.f32 %v4767, %v4438
      %v4769 = vmax.f32 %v4768, %v4443
      %v4770 = vmax.f32 %v4769, %v4446
      %v4771 = vmax.f32 %v4770, %v4451
      %v4772 = vmax.f32 %v4771, %v4454
      %v4773 = vrot.slane %v4772, 4
      %v4774 = vmax.f32 %v4772, %v4773
      %v4775 = vrot.slane %v4774, 2
      %v4776 = vmax.f32 %v4774, %v4775
      %v4777 = vrot.slane %v4776, 1
      %v4778 = vmax.f32 %v4776, %v4777
      %v4779 = vmax.f32 %v4459, %v4462
      %v4780 = vmax.f32 %v4779, %v4467
      %v4781 = vmax.f32 %v4780, %v4470
      %v4782 = vmax.f32 %v4781, %v4475
      %v4783 = vmax.f32 %v4782, %v4478
      %v4784 = vmax.f32 %v4783, %v4483
      %v4785 = vmax.f32 %v4784, %v4486
      %v4786 = vrot.slane %v4785, 4
      %v4787 = vmax.f32 %v4785, %v4786
      %v4788 = vrot.slane %v4787, 2
      %v4789 = vmax.f32 %v4787, %v4788
      %v4790 = vrot.slane %v4789, 1
      %v4791 = vmax.f32 %v4789, %v4790
      %v4792 = vmax.f32 %v4491, %v4494
      %v4793 = vmax.f32 %v4792, %v4499
      %v4794 = vmax.f32 %v4793, %v4502
      %v4795 = vmax.f32 %v4794, %v4507
      %v4796 = vmax.f32 %v4795, %v4510
      %v4797 = vmax.f32 %v4796, %v4515
      %v4798 = vmax.f32 %v4797, %v4518
      %v4799 = vrot.slane %v4798, 4
      %v4800 = vmax.f32 %v4798, %v4799
      %v4801 = vrot.slane %v4800, 2
      %v4802 = vmax.f32 %v4800, %v4801
      %v4803 = vrot.slane %v4802, 1
      %v4804 = vmax.f32 %v4802, %v4803
      %v4805 = vmax.f32 %v4523, %v4526
      %v4806 = vmax.f32 %v4805, %v4531
      %v4807 = vmax.f32 %v4806, %v4534
      %v4808 = vmax.f32 %v4807, %v4539
      %v4809 = vmax.f32 %v4808, %v4542
      %v4810 = vmax.f32 %v4809, %v4547
      %v4811 = vmax.f32 %v4810, %v4550
      %v4812 = vrot.slane %v4811, 4
      %v4813 = vmax.f32 %v4811, %v4812
      %v4814 = vrot.slane %v4813, 2
      %v4815 = vmax.f32 %v4813, %v4814
      %v4816 = vrot.slane %v4815, 1
      %v4817 = vmax.f32 %v4815, %v4816
      %v4818 = vmax.f32 %v4555, %v4558
      %v4819 = vmax.f32 %v4818, %v4563
      %v4820 = vmax.f32 %v4819, %v4566
      %v4821 = vmax.f32 %v4820, %v4571
      %v4822 = vmax.f32 %v4821, %v4574
      %v4823 = vmax.f32 %v4822, %v4579
      %v4824 = vmax.f32 %v4823, %v4582
      %v4825 = vrot.slane %v4824, 4
      %v4826 = vmax.f32 %v4824, %v4825
      %v4827 = vrot.slane %v4826, 2
      %v4828 = vmax.f32 %v4826, %v4827
      %v4829 = vrot.slane %v4828, 1
      %v4830 = vmax.f32 %v4828, %v4829
      %v4831 = vmax.f32 %v4587, %v4590
      %v4832 = vmax.f32 %v4831, %v4595
      %v4833 = vmax.f32 %v4832, %v4598
      %v4834 = vmax.f32 %v4833, %v4603
      %v4835 = vmax.f32 %v4834, %v4606
      %v4836 = vmax.f32 %v4835, %v4611
      %v4837 = vmax.f32 %v4836, %v4614
      %v4838 = vrot.slane %v4837, 4
      %v4839 = vmax.f32 %v4837, %v4838
      %v4840 = vrot.slane %v4839, 2
      %v4841 = vmax.f32 %v4839, %v4840
      %v4842 = vrot.slane %v4841, 1
      %v4843 = vmax.f32 %v4841, %v4842
      %v4844 = vmax.f32 %v4619, %v4622
      %v4845 = vmax.f32 %v4844, %v4627
      %v4846 = vmax.f32 %v4845, %v4630
      %v4847 = vmax.f32 %v4846, %v4635
      %v4848 = vmax.f32 %v4847, %v4638
      %v4849 = vmax.f32 %v4848, %v4643
      %v4850 = vmax.f32 %v4849, %v4646
      %v4851 = vrot.slane %v4850, 4
      %v4852 = vmax.f32 %v4850, %v4851
      %v4853 = vrot.slane %v4852, 2
      %v4854 = vmax.f32 %v4852, %v4853
      %v4855 = vrot.slane %v4854, 1
      %v4856 = vmax.f32 %v4854, %v4855
      %v4857 = vpack.c.bf16 %v4661, %v4661
      %v4858 = vpack.c.bf16 %v4674, %v4674
      %v4859 = vpack.c.bf16 %v4687, %v4687
      %v4860 = vpack.c.bf16 %v4700, %v4700
      %v4861 = vpack.c.bf16 %v4713, %v4713
      %v4862 = vpack.c.bf16 %v4726, %v4726
      %v4863 = vpack.c.bf16 %v4739, %v4739
      %v4864 = vpack.c.bf16 %v4752, %v4752
      %v4865 = vpack.c.bf16 %v4765, %v4765
      %v4866 = vpack.c.bf16 %v4778, %v4778
      %v4867 = vpack.c.bf16 %v4791, %v4791
      %v4868 = vpack.c.bf16 %v4804, %v4804
      %v4869 = vpack.c.bf16 %v4817, %v4817
      %v4870 = vpack.c.bf16 %v4830, %v4830
      %v4871 = vpack.c.bf16 %v4843, %v4843
      %v4872 = vpack.c.bf16 %v4856, %v4856
      %v4889 = vunpack.c.l.b16 %v4857
      %v4890 = vunpack.c.l.b16 %v4858
      %v4891 = vunpack.c.l.b16 %v4859
      %v4892 = vunpack.c.l.b16 %v4860
      %v4893 = vunpack.c.l.b16 %v4861
      %v4894 = vunpack.c.l.b16 %v4862
      %v4895 = vunpack.c.l.b16 %v4863
      %v4896 = vunpack.c.l.b16 %v4864
      %v4897 = vunpack.c.l.b16 %v4865
      %v4898 = vunpack.c.l.b16 %v4866
      %v4899 = vunpack.c.l.b16 %v4867
      %v4900 = vunpack.c.l.b16 %v4868
      %v4901 = vunpack.c.l.b16 %v4869
      %v4902 = vunpack.c.l.b16 %v4870
      %v4903 = vunpack.c.l.b16 %v4871
      %v4904 = vunpack.c.l.b16 %v4872
      %v4905 = vpack.c.b16 %v4889, %v4889
      %v4906 = vpack.c.b16 %v4890, %v4890
      %v4907 = vpack.c.b16 %v4891, %v4891
      %v4908 = vpack.c.b16 %v4892, %v4892
      %v4909 = vpack.c.b16 %v4893, %v4893
      %v4910 = vpack.c.b16 %v4894, %v4894
      %v4911 = vpack.c.b16 %v4895, %v4895
      %v4912 = vpack.c.b16 %v4896, %v4896
      %v4913 = vpack.c.b16 %v4897, %v4897
      %v4914 = vpack.c.b16 %v4898, %v4898
      %v4915 = vpack.c.b16 %v4899, %v4899
      %v4916 = vpack.c.b16 %v4900, %v4900
      %v4917 = vpack.c.b16 %v4901, %v4901
      %v4918 = vpack.c.b16 %v4902, %v4902
      %v4919 = vpack.c.b16 %v4903, %v4903
      %v4920 = vpack.c.b16 %v4904, %v4904
      %v4921 = vunpack.c.l.b16 %v4905
      %v4922 = vunpack.c.l.b16 %v4906
      %v4923 = vunpack.c.l.b16 %v4907
      %v4924 = vunpack.c.l.b16 %v4908
      %v4925 = vunpack.c.l.b16 %v4909
      %v4926 = vunpack.c.l.b16 %v4910
      %v4927 = vunpack.c.l.b16 %v4911
      %v4928 = vunpack.c.l.b16 %v4912
      %v4929 = vunpack.c.l.b16 %v4913
      %v4930 = vunpack.c.l.b16 %v4914
      %v4931 = vunpack.c.l.b16 %v4915
      %v4932 = vunpack.c.l.b16 %v4916
      %v4933 = vunpack.c.l.b16 %v4917
      %v4934 = vunpack.c.l.b16 %v4918
      %v4935 = vunpack.c.l.b16 %v4919
      %v4936 = vunpack.c.l.b16 %v4920
      %vm4937 = vcmask 1041409
      %v4938 = vsel %vm4937, %v4922, %v4921
      %vm4939 = vcmask 1042434
      %v4940 = vsel %vm4939, %v4923, %v4938
      %vm4941 = vcmask 1043459
      %v4942 = vsel %vm4941, %v4924, %v4940
      %vm4943 = vcmask 1044484
      %v4944 = vsel %vm4943, %v4925, %v4942
      %vm4945 = vcmask 1045509
      %v4946 = vsel %vm4945, %v4926, %v4944
      %vm4947 = vcmask 1046534
      %v4948 = vsel %vm4947, %v4927, %v4946
      %vm4949 = vcmask 1047559
      %v4950 = vsel %vm4949, %v4928, %v4948
      %v4951 = vsel %vm4937, %v4930, %v4929
      %v4952 = vsel %vm4939, %v4931, %v4951
      %v4953 = vsel %vm4941, %v4932, %v4952
      %v4954 = vsel %vm4943, %v4933, %v4953
      %v4955 = vsel %vm4945, %v4934, %v4954
      %v4956 = vsel %vm4947, %v4935, %v4955
      %v4957 = vsel %vm4949, %v4936, %v4956
      %v4958 = vpack.c.b16 %v4950, %v4950
      %v4959 = vpack.c.b16 %v4957, %v4957
      %4962 = vst [vmem:[%s283] sm:$0xf] %v4958
      %4963 = vst [vmem:[%s283 + $0x4] sm:$0xf] %v4959
      %s4964 = smul.u32 2, %s18
      %p4965 = scmp.lt.s32.totalorder %s4964, 7
      %s4966 = scalar_select %p4965, %s4964, 7
      %s4967 = smul.addr %s4966, 4
      %s4968 = scalar_lea.vmem %s7, %s4967
      // Predicated region
      $region49: #{pointnet_pp_forward.4} parent=47 // pred_check
        %p4969 = pneg %p188
      $region50: #{pointnet_pp_forward.4} parent=47 // pred_check_branch
        %4971 = sbr.rel (%p4969) target = $region52
      $region51: #{pointnet_pp_forward.4} parent=47 // pred_region
        %s4972 = smul.u32 2, %s18
      $region52: #{pointnet_pp_forward.4} parent=47 // pred_fallthru
        _
    $region48: #{pointnet_pp_forward.4} parent=5 // pred_fallthru
      _
    %p4973 = scmp.le.s32.totalorder 2, %s13
    // Predicated region
    $region53: #{pointnet_pp_forward.4} parent=5 // pred_check
      %p4974 = pneg %p4973
    $region54: #{pointnet_pp_forward.4} parent=5 // pred_check_branch
      %4976 = sbr.rel (%p4974) target = $region56
    $region55: #{pointnet_pp_forward.4} parent=5 // pred_region
      %s4977 = ssub.s32 %s13, 2
      // Predicated region
      $region57: #{pointnet_pp_forward.4} parent=55 // pred_check
        %p4978 = pneg %p194
      $region58: #{pointnet_pp_forward.4} parent=55 // pred_check_branch
        %4980 = sbr.rel (%p4978) target = $region60
      $region59: #{pointnet_pp_forward.4} parent=55 // pred_region
        %s4981 = smul.u32 2, %s19
        %p4982 = scmp.lt.s32.totalorder %s4981, 7
        %s4983 = scalar_select %p4982, %s4981, 7
        %s4984 = smul.addr %s4983, 4
        %s4985 = scalar_lea.vmem %s7, %s4984
      $region60: #{pointnet_pp_forward.4} parent=55 // pred_fallthru
        _
    $region56: #{pointnet_pp_forward.4} parent=5 // pred_fallthru
      _
  $region6: #{pointnet_pp_forward.4} parent=0 // loop_footer
    %s17 = sadd.s32 1, %s13
  $region7: #{pointnet_pp_forward.4} parent=0 // loop_footer_branch
    %12 = sbr.rel target = $region3
  $region8: #{pointnet_pp_forward.4} parent=0 // loop_exit
    _

// kernel: pointnet_pp_forward.5
$region0: #{pointnet_pp_forward.5}
  #allocation0 [shape = 'u32[]', space=smem, size = 0x4, offset = 0x4, fixed_abs, tag = 'smem constant byte address 0x4 - core index']
  #allocation1 [shape = 'u32[144,128]{1,0:T(1,128)}', space=vmem, size = 0x12000, scoped, tag = 'internal scratch']
  %s0 = inlined_call_operand.vmem [shape: bf16[512,128], index: 0, kind: input, shape index: {}]
  %s1 = inlined_call_operand.vmem [shape: bf16[16,96], index: 1, kind: input, shape index: {}]
  %s2 = inlined_call_operand.vmem [shape: bf16[128,128], index: 2, kind: input, shape index: {}]
  %s3 = inlined_call_operand.vmem [shape: f32[3,128], index: 3, kind: input, shape index: {}]
  %s4 = inlined_call_operand.vmem [shape: f32[1,128], index: 4, kind: input, shape index: {}]
  %s5 = inlined_call_operand.vmem [shape: bf16[128,128], index: 5, kind: input, shape index: {}]
  %s6 = inlined_call_operand.vmem [shape: f32[1,128], index: 6, kind: input, shape index: {}]
  %s7 = inlined_call_operand.vmem [shape: bf16[128,256], index: 7, kind: input, shape index: {}]
  %s8 = inlined_call_operand.vmem [shape: f32[1,256], index: 8, kind: input, shape index: {}]
  %s9 = inlined_call_operand.vmem [shape: bf16[16,256], index: 9, kind: output, shape index: {}]
  %s10 = sld [smem:[#allocation0]]
  $region69: #{pointnet_pp_forward.5} parent=0
    _
  %s12 = ssub.s32 1, %s10
  %s13 = scalar_select 0, %s12, %s10
  loop: start=0, step=1, limit=4
  $region2: #{pointnet_pp_forward.5} parent=0 // loop_pre_header
    _
  $region3: #{pointnet_pp_forward.5} parent=0 // loop_header
    %s15 = sphi 0, %s19
    %p16 = scmp.ge.s32.totalorder %s15, 4
    %s25 = sphi 0, %s27
    %s28 = sphi 0, %s25
    %s29 = sphi 0, %s28
    %s45 = sphi 0, %s29
    %s51 = sphi 0, %s53
    %s54 = sphi 0, %s51
    %s55 = sphi 0, %s54
    %s71 = sphi 0, %s55
    %s75 = sphi 0, %s75
    %s77 = sphi 0, %s75
    %s78 = sphi 0, %s77
    %s92 = sphi 0, %s78
    %s96 = sphi 0, %s96
    %s98 = sphi 0, %s96
    %s99 = sphi 0, %s98
    %s113 = sphi 0, %s99
    %s117 = sphi 0, %s117
    %s119 = sphi 0, %s117
    %s120 = sphi 0, %s119
    %s134 = sphi 0, %s120
    %s138 = sphi 0, %s138
    %s140 = sphi 0, %s138
    %s141 = sphi 0, %s140
    %s155 = sphi 0, %s141
    %s159 = sphi 0, %s159
    %s161 = sphi 0, %s159
    %s162 = sphi 0, %s161
    %s176 = sphi 0, %s162
    %s180 = sphi 0, %s180
    %s182 = sphi 0, %s180
    %s183 = sphi 0, %s182
    %s197 = sphi 0, %s183
    %s201 = sphi 0, %s201
    %s203 = sphi 0, %s201
    %s204 = sphi 0, %s203
    %s218 = sphi 0, %s204
    %s224 = sphi 0, %s226
    %s227 = sphi 0, %s224
    %s228 = sphi 0, %s227
    %s244 = sphi 0, %s228
  $region4: #{pointnet_pp_forward.5} parent=0 // loop_header_branch
    %18 = sbr.rel (%p16) target = $region8
  $region5: #{pointnet_pp_forward.5} parent=0 // loop_body
    %s20 = ssub.s32 %s15, 1
    %s21 = ssub.s32 %s15, 2
    %s22 = sadd.s32 %s15, 1
    %s23 = ssub.s32 %s15, %s22
    %p24 = scmp.eq.s32.totalorder %s23, 0
    %s26 = sadd.s32 %s25, 1
    %s27 = scalar_select %p24, %s25, %s26
    %p30 = pneg %p24
    %p31 = scmp.eq.s32.totalorder %s15, 1
    %p32 = por %p30, %p31
    %p33 = scmp.ne.s32.totalorder %s25, %s28
    %p34 = scmp.eq.s32.totalorder %s15, 0
    %p35 = por %p33, %p34
    %p36 = scmp.ne.s32.totalorder %s25, %s28
    %p37 = scmp.eq.s32.totalorder %s20, 1
    %p38 = por %p36, %p37
    %p39 = scmp.ne.s32.totalorder %s28, %s29
    %p40 = scmp.eq.s32.totalorder %s20, 0
    %p41 = por %p39, %p40
    %p42 = scmp.ne.s32.totalorder %s28, %s29
    %p43 = scmp.eq.s32.totalorder %s21, 1
    %p44 = por %p42, %p43
    %p46 = scmp.ne.s32.totalorder %s29, %s45
    %p47 = scmp.eq.s32.totalorder %s21, 0
    %p48 = por %p46, %p47
    %s49 = ssub.s32 %s15, %s22
    %p50 = scmp.eq.s32.totalorder %s49, 0
    %s52 = sadd.s32 %s51, 1
    %s53 = scalar_select %p50, %s51, %s52
    %p56 = pneg %p50
    %p57 = scmp.eq.s32.totalorder %s15, 1
    %p58 = por %p56, %p57
    %p59 = scmp.ne.s32.totalorder %s51, %s54
    %p60 = scmp.eq.s32.totalorder %s15, 0
    %p61 = por %p59, %p60
    %p62 = scmp.ne.s32.totalorder %s51, %s54
    %p63 = scmp.eq.s32.totalorder %s20, 1
    %p64 = por %p62, %p63
    %p65 = scmp.ne.s32.totalorder %s54, %s55
    %p66 = scmp.eq.s32.totalorder %s20, 0
    %p67 = por %p65, %p66
    %p68 = scmp.ne.s32.totalorder %s54, %s55
    %p69 = scmp.eq.s32.totalorder %s21, 1
    %p70 = por %p68, %p69
    %p72 = scmp.ne.s32.totalorder %s55, %s71
    %p73 = scmp.eq.s32.totalorder %s21, 0
    %p74 = por %p72, %p73
    %s76 = sadd.s32 %s75, 1
    %p79 = scmp.eq.s32.totalorder %s15, 1
    %p80 = scmp.ne.s32.totalorder %s75, %s77
    %p81 = scmp.eq.s32.totalorder %s15, 0
    %p82 = por %p80, %p81
    %p83 = scmp.ne.s32.totalorder %s75, %s77
    %p84 = scmp.eq.s32.totalorder %s20, 1
    %p85 = por %p83, %p84
    %p86 = scmp.ne.s32.totalorder %s77, %s78
    %p87 = scmp.eq.s32.totalorder %s20, 0
    %p88 = por %p86, %p87
    %p89 = scmp.ne.s32.totalorder %s77, %s78
    %p90 = scmp.eq.s32.totalorder %s21, 1
    %p91 = por %p89, %p90
    %p93 = scmp.ne.s32.totalorder %s78, %s92
    %p94 = scmp.eq.s32.totalorder %s21, 0
    %p95 = por %p93, %p94
    %s97 = sadd.s32 %s96, 1
    %p100 = scmp.eq.s32.totalorder %s15, 1
    %p101 = scmp.ne.s32.totalorder %s96, %s98
    %p102 = scmp.eq.s32.totalorder %s15, 0
    %p103 = por %p101, %p102
    %p104 = scmp.ne.s32.totalorder %s96, %s98
    %p105 = scmp.eq.s32.totalorder %s20, 1
    %p106 = por %p104, %p105
    %p107 = scmp.ne.s32.totalorder %s98, %s99
    %p108 = scmp.eq.s32.totalorder %s20, 0
    %p109 = por %p107, %p108
    %p110 = scmp.ne.s32.totalorder %s98, %s99
    %p111 = scmp.eq.s32.totalorder %s21, 1
    %p112 = por %p110, %p111
    %p114 = scmp.ne.s32.totalorder %s99, %s113
    %p115 = scmp.eq.s32.totalorder %s21, 0
    %p116 = por %p114, %p115
    %s118 = sadd.s32 %s117, 1
    %p121 = scmp.eq.s32.totalorder %s15, 1
    %p122 = scmp.ne.s32.totalorder %s117, %s119
    %p123 = scmp.eq.s32.totalorder %s15, 0
    %p124 = por %p122, %p123
    %p125 = scmp.ne.s32.totalorder %s117, %s119
    %p126 = scmp.eq.s32.totalorder %s20, 1
    %p127 = por %p125, %p126
    %p128 = scmp.ne.s32.totalorder %s119, %s120
    %p129 = scmp.eq.s32.totalorder %s20, 0
    %p130 = por %p128, %p129
    %p131 = scmp.ne.s32.totalorder %s119, %s120
    %p132 = scmp.eq.s32.totalorder %s21, 1
    %p133 = por %p131, %p132
    %p135 = scmp.ne.s32.totalorder %s120, %s134
    %p136 = scmp.eq.s32.totalorder %s21, 0
    %p137 = por %p135, %p136
    %s139 = sadd.s32 %s138, 1
    %p142 = scmp.eq.s32.totalorder %s15, 1
    %p143 = scmp.ne.s32.totalorder %s138, %s140
    %p144 = scmp.eq.s32.totalorder %s15, 0
    %p145 = por %p143, %p144
    %p146 = scmp.ne.s32.totalorder %s138, %s140
    %p147 = scmp.eq.s32.totalorder %s20, 1
    %p148 = por %p146, %p147
    %p149 = scmp.ne.s32.totalorder %s140, %s141
    %p150 = scmp.eq.s32.totalorder %s20, 0
    %p151 = por %p149, %p150
    %p152 = scmp.ne.s32.totalorder %s140, %s141
    %p153 = scmp.eq.s32.totalorder %s21, 1
    %p154 = por %p152, %p153
    %p156 = scmp.ne.s32.totalorder %s141, %s155
    %p157 = scmp.eq.s32.totalorder %s21, 0
    %p158 = por %p156, %p157
    %s160 = sadd.s32 %s159, 1
    %p163 = scmp.eq.s32.totalorder %s15, 1
    %p164 = scmp.ne.s32.totalorder %s159, %s161
    %p165 = scmp.eq.s32.totalorder %s15, 0
    %p166 = por %p164, %p165
    %p167 = scmp.ne.s32.totalorder %s159, %s161
    %p168 = scmp.eq.s32.totalorder %s20, 1
    %p169 = por %p167, %p168
    %p170 = scmp.ne.s32.totalorder %s161, %s162
    %p171 = scmp.eq.s32.totalorder %s20, 0
    %p172 = por %p170, %p171
    %p173 = scmp.ne.s32.totalorder %s161, %s162
    %p174 = scmp.eq.s32.totalorder %s21, 1
    %p175 = por %p173, %p174
    %p177 = scmp.ne.s32.totalorder %s162, %s176
    %p178 = scmp.eq.s32.totalorder %s21, 0
    %p179 = por %p177, %p178
    %s181 = sadd.s32 %s180, 1
    %p184 = scmp.eq.s32.totalorder %s15, 1
    %p185 = scmp.ne.s32.totalorder %s180, %s182
    %p186 = scmp.eq.s32.totalorder %s15, 0
    %p187 = por %p185, %p186
    %p188 = scmp.ne.s32.totalorder %s180, %s182
    %p189 = scmp.eq.s32.totalorder %s20, 1
    %p190 = por %p188, %p189
    %p191 = scmp.ne.s32.totalorder %s182, %s183
    %p192 = scmp.eq.s32.totalorder %s20, 0
    %p193 = por %p191, %p192
    %p194 = scmp.ne.s32.totalorder %s182, %s183
    %p195 = scmp.eq.s32.totalorder %s21, 1
    %p196 = por %p194, %p195
    %p198 = scmp.ne.s32.totalorder %s183, %s197
    %p199 = scmp.eq.s32.totalorder %s21, 0
    %p200 = por %p198, %p199
    %s202 = sadd.s32 %s201, 1
    %p205 = scmp.eq.s32.totalorder %s15, 1
    %p206 = scmp.ne.s32.totalorder %s201, %s203
    %p207 = scmp.eq.s32.totalorder %s15, 0
    %p208 = por %p206, %p207
    %p209 = scmp.ne.s32.totalorder %s201, %s203
    %p210 = scmp.eq.s32.totalorder %s20, 1
    %p211 = por %p209, %p210
    %p212 = scmp.ne.s32.totalorder %s203, %s204
    %p213 = scmp.eq.s32.totalorder %s20, 0
    %p214 = por %p212, %p213
    %p215 = scmp.ne.s32.totalorder %s203, %s204
    %p216 = scmp.eq.s32.totalorder %s21, 1
    %p217 = por %p215, %p216
    %p219 = scmp.ne.s32.totalorder %s204, %s218
    %p220 = scmp.eq.s32.totalorder %s21, 0
    %p221 = por %p219, %p220
    %s222 = ssub.s32 %s15, %s22
    %p223 = scmp.eq.s32.totalorder %s222, 0
    %s225 = sadd.s32 %s224, 1
    %s226 = scalar_select %p223, %s224, %s225
    %p229 = pneg %p223
    %p230 = scmp.eq.s32.totalorder %s15, 1
    %p231 = por %p229, %p230
    %p232 = scmp.ne.s32.totalorder %s224, %s227
    %p233 = scmp.eq.s32.totalorder %s15, 0
    %p234 = por %p232, %p233
    %p235 = scmp.ne.s32.totalorder %s224, %s227
    %p236 = scmp.eq.s32.totalorder %s20, 1
    %p237 = por %p235, %p236
    %p238 = scmp.ne.s32.totalorder %s227, %s228
    %p239 = scmp.eq.s32.totalorder %s20, 0
    %p240 = por %p238, %p239
    %p241 = scmp.ne.s32.totalorder %s227, %s228
    %p242 = scmp.eq.s32.totalorder %s21, 1
    %p243 = por %p241, %p242
    %p245 = scmp.ne.s32.totalorder %s228, %s244
    %p246 = scmp.eq.s32.totalorder %s21, 0
    %p247 = por %p245, %p246
    %p248 = scmp.le.s32.totalorder 1, %s15
    %p249 = scmp.lt.s32.totalorder %s15, 3
    %p250 = pnand %p248, %p249
    %p251 = pneg %p250
    // Predicated region
    $region9: #{pointnet_pp_forward.5} parent=5 // pred_check
      _
    $region10: #{pointnet_pp_forward.5} parent=5 // pred_check_branch
      %253 = sbr.rel (%p250) target = $region12
    $region11: #{pointnet_pp_forward.5} parent=5 // pred_region
      %s254 = ssub.s32 %s15, 1
      // Predicated region
      $region13: #{pointnet_pp_forward.5} parent=11 // pred_check
        %p255 = pneg %p88
      $region14: #{pointnet_pp_forward.5} parent=11 // pred_check_branch
        %257 = sbr.rel (%p255) target = $region16
      $region15: #{pointnet_pp_forward.5} parent=11 // pred_region
        _
      $region16: #{pointnet_pp_forward.5} parent=11 // pred_fallthru
        _
      // Predicated region
      $region17: #{pointnet_pp_forward.5} parent=11 // pred_check
        %p258 = pneg %p109
      $region18: #{pointnet_pp_forward.5} parent=11 // pred_check_branch
        %260 = sbr.rel (%p258) target = $region20
      $region19: #{pointnet_pp_forward.5} parent=11 // pred_region
        _
      $region20: #{pointnet_pp_forward.5} parent=11 // pred_fallthru
        _
      // Predicated region
      $region21: #{pointnet_pp_forward.5} parent=11 // pred_check
        %p261 = pneg %p130
      $region22: #{pointnet_pp_forward.5} parent=11 // pred_check_branch
        %263 = sbr.rel (%p261) target = $region24
      $region23: #{pointnet_pp_forward.5} parent=11 // pred_region
        _
      $region24: #{pointnet_pp_forward.5} parent=11 // pred_fallthru
        _
      // Predicated region
      $region25: #{pointnet_pp_forward.5} parent=11 // pred_check
        %p264 = pneg %p151
      $region26: #{pointnet_pp_forward.5} parent=11 // pred_check_branch
        %266 = sbr.rel (%p264) target = $region28
      $region27: #{pointnet_pp_forward.5} parent=11 // pred_region
        _
      $region28: #{pointnet_pp_forward.5} parent=11 // pred_fallthru
        _
      // Predicated region
      $region29: #{pointnet_pp_forward.5} parent=11 // pred_check
        %p267 = pneg %p172
      $region30: #{pointnet_pp_forward.5} parent=11 // pred_check_branch
        %269 = sbr.rel (%p267) target = $region32
      $region31: #{pointnet_pp_forward.5} parent=11 // pred_region
        _
      $region32: #{pointnet_pp_forward.5} parent=11 // pred_fallthru
        _
      // Predicated region
      $region33: #{pointnet_pp_forward.5} parent=11 // pred_check
        %p270 = pneg %p193
      $region34: #{pointnet_pp_forward.5} parent=11 // pred_check_branch
        %272 = sbr.rel (%p270) target = $region36
      $region35: #{pointnet_pp_forward.5} parent=11 // pred_region
        _
      $region36: #{pointnet_pp_forward.5} parent=11 // pred_fallthru
        _
      // Predicated region
      $region37: #{pointnet_pp_forward.5} parent=11 // pred_check
        %p273 = pneg %p214
      $region38: #{pointnet_pp_forward.5} parent=11 // pred_check_branch
        %275 = sbr.rel (%p273) target = $region40
      $region39: #{pointnet_pp_forward.5} parent=11 // pred_region
        _
      $region40: #{pointnet_pp_forward.5} parent=11 // pred_fallthru
        _
    $region12: #{pointnet_pp_forward.5} parent=5 // pred_fallthru
      _
    %p276 = scmp.lt.s32.totalorder %s15, 2
    // Predicated region
    $region41: #{pointnet_pp_forward.5} parent=5 // pred_check
      %p277 = pneg %p276
    $region42: #{pointnet_pp_forward.5} parent=5 // pred_check_branch
      %279 = sbr.rel (%p277) target = $region44
    $region43: #{pointnet_pp_forward.5} parent=5 // pred_region
      // Predicated region
      $region45: #{pointnet_pp_forward.5} parent=43 // pred_check
        %p280 = pneg %p35
      $region46: #{pointnet_pp_forward.5} parent=43 // pred_check_branch
        %282 = sbr.rel (%p280) target = $region48
      $region47: #{pointnet_pp_forward.5} parent=43 // pred_region
        %s283 = smul.u32 32, %s15
        %p284 = scmp.lt.s32.totalorder %s283, 63
        %s285 = scalar_select %p284, %s283, 63
        %s286 = smul.addr %s285, 4
        %s287 = scalar_lea.vmem %s0, %s286
        %s288 = smul.u32 32, %s15
      $region48: #{pointnet_pp_forward.5} parent=43 // pred_fallthru
        _
      // Predicated region
      $region49: #{pointnet_pp_forward.5} parent=43 // pred_check
        %p289 = pneg %p61
      $region50: #{pointnet_pp_forward.5} parent=43 // pred_check_branch
        %291 = sbr.rel (%p289) target = $region52
      $region51: #{pointnet_pp_forward.5} parent=43 // pred_region
        %p292 = scmp.lt.s32.totalorder %s15, 1
        %s293 = scalar_select %p292, %s15, 1
        %s294 = smul.addr %s293, 4
        %s295 = scalar_lea.vmem %s1, %s294
      $region52: #{pointnet_pp_forward.5} parent=43 // pred_fallthru
        _
    $region44: #{pointnet_pp_forward.5} parent=5 // pred_fallthru
      _
    %p296 = scmp.le.s32.totalorder 1, %s15
    %p297 = scmp.lt.s32.totalorder %s15, 3
    %p298 = pnand %p296, %p297
    %p299 = pneg %p298
    // Predicated region
    $region53: #{pointnet_pp_forward.5} parent=5 // pred_check
      _
    $region54: #{pointnet_pp_forward.5} parent=5 // pred_check_branch
      %301 = sbr.rel (%p298) target = $region56
    $region55: #{pointnet_pp_forward.5} parent=5 // pred_region
      %s302 = ssub.s32 %s15, 1
      %s303 = smul.u32 32, %s20
      %p304 = scmp.lt.s32.totalorder %s303, 63
      %s305 = scalar_select %p304, %s303, 63
      %s306 = smul.addr %s305, 4
      %s307 = scalar_lea.vmem %s0, %s306
      %p308 = pneg %p41
      %p309 = pneg %p38
      %p310 = scmp.lt.s32.totalorder %s20, 1
      %s311 = scalar_select %p310, %s20, 1
      %s312 = smul.addr %s311, 4
      %s313 = scalar_lea.vmem %s1, %s312
      %p314 = pneg %p67
      %p315 = pneg %p64
      %p316 = pneg %p88
      %p317 = pneg %p85
      %p318 = pneg %p109
      %p319 = pneg %p106
      %p320 = pneg %p130
      %p321 = pneg %p127
      %p322 = pneg %p151
      %p323 = pneg %p148
      %p324 = pneg %p172
      %p325 = pneg %p169
      %p326 = pneg %p193
      %p327 = pneg %p190
      %p328 = pneg %p214
      %p329 = pneg %p211
      %p330 = pneg %p240
      %p331 = pneg %p237
      %p332 = scmp.lt.s32.totalorder %s20, 1
      %s333 = scalar_select %p332, %s20, 1
      %s334 = smul.addr %s333, 2
      %s335 = smul.addr %s334, 4
      %s336 = scalar_lea.vmem %s9, %s335
      %s337 = smul.u32 32, %s20
      %p338 = scmp.lt.s32.totalorder %s337, 63
      %s339 = scalar_select %p338, %s337, 63
      %s340 = smul.addr %s339, 4
      %s341 = scalar_lea.vmem %s0, %s340
      %s342 = smul.u32 32, %s20
      %p343 = scmp.lt.s32.totalorder %s20, 1
      %s344 = scalar_select %p343, %s20, 1
      %s345 = smul.addr %s344, 4
      %s346 = scalar_lea.vmem %s1, %s345
      %p347 = scmp.lt.s32.totalorder %s20, 1
      %s348 = scalar_select %p347, %s20, 1
      %s349 = smul.addr %s348, 2
      %s350 = smul.addr %s349, 4
      %s351 = scalar_lea.vmem %s9, %s350
      %v353 = vld [vmem:[%s346] sm:$0xf]
      %v354 = vunpack.c.l.bf16 %v353
      %v355 = vld [vmem:[%s3] sm:$0x7]
      %v356 = vlaneseq
      %v357 = vshrl.u32 %v356, 7
      %v358 = vsub.s32 0, %v357
      %v359 = vrot.slane %v354, %v358
      %361 = vbcast.lane.b32.xlu0 %v359, 256
      %v362 = vpop.permute.xlu0 %361
      %s364 = sor.u32 256, 8
      %365 = vbcast.lane.b32.xlu0 %v359, %s364
      %v366 = vpop.permute.xlu0 %365
      %s368 = sor.u32 256, 16
      %369 = vbcast.lane.b32.xlu0 %v359, %s368
      %v370 = vpop.permute.xlu0 %369
      %s372 = sor.u32 256, 24
      %373 = vbcast.lane.b32.xlu0 %v359, %s372
      %v374 = vpop.permute.xlu0 %373
      %v375 = vlaneseq
      %v376 = vshrl.u32 %v375, 7
      %v377 = vsub.s32 1, %v376
      %v378 = vrot.slane %v354, %v377
      %380 = vbcast.lane.b32.xlu0 %v378, 256
      %v381 = vpop.permute.xlu0 %380
      %s383 = sor.u32 256, 8
      %384 = vbcast.lane.b32.xlu0 %v378, %s383
      %v385 = vpop.permute.xlu0 %384
      %s387 = sor.u32 256, 16
      %388 = vbcast.lane.b32.xlu0 %v378, %s387
      %v389 = vpop.permute.xlu0 %388
      %s391 = sor.u32 256, 24
      %392 = vbcast.lane.b32.xlu0 %v378, %s391
      %v393 = vpop.permute.xlu0 %392
      %v394 = vlaneseq
      %v395 = vshrl.u32 %v394, 7
      %v396 = vsub.s32 2, %v395
      %v397 = vrot.slane %v354, %v396
      %399 = vbcast.lane.b32.xlu0 %v397, 256
      %v400 = vpop.permute.xlu0 %399
      %s402 = sor.u32 256, 8
      %403 = vbcast.lane.b32.xlu0 %v397, %s402
      %v404 = vpop.permute.xlu0 %403
      %s406 = sor.u32 256, 16
      %407 = vbcast.lane.b32.xlu0 %v397, %s406
      %v408 = vpop.permute.xlu0 %407
      %s410 = sor.u32 256, 24
      %411 = vbcast.lane.b32.xlu0 %v397, %s410
      %v412 = vpop.permute.xlu0 %411
      %v413 = vlaneseq
      %v414 = vshrl.u32 %v413, 7
      %v415 = vsub.s32 3, %v414
      %v416 = vrot.slane %v354, %v415
      %418 = vbcast.lane.b32.xlu0 %v416, 256
      %v419 = vpop.permute.xlu0 %418
      %s421 = sor.u32 256, 8
      %422 = vbcast.lane.b32.xlu0 %v416, %s421
      %v423 = vpop.permute.xlu0 %422
      %s425 = sor.u32 256, 16
      %426 = vbcast.lane.b32.xlu0 %v416, %s425
      %v427 = vpop.permute.xlu0 %426
      %s429 = sor.u32 256, 24
      %430 = vbcast.lane.b32.xlu0 %v416, %s429
      %v431 = vpop.permute.xlu0 %430
      %v432 = vlaneseq
      %v433 = vshrl.u32 %v432, 7
      %v434 = vsub.s32 4, %v433
      %v435 = vrot.slane %v354, %v434
      %437 = vbcast.lane.b32.xlu0 %v435, 256
      %v438 = vpop.permute.xlu0 %437
      %s440 = sor.u32 256, 8
      %441 = vbcast.lane.b32.xlu0 %v435, %s440
      %v442 = vpop.permute.xlu0 %441
      %s444 = sor.u32 256, 16
      %445 = vbcast.lane.b32.xlu0 %v435, %s444
      %v446 = vpop.permute.xlu0 %445
      %s448 = sor.u32 256, 24
      %449 = vbcast.lane.b32.xlu0 %v435, %s448
      %v450 = vpop.permute.xlu0 %449
      %v451 = vlaneseq
      %v452 = vshrl.u32 %v451, 7
      %v453 = vsub.s32 5, %v452
      %v454 = vrot.slane %v354, %v453
      %456 = vbcast.lane.b32.xlu0 %v454, 256
      %v457 = vpop.permute.xlu0 %456
      %s459 = sor.u32 256, 8
      %460 = vbcast.lane.b32.xlu0 %v454, %s459
      %v461 = vpop.permute.xlu0 %460
      %s463 = sor.u32 256, 16
      %464 = vbcast.lane.b32.xlu0 %v454, %s463
      %v465 = vpop.permute.xlu0 %464
      %s467 = sor.u32 256, 24
      %468 = vbcast.lane.b32.xlu0 %v454, %s467
      %v469 = vpop.permute.xlu0 %468
      %v470 = vlaneseq
      %v471 = vshrl.u32 %v470, 7
      %v472 = vsub.s32 6, %v471
      %v473 = vrot.slane %v354, %v472
      %475 = vbcast.lane.b32.xlu0 %v473, 256
      %v476 = vpop.permute.xlu0 %475
      %s478 = sor.u32 256, 8
      %479 = vbcast.lane.b32.xlu0 %v473, %s478
      %v480 = vpop.permute.xlu0 %479
      %s482 = sor.u32 256, 16
      %483 = vbcast.lane.b32.xlu0 %v473, %s482
      %v484 = vpop.permute.xlu0 %483
      %s486 = sor.u32 256, 24
      %487 = vbcast.lane.b32.xlu0 %v473, %s486
      %v488 = vpop.permute.xlu0 %487
      %v489 = vlaneseq
      %v490 = vshrl.u32 %v489, 7
      %v491 = vsub.s32 7, %v490
      %v492 = vrot.slane %v354, %v491
      %494 = vbcast.lane.b32.xlu0 %v492, 256
      %v495 = vpop.permute.xlu0 %494
      %s497 = sor.u32 256, 8
      %498 = vbcast.lane.b32.xlu0 %v492, %s497
      %v499 = vpop.permute.xlu0 %498
      %s501 = sor.u32 256, 16
      %502 = vbcast.lane.b32.xlu0 %v492, %s501
      %v503 = vpop.permute.xlu0 %502
      %s505 = sor.u32 256, 24
      %506 = vbcast.lane.b32.xlu0 %v492, %s505
      %v507 = vpop.permute.xlu0 %506
      %v508 = vlaneseq
      %v509 = vshrl.u32 %v508, 7
      %v510 = vsub.s32 0, %v509
      %v511 = vrot.slane %v355, %v510
      %v512 = vmul.f32 %v362, %v511
      %v513 = vmul.f32 %v366, %v511
      %v514 = vmul.f32 %v370, %v511
      %v515 = vmul.f32 %v374, %v511
      %v516 = vmul.f32 %v381, %v511
      %v517 = vmul.f32 %v385, %v511
      %v518 = vmul.f32 %v389, %v511
      %v519 = vmul.f32 %v393, %v511
      %v520 = vmul.f32 %v400, %v511
      %v521 = vmul.f32 %v404, %v511
      %v522 = vmul.f32 %v408, %v511
      %v523 = vmul.f32 %v412, %v511
      %v524 = vmul.f32 %v419, %v511
      %v525 = vmul.f32 %v423, %v511
      %v526 = vmul.f32 %v427, %v511
      %v527 = vmul.f32 %v431, %v511
      %v528 = vmul.f32 %v438, %v511
      %v529 = vmul.f32 %v442, %v511
      %v530 = vmul.f32 %v446, %v511
      %v531 = vmul.f32 %v450, %v511
      %v532 = vmul.f32 %v457, %v511
      %v533 = vmul.f32 %v461, %v511
      %v534 = vmul.f32 %v465, %v511
      %v535 = vmul.f32 %v469, %v511
      %v536 = vmul.f32 %v476, %v511
      %v537 = vmul.f32 %v480, %v511
      %v538 = vmul.f32 %v484, %v511
      %v539 = vmul.f32 %v488, %v511
      %v540 = vmul.f32 %v495, %v511
      %v541 = vmul.f32 %v499, %v511
      %v542 = vmul.f32 %v503, %v511
      %v543 = vmul.f32 %v507, %v511
      %s545 = sor.u32 256, 32
      %546 = vbcast.lane.b32.xlu0 %v359, %s545
      %v547 = vpop.permute.xlu0 %546
      %s549 = sor.u32 256, 40
      %550 = vbcast.lane.b32.xlu0 %v359, %s549
      %v551 = vpop.permute.xlu0 %550
      %s553 = sor.u32 256, 48
      %554 = vbcast.lane.b32.xlu0 %v359, %s553
      %v555 = vpop.permute.xlu0 %554
      %s557 = sor.u32 256, 56
      %558 = vbcast.lane.b32.xlu0 %v359, %s557
      %v559 = vpop.permute.xlu0 %558
      %s561 = sor.u32 256, 32
      %562 = vbcast.lane.b32.xlu0 %v378, %s561
      %v563 = vpop.permute.xlu0 %562
      %s565 = sor.u32 256, 40
      %566 = vbcast.lane.b32.xlu0 %v378, %s565
      %v567 = vpop.permute.xlu0 %566
      %s569 = sor.u32 256, 48
      %570 = vbcast.lane.b32.xlu0 %v378, %s569
      %v571 = vpop.permute.xlu0 %570
      %s573 = sor.u32 256, 56
      %574 = vbcast.lane.b32.xlu0 %v378, %s573
      %v575 = vpop.permute.xlu0 %574
      %s577 = sor.u32 256, 32
      %578 = vbcast.lane.b32.xlu0 %v397, %s577
      %v579 = vpop.permute.xlu0 %578
      %s581 = sor.u32 256, 40
      %582 = vbcast.lane.b32.xlu0 %v397, %s581
      %v583 = vpop.permute.xlu0 %582
      %s585 = sor.u32 256, 48
      %586 = vbcast.lane.b32.xlu0 %v397, %s585
      %v587 = vpop.permute.xlu0 %586
      %s589 = sor.u32 256, 56
      %590 = vbcast.lane.b32.xlu0 %v397, %s589
      %v591 = vpop.permute.xlu0 %590
      %s593 = sor.u32 256, 32
      %594 = vbcast.lane.b32.xlu0 %v416, %s593
      %v595 = vpop.permute.xlu0 %594
      %s597 = sor.u32 256, 40
      %598 = vbcast.lane.b32.xlu0 %v416, %s597
      %v599 = vpop.permute.xlu0 %598
      %s601 = sor.u32 256, 48
      %602 = vbcast.lane.b32.xlu0 %v416, %s601
      %v603 = vpop.permute.xlu0 %602
      %s605 = sor.u32 256, 56
      %606 = vbcast.lane.b32.xlu0 %v416, %s605
      %v607 = vpop.permute.xlu0 %606
      %s609 = sor.u32 256, 32
      %610 = vbcast.lane.b32.xlu0 %v435, %s609
      %v611 = vpop.permute.xlu0 %610
      %s613 = sor.u32 256, 40
      %614 = vbcast.lane.b32.xlu0 %v435, %s613
      %v615 = vpop.permute.xlu0 %614
      %s617 = sor.u32 256, 48
      %618 = vbcast.lane.b32.xlu0 %v435, %s617
      %v619 = vpop.permute.xlu0 %618
      %s621 = sor.u32 256, 56
      %622 = vbcast.lane.b32.xlu0 %v435, %s621
      %v623 = vpop.permute.xlu0 %622
      %s625 = sor.u32 256, 32
      %626 = vbcast.lane.b32.xlu0 %v454, %s625
      %v627 = vpop.permute.xlu0 %626
      %s629 = sor.u32 256, 40
      %630 = vbcast.lane.b32.xlu0 %v454, %s629
      %v631 = vpop.permute.xlu0 %630
      %s633 = sor.u32 256, 48
      %634 = vbcast.lane.b32.xlu0 %v454, %s633
      %v635 = vpop.permute.xlu0 %634
      %s637 = sor.u32 256, 56
      %638 = vbcast.lane.b32.xlu0 %v454, %s637
      %v639 = vpop.permute.xlu0 %638
      %s641 = sor.u32 256, 32
      %642 = vbcast.lane.b32.xlu0 %v473, %s641
      %v643 = vpop.permute.xlu0 %642
      %s645 = sor.u32 256, 40
      %646 = vbcast.lane.b32.xlu0 %v473, %s645
      %v647 = vpop.permute.xlu0 %646
      %s649 = sor.u32 256, 48
      %650 = vbcast.lane.b32.xlu0 %v473, %s649
      %v651 = vpop.permute.xlu0 %650
      %s653 = sor.u32 256, 56
      %654 = vbcast.lane.b32.xlu0 %v473, %s653
      %v655 = vpop.permute.xlu0 %654
      %s657 = sor.u32 256, 32
      %658 = vbcast.lane.b32.xlu0 %v492, %s657
      %v659 = vpop.permute.xlu0 %658
      %s661 = sor.u32 256, 40
      %662 = vbcast.lane.b32.xlu0 %v492, %s661
      %v663 = vpop.permute.xlu0 %662
      %s665 = sor.u32 256, 48
      %666 = vbcast.lane.b32.xlu0 %v492, %s665
      %v667 = vpop.permute.xlu0 %666
      %s669 = sor.u32 256, 56
      %670 = vbcast.lane.b32.xlu0 %v492, %s669
      %v671 = vpop.permute.xlu0 %670
      %v672 = vlaneseq
      %v673 = vshrl.u32 %v672, 7
      %v674 = vsub.s32 1, %v673
      %v675 = vrot.slane %v355, %v674
      %v676 = vmul.f32 %v547, %v675
      %v677 = vmul.f32 %v551, %v675
      %v678 = vmul.f32 %v555, %v675
      %v679 = vmul.f32 %v559, %v675
      %v680 = vmul.f32 %v563, %v675
      %v681 = vmul.f32 %v567, %v675
      %v682 = vmul.f32 %v571, %v675
      %v683 = vmul.f32 %v575, %v675
      %v684 = vmul.f32 %v579, %v675
      %v685 = vmul.f32 %v583, %v675
      %v686 = vmul.f32 %v587, %v675
      %v687 = vmul.f32 %v591, %v675
      %v688 = vmul.f32 %v595, %v675
      %v689 = vmul.f32 %v599, %v675
      %v690 = vmul.f32 %v603, %v675
      %v691 = vmul.f32 %v607, %v675
      %v692 = vmul.f32 %v611, %v675
      %v693 = vmul.f32 %v615, %v675
      %v694 = vmul.f32 %v619, %v675
      %v695 = vmul.f32 %v623, %v675
      %v696 = vmul.f32 %v627, %v675
      %v697 = vmul.f32 %v631, %v675
      %v698 = vmul.f32 %v635, %v675
      %v699 = vmul.f32 %v639, %v675
      %v700 = vmul.f32 %v643, %v675
      %v701 = vmul.f32 %v647, %v675
      %v702 = vmul.f32 %v651, %v675
      %v703 = vmul.f32 %v655, %v675
      %v704 = vmul.f32 %v659, %v675
      %v705 = vmul.f32 %v663, %v675
      %v706 = vmul.f32 %v667, %v675
      %v707 = vmul.f32 %v671, %v675
      %v708 = vadd.f32 %v512, %v676
      %v709 = vadd.f32 %v513, %v677
      %v710 = vadd.f32 %v514, %v678
      %v711 = vadd.f32 %v515, %v679
      %v712 = vadd.f32 %v516, %v680
      %v713 = vadd.f32 %v517, %v681
      %v714 = vadd.f32 %v518, %v682
      %v715 = vadd.f32 %v519, %v683
      %v716 = vadd.f32 %v520, %v684
      %v717 = vadd.f32 %v521, %v685
      %v718 = vadd.f32 %v522, %v686
      %v719 = vadd.f32 %v523, %v687
      %v720 = vadd.f32 %v524, %v688
      %v721 = vadd.f32 %v525, %v689
      %v722 = vadd.f32 %v526, %v690
      %v723 = vadd.f32 %v527, %v691
      %v724 = vadd.f32 %v528, %v692
      %v725 = vadd.f32 %v529, %v693
      %v726 = vadd.f32 %v530, %v694
      %v727 = vadd.f32 %v531, %v695
      %v728 = vadd.f32 %v532, %v696
      %v729 = vadd.f32 %v533, %v697
      %v730 = vadd.f32 %v534, %v698
      %v731 = vadd.f32 %v535, %v699
      %v732 = vadd.f32 %v536, %v700
      %v733 = vadd.f32 %v537, %v701
      %v734 = vadd.f32 %v538, %v702
      %v735 = vadd.f32 %v539, %v703
      %v736 = vadd.f32 %v540, %v704
      %v737 = vadd.f32 %v541, %v705
      %v738 = vadd.f32 %v542, %v706
      %v739 = vadd.f32 %v543, %v707
      %s741 = sor.u32 256, 64
      %742 = vbcast.lane.b32.xlu0 %v359, %s741
      %v743 = vpop.permute.xlu0 %742
      %s745 = sor.u32 256, 72
      %746 = vbcast.lane.b32.xlu0 %v359, %s745
      %v747 = vpop.permute.xlu0 %746
      %s749 = sor.u32 256, 80
      %750 = vbcast.lane.b32.xlu0 %v359, %s749
      %v751 = vpop.permute.xlu0 %750
      %s753 = sor.u32 256, 88
      %754 = vbcast.lane.b32.xlu0 %v359, %s753
      %v755 = vpop.permute.xlu0 %754
      %s757 = sor.u32 256, 64
      %758 = vbcast.lane.b32.xlu0 %v378, %s757
      %v759 = vpop.permute.xlu0 %758
      %s761 = sor.u32 256, 72
      %762 = vbcast.lane.b32.xlu0 %v378, %s761
      %v763 = vpop.permute.xlu0 %762
      %s765 = sor.u32 256, 80
      %766 = vbcast.lane.b32.xlu0 %v378, %s765
      %v767 = vpop.permute.xlu0 %766
      %s769 = sor.u32 256, 88
      %770 = vbcast.lane.b32.xlu0 %v378, %s769
      %v771 = vpop.permute.xlu0 %770
      %s773 = sor.u32 256, 64
      %774 = vbcast.lane.b32.xlu0 %v397, %s773
      %v775 = vpop.permute.xlu0 %774
      %s777 = sor.u32 256, 72
      %778 = vbcast.lane.b32.xlu0 %v397, %s777
      %v779 = vpop.permute.xlu0 %778
      %s781 = sor.u32 256, 80
      %782 = vbcast.lane.b32.xlu0 %v397, %s781
      %v783 = vpop.permute.xlu0 %782
      %s785 = sor.u32 256, 88
      %786 = vbcast.lane.b32.xlu0 %v397, %s785
      %v787 = vpop.permute.xlu0 %786
      %s789 = sor.u32 256, 64
      %790 = vbcast.lane.b32.xlu0 %v416, %s789
      %v791 = vpop.permute.xlu0 %790
      %s793 = sor.u32 256, 72
      %794 = vbcast.lane.b32.xlu0 %v416, %s793
      %v795 = vpop.permute.xlu0 %794
      %s797 = sor.u32 256, 80
      %798 = vbcast.lane.b32.xlu0 %v416, %s797
      %v799 = vpop.permute.xlu0 %798
      %s801 = sor.u32 256, 88
      %802 = vbcast.lane.b32.xlu0 %v416, %s801
      %v803 = vpop.permute.xlu0 %802
      %s805 = sor.u32 256, 64
      %806 = vbcast.lane.b32.xlu0 %v435, %s805
      %v807 = vpop.permute.xlu0 %806
      %s809 = sor.u32 256, 72
      %810 = vbcast.lane.b32.xlu0 %v435, %s809
      %v811 = vpop.permute.xlu0 %810
      %s813 = sor.u32 256, 80
      %814 = vbcast.lane.b32.xlu0 %v435, %s813
      %v815 = vpop.permute.xlu0 %814
      %s817 = sor.u32 256, 88
      %818 = vbcast.lane.b32.xlu0 %v435, %s817
      %v819 = vpop.permute.xlu0 %818
      %s821 = sor.u32 256, 64
      %822 = vbcast.lane.b32.xlu0 %v454, %s821
      %v823 = vpop.permute.xlu0 %822
      %s825 = sor.u32 256, 72
      %826 = vbcast.lane.b32.xlu0 %v454, %s825
      %v827 = vpop.permute.xlu0 %826
      %s829 = sor.u32 256, 80
      %830 = vbcast.lane.b32.xlu0 %v454, %s829
      %v831 = vpop.permute.xlu0 %830
      %s833 = sor.u32 256, 88
      %834 = vbcast.lane.b32.xlu0 %v454, %s833
      %v835 = vpop.permute.xlu0 %834
      %s837 = sor.u32 256, 64
      %838 = vbcast.lane.b32.xlu0 %v473, %s837
      %v839 = vpop.permute.xlu0 %838
      %s841 = sor.u32 256, 72
      %842 = vbcast.lane.b32.xlu0 %v473, %s841
      %v843 = vpop.permute.xlu0 %842
      %s845 = sor.u32 256, 80
      %846 = vbcast.lane.b32.xlu0 %v473, %s845
      %v847 = vpop.permute.xlu0 %846
      %s849 = sor.u32 256, 88
      %850 = vbcast.lane.b32.xlu0 %v473, %s849
      %v851 = vpop.permute.xlu0 %850
      %s853 = sor.u32 256, 64
      %854 = vbcast.lane.b32.xlu0 %v492, %s853
      %v855 = vpop.permute.xlu0 %854
      %s857 = sor.u32 256, 72
      %858 = vbcast.lane.b32.xlu0 %v492, %s857
      %v859 = vpop.permute.xlu0 %858
      %s861 = sor.u32 256, 80
      %862 = vbcast.lane.b32.xlu0 %v492, %s861
      %v863 = vpop.permute.xlu0 %862
      %s865 = sor.u32 256, 88
      %866 = vbcast.lane.b32.xlu0 %v492, %s865
      %v867 = vpop.permute.xlu0 %866
      %v868 = vlaneseq
      %v869 = vshrl.u32 %v868, 7
      %v870 = vsub.s32 2, %v869
      %v871 = vrot.slane %v355, %v870
      %v872 = vmul.f32 %v743, %v871
      %v873 = vmul.f32 %v747, %v871
      %v874 = vmul.f32 %v751, %v871
      %v875 = vmul.f32 %v755, %v871
      %v876 = vmul.f32 %v759, %v871
      %v877 = vmul.f32 %v763, %v871
      %v878 = vmul.f32 %v767, %v871
      %v879 = vmul.f32 %v771, %v871
      %v880 = vmul.f32 %v775, %v871
      %v881 = vmul.f32 %v779, %v871
      %v882 = vmul.f32 %v783, %v871
      %v883 = vmul.f32 %v787, %v871
      %v884 = vmul.f32 %v791, %v871
      %v885 = vmul.f32 %v795, %v871
      %v886 = vmul.f32 %v799, %v871
      %v887 = vmul.f32 %v803, %v871
      %v888 = vmul.f32 %v807, %v871
      %v889 = vmul.f32 %v811, %v871
      %v890 = vmul.f32 %v815, %v871
      %v891 = vmul.f32 %v819, %v871
      %v892 = vmul.f32 %v823, %v871
      %v893 = vmul.f32 %v827, %v871
      %v894 = vmul.f32 %v831, %v871
      %v895 = vmul.f32 %v835, %v871
      %v896 = vmul.f32 %v839, %v871
      %v897 = vmul.f32 %v843, %v871
      %v898 = vmul.f32 %v847, %v871
      %v899 = vmul.f32 %v851, %v871
      %v900 = vmul.f32 %v855, %v871
      %v901 = vmul.f32 %v859, %v871
      %v902 = vmul.f32 %v863, %v871
      %v903 = vmul.f32 %v867, %v871
      %v904 = vadd.f32 %v708, %v872
      %v905 = vadd.f32 %v709, %v873
      %v906 = vadd.f32 %v710, %v874
      %v907 = vadd.f32 %v711, %v875
      %v908 = vadd.f32 %v712, %v876
      %v909 = vadd.f32 %v713, %v877
      %v910 = vadd.f32 %v714, %v878
      %v911 = vadd.f32 %v715, %v879
      %v912 = vadd.f32 %v716, %v880
      %v913 = vadd.f32 %v717, %v881
      %v914 = vadd.f32 %v718, %v882
      %v915 = vadd.f32 %v719, %v883
      %v916 = vadd.f32 %v720, %v884
      %v917 = vadd.f32 %v721, %v885
      %v918 = vadd.f32 %v722, %v886
      %v919 = vadd.f32 %v723, %v887
      %v920 = vadd.f32 %v724, %v888
      %v921 = vadd.f32 %v725, %v889
      %v922 = vadd.f32 %v726, %v890
      %v923 = vadd.f32 %v727, %v891
      %v924 = vadd.f32 %v728, %v892
      %v925 = vadd.f32 %v729, %v893
      %v926 = vadd.f32 %v730, %v894
      %v927 = vadd.f32 %v731, %v895
      %v928 = vadd.f32 %v732, %v896
      %v929 = vadd.f32 %v733, %v897
      %v930 = vadd.f32 %v734, %v898
      %v931 = vadd.f32 %v735, %v899
      %v932 = vadd.f32 %v736, %v900
      %v933 = vadd.f32 %v737, %v901
      %v934 = vadd.f32 %v738, %v902
      %v935 = vadd.f32 %v739, %v903
      %v936 = vld [vmem:[%s4] sm:$0x1]
      %v938 = vlaneseq
      %v939 = vshrl.u32 %v938, 7
      %v940 = vsub.s32 0, %v939
      %v941 = vrot.slane %v936, %v940
      %v943 = vadd.f32 %v904, %v941
      %v944 = vadd.f32 %v905, %v941
      %v945 = vadd.f32 %v906, %v941
      %v946 = vadd.f32 %v907, %v941
      %v947 = vadd.f32 %v908, %v941
      %v948 = vadd.f32 %v909, %v941
      %v949 = vadd.f32 %v910, %v941
      %v950 = vadd.f32 %v911, %v941
      %v951 = vadd.f32 %v912, %v941
      %v952 = vadd.f32 %v913, %v941
      %v953 = vadd.f32 %v914, %v941
      %v954 = vadd.f32 %v915, %v941
      %v955 = vadd.f32 %v916, %v941
      %v956 = vadd.f32 %v917, %v941
      %v957 = vadd.f32 %v918, %v941
      %v958 = vadd.f32 %v919, %v941
      %v959 = vadd.f32 %v920, %v941
      %v960 = vadd.f32 %v921, %v941
      %v961 = vadd.f32 %v922, %v941
      %v962 = vadd.f32 %v923, %v941
      %v963 = vadd.f32 %v924, %v941
      %v964 = vadd.f32 %v925, %v941
      %v965 = vadd.f32 %v926, %v941
      %v966 = vadd.f32 %v927, %v941
      %v967 = vadd.f32 %v928, %v941
      %v968 = vadd.f32 %v929, %v941
      %v969 = vadd.f32 %v930, %v941
      %v970 = vadd.f32 %v931, %v941
      %v971 = vadd.f32 %v932, %v941
      %v972 = vadd.f32 %v933, %v941
      %v973 = vadd.f32 %v934, %v941
      %v974 = vadd.f32 %v935, %v941
      %v975 = vld [vmem:[%s341] sm:$0xf]
      %v976 = vld [vmem:[%s341 + $0x4] sm:$0xf]
      %v977 = vld [vmem:[%s341 + $0x8] sm:$0xf]
      %v978 = vld [vmem:[%s341 + $0xc] sm:$0xf]
      %v979 = vld [vmem:[%s341 + $0x10] sm:$0xf]
      %v980 = vld [vmem:[%s341 + $0x14] sm:$0xf]
      %v981 = vld [vmem:[%s341 + $0x18] sm:$0xf]
      %v982 = vld [vmem:[%s341 + $0x1c] sm:$0xf]
      %v983 = vld [vmem:[%s341 + $0x20] sm:$0xf]
      %v984 = vld [vmem:[%s341 + $0x24] sm:$0xf]
      %v985 = vld [vmem:[%s341 + $0x28] sm:$0xf]
      %v986 = vld [vmem:[%s341 + $0x2c] sm:$0xf]
      %v987 = vld [vmem:[%s341 + $0x30] sm:$0xf]
      %v988 = vld [vmem:[%s341 + $0x34] sm:$0xf]
      %v989 = vld [vmem:[%s341 + $0x38] sm:$0xf]
      %v990 = vld [vmem:[%s341 + $0x3c] sm:$0xf]
      %v991 = vld [vmem:[%s341 + $0x40] sm:$0xf]
      %v992 = vld [vmem:[%s341 + $0x44] sm:$0xf]
      %v993 = vld [vmem:[%s341 + $0x48] sm:$0xf]
      %v994 = vld [vmem:[%s341 + $0x4c] sm:$0xf]
      %v995 = vld [vmem:[%s341 + $0x50] sm:$0xf]
      %v996 = vld [vmem:[%s341 + $0x54] sm:$0xf]
      %v997 = vld [vmem:[%s341 + $0x58] sm:$0xf]
      %v998 = vld [vmem:[%s341 + $0x5c] sm:$0xf]
      %v999 = vld [vmem:[%s341 + $0x60] sm:$0xf]
      %v1000 = vld [vmem:[%s341 + $0x64] sm:$0xf]
      %v1001 = vld [vmem:[%s341 + $0x68] sm:$0xf]
      %v1002 = vld [vmem:[%s341 + $0x6c] sm:$0xf]
      %v1003 = vld [vmem:[%s341 + $0x70] sm:$0xf]
      %v1004 = vld [vmem:[%s341 + $0x74] sm:$0xf]
      %v1005 = vld [vmem:[%s341 + $0x78] sm:$0xf]
      %v1006 = vld [vmem:[%s341 + $0x7c] sm:$0xf]
      %v1007 = vld [vmem:[%s2] sm:$0xf]
      %v1008 = vld [vmem:[%s2 + $0x4] sm:$0xf]
      %v1009 = vld [vmem:[%s2 + $0x8] sm:$0xf]
      %v1010 = vld [vmem:[%s2 + $0xc] sm:$0xf]
      %v1011 = vld [vmem:[%s2 + $0x10] sm:$0xf]
      %v1012 = vld [vmem:[%s2 + $0x14] sm:$0xf]
      %v1013 = vld [vmem:[%s2 + $0x18] sm:$0xf]
      %v1014 = vld [vmem:[%s2 + $0x1c] sm:$0xf]
      %v1015 = vld [vmem:[%s2 + $0x20] sm:$0xf]
      %v1016 = vld [vmem:[%s2 + $0x24] sm:$0xf]
      %v1017 = vld [vmem:[%s2 + $0x28] sm:$0xf]
      %v1018 = vld [vmem:[%s2 + $0x2c] sm:$0xf]
      %v1019 = vld [vmem:[%s2 + $0x30] sm:$0xf]
      %v1020 = vld [vmem:[%s2 + $0x34] sm:$0xf]
      %v1021 = vld [vmem:[%s2 + $0x38] sm:$0xf]
      %v1022 = vld [vmem:[%s2 + $0x3c] sm:$0xf]
      %v1055 = vunpack.c.l.b16 %v975
      %v1056 = vunpack.c.l.b16 %v976
      %v1057 = vunpack.c.l.b16 %v977
      %v1058 = vunpack.c.l.b16 %v978
      %v1059 = vunpack.c.l.b16 %v979
      %v1060 = vunpack.c.l.b16 %v980
      %v1061 = vunpack.c.l.b16 %v981
      %v1062 = vunpack.c.l.b16 %v982
      %v1063 = vunpack.c.l.b16 %v983
      %v1064 = vunpack.c.l.b16 %v984
      %v1065 = vunpack.c.l.b16 %v985
      %v1066 = vunpack.c.l.b16 %v986
      %v1067 = vunpack.c.l.b16 %v987
      %v1068 = vunpack.c.l.b16 %v988
      %v1069 = vunpack.c.l.b16 %v989
      %v1070 = vunpack.c.l.b16 %v990
      %v1071 = vunpack.c.l.b16 %v991
      %v1072 = vunpack.c.l.b16 %v992
      %v1073 = vunpack.c.l.b16 %v993
      %v1074 = vunpack.c.l.b16 %v994
      %v1075 = vunpack.c.l.b16 %v995
      %v1076 = vunpack.c.l.b16 %v996
      %v1077 = vunpack.c.l.b16 %v997
      %v1078 = vunpack.c.l.b16 %v998
      %v1079 = vunpack.c.l.b16 %v999
      %v1080 = vunpack.c.l.b16 %v1000
      %v1081 = vunpack.c.l.b16 %v1001
      %v1082 = vunpack.c.l.b16 %v1002
      %v1083 = vunpack.c.l.b16 %v1003
      %v1084 = vunpack.c.l.b16 %v1004
      %v1085 = vunpack.c.l.b16 %v1005
      %v1086 = vunpack.c.l.b16 %v1006
      %v1087 = vpack.c.b16 %v1056, %v1055
      %v1088 = vpack.c.b16 %v1058, %v1057
      %v1089 = vpack.c.b16 %v1060, %v1059
      %v1090 = vpack.c.b16 %v1062, %v1061
      %v1091 = vpack.c.b16 %v1064, %v1063
      %v1092 = vpack.c.b16 %v1066, %v1065
      %v1093 = vpack.c.b16 %v1068, %v1067
      %v1094 = vpack.c.b16 %v1070, %v1069
      %v1095 = vpack.c.b16 %v1072, %v1071
      %v1096 = vpack.c.b16 %v1074, %v1073
      %v1097 = vpack.c.b16 %v1076, %v1075
      %v1098 = vpack.c.b16 %v1078, %v1077
      %v1099 = vpack.c.b16 %v1080, %v1079
      %v1100 = vpack.c.b16 %v1082, %v1081
      %v1101 = vpack.c.b16 %v1084, %v1083
      %v1102 = vpack.c.b16 %v1086, %v1085
      %v1135 = vunpack.c.l.b16 %v1007
      %v1136 = vunpack.c.l.b16 %v1008
      %v1137 = vunpack.c.l.b16 %v1009
      %v1138 = vunpack.c.l.b16 %v1010
      %v1139 = vunpack.c.l.b16 %v1011
      %v1140 = vunpack.c.l.b16 %v1012
      %v1141 = vunpack.c.l.b16 %v1013
      %v1142 = vunpack.c.l.b16 %v1014
      %v1143 = vunpack.c.l.b16 %v1015
      %v1144 = vunpack.c.l.b16 %v1016
      %v1145 = vunpack.c.l.b16 %v1017
      %v1146 = vunpack.c.l.b16 %v1018
      %v1147 = vunpack.c.l.b16 %v1019
      %v1148 = vunpack.c.l.b16 %v1020
      %v1149 = vunpack.c.l.b16 %v1021
      %v1150 = vunpack.c.l.b16 %v1022
      %v1151 = vpack.c.b16 %v1136, %v1135
      %v1152 = vpack.c.b16 %v1138, %v1137
      %v1153 = vpack.c.b16 %v1140, %v1139
      %v1154 = vpack.c.b16 %v1142, %v1141
      %v1155 = vpack.c.b16 %v1144, %v1143
      %v1156 = vpack.c.b16 %v1146, %v1145
      %v1157 = vpack.c.b16 %v1148, %v1147
      %v1158 = vpack.c.b16 %v1150, %v1149
      %1167 = vmatprep.subr.bf16.mxu0 0
      %1168 = vmatpush1.bf16.msra.mxu0 %v1158
      %1169 = vmatprep.subr.bf16.mxu0 0
      %1170 = vmatpush1.bf16.msra.mxu0 %v1157
      %1171 = vmatprep.subr.bf16.mxu0 0
      %1172 = vmatpush1.bf16.msra.mxu0 %v1156
      %1173 = vmatprep.subr.bf16.mxu0 0
      %1174 = vmatpush1.bf16.msra.mxu0 %v1155
      %1175 = vmatprep.subr.bf16.mxu0 0
      %1176 = vmatpush1.bf16.msra.mxu0 %v1154
      %1177 = vmatprep.subr.bf16.mxu0 0
      %1178 = vmatpush1.bf16.msra.mxu0 %v1153
      %1179 = vmatprep.subr.bf16.mxu0 0
      %1180 = vmatpush1.bf16.msra.mxu0 %v1152
      %1181 = vmatprep.subr.bf16.mxu0 0
      %1182 = vmatpush1.bf16.msra.mxu0 %v1151
      %1183 = vmatprep.subr.bf16.mxu0 0
      %1184 = vmatpush2.bf16.msra.mxu0 0
      %1185 = vmatprep.subr.bf16.mxu0 0
      %1186 = vmatpush2.bf16.msra.mxu0 0
      %1187 = vmatprep.subr.bf16.mxu0 0
      %1188 = vmatpush2.bf16.msra.mxu0 0
      %1189 = vmatprep.subr.bf16.mxu0 0
      %1190 = vmatpush2.bf16.msra.mxu0 0
      %1191 = vmatprep.subr.bf16.mxu0 0
      %1192 = vmatpush2.bf16.msra.mxu0 0
      %1193 = vmatprep.subr.bf16.mxu0 0
      %1194 = vmatpush2.bf16.msra.mxu0 0
      %1195 = vmatprep.subr.bf16.mxu0 0
      %1196 = vmatpush2.bf16.msra.mxu0 0
      %1197 = vmatprep.subr.bf16.mxu0 0
      %1198 = vmatpush2.bf16.msra.mxu0 0
      %1199 = vmatprep.mubr.bf16.mxu0 0
      %1200 = vmatmul.mubr.bf16.gmra.mxu0 %v1087
      %v1201 = vpop.f32.mrf.mxu0
      %v1202 = vadd.f32 0.0, %v1201
      %v1203 = vpop.f32.mrf.mxu0
      %v1204 = vpop.f32.mrf.mxu0
      %v1205 = vadd.f32 0.0, %v1204
      %v1206 = vpop.f32.mrf.mxu0
      %1207 = vmatprep.mubr.bf16.mxu0 0
      %1208 = vmatmul.mubr.bf16.gmra.mxu0 %v1088
      %v1209 = vpop.f32.mrf.mxu0
      %v1210 = vadd.f32 0.0, %v1209
      %v1211 = vpop.f32.mrf.mxu0
      %v1212 = vpop.f32.mrf.mxu0
      %v1213 = vadd.f32 0.0, %v1212
      %v1214 = vpop.f32.mrf.mxu0
      %1215 = vmatprep.mubr.bf16.mxu0 0
      %1216 = vmatmul.mubr.bf16.gmra.mxu0 %v1089
      %v1217 = vpop.f32.mrf.mxu0
      %v1218 = vadd.f32 0.0, %v1217
      %v1219 = vpop.f32.mrf.mxu0
      %v1220 = vpop.f32.mrf.mxu0
      %v1221 = vadd.f32 0.0, %v1220
      %v1222 = vpop.f32.mrf.mxu0
      %1223 = vmatprep.mubr.bf16.mxu0 0
      %1224 = vmatmul.mubr.bf16.gmra.mxu0 %v1090
      %v1225 = vpop.f32.mrf.mxu0
      %v1226 = vadd.f32 0.0, %v1225
      %v1227 = vpop.f32.mrf.mxu0
      %v1228 = vpop.f32.mrf.mxu0
      %v1229 = vadd.f32 0.0, %v1228
      %v1230 = vpop.f32.mrf.mxu0
      %1231 = vmatprep.mubr.bf16.mxu0 0
      %1232 = vmatmul.mubr.bf16.gmra.mxu0 %v1091
      %v1233 = vpop.f32.mrf.mxu0
      %v1234 = vadd.f32 0.0, %v1233
      %v1235 = vpop.f32.mrf.mxu0
      %v1236 = vpop.f32.mrf.mxu0
      %v1237 = vadd.f32 0.0, %v1236
      %v1238 = vpop.f32.mrf.mxu0
      %1239 = vmatprep.mubr.bf16.mxu0 0
      %1240 = vmatmul.mubr.bf16.gmra.mxu0 %v1092
      %v1241 = vpop.f32.mrf.mxu0
      %v1242 = vadd.f32 0.0, %v1241
      %v1243 = vpop.f32.mrf.mxu0
      %v1244 = vpop.f32.mrf.mxu0
      %v1245 = vadd.f32 0.0, %v1244
      %v1246 = vpop.f32.mrf.mxu0
      %1247 = vmatprep.mubr.bf16.mxu0 0
      %1248 = vmatmul.mubr.bf16.gmra.mxu0 %v1093
      %v1249 = vpop.f32.mrf.mxu0
      %v1250 = vadd.f32 0.0, %v1249
      %v1251 = vpop.f32.mrf.mxu0
      %v1252 = vpop.f32.mrf.mxu0
      %v1253 = vadd.f32 0.0, %v1252
      %v1254 = vpop.f32.mrf.mxu0
      %1255 = vmatprep.mubr.bf16.mxu0 0
      %1256 = vmatmul.mubr.bf16.gmra.mxu0 %v1094
      %v1257 = vpop.f32.mrf.mxu0
      %v1258 = vadd.f32 0.0, %v1257
      %v1259 = vpop.f32.mrf.mxu0
      %v1260 = vpop.f32.mrf.mxu0
      %v1261 = vadd.f32 0.0, %v1260
      %v1262 = vpop.f32.mrf.mxu0
      %1263 = vmatprep.mubr.bf16.mxu0 0
      %1264 = vmatmul.mubr.bf16.gmra.mxu0 %v1095
      %v1265 = vpop.f32.mrf.mxu0
      %v1266 = vadd.f32 0.0, %v1265
      %v1267 = vpop.f32.mrf.mxu0
      %v1268 = vpop.f32.mrf.mxu0
      %v1269 = vadd.f32 0.0, %v1268
      %v1270 = vpop.f32.mrf.mxu0
      %1271 = vmatprep.mubr.bf16.mxu0 0
      %1272 = vmatmul.mubr.bf16.gmra.mxu0 %v1096
      %v1273 = vpop.f32.mrf.mxu0
      %v1274 = vadd.f32 0.0, %v1273
      %v1275 = vpop.f32.mrf.mxu0
      %v1276 = vpop.f32.mrf.mxu0
      %v1277 = vadd.f32 0.0, %v1276
      %v1278 = vpop.f32.mrf.mxu0
      %1279 = vmatprep.mubr.bf16.mxu0 0
      %1280 = vmatmul.mubr.bf16.gmra.mxu0 %v1097
      %v1281 = vpop.f32.mrf.mxu0
      %v1282 = vadd.f32 0.0, %v1281
      %v1283 = vpop.f32.mrf.mxu0
      %v1284 = vpop.f32.mrf.mxu0
      %v1285 = vadd.f32 0.0, %v1284
      %v1286 = vpop.f32.mrf.mxu0
      %1287 = vmatprep.mubr.bf16.mxu0 0
      %1288 = vmatmul.mubr.bf16.gmra.mxu0 %v1098
      %v1289 = vpop.f32.mrf.mxu0
      %v1290 = vadd.f32 0.0, %v1289
      %v1291 = vpop.f32.mrf.mxu0
      %v1292 = vpop.f32.mrf.mxu0
      %v1293 = vadd.f32 0.0, %v1292
      %v1294 = vpop.f32.mrf.mxu0
      %1295 = vmatprep.mubr.bf16.mxu0 0
      %1296 = vmatmul.mubr.bf16.gmra.mxu0 %v1099
      %v1297 = vpop.f32.mrf.mxu0
      %v1298 = vadd.f32 0.0, %v1297
      %v1299 = vpop.f32.mrf.mxu0
      %v1300 = vpop.f32.mrf.mxu0
      %v1301 = vadd.f32 0.0, %v1300
      %v1302 = vpop.f32.mrf.mxu0
      %1303 = vmatprep.mubr.bf16.mxu0 0
      %1304 = vmatmul.mubr.bf16.gmra.mxu0 %v1100
      %v1305 = vpop.f32.mrf.mxu0
      %v1306 = vadd.f32 0.0, %v1305
      %v1307 = vpop.f32.mrf.mxu0
      %v1308 = vpop.f32.mrf.mxu0
      %v1309 = vadd.f32 0.0, %v1308
      %v1310 = vpop.f32.mrf.mxu0
      %1311 = vmatprep.mubr.bf16.mxu0 0
      %1312 = vmatmul.mubr.bf16.gmra.mxu0 %v1101
      %v1313 = vpop.f32.mrf.mxu0
      %v1314 = vadd.f32 0.0, %v1313
      %v1315 = vpop.f32.mrf.mxu0
      %v1316 = vpop.f32.mrf.mxu0
      %v1317 = vadd.f32 0.0, %v1316
      %v1318 = vpop.f32.mrf.mxu0
      %1319 = vmatprep.mubr.bf16.mxu0 0
      %1320 = vmatmul.mubr.bf16.gmra.mxu0 %v1102
      %v1321 = vpop.f32.mrf.mxu0
      %v1322 = vadd.f32 0.0, %v1321
      %v1323 = vpop.f32.mrf.mxu0
      %v1324 = vpop.f32.mrf.mxu0
      %v1325 = vadd.f32 0.0, %v1324
      %v1326 = vpop.f32.mrf.mxu0
      %1327 = vdwg.mxu0
      %v1328 = vadd.f32 %v943, %v1202
      %v1329 = vadd.f32 %v944, %v1205
      %v1330 = vadd.f32 %v945, %v1210
      %v1331 = vadd.f32 %v946, %v1213
      %v1332 = vadd.f32 %v947, %v1218
      %v1333 = vadd.f32 %v948, %v1221
      %v1334 = vadd.f32 %v949, %v1226
      %v1335 = vadd.f32 %v950, %v1229
      %v1336 = vadd.f32 %v951, %v1234
      %v1337 = vadd.f32 %v952, %v1237
      %v1338 = vadd.f32 %v953, %v1242
      %v1339 = vadd.f32 %v954, %v1245
      %v1340 = vadd.f32 %v955, %v1250
      %v1341 = vadd.f32 %v956, %v1253
      %v1342 = vadd.f32 %v957, %v1258
      %v1343 = vadd.f32 %v958, %v1261
      %v1344 = vadd.f32 %v959, %v1266
      %v1345 = vadd.f32 %v960, %v1269
      %v1346 = vadd.f32 %v961, %v1274
      %v1347 = vadd.f32 %v962, %v1277
      %v1348 = vadd.f32 %v963, %v1282
      %v1349 = vadd.f32 %v964, %v1285
      %v1350 = vadd.f32 %v965, %v1290
      %v1351 = vadd.f32 %v966, %v1293
      %v1352 = vadd.f32 %v967, %v1298
      %v1353 = vadd.f32 %v968, %v1301
      %v1354 = vadd.f32 %v969, %v1306
      %v1355 = vadd.f32 %v970, %v1309
      %v1356 = vadd.f32 %v971, %v1314
      %v1357 = vadd.f32 %v972, %v1317
      %v1358 = vadd.f32 %v973, %v1322
      %v1359 = vadd.f32 %v974, %v1325
      %v1360 = vmax.f32 %v1328, 0.0
      %v1361 = vmax.f32 %v1329, 0.0
      %v1362 = vmax.f32 %v1330, 0.0
      %v1363 = vmax.f32 %v1331, 0.0
      %v1364 = vmax.f32 %v1332, 0.0
      %v1365 = vmax.f32 %v1333, 0.0
      %v1366 = vmax.f32 %v1334, 0.0
      %v1367 = vmax.f32 %v1335, 0.0
      %v1368 = vmax.f32 %v1336, 0.0
      %v1369 = vmax.f32 %v1337, 0.0
      %v1370 = vmax.f32 %v1338, 0.0
      %v1371 = vmax.f32 %v1339, 0.0
      %v1372 = vmax.f32 %v1340, 0.0
      %v1373 = vmax.f32 %v1341, 0.0
      %v1374 = vmax.f32 %v1342, 0.0
      %v1375 = vmax.f32 %v1343, 0.0
      %v1376 = vmax.f32 %v1344, 0.0
      %v1377 = vmax.f32 %v1345, 0.0
      %v1378 = vmax.f32 %v1346, 0.0
      %v1379 = vmax.f32 %v1347, 0.0
      %v1380 = vmax.f32 %v1348, 0.0
      %v1381 = vmax.f32 %v1349, 0.0
      %v1382 = vmax.f32 %v1350, 0.0
      %v1383 = vmax.f32 %v1351, 0.0
      %v1384 = vmax.f32 %v1352, 0.0
      %v1385 = vmax.f32 %v1353, 0.0
      %v1386 = vmax.f32 %v1354, 0.0
      %v1387 = vmax.f32 %v1355, 0.0
      %v1388 = vmax.f32 %v1356, 0.0
      %v1389 = vmax.f32 %v1357, 0.0
      %v1390 = vmax.f32 %v1358, 0.0
      %v1391 = vmax.f32 %v1359, 0.0
      %v1392 = vpack.c.bf16 %v1361, %v1360
      %v1393 = vpack.c.bf16 %v1363, %v1362
      %v1394 = vpack.c.bf16 %v1365, %v1364
      %v1395 = vpack.c.bf16 %v1367, %v1366
      %v1396 = vpack.c.bf16 %v1369, %v1368
      %v1397 = vpack.c.bf16 %v1371, %v1370
      %v1398 = vpack.c.bf16 %v1373, %v1372
      %v1399 = vpack.c.bf16 %v1375, %v1374
      %v1400 = vpack.c.bf16 %v1377, %v1376
      %v1401 = vpack.c.bf16 %v1379, %v1378
      %v1402 = vpack.c.bf16 %v1381, %v1380
      %v1403 = vpack.c.bf16 %v1383, %v1382
      %v1404 = vpack.c.bf16 %v1385, %v1384
      %v1405 = vpack.c.bf16 %v1387, %v1386
      %v1406 = vpack.c.bf16 %v1389, %v1388
      %v1407 = vpack.c.bf16 %v1391, %v1390
      %v1408 = vld [vmem:[%s5] sm:$0xf]
      %v1409 = vld [vmem:[%s5 + $0x4] sm:$0xf]
      %v1410 = vld [vmem:[%s5 + $0x8] sm:$0xf]
      %v1411 = vld [vmem:[%s5 + $0xc] sm:$0xf]
      %v1412 = vld [vmem:[%s5 + $0x10] sm:$0xf]
      %v1413 = vld [vmem:[%s5 + $0x14] sm:$0xf]
      %v1414 = vld [vmem:[%s5 + $0x18] sm:$0xf]
      %v1415 = vld [vmem:[%s5 + $0x1c] sm:$0xf]
      %v1416 = vld [vmem:[%s5 + $0x20] sm:$0xf]
      %v1417 = vld [vmem:[%s5 + $0x24] sm:$0xf]
      %v1418 = vld [vmem:[%s5 + $0x28] sm:$0xf]
      %v1419 = vld [vmem:[%s5 + $0x2c] sm:$0xf]
      %v1420 = vld [vmem:[%s5 + $0x30] sm:$0xf]
      %v1421 = vld [vmem:[%s5 + $0x34] sm:$0xf]
      %v1422 = vld [vmem:[%s5 + $0x38] sm:$0xf]
      %v1423 = vld [vmem:[%s5 + $0x3c] sm:$0xf]
      %v1424 = vld [vmem:[%s6] sm:$0x1]
      %v1426 = vlaneseq
      %v1427 = vshrl.u32 %v1426, 7
      %v1428 = vsub.s32 0, %v1427
      %v1429 = vrot.slane %v1424, %v1428
      %v1447 = vunpack.c.l.b16 %v1408
      %v1448 = vunpack.c.l.b16 %v1409
      %v1449 = vunpack.c.l.b16 %v1410
      %v1450 = vunpack.c.l.b16 %v1411
      %v1451 = vunpack.c.l.b16 %v1412
      %v1452 = vunpack.c.l.b16 %v1413
      %v1453 = vunpack.c.l.b16 %v1414
      %v1454 = vunpack.c.l.b16 %v1415
      %v1455 = vunpack.c.l.b16 %v1416
      %v1456 = vunpack.c.l.b16 %v1417
      %v1457 = vunpack.c.l.b16 %v1418
      %v1458 = vunpack.c.l.b16 %v1419
      %v1459 = vunpack.c.l.b16 %v1420
      %v1460 = vunpack.c.l.b16 %v1421
      %v1461 = vunpack.c.l.b16 %v1422
      %v1462 = vunpack.c.l.b16 %v1423
      %v1463 = vpack.c.b16 %v1448, %v1447
      %v1464 = vpack.c.b16 %v1450, %v1449
      %v1465 = vpack.c.b16 %v1452, %v1451
      %v1466 = vpack.c.b16 %v1454, %v1453
      %v1467 = vpack.c.b16 %v1456, %v1455
      %v1468 = vpack.c.b16 %v1458, %v1457
      %v1469 = vpack.c.b16 %v1460, %v1459
      %v1470 = vpack.c.b16 %v1462, %v1461
      %1479 = vmatprep.subr.bf16.mxu0 0
      %1480 = vmatpush1.bf16.msra.mxu0 %v1470
      %1481 = vmatprep.subr.bf16.mxu0 0
      %1482 = vmatpush1.bf16.msra.mxu0 %v1469
      %1483 = vmatprep.subr.bf16.mxu0 0
      %1484 = vmatpush1.bf16.msra.mxu0 %v1468
      %1485 = vmatprep.subr.bf16.mxu0 0
      %1486 = vmatpush1.bf16.msra.mxu0 %v1467
      %1487 = vmatprep.subr.bf16.mxu0 0
      %1488 = vmatpush1.bf16.msra.mxu0 %v1466
      %1489 = vmatprep.subr.bf16.mxu0 0
      %1490 = vmatpush1.bf16.msra.mxu0 %v1465
      %1491 = vmatprep.subr.bf16.mxu0 0
      %1492 = vmatpush1.bf16.msra.mxu0 %v1464
      %1493 = vmatprep.subr.bf16.mxu0 0
      %1494 = vmatpush1.bf16.msra.mxu0 %v1463
      %1495 = vmatprep.subr.bf16.mxu0 0
      %1496 = vmatpush2.bf16.msra.mxu0 0
      %1497 = vmatprep.subr.bf16.mxu0 0
      %1498 = vmatpush2.bf16.msra.mxu0 0
      %1499 = vmatprep.subr.bf16.mxu0 0
      %1500 = vmatpush2.bf16.msra.mxu0 0
      %1501 = vmatprep.subr.bf16.mxu0 0
      %1502 = vmatpush2.bf16.msra.mxu0 0
      %1503 = vmatprep.subr.bf16.mxu0 0
      %1504 = vmatpush2.bf16.msra.mxu0 0
      %1505 = vmatprep.subr.bf16.mxu0 0
      %1506 = vmatpush2.bf16.msra.mxu0 0
      %1507 = vmatprep.subr.bf16.mxu0 0
      %1508 = vmatpush2.bf16.msra.mxu0 0
      %1509 = vmatprep.subr.bf16.mxu0 0
      %1510 = vmatpush2.bf16.msra.mxu0 0
      %1511 = vmatprep.mubr.bf16.mxu0 0
      %1512 = vmatmul.mubr.bf16.gmra.mxu0 %v1392
      %v1513 = vpop.f32.mrf.mxu0
      %v1514 = vadd.f32 %v1429, %v1513
      %v1515 = vpop.f32.mrf.mxu0
      %v1516 = vpop.f32.mrf.mxu0
      %v1517 = vadd.f32 %v1429, %v1516
      %v1518 = vpop.f32.mrf.mxu0
      %1519 = vmatprep.mubr.bf16.mxu0 0
      %1520 = vmatmul.mubr.bf16.gmra.mxu0 %v1393
      %v1521 = vpop.f32.mrf.mxu0
      %v1522 = vadd.f32 %v1429, %v1521
      %v1523 = vpop.f32.mrf.mxu0
      %v1524 = vpop.f32.mrf.mxu0
      %v1525 = vadd.f32 %v1429, %v1524
      %v1526 = vpop.f32.mrf.mxu0
      %1527 = vmatprep.mubr.bf16.mxu0 0
      %1528 = vmatmul.mubr.bf16.gmra.mxu0 %v1394
      %v1529 = vpop.f32.mrf.mxu0
      %v1530 = vadd.f32 %v1429, %v1529
      %v1531 = vpop.f32.mrf.mxu0
      %v1532 = vpop.f32.mrf.mxu0
      %v1533 = vadd.f32 %v1429, %v1532
      %v1534 = vpop.f32.mrf.mxu0
      %1535 = vmatprep.mubr.bf16.mxu0 0
      %1536 = vmatmul.mubr.bf16.gmra.mxu0 %v1395
      %v1537 = vpop.f32.mrf.mxu0
      %v1538 = vadd.f32 %v1429, %v1537
      %v1539 = vpop.f32.mrf.mxu0
      %v1540 = vpop.f32.mrf.mxu0
      %v1541 = vadd.f32 %v1429, %v1540
      %v1542 = vpop.f32.mrf.mxu0
      %1543 = vmatprep.mubr.bf16.mxu0 0
      %1544 = vmatmul.mubr.bf16.gmra.mxu0 %v1396
      %v1545 = vpop.f32.mrf.mxu0
      %v1546 = vadd.f32 %v1429, %v1545
      %v1547 = vpop.f32.mrf.mxu0
      %v1548 = vpop.f32.mrf.mxu0
      %v1549 = vadd.f32 %v1429, %v1548
      %v1550 = vpop.f32.mrf.mxu0
      %1551 = vmatprep.mubr.bf16.mxu0 0
      %1552 = vmatmul.mubr.bf16.gmra.mxu0 %v1397
      %v1553 = vpop.f32.mrf.mxu0
      %v1554 = vadd.f32 %v1429, %v1553
      %v1555 = vpop.f32.mrf.mxu0
      %v1556 = vpop.f32.mrf.mxu0
      %v1557 = vadd.f32 %v1429, %v1556
      %v1558 = vpop.f32.mrf.mxu0
      %1559 = vmatprep.mubr.bf16.mxu0 0
      %1560 = vmatmul.mubr.bf16.gmra.mxu0 %v1398
      %v1561 = vpop.f32.mrf.mxu0
      %v1562 = vadd.f32 %v1429, %v1561
      %v1563 = vpop.f32.mrf.mxu0
      %v1564 = vpop.f32.mrf.mxu0
      %v1565 = vadd.f32 %v1429, %v1564
      %v1566 = vpop.f32.mrf.mxu0
      %1567 = vmatprep.mubr.bf16.mxu0 0
      %1568 = vmatmul.mubr.bf16.gmra.mxu0 %v1399
      %v1569 = vpop.f32.mrf.mxu0
      %v1570 = vadd.f32 %v1429, %v1569
      %v1571 = vpop.f32.mrf.mxu0
      %v1572 = vpop.f32.mrf.mxu0
      %v1573 = vadd.f32 %v1429, %v1572
      %v1574 = vpop.f32.mrf.mxu0
      %1575 = vmatprep.mubr.bf16.mxu0 0
      %1576 = vmatmul.mubr.bf16.gmra.mxu0 %v1400
      %v1577 = vpop.f32.mrf.mxu0
      %v1578 = vadd.f32 %v1429, %v1577
      %v1579 = vpop.f32.mrf.mxu0
      %v1580 = vpop.f32.mrf.mxu0
      %v1581 = vadd.f32 %v1429, %v1580
      %v1582 = vpop.f32.mrf.mxu0
      %1583 = vmatprep.mubr.bf16.mxu0 0
      %1584 = vmatmul.mubr.bf16.gmra.mxu0 %v1401
      %v1585 = vpop.f32.mrf.mxu0
      %v1586 = vadd.f32 %v1429, %v1585
      %v1587 = vpop.f32.mrf.mxu0
      %v1588 = vpop.f32.mrf.mxu0
      %v1589 = vadd.f32 %v1429, %v1588
      %v1590 = vpop.f32.mrf.mxu0
      %1591 = vmatprep.mubr.bf16.mxu0 0
      %1592 = vmatmul.mubr.bf16.gmra.mxu0 %v1402
      %v1593 = vpop.f32.mrf.mxu0
      %v1594 = vadd.f32 %v1429, %v1593
      %v1595 = vpop.f32.mrf.mxu0
      %v1596 = vpop.f32.mrf.mxu0
      %v1597 = vadd.f32 %v1429, %v1596
      %v1598 = vpop.f32.mrf.mxu0
      %1599 = vmatprep.mubr.bf16.mxu0 0
      %1600 = vmatmul.mubr.bf16.gmra.mxu0 %v1403
      %v1601 = vpop.f32.mrf.mxu0
      %v1602 = vadd.f32 %v1429, %v1601
      %v1603 = vpop.f32.mrf.mxu0
      %v1604 = vpop.f32.mrf.mxu0
      %v1605 = vadd.f32 %v1429, %v1604
      %v1606 = vpop.f32.mrf.mxu0
      %1607 = vmatprep.mubr.bf16.mxu0 0
      %1608 = vmatmul.mubr.bf16.gmra.mxu0 %v1404
      %v1609 = vpop.f32.mrf.mxu0
      %v1610 = vadd.f32 %v1429, %v1609
      %v1611 = vpop.f32.mrf.mxu0
      %v1612 = vpop.f32.mrf.mxu0
      %v1613 = vadd.f32 %v1429, %v1612
      %v1614 = vpop.f32.mrf.mxu0
      %1615 = vmatprep.mubr.bf16.mxu0 0
      %1616 = vmatmul.mubr.bf16.gmra.mxu0 %v1405
      %v1617 = vpop.f32.mrf.mxu0
      %v1618 = vadd.f32 %v1429, %v1617
      %v1619 = vpop.f32.mrf.mxu0
      %v1620 = vpop.f32.mrf.mxu0
      %v1621 = vadd.f32 %v1429, %v1620
      %v1622 = vpop.f32.mrf.mxu0
      %1623 = vmatprep.mubr.bf16.mxu0 0
      %1624 = vmatmul.mubr.bf16.gmra.mxu0 %v1406
      %v1625 = vpop.f32.mrf.mxu0
      %v1626 = vadd.f32 %v1429, %v1625
      %v1627 = vpop.f32.mrf.mxu0
      %v1628 = vpop.f32.mrf.mxu0
      %v1629 = vadd.f32 %v1429, %v1628
      %v1630 = vpop.f32.mrf.mxu0
      %1631 = vmatprep.mubr.bf16.mxu0 0
      %1632 = vmatmul.mubr.bf16.gmra.mxu0 %v1407
      %v1633 = vpop.f32.mrf.mxu0
      %v1634 = vadd.f32 %v1429, %v1633
      %v1635 = vpop.f32.mrf.mxu0
      %v1636 = vpop.f32.mrf.mxu0
      %v1637 = vadd.f32 %v1429, %v1636
      %v1638 = vpop.f32.mrf.mxu0
      %1639 = vdwg.mxu0
      %v1640 = vmax.f32 %v1514, 0.0
      %v1641 = vmax.f32 %v1517, 0.0
      %v1642 = vmax.f32 %v1522, 0.0
      %v1643 = vmax.f32 %v1525, 0.0
      %v1644 = vmax.f32 %v1530, 0.0
      %v1645 = vmax.f32 %v1533, 0.0
      %v1646 = vmax.f32 %v1538, 0.0
      %v1647 = vmax.f32 %v1541, 0.0
      %v1648 = vmax.f32 %v1546, 0.0
      %v1649 = vmax.f32 %v1549, 0.0
      %v1650 = vmax.f32 %v1554, 0.0
      %v1651 = vmax.f32 %v1557, 0.0
      %v1652 = vmax.f32 %v1562, 0.0
      %v1653 = vmax.f32 %v1565, 0.0
      %v1654 = vmax.f32 %v1570, 0.0
      %v1655 = vmax.f32 %v1573, 0.0
      %v1656 = vmax.f32 %v1578, 0.0
      %v1657 = vmax.f32 %v1581, 0.0
      %v1658 = vmax.f32 %v1586, 0.0
      %v1659 = vmax.f32 %v1589, 0.0
      %v1660 = vmax.f32 %v1594, 0.0
      %v1661 = vmax.f32 %v1597, 0.0
      %v1662 = vmax.f32 %v1602, 0.0
      %v1663 = vmax.f32 %v1605, 0.0
      %v1664 = vmax.f32 %v1610, 0.0
      %v1665 = vmax.f32 %v1613, 0.0
      %v1666 = vmax.f32 %v1618, 0.0
      %v1667 = vmax.f32 %v1621, 0.0
      %v1668 = vmax.f32 %v1626, 0.0
      %v1669 = vmax.f32 %v1629, 0.0
      %v1670 = vmax.f32 %v1634, 0.0
      %v1671 = vmax.f32 %v1637, 0.0
      %v1672 = vpack.c.bf16 %v1641, %v1640
      %v1673 = vpack.c.bf16 %v1643, %v1642
      %v1674 = vpack.c.bf16 %v1645, %v1644
      %v1675 = vpack.c.bf16 %v1647, %v1646
      %v1676 = vpack.c.bf16 %v1649, %v1648
      %v1677 = vpack.c.bf16 %v1651, %v1650
      %v1678 = vpack.c.bf16 %v1653, %v1652
      %v1679 = vpack.c.bf16 %v1655, %v1654
      %v1680 = vpack.c.bf16 %v1657, %v1656
      %v1681 = vpack.c.bf16 %v1659, %v1658
      %v1682 = vpack.c.bf16 %v1661, %v1660
      %v1683 = vpack.c.bf16 %v1663, %v1662
      %v1684 = vpack.c.bf16 %v1665, %v1664
      %v1685 = vpack.c.bf16 %v1667, %v1666
      %v1686 = vpack.c.bf16 %v1669, %v1668
      %v1687 = vpack.c.bf16 %v1671, %v1670
      %v1688 = vld [vmem:[%s7] sm:$0xff]
      %v1689 = vld [vmem:[%s7 + $0x8] sm:$0xff]
      %v1690 = vld [vmem:[%s7 + $0x10] sm:$0xff]
      %v1691 = vld [vmem:[%s7 + $0x18] sm:$0xff]
      %v1692 = vld [vmem:[%s7 + $0x20] sm:$0xff]
      %v1693 = vld [vmem:[%s7 + $0x28] sm:$0xff]
      %v1694 = vld [vmem:[%s7 + $0x30] sm:$0xff]
      %v1695 = vld [vmem:[%s7 + $0x38] sm:$0xff]
      %v1696 = vld [vmem:[%s7 + $0x40] sm:$0xff]
      %v1697 = vld [vmem:[%s7 + $0x48] sm:$0xff]
      %v1698 = vld [vmem:[%s7 + $0x50] sm:$0xff]
      %v1699 = vld [vmem:[%s7 + $0x58] sm:$0xff]
      %v1700 = vld [vmem:[%s7 + $0x60] sm:$0xff]
      %v1701 = vld [vmem:[%s7 + $0x68] sm:$0xff]
      %v1702 = vld [vmem:[%s7 + $0x70] sm:$0xff]
      %v1703 = vld [vmem:[%s7 + $0x78] sm:$0xff]
      %v1704 = vld [vmem:[%s8] sm:$0x3]
      %v1706 = vlaneseq
      %v1707 = vshrl.u32 %v1706, 7
      %v1708 = vsub.s32 0, %v1707
      %v1709 = vrot.slane %v1704, %v1708
      %v1710 = vlaneseq
      %v1711 = vshrl.u32 %v1710, 7
      %v1712 = vsub.s32 1, %v1711
      %v1713 = vrot.slane %v1704, %v1712
      %v1732 = vunpack.c.l.b16 %v1688
      %v1733 = vunpack.c.h.b16 %v1688
      %v1734 = vunpack.c.l.b16 %v1689
      %v1735 = vunpack.c.h.b16 %v1689
      %v1736 = vunpack.c.l.b16 %v1690
      %v1737 = vunpack.c.h.b16 %v1690
      %v1738 = vunpack.c.l.b16 %v1691
      %v1739 = vunpack.c.h.b16 %v1691
      %v1740 = vunpack.c.l.b16 %v1692
      %v1741 = vunpack.c.h.b16 %v1692
      %v1742 = vunpack.c.l.b16 %v1693
      %v1743 = vunpack.c.h.b16 %v1693
      %v1744 = vunpack.c.l.b16 %v1694
      %v1745 = vunpack.c.h.b16 %v1694
      %v1746 = vunpack.c.l.b16 %v1695
      %v1747 = vunpack.c.h.b16 %v1695
      %v1748 = vunpack.c.l.b16 %v1696
      %v1749 = vunpack.c.h.b16 %v1696
      %v1750 = vunpack.c.l.b16 %v1697
      %v1751 = vunpack.c.h.b16 %v1697
      %v1752 = vunpack.c.l.b16 %v1698
      %v1753 = vunpack.c.h.b16 %v1698
      %v1754 = vunpack.c.l.b16 %v1699
      %v1755 = vunpack.c.h.b16 %v1699
      %v1756 = vunpack.c.l.b16 %v1700
      %v1757 = vunpack.c.h.b16 %v1700
      %v1758 = vunpack.c.l.b16 %v1701
      %v1759 = vunpack.c.h.b16 %v1701
      %v1760 = vunpack.c.l.b16 %v1702
      %v1761 = vunpack.c.h.b16 %v1702
      %v1762 = vunpack.c.l.b16 %v1703
      %v1763 = vunpack.c.h.b16 %v1703
      %v1764 = vpack.c.b16 %v1734, %v1732
      %v1765 = vpack.c.b16 %v1735, %v1733
      %v1766 = vpack.c.b16 %v1738, %v1736
      %v1767 = vpack.c.b16 %v1739, %v1737
      %v1768 = vpack.c.b16 %v1742, %v1740
      %v1769 = vpack.c.b16 %v1743, %v1741
      %v1770 = vpack.c.b16 %v1746, %v1744
      %v1771 = vpack.c.b16 %v1747, %v1745
      %v1772 = vpack.c.b16 %v1750, %v1748
      %v1773 = vpack.c.b16 %v1751, %v1749
      %v1774 = vpack.c.b16 %v1754, %v1752
      %v1775 = vpack.c.b16 %v1755, %v1753
      %v1776 = vpack.c.b16 %v1758, %v1756
      %v1777 = vpack.c.b16 %v1759, %v1757
      %v1778 = vpack.c.b16 %v1762, %v1760
      %v1779 = vpack.c.b16 %v1763, %v1761
      %1796 = vmatprep.subr.bf16.mxu0 %v1779
      %1797 = vmatpush1.bf16.msra.mxu0 %v1778
      %1798 = vmatprep.subr.bf16.mxu0 %v1777
      %1799 = vmatpush1.bf16.msra.mxu0 %v1776
      %1800 = vmatprep.subr.bf16.mxu0 %v1775
      %1801 = vmatpush1.bf16.msra.mxu0 %v1774
      %1802 = vmatprep.subr.bf16.mxu0 %v1773
      %1803 = vmatpush1.bf16.msra.mxu0 %v1772
      %1804 = vmatprep.subr.bf16.mxu0 %v1771
      %1805 = vmatpush1.bf16.msra.mxu0 %v1770
      %1806 = vmatprep.subr.bf16.mxu0 %v1769
      %1807 = vmatpush1.bf16.msra.mxu0 %v1768
      %1808 = vmatprep.subr.bf16.mxu0 %v1767
      %1809 = vmatpush1.bf16.msra.mxu0 %v1766
      %1810 = vmatprep.subr.bf16.mxu0 %v1765
      %1811 = vmatpush1.bf16.msra.mxu0 %v1764
      %1812 = vmatprep.subr.bf16.mxu0 0
      %1813 = vmatpush2.bf16.msra.mxu0 0
      %1814 = vmatprep.subr.bf16.mxu0 0
      %1815 = vmatpush2.bf16.msra.mxu0 0
      %1816 = vmatprep.subr.bf16.mxu0 0
      %1817 = vmatpush2.bf16.msra.mxu0 0
      %1818 = vmatprep.subr.bf16.mxu0 0
      %1819 = vmatpush2.bf16.msra.mxu0 0
      %1820 = vmatprep.subr.bf16.mxu0 0
      %1821 = vmatpush2.bf16.msra.mxu0 0
      %1822 = vmatprep.subr.bf16.mxu0 0
      %1823 = vmatpush2.bf16.msra.mxu0 0
      %1824 = vmatprep.subr.bf16.mxu0 0
      %1825 = vmatpush2.bf16.msra.mxu0 0
      %1826 = vmatprep.subr.bf16.mxu0 0
      %1827 = vmatpush2.bf16.msra.mxu0 0
      %1828 = vmatprep.mubr.bf16.mxu0 0
      %1829 = vmatmul.mubr.bf16.gmra.mxu0 %v1672
      %v1830 = vpop.f32.mrf.mxu0
      %v1831 = vadd.f32 %v1709, %v1830
      %v1832 = vpop.f32.mrf.mxu0
      %v1833 = vadd.f32 %v1713, %v1832
      %v1834 = vpop.f32.mrf.mxu0
      %v1835 = vadd.f32 %v1709, %v1834
      %v1836 = vpop.f32.mrf.mxu0
      %v1837 = vadd.f32 %v1713, %v1836
      %1838 = vmatprep.mubr.bf16.mxu0 0
      %1839 = vmatmul.mubr.bf16.gmra.mxu0 %v1673
      %v1840 = vpop.f32.mrf.mxu0
      %v1841 = vadd.f32 %v1709, %v1840
      %v1842 = vpop.f32.mrf.mxu0
      %v1843 = vadd.f32 %v1713, %v1842
      %v1844 = vpop.f32.mrf.mxu0
      %v1845 = vadd.f32 %v1709, %v1844
      %v1846 = vpop.f32.mrf.mxu0
      %v1847 = vadd.f32 %v1713, %v1846
      %1848 = vmatprep.mubr.bf16.mxu0 0
      %1849 = vmatmul.mubr.bf16.gmra.mxu0 %v1674
      %v1850 = vpop.f32.mrf.mxu0
      %v1851 = vadd.f32 %v1709, %v1850
      %v1852 = vpop.f32.mrf.mxu0
      %v1853 = vadd.f32 %v1713, %v1852
      %v1854 = vpop.f32.mrf.mxu0
      %v1855 = vadd.f32 %v1709, %v1854
      %v1856 = vpop.f32.mrf.mxu0
      %v1857 = vadd.f32 %v1713, %v1856
      %1858 = vmatprep.mubr.bf16.mxu0 0
      %1859 = vmatmul.mubr.bf16.gmra.mxu0 %v1675
      %v1860 = vpop.f32.mrf.mxu0
      %v1861 = vadd.f32 %v1709, %v1860
      %v1862 = vpop.f32.mrf.mxu0
      %v1863 = vadd.f32 %v1713, %v1862
      %v1864 = vpop.f32.mrf.mxu0
      %v1865 = vadd.f32 %v1709, %v1864
      %v1866 = vpop.f32.mrf.mxu0
      %v1867 = vadd.f32 %v1713, %v1866
      %1868 = vmatprep.mubr.bf16.mxu0 0
      %1869 = vmatmul.mubr.bf16.gmra.mxu0 %v1676
      %v1870 = vpop.f32.mrf.mxu0
      %v1871 = vadd.f32 %v1709, %v1870
      %v1872 = vpop.f32.mrf.mxu0
      %v1873 = vadd.f32 %v1713, %v1872
      %v1874 = vpop.f32.mrf.mxu0
      %v1875 = vadd.f32 %v1709, %v1874
      %v1876 = vpop.f32.mrf.mxu0
      %v1877 = vadd.f32 %v1713, %v1876
      %1878 = vmatprep.mubr.bf16.mxu0 0
      %1879 = vmatmul.mubr.bf16.gmra.mxu0 %v1677
      %v1880 = vpop.f32.mrf.mxu0
      %v1881 = vadd.f32 %v1709, %v1880
      %v1882 = vpop.f32.mrf.mxu0
      %v1883 = vadd.f32 %v1713, %v1882
      %v1884 = vpop.f32.mrf.mxu0
      %v1885 = vadd.f32 %v1709, %v1884
      %v1886 = vpop.f32.mrf.mxu0
      %v1887 = vadd.f32 %v1713, %v1886
      %1888 = vmatprep.mubr.bf16.mxu0 0
      %1889 = vmatmul.mubr.bf16.gmra.mxu0 %v1678
      %v1890 = vpop.f32.mrf.mxu0
      %v1891 = vadd.f32 %v1709, %v1890
      %v1892 = vpop.f32.mrf.mxu0
      %v1893 = vadd.f32 %v1713, %v1892
      %v1894 = vpop.f32.mrf.mxu0
      %v1895 = vadd.f32 %v1709, %v1894
      %v1896 = vpop.f32.mrf.mxu0
      %v1897 = vadd.f32 %v1713, %v1896
      %1898 = vmatprep.mubr.bf16.mxu0 0
      %1899 = vmatmul.mubr.bf16.gmra.mxu0 %v1679
      %v1900 = vpop.f32.mrf.mxu0
      %v1901 = vadd.f32 %v1709, %v1900
      %v1902 = vpop.f32.mrf.mxu0
      %v1903 = vadd.f32 %v1713, %v1902
      %v1904 = vpop.f32.mrf.mxu0
      %v1905 = vadd.f32 %v1709, %v1904
      %v1906 = vpop.f32.mrf.mxu0
      %v1907 = vadd.f32 %v1713, %v1906
      %1908 = vmatprep.mubr.bf16.mxu0 0
      %1909 = vmatmul.mubr.bf16.gmra.mxu0 %v1680
      %v1910 = vpop.f32.mrf.mxu0
      %v1911 = vadd.f32 %v1709, %v1910
      %v1912 = vpop.f32.mrf.mxu0
      %v1913 = vadd.f32 %v1713, %v1912
      %v1914 = vpop.f32.mrf.mxu0
      %v1915 = vadd.f32 %v1709, %v1914
      %v1916 = vpop.f32.mrf.mxu0
      %v1917 = vadd.f32 %v1713, %v1916
      %1918 = vmatprep.mubr.bf16.mxu0 0
      %1919 = vmatmul.mubr.bf16.gmra.mxu0 %v1681
      %v1920 = vpop.f32.mrf.mxu0
      %v1921 = vadd.f32 %v1709, %v1920
      %v1922 = vpop.f32.mrf.mxu0
      %v1923 = vadd.f32 %v1713, %v1922
      %v1924 = vpop.f32.mrf.mxu0
      %v1925 = vadd.f32 %v1709, %v1924
      %v1926 = vpop.f32.mrf.mxu0
      %v1927 = vadd.f32 %v1713, %v1926
      %1928 = vmatprep.mubr.bf16.mxu0 0
      %1929 = vmatmul.mubr.bf16.gmra.mxu0 %v1682
      %v1930 = vpop.f32.mrf.mxu0
      %v1931 = vadd.f32 %v1709, %v1930
      %v1932 = vpop.f32.mrf.mxu0
      %v1933 = vadd.f32 %v1713, %v1932
      %v1934 = vpop.f32.mrf.mxu0
      %v1935 = vadd.f32 %v1709, %v1934
      %v1936 = vpop.f32.mrf.mxu0
      %v1937 = vadd.f32 %v1713, %v1936
      %1938 = vmatprep.mubr.bf16.mxu0 0
      %1939 = vmatmul.mubr.bf16.gmra.mxu0 %v1683
      %v1940 = vpop.f32.mrf.mxu0
      %v1941 = vadd.f32 %v1709, %v1940
      %v1942 = vpop.f32.mrf.mxu0
      %v1943 = vadd.f32 %v1713, %v1942
      %v1944 = vpop.f32.mrf.mxu0
      %v1945 = vadd.f32 %v1709, %v1944
      %v1946 = vpop.f32.mrf.mxu0
      %v1947 = vadd.f32 %v1713, %v1946
      %1948 = vmatprep.mubr.bf16.mxu0 0
      %1949 = vmatmul.mubr.bf16.gmra.mxu0 %v1684
      %v1950 = vpop.f32.mrf.mxu0
      %v1951 = vadd.f32 %v1709, %v1950
      %v1952 = vpop.f32.mrf.mxu0
      %v1953 = vadd.f32 %v1713, %v1952
      %v1954 = vpop.f32.mrf.mxu0
      %v1955 = vadd.f32 %v1709, %v1954
      %v1956 = vpop.f32.mrf.mxu0
      %v1957 = vadd.f32 %v1713, %v1956
      %1958 = vmatprep.mubr.bf16.mxu0 0
      %1959 = vmatmul.mubr.bf16.gmra.mxu0 %v1685
      %v1960 = vpop.f32.mrf.mxu0
      %v1961 = vadd.f32 %v1709, %v1960
      %v1962 = vpop.f32.mrf.mxu0
      %v1963 = vadd.f32 %v1713, %v1962
      %v1964 = vpop.f32.mrf.mxu0
      %v1965 = vadd.f32 %v1709, %v1964
      %v1966 = vpop.f32.mrf.mxu0
      %v1967 = vadd.f32 %v1713, %v1966
      %1968 = vmatprep.mubr.bf16.mxu0 0
      %1969 = vmatmul.mubr.bf16.gmra.mxu0 %v1686
      %v1970 = vpop.f32.mrf.mxu0
      %v1971 = vadd.f32 %v1709, %v1970
      %v1972 = vpop.f32.mrf.mxu0
      %v1973 = vadd.f32 %v1713, %v1972
      %v1974 = vpop.f32.mrf.mxu0
      %v1975 = vadd.f32 %v1709, %v1974
      %v1976 = vpop.f32.mrf.mxu0
      %v1977 = vadd.f32 %v1713, %v1976
      %1978 = vmatprep.mubr.bf16.mxu0 0
      %1979 = vmatmul.mubr.bf16.gmra.mxu0 %v1687
      %v1980 = vpop.f32.mrf.mxu0
      %v1981 = vadd.f32 %v1709, %v1980
      %v1982 = vpop.f32.mrf.mxu0
      %v1983 = vadd.f32 %v1713, %v1982
      %v1984 = vpop.f32.mrf.mxu0
      %v1985 = vadd.f32 %v1709, %v1984
      %v1986 = vpop.f32.mrf.mxu0
      %v1987 = vadd.f32 %v1713, %v1986
      %1988 = vdwg.mxu0
      %v1989 = vmax.f32 %v1831, %v1835
      %v1990 = vmax.f32 %v1989, %v1841
      %v1991 = vmax.f32 %v1990, %v1845
      %v1992 = vrot.slane %v1991, 4
      %v1993 = vmax.f32 %v1991, %v1992
      %v1994 = vrot.slane %v1993, 2
      %v1995 = vmax.f32 %v1993, %v1994
      %v1996 = vrot.slane %v1995, 1
      %v1997 = vmax.f32 %v1995, %v1996
      %v1998 = vmax.f32 %v1833, %v1837
      %v1999 = vmax.f32 %v1998, %v1843
      %v2000 = vmax.f32 %v1999, %v1847
      %v2001 = vrot.slane %v2000, 4
      %v2002 = vmax.f32 %v2000, %v2001
      %v2003 = vrot.slane %v2002, 2
      %v2004 = vmax.f32 %v2002, %v2003
      %v2005 = vrot.slane %v2004, 1
      %v2006 = vmax.f32 %v2004, %v2005
      %v2007 = vmax.f32 %v1851, %v1855
      %v2008 = vmax.f32 %v2007, %v1861
      %v2009 = vmax.f32 %v2008, %v1865
      %v2010 = vrot.slane %v2009, 4
      %v2011 = vmax.f32 %v2009, %v2010
      %v2012 = vrot.slane %v2011, 2
      %v2013 = vmax.f32 %v2011, %v2012
      %v2014 = vrot.slane %v2013, 1
      %v2015 = vmax.f32 %v2013, %v2014
      %v2016 = vmax.f32 %v1853, %v1857
      %v2017 = vmax.f32 %v2016, %v1863
      %v2018 = vmax.f32 %v2017, %v1867
      %v2019 = vrot.slane %v2018, 4
      %v2020 = vmax.f32 %v2018, %v2019
      %v2021 = vrot.slane %v2020, 2
      %v2022 = vmax.f32 %v2020, %v2021
      %v2023 = vrot.slane %v2022, 1
      %v2024 = vmax.f32 %v2022, %v2023
      %v2025 = vmax.f32 %v1871, %v1875
      %v2026 = vmax.f32 %v2025, %v1881
      %v2027 = vmax.f32 %v2026, %v1885
      %v2028 = vrot.slane %v2027, 4
      %v2029 = vmax.f32 %v2027, %v2028
      %v2030 = vrot.slane %v2029, 2
      %v2031 = vmax.f32 %v2029, %v2030
      %v2032 = vrot.slane %v2031, 1
      %v2033 = vmax.f32 %v2031, %v2032
      %v2034 = vmax.f32 %v1873, %v1877
      %v2035 = vmax.f32 %v2034, %v1883
      %v2036 = vmax.f32 %v2035, %v1887
      %v2037 = vrot.slane %v2036, 4
      %v2038 = vmax.f32 %v2036, %v2037
      %v2039 = vrot.slane %v2038, 2
      %v2040 = vmax.f32 %v2038, %v2039
      %v2041 = vrot.slane %v2040, 1
      %v2042 = vmax.f32 %v2040, %v2041
      %v2043 = vmax.f32 %v1891, %v1895
      %v2044 = vmax.f32 %v2043, %v1901
      %v2045 = vmax.f32 %v2044, %v1905
      %v2046 = vrot.slane %v2045, 4
      %v2047 = vmax.f32 %v2045, %v2046
      %v2048 = vrot.slane %v2047, 2
      %v2049 = vmax.f32 %v2047, %v2048
      %v2050 = vrot.slane %v2049, 1
      %v2051 = vmax.f32 %v2049, %v2050
      %v2052 = vmax.f32 %v1893, %v1897
      %v2053 = vmax.f32 %v2052, %v1903
      %v2054 = vmax.f32 %v2053, %v1907
      %v2055 = vrot.slane %v2054, 4
      %v2056 = vmax.f32 %v2054, %v2055
      %v2057 = vrot.slane %v2056, 2
      %v2058 = vmax.f32 %v2056, %v2057
      %v2059 = vrot.slane %v2058, 1
      %v2060 = vmax.f32 %v2058, %v2059
      %v2061 = vmax.f32 %v1911, %v1915
      %v2062 = vmax.f32 %v2061, %v1921
      %v2063 = vmax.f32 %v2062, %v1925
      %v2064 = vrot.slane %v2063, 4
      %v2065 = vmax.f32 %v2063, %v2064
      %v2066 = vrot.slane %v2065, 2
      %v2067 = vmax.f32 %v2065, %v2066
      %v2068 = vrot.slane %v2067, 1
      %v2069 = vmax.f32 %v2067, %v2068
      %v2070 = vmax.f32 %v1913, %v1917
      %v2071 = vmax.f32 %v2070, %v1923
      %v2072 = vmax.f32 %v2071, %v1927
      %v2073 = vrot.slane %v2072, 4
      %v2074 = vmax.f32 %v2072, %v2073
      %v2075 = vrot.slane %v2074, 2
      %v2076 = vmax.f32 %v2074, %v2075
      %v2077 = vrot.slane %v2076, 1
      %v2078 = vmax.f32 %v2076, %v2077
      %v2079 = vmax.f32 %v1931, %v1935
      %v2080 = vmax.f32 %v2079, %v1941
      %v2081 = vmax.f32 %v2080, %v1945
      %v2082 = vrot.slane %v2081, 4
      %v2083 = vmax.f32 %v2081, %v2082
      %v2084 = vrot.slane %v2083, 2
      %v2085 = vmax.f32 %v2083, %v2084
      %v2086 = vrot.slane %v2085, 1
      %v2087 = vmax.f32 %v2085, %v2086
      %v2088 = vmax.f32 %v1933, %v1937
      %v2089 = vmax.f32 %v2088, %v1943
      %v2090 = vmax.f32 %v2089, %v1947
      %v2091 = vrot.slane %v2090, 4
      %v2092 = vmax.f32 %v2090, %v2091
      %v2093 = vrot.slane %v2092, 2
      %v2094 = vmax.f32 %v2092, %v2093
      %v2095 = vrot.slane %v2094, 1
      %v2096 = vmax.f32 %v2094, %v2095
      %v2097 = vmax.f32 %v1951, %v1955
      %v2098 = vmax.f32 %v2097, %v1961
      %v2099 = vmax.f32 %v2098, %v1965
      %v2100 = vrot.slane %v2099, 4
      %v2101 = vmax.f32 %v2099, %v2100
      %v2102 = vrot.slane %v2101, 2
      %v2103 = vmax.f32 %v2101, %v2102
      %v2104 = vrot.slane %v2103, 1
      %v2105 = vmax.f32 %v2103, %v2104
      %v2106 = vmax.f32 %v1953, %v1957
      %v2107 = vmax.f32 %v2106, %v1963
      %v2108 = vmax.f32 %v2107, %v1967
      %v2109 = vrot.slane %v2108, 4
      %v2110 = vmax.f32 %v2108, %v2109
      %v2111 = vrot.slane %v2110, 2
      %v2112 = vmax.f32 %v2110, %v2111
      %v2113 = vrot.slane %v2112, 1
      %v2114 = vmax.f32 %v2112, %v2113
      %v2115 = vmax.f32 %v1971, %v1975
      %v2116 = vmax.f32 %v2115, %v1981
      %v2117 = vmax.f32 %v2116, %v1985
      %v2118 = vrot.slane %v2117, 4
      %v2119 = vmax.f32 %v2117, %v2118
      %v2120 = vrot.slane %v2119, 2
      %v2121 = vmax.f32 %v2119, %v2120
      %v2122 = vrot.slane %v2121, 1
      %v2123 = vmax.f32 %v2121, %v2122
      %v2124 = vmax.f32 %v1973, %v1977
      %v2125 = vmax.f32 %v2124, %v1983
      %v2126 = vmax.f32 %v2125, %v1987
      %v2127 = vrot.slane %v2126, 4
      %v2128 = vmax.f32 %v2126, %v2127
      %v2129 = vrot.slane %v2128, 2
      %v2130 = vmax.f32 %v2128, %v2129
      %v2131 = vrot.slane %v2130, 1
      %v2132 = vmax.f32 %v2130, %v2131
      %v2133 = vpack.c.bf16 %v1997, %v1997
      %v2134 = vpack.c.bf16 %v2006, %v2006
      %v2135 = vpack.c.bf16 %v2015, %v2015
      %v2136 = vpack.c.bf16 %v2024, %v2024
      %v2137 = vpack.c.bf16 %v2033, %v2033
      %v2138 = vpack.c.bf16 %v2042, %v2042
      %v2139 = vpack.c.bf16 %v2051, %v2051
      %v2140 = vpack.c.bf16 %v2060, %v2060
      %v2141 = vpack.c.bf16 %v2069, %v2069
      %v2142 = vpack.c.bf16 %v2078, %v2078
      %v2143 = vpack.c.bf16 %v2087, %v2087
      %v2144 = vpack.c.bf16 %v2096, %v2096
      %v2145 = vpack.c.bf16 %v2105, %v2105
      %v2146 = vpack.c.bf16 %v2114, %v2114
      %v2147 = vpack.c.bf16 %v2123, %v2123
      %v2148 = vpack.c.bf16 %v2132, %v2132
      %v2165 = vunpack.c.l.b16 %v2133
      %v2166 = vunpack.c.l.b16 %v2134
      %v2167 = vunpack.c.l.b16 %v2135
      %v2168 = vunpack.c.l.b16 %v2136
      %v2169 = vunpack.c.l.b16 %v2137
      %v2170 = vunpack.c.l.b16 %v2138
      %v2171 = vunpack.c.l.b16 %v2139
      %v2172 = vunpack.c.l.b16 %v2140
      %v2173 = vunpack.c.l.b16 %v2141
      %v2174 = vunpack.c.l.b16 %v2142
      %v2175 = vunpack.c.l.b16 %v2143
      %v2176 = vunpack.c.l.b16 %v2144
      %v2177 = vunpack.c.l.b16 %v2145
      %v2178 = vunpack.c.l.b16 %v2146
      %v2179 = vunpack.c.l.b16 %v2147
      %v2180 = vunpack.c.l.b16 %v2148
      %v2181 = vpack.c.b16 %v2166, %v2165
      %v2182 = vpack.c.b16 %v2168, %v2167
      %v2183 = vpack.c.b16 %v2170, %v2169
      %v2184 = vpack.c.b16 %v2172, %v2171
      %v2185 = vpack.c.b16 %v2174, %v2173
      %v2186 = vpack.c.b16 %v2176, %v2175
      %v2187 = vpack.c.b16 %v2178, %v2177
      %v2188 = vpack.c.b16 %v2180, %v2179
      %v2189 = vunpack.c.l.b16 %v2181
      %v2190 = vunpack.c.h.b16 %v2181
      %v2191 = vunpack.c.l.b16 %v2182
      %v2192 = vunpack.c.h.b16 %v2182
      %v2193 = vunpack.c.l.b16 %v2183
      %v2194 = vunpack.c.h.b16 %v2183
      %v2195 = vunpack.c.l.b16 %v2184
      %v2196 = vunpack.c.h.b16 %v2184
      %v2197 = vunpack.c.l.b16 %v2185
      %v2198 = vunpack.c.h.b16 %v2185
      %v2199 = vunpack.c.l.b16 %v2186
      %v2200 = vunpack.c.h.b16 %v2186
      %v2201 = vunpack.c.l.b16 %v2187
      %v2202 = vunpack.c.h.b16 %v2187
      %v2203 = vunpack.c.l.b16 %v2188
      %v2204 = vunpack.c.h.b16 %v2188
      %vm2205 = vcmask 1041409
      %v2206 = vsel %vm2205, %v2191, %v2189
      %vm2207 = vcmask 1042434
      %v2208 = vsel %vm2207, %v2193, %v2206
      %vm2209 = vcmask 1043459
      %v2210 = vsel %vm2209, %v2195, %v2208
      %vm2211 = vcmask 1044484
      %v2212 = vsel %vm2211, %v2197, %v2210
      %vm2213 = vcmask 1045509
      %v2214 = vsel %vm2213, %v2199, %v2212
      %vm2215 = vcmask 1046534
      %v2216 = vsel %vm2215, %v2201, %v2214
      %vm2217 = vcmask 1047559
      %v2218 = vsel %vm2217, %v2203, %v2216
      %v2219 = vsel %vm2205, %v2192, %v2190
      %v2220 = vsel %vm2207, %v2194, %v2219
      %v2221 = vsel %vm2209, %v2196, %v2220
      %v2222 = vsel %vm2211, %v2198, %v2221
      %v2223 = vsel %vm2213, %v2200, %v2222
      %v2224 = vsel %vm2215, %v2202, %v2223
      %v2225 = vsel %vm2217, %v2204, %v2224
      %v2226 = vpack.c.b16 %v2225, %v2218
      %2228 = vst [vmem:[%s351] sm:$0xff] %v2226
      %p2229 = scmp.lt.s32.totalorder %s20, 1
      %s2230 = scalar_select %p2229, %s20, 1
      %s2231 = smul.addr %s2230, 2
      %s2232 = smul.addr %s2231, 4
      %s2233 = scalar_lea.vmem %s9, %s2232
      // Predicated region
      $region57: #{pointnet_pp_forward.5} parent=55 // pred_check
        %p2234 = pneg %p237
      $region58: #{pointnet_pp_forward.5} parent=55 // pred_check_branch
        %2236 = sbr.rel (%p2234) target = $region60
      $region59: #{pointnet_pp_forward.5} parent=55 // pred_region
        _
      $region60: #{pointnet_pp_forward.5} parent=55 // pred_fallthru
        _
    $region56: #{pointnet_pp_forward.5} parent=5 // pred_fallthru
      _
    %p2237 = scmp.le.s32.totalorder 2, %s15
    // Predicated region
    $region61: #{pointnet_pp_forward.5} parent=5 // pred_check
      %p2238 = pneg %p2237
    $region62: #{pointnet_pp_forward.5} parent=5 // pred_check_branch
      %2240 = sbr.rel (%p2238) target = $region64
    $region63: #{pointnet_pp_forward.5} parent=5 // pred_region
      %s2241 = ssub.s32 %s15, 2
      // Predicated region
      $region65: #{pointnet_pp_forward.5} parent=63 // pred_check
        %p2242 = pneg %p243
      $region66: #{pointnet_pp_forward.5} parent=63 // pred_check_branch
        %2244 = sbr.rel (%p2242) target = $region68
      $region67: #{pointnet_pp_forward.5} parent=63 // pred_region
        %p2245 = scmp.lt.s32.totalorder %s21, 1
        %s2246 = scalar_select %p2245, %s21, 1
        %s2247 = smul.addr %s2246, 2
        %s2248 = smul.addr %s2247, 4
        %s2249 = scalar_lea.vmem %s9, %s2248
      $region68: #{pointnet_pp_forward.5} parent=63 // pred_fallthru
        _
    $region64: #{pointnet_pp_forward.5} parent=5 // pred_fallthru
      _
  $region6: #{pointnet_pp_forward.5} parent=0 // loop_footer
    %s19 = sadd.s32 1, %s15
  $region7: #{pointnet_pp_forward.5} parent=0 // loop_footer_branch
    %14 = sbr.rel target = $region3
  $region8: #{pointnet_pp_forward.5} parent=0 // loop_exit
    _

// kernel: pointnet_pp_forward.6
$region0: #{pointnet_pp_forward.6}
  #allocation0 [shape = 'u32[]', space=smem, size = 0x4, offset = 0x4, fixed_abs, tag = 'smem constant byte address 0x4 - core index']
  #allocation1 [shape = 'u32[144,128]{1,0:T(1,128)}', space=vmem, size = 0x12000, scoped, tag = 'internal scratch']
  #allocation2 [shape = 'f32[1,1024]{1,0:T(1,128)}', space=vmem, size = 0x1000, scoped, tag = 'scratch operand']
  %s0 = inlined_call_operand.vmem [shape: bf16[2,8,259], index: 0, kind: input, shape index: {}]
  %s1 = inlined_call_operand.vmem [shape: bf16[259,256], index: 1, kind: input, shape index: {}]
  %s2 = inlined_call_operand.vmem [shape: f32[1,256], index: 2, kind: input, shape index: {}]
  %s3 = inlined_call_operand.vmem [shape: bf16[256,512], index: 3, kind: input, shape index: {}]
  %s4 = inlined_call_operand.vmem [shape: f32[1,512], index: 4, kind: input, shape index: {}]
  %s5 = inlined_call_operand.vmem [shape: bf16[512,1024], index: 5, kind: input, shape index: {}]
  %s6 = inlined_call_operand.vmem [shape: f32[1,1024], index: 6, kind: input, shape index: {}]
  %s7 = inlined_call_operand.vmem [shape: bf16[2,1,1024], index: 7, kind: output, shape index: {}]
  %s8 = sld [smem:[#allocation0]]
  $region69: #{pointnet_pp_forward.6} parent=0
    _
  %s10 = ssub.s32 1, %s8
  %s11 = scalar_select 0, %s10, %s8
  loop: start=0, step=1, limit=4
  $region2: #{pointnet_pp_forward.6} parent=0 // loop_pre_header
    _
  $region3: #{pointnet_pp_forward.6} parent=0 // loop_header
    %s13 = sphi 0, %s17
    %p14 = scmp.ge.s32.totalorder %s13, 4
    %s20 = sphi 0, %s32
    %s21 = sphi 0, %s28
    %s22 = sphi 0, %s20
    %s23 = sphi 0, %s21
    %s24 = sphi 0, %s22
    %s25 = sphi 0, %s23
    %s37 = sphi 0, %s39
    %s40 = sphi 0, %s37
    %s41 = sphi 0, %s40
    %s57 = sphi 0, %s41
    %s61 = sphi 0, %s61
    %s63 = sphi 0, %s61
    %s64 = sphi 0, %s63
    %s78 = sphi 0, %s64
    %s82 = sphi 0, %s82
    %s84 = sphi 0, %s82
    %s85 = sphi 0, %s84
    %s99 = sphi 0, %s85
    %s103 = sphi 0, %s103
    %s105 = sphi 0, %s103
    %s106 = sphi 0, %s105
    %s120 = sphi 0, %s106
    %s124 = sphi 0, %s124
    %s126 = sphi 0, %s124
    %s127 = sphi 0, %s126
    %s141 = sphi 0, %s127
    %s145 = sphi 0, %s145
    %s147 = sphi 0, %s145
    %s148 = sphi 0, %s147
    %s162 = sphi 0, %s148
    %s166 = sphi 0, %s166
    %s168 = sphi 0, %s166
    %s169 = sphi 0, %s168
    %s183 = sphi 0, %s169
    %s189 = sphi 0, %s191
    %s192 = sphi 0, %s189
    %s193 = sphi 0, %s192
    %s209 = sphi 0, %s193
  $region4: #{pointnet_pp_forward.6} parent=0 // loop_header_branch
    %16 = sbr.rel (%p14) target = $region8
  $region5: #{pointnet_pp_forward.6} parent=0 // loop_body
    %s18 = ssub.s32 %s13, 1
    %s19 = ssub.s32 %s13, 2
    %s26 = sadd.s32 1, %s21
    %p27 = scmp.ge.s32.totalorder %s26, 1
    %s28 = scalar_select %p27, 0, %s26
    %s29 = sadd.s32 1, %s20
    %s30 = scalar_select %p27, %s29, %s20
    %p31 = scmp.ge.s32.totalorder %s30, 2
    %s32 = scalar_select %p31, 0, %s30
    %s33 = ssub.s32 %s20, %s32
    %s34 = ssub.s32 %s21, %s28
    %s35 = sor.u32 %s33, %s34
    %p36 = scmp.eq.s32.totalorder %s35, 0
    %s38 = sadd.s32 %s37, 1
    %s39 = scalar_select %p36, %s37, %s38
    %p42 = pneg %p36
    %p43 = scmp.eq.s32.totalorder %s13, 1
    %p44 = por %p42, %p43
    %p45 = scmp.ne.s32.totalorder %s37, %s40
    %p46 = scmp.eq.s32.totalorder %s13, 0
    %p47 = por %p45, %p46
    %p48 = scmp.ne.s32.totalorder %s37, %s40
    %p49 = scmp.eq.s32.totalorder %s18, 1
    %p50 = por %p48, %p49
    %p51 = scmp.ne.s32.totalorder %s40, %s41
    %p52 = scmp.eq.s32.totalorder %s18, 0
    %p53 = por %p51, %p52
    %p54 = scmp.ne.s32.totalorder %s40, %s41
    %p55 = scmp.eq.s32.totalorder %s19, 1
    %p56 = por %p54, %p55
    %p58 = scmp.ne.s32.totalorder %s41, %s57
    %p59 = scmp.eq.s32.totalorder %s19, 0
    %p60 = por %p58, %p59
    %s62 = sadd.s32 %s61, 1
    %p65 = scmp.eq.s32.totalorder %s13, 1
    %p66 = scmp.ne.s32.totalorder %s61, %s63
    %p67 = scmp.eq.s32.totalorder %s13, 0
    %p68 = por %p66, %p67
    %p69 = scmp.ne.s32.totalorder %s61, %s63
    %p70 = scmp.eq.s32.totalorder %s18, 1
    %p71 = por %p69, %p70
    %p72 = scmp.ne.s32.totalorder %s63, %s64
    %p73 = scmp.eq.s32.totalorder %s18, 0
    %p74 = por %p72, %p73
    %p75 = scmp.ne.s32.totalorder %s63, %s64
    %p76 = scmp.eq.s32.totalorder %s19, 1
    %p77 = por %p75, %p76
    %p79 = scmp.ne.s32.totalorder %s64, %s78
    %p80 = scmp.eq.s32.totalorder %s19, 0
    %p81 = por %p79, %p80
    %s83 = sadd.s32 %s82, 1
    %p86 = scmp.eq.s32.totalorder %s13, 1
    %p87 = scmp.ne.s32.totalorder %s82, %s84
    %p88 = scmp.eq.s32.totalorder %s13, 0
    %p89 = por %p87, %p88
    %p90 = scmp.ne.s32.totalorder %s82, %s84
    %p91 = scmp.eq.s32.totalorder %s18, 1
    %p92 = por %p90, %p91
    %p93 = scmp.ne.s32.totalorder %s84, %s85
    %p94 = scmp.eq.s32.totalorder %s18, 0
    %p95 = por %p93, %p94
    %p96 = scmp.ne.s32.totalorder %s84, %s85
    %p97 = scmp.eq.s32.totalorder %s19, 1
    %p98 = por %p96, %p97
    %p100 = scmp.ne.s32.totalorder %s85, %s99
    %p101 = scmp.eq.s32.totalorder %s19, 0
    %p102 = por %p100, %p101
    %s104 = sadd.s32 %s103, 1
    %p107 = scmp.eq.s32.totalorder %s13, 1
    %p108 = scmp.ne.s32.totalorder %s103, %s105
    %p109 = scmp.eq.s32.totalorder %s13, 0
    %p110 = por %p108, %p109
    %p111 = scmp.ne.s32.totalorder %s103, %s105
    %p112 = scmp.eq.s32.totalorder %s18, 1
    %p113 = por %p111, %p112
    %p114 = scmp.ne.s32.totalorder %s105, %s106
    %p115 = scmp.eq.s32.totalorder %s18, 0
    %p116 = por %p114, %p115
    %p117 = scmp.ne.s32.totalorder %s105, %s106
    %p118 = scmp.eq.s32.totalorder %s19, 1
    %p119 = por %p117, %p118
    %p121 = scmp.ne.s32.totalorder %s106, %s120
    %p122 = scmp.eq.s32.totalorder %s19, 0
    %p123 = por %p121, %p122
    %s125 = sadd.s32 %s124, 1
    %p128 = scmp.eq.s32.totalorder %s13, 1
    %p129 = scmp.ne.s32.totalorder %s124, %s126
    %p130 = scmp.eq.s32.totalorder %s13, 0
    %p131 = por %p129, %p130
    %p132 = scmp.ne.s32.totalorder %s124, %s126
    %p133 = scmp.eq.s32.totalorder %s18, 1
    %p134 = por %p132, %p133
    %p135 = scmp.ne.s32.totalorder %s126, %s127
    %p136 = scmp.eq.s32.totalorder %s18, 0
    %p137 = por %p135, %p136
    %p138 = scmp.ne.s32.totalorder %s126, %s127
    %p139 = scmp.eq.s32.totalorder %s19, 1
    %p140 = por %p138, %p139
    %p142 = scmp.ne.s32.totalorder %s127, %s141
    %p143 = scmp.eq.s32.totalorder %s19, 0
    %p144 = por %p142, %p143
    %s146 = sadd.s32 %s145, 1
    %p149 = scmp.eq.s32.totalorder %s13, 1
    %p150 = scmp.ne.s32.totalorder %s145, %s147
    %p151 = scmp.eq.s32.totalorder %s13, 0
    %p152 = por %p150, %p151
    %p153 = scmp.ne.s32.totalorder %s145, %s147
    %p154 = scmp.eq.s32.totalorder %s18, 1
    %p155 = por %p153, %p154
    %p156 = scmp.ne.s32.totalorder %s147, %s148
    %p157 = scmp.eq.s32.totalorder %s18, 0
    %p158 = por %p156, %p157
    %p159 = scmp.ne.s32.totalorder %s147, %s148
    %p160 = scmp.eq.s32.totalorder %s19, 1
    %p161 = por %p159, %p160
    %p163 = scmp.ne.s32.totalorder %s148, %s162
    %p164 = scmp.eq.s32.totalorder %s19, 0
    %p165 = por %p163, %p164
    %s167 = sadd.s32 %s166, 1
    %p170 = scmp.eq.s32.totalorder %s13, 1
    %p171 = scmp.ne.s32.totalorder %s166, %s168
    %p172 = scmp.eq.s32.totalorder %s13, 0
    %p173 = por %p171, %p172
    %p174 = scmp.ne.s32.totalorder %s166, %s168
    %p175 = scmp.eq.s32.totalorder %s18, 1
    %p176 = por %p174, %p175
    %p177 = scmp.ne.s32.totalorder %s168, %s169
    %p178 = scmp.eq.s32.totalorder %s18, 0
    %p179 = por %p177, %p178
    %p180 = scmp.ne.s32.totalorder %s168, %s169
    %p181 = scmp.eq.s32.totalorder %s19, 1
    %p182 = por %p180, %p181
    %p184 = scmp.ne.s32.totalorder %s169, %s183
    %p185 = scmp.eq.s32.totalorder %s19, 0
    %p186 = por %p184, %p185
    %s187 = ssub.s32 %s20, %s32
    %p188 = scmp.eq.s32.totalorder %s187, 0
    %s190 = sadd.s32 %s189, 1
    %s191 = scalar_select %p188, %s189, %s190
    %p194 = pneg %p188
    %p195 = scmp.eq.s32.totalorder %s13, 1
    %p196 = por %p194, %p195
    %p197 = scmp.ne.s32.totalorder %s189, %s192
    %p198 = scmp.eq.s32.totalorder %s13, 0
    %p199 = por %p197, %p198
    %p200 = scmp.ne.s32.totalorder %s189, %s192
    %p201 = scmp.eq.s32.totalorder %s18, 1
    %p202 = por %p200, %p201
    %p203 = scmp.ne.s32.totalorder %s192, %s193
    %p204 = scmp.eq.s32.totalorder %s18, 0
    %p205 = por %p203, %p204
    %p206 = scmp.ne.s32.totalorder %s192, %s193
    %p207 = scmp.eq.s32.totalorder %s19, 1
    %p208 = por %p206, %p207
    %p210 = scmp.ne.s32.totalorder %s193, %s209
    %p211 = scmp.eq.s32.totalorder %s19, 0
    %p212 = por %p210, %p211
    %p213 = scmp.le.s32.totalorder 1, %s13
    %p214 = scmp.lt.s32.totalorder %s13, 3
    %p215 = pnand %p213, %p214
    %p216 = pneg %p215
    // Predicated region
    $region9: #{pointnet_pp_forward.6} parent=5 // pred_check
      _
    $region10: #{pointnet_pp_forward.6} parent=5 // pred_check_branch
      %218 = sbr.rel (%p215) target = $region12
    $region11: #{pointnet_pp_forward.6} parent=5 // pred_region
      %s219 = ssub.s32 %s13, 1
      // Predicated region
      $region13: #{pointnet_pp_forward.6} parent=11 // pred_check
        %p220 = pneg %p74
      $region14: #{pointnet_pp_forward.6} parent=11 // pred_check_branch
        %222 = sbr.rel (%p220) target = $region16
      $region15: #{pointnet_pp_forward.6} parent=11 // pred_region
        _
      $region16: #{pointnet_pp_forward.6} parent=11 // pred_fallthru
        _
      // Predicated region
      $region17: #{pointnet_pp_forward.6} parent=11 // pred_check
        %p223 = pneg %p95
      $region18: #{pointnet_pp_forward.6} parent=11 // pred_check_branch
        %225 = sbr.rel (%p223) target = $region20
      $region19: #{pointnet_pp_forward.6} parent=11 // pred_region
        _
      $region20: #{pointnet_pp_forward.6} parent=11 // pred_fallthru
        _
      // Predicated region
      $region21: #{pointnet_pp_forward.6} parent=11 // pred_check
        %p226 = pneg %p116
      $region22: #{pointnet_pp_forward.6} parent=11 // pred_check_branch
        %228 = sbr.rel (%p226) target = $region24
      $region23: #{pointnet_pp_forward.6} parent=11 // pred_region
        _
      $region24: #{pointnet_pp_forward.6} parent=11 // pred_fallthru
        _
      // Predicated region
      $region25: #{pointnet_pp_forward.6} parent=11 // pred_check
        %p229 = pneg %p137
      $region26: #{pointnet_pp_forward.6} parent=11 // pred_check_branch
        %231 = sbr.rel (%p229) target = $region28
      $region27: #{pointnet_pp_forward.6} parent=11 // pred_region
        _
      $region28: #{pointnet_pp_forward.6} parent=11 // pred_fallthru
        _
      // Predicated region
      $region29: #{pointnet_pp_forward.6} parent=11 // pred_check
        %p232 = pneg %p158
      $region30: #{pointnet_pp_forward.6} parent=11 // pred_check_branch
        %234 = sbr.rel (%p232) target = $region32
      $region31: #{pointnet_pp_forward.6} parent=11 // pred_region
        _
      $region32: #{pointnet_pp_forward.6} parent=11 // pred_fallthru
        _
      // Predicated region
      $region33: #{pointnet_pp_forward.6} parent=11 // pred_check
        %p235 = pneg %p179
      $region34: #{pointnet_pp_forward.6} parent=11 // pred_check_branch
        %237 = sbr.rel (%p235) target = $region36
      $region35: #{pointnet_pp_forward.6} parent=11 // pred_region
        _
      $region36: #{pointnet_pp_forward.6} parent=11 // pred_fallthru
        _
    $region12: #{pointnet_pp_forward.6} parent=5 // pred_fallthru
      _
    %p238 = scmp.lt.s32.totalorder %s13, 2
    // Predicated region
    $region37: #{pointnet_pp_forward.6} parent=5 // pred_check
      %p239 = pneg %p238
    $region38: #{pointnet_pp_forward.6} parent=5 // pred_check_branch
      %241 = sbr.rel (%p239) target = $region40
    $region39: #{pointnet_pp_forward.6} parent=5 // pred_region
      // Predicated region
      $region41: #{pointnet_pp_forward.6} parent=39 // pred_check
        %p242 = pneg %p47
      $region42: #{pointnet_pp_forward.6} parent=39 // pred_check_branch
        %244 = sbr.rel (%p242) target = $region44
      $region43: #{pointnet_pp_forward.6} parent=39 // pred_region
        %p245 = scmp.lt.s32.totalorder %s20, 1
        %s246 = scalar_select %p245, %s20, 1
        %p247 = scmp.lt.s32.totalorder %s21, 0
        %s248 = scalar_select %p247, %s21, 0
        %s249 = smul.addr %s248, 3
        %s250 = smul.addr %s246, 3
        %s251 = sadd.s32 %s249, %s250
        %s252 = smul.addr %s251, 4
        %s253 = scalar_lea.vmem %s0, %s252
      $region44: #{pointnet_pp_forward.6} parent=39 // pred_fallthru
        _
    $region40: #{pointnet_pp_forward.6} parent=5 // pred_fallthru
      _
    %p254 = scmp.le.s32.totalorder 1, %s13
    %p255 = scmp.lt.s32.totalorder %s13, 3
    %p256 = pnand %p254, %p255
    %p257 = pneg %p256
    // Predicated region
    $region45: #{pointnet_pp_forward.6} parent=5 // pred_check
      _
    $region46: #{pointnet_pp_forward.6} parent=5 // pred_check_branch
      %259 = sbr.rel (%p256) target = $region48
    $region47: #{pointnet_pp_forward.6} parent=5 // pred_region
      %s260 = ssub.s32 %s13, 1
      %p261 = scmp.lt.s32.totalorder %s22, 1
      %s262 = scalar_select %p261, %s22, 1
      %p263 = scmp.lt.s32.totalorder %s23, 0
      %s264 = scalar_select %p263, %s23, 0
      %s265 = smul.addr %s264, 3
      %s266 = smul.addr %s262, 3
      %s267 = sadd.s32 %s265, %s266
      %s268 = smul.addr %s267, 4
      %s269 = scalar_lea.vmem %s0, %s268
      %p270 = pneg %p53
      %p271 = pneg %p50
      %p272 = pneg %p74
      %p273 = pneg %p71
      %p274 = pneg %p95
      %p275 = pneg %p92
      %p276 = pneg %p116
      %p277 = pneg %p113
      %p278 = pneg %p137
      %p279 = pneg %p134
      %p280 = pneg %p158
      %p281 = pneg %p155
      %p282 = pneg %p179
      %p283 = pneg %p176
      %p284 = pneg %p205
      %p285 = pneg %p202
      %p286 = scmp.lt.s32.totalorder %s22, 1
      %s287 = scalar_select %p286, %s22, 1
      %s288 = smul.addr %s287, 8
      %s289 = scalar_lea.vmem %s7, %s288
      %p290 = scmp.lt.s32.totalorder %s22, 1
      %s291 = scalar_select %p290, %s22, 1
      %p292 = scmp.lt.s32.totalorder %s23, 0
      %s293 = scalar_select %p292, %s23, 0
      %s294 = smul.addr %s293, 3
      %s295 = smul.addr %s291, 3
      %s296 = sadd.s32 %s294, %s295
      %s297 = smul.addr %s296, 4
      %s298 = scalar_lea.vmem %s0, %s297
      %p299 = scmp.lt.s32.totalorder %s22, 1
      %s300 = scalar_select %p299, %s22, 1
      %s301 = smul.addr %s300, 8
      %s302 = scalar_lea.vmem %s7, %s301
      %v304 = vld [vmem:[%s298] sm:$0xff]
      %v305 = vld [vmem:[%s298 + $0x8] sm:$0xf]
      %v306 = vld [vmem:[%s1] sm:$0xff]
      %v307 = vld [vmem:[%s1 + $0x8] sm:$0xff]
      %v308 = vld [vmem:[%s1 + $0x10] sm:$0xff]
      %v309 = vld [vmem:[%s1 + $0x18] sm:$0xff]
      %v310 = vld [vmem:[%s1 + $0x20] sm:$0xff]
      %v311 = vld [vmem:[%s1 + $0x28] sm:$0xff]
      %v312 = vld [vmem:[%s1 + $0x30] sm:$0xff]
      %v313 = vld [vmem:[%s1 + $0x38] sm:$0xff]
      %v314 = vld [vmem:[%s1 + $0x40] sm:$0xff]
      %v315 = vld [vmem:[%s1 + $0x48] sm:$0xff]
      %v316 = vld [vmem:[%s1 + $0x50] sm:$0xff]
      %v317 = vld [vmem:[%s1 + $0x58] sm:$0xff]
      %v318 = vld [vmem:[%s1 + $0x60] sm:$0xff]
      %v319 = vld [vmem:[%s1 + $0x68] sm:$0xff]
      %v320 = vld [vmem:[%s1 + $0x70] sm:$0xff]
      %v321 = vld [vmem:[%s1 + $0x78] sm:$0xff]
      %v322 = vld [vmem:[%s1 + $0x80] sm:$0xff]
      %v323 = vld [vmem:[%s1 + $0x88] sm:$0xff]
      %v324 = vld [vmem:[%s1 + $0x90] sm:$0xff]
      %v325 = vld [vmem:[%s1 + $0x98] sm:$0xff]
      %v326 = vld [vmem:[%s1 + $0xa0] sm:$0xff]
      %v327 = vld [vmem:[%s1 + $0xa8] sm:$0xff]
      %v328 = vld [vmem:[%s1 + $0xb0] sm:$0xff]
      %v329 = vld [vmem:[%s1 + $0xb8] sm:$0xff]
      %v330 = vld [vmem:[%s1 + $0xc0] sm:$0xff]
      %v331 = vld [vmem:[%s1 + $0xc8] sm:$0xff]
      %v332 = vld [vmem:[%s1 + $0xd0] sm:$0xff]
      %v333 = vld [vmem:[%s1 + $0xd8] sm:$0xff]
      %v334 = vld [vmem:[%s1 + $0xe0] sm:$0xff]
      %v335 = vld [vmem:[%s1 + $0xe8] sm:$0xff]
      %v336 = vld [vmem:[%s1 + $0xf0] sm:$0xff]
      %v337 = vld [vmem:[%s1 + $0xf8] sm:$0xff]
      %v338 = vld [vmem:[%s1 + $0x100] sm:$0x33]
      %v339 = vld [vmem:[%s2] sm:$0x3]
      %v341 = vlaneseq
      %v342 = vshrl.u32 %v341, 7
      %v343 = vsub.s32 0, %v342
      %v344 = vrot.slane %v339, %v343
      %v345 = vlaneseq
      %v346 = vshrl.u32 %v345, 7
      %v347 = vsub.s32 1, %v346
      %v348 = vrot.slane %v339, %v347
      %v353 = vunpack.c.l.b16 %v304
      %v354 = vunpack.c.h.b16 %v304
      %v355 = vunpack.c.l.b16 %v305
      %v356 = vpack.c.b16 %v353, %v353
      %v357 = vpack.c.b16 %v354, %v354
      %v358 = vpack.c.b16 %v355, %v355
      %v394 = vunpack.c.l.b16 %v306
      %v395 = vunpack.c.h.b16 %v306
      %v396 = vunpack.c.l.b16 %v307
      %v397 = vunpack.c.h.b16 %v307
      %v398 = vunpack.c.l.b16 %v308
      %v399 = vunpack.c.h.b16 %v308
      %v400 = vunpack.c.l.b16 %v309
      %v401 = vunpack.c.h.b16 %v309
      %v402 = vunpack.c.l.b16 %v310
      %v403 = vunpack.c.h.b16 %v310
      %v404 = vunpack.c.l.b16 %v311
      %v405 = vunpack.c.h.b16 %v311
      %v406 = vunpack.c.l.b16 %v312
      %v407 = vunpack.c.h.b16 %v312
      %v408 = vunpack.c.l.b16 %v313
      %v409 = vunpack.c.h.b16 %v313
      %v410 = vunpack.c.l.b16 %v314
      %v411 = vunpack.c.h.b16 %v314
      %v412 = vunpack.c.l.b16 %v315
      %v413 = vunpack.c.h.b16 %v315
      %v414 = vunpack.c.l.b16 %v316
      %v415 = vunpack.c.h.b16 %v316
      %v416 = vunpack.c.l.b16 %v317
      %v417 = vunpack.c.h.b16 %v317
      %v418 = vunpack.c.l.b16 %v318
      %v419 = vunpack.c.h.b16 %v318
      %v420 = vunpack.c.l.b16 %v319
      %v421 = vunpack.c.h.b16 %v319
      %v422 = vunpack.c.l.b16 %v320
      %v423 = vunpack.c.h.b16 %v320
      %v424 = vunpack.c.l.b16 %v321
      %v425 = vunpack.c.h.b16 %v321
      %v426 = vunpack.c.l.b16 %v322
      %v427 = vunpack.c.h.b16 %v322
      %v428 = vunpack.c.l.b16 %v323
      %v429 = vunpack.c.h.b16 %v323
      %v430 = vunpack.c.l.b16 %v324
      %v431 = vunpack.c.h.b16 %v324
      %v432 = vunpack.c.l.b16 %v325
      %v433 = vunpack.c.h.b16 %v325
      %v434 = vunpack.c.l.b16 %v326
      %v435 = vunpack.c.h.b16 %v326
      %v436 = vunpack.c.l.b16 %v327
      %v437 = vunpack.c.h.b16 %v327
      %v438 = vunpack.c.l.b16 %v328
      %v439 = vunpack.c.h.b16 %v328
      %v440 = vunpack.c.l.b16 %v329
      %v441 = vunpack.c.h.b16 %v329
      %v442 = vunpack.c.l.b16 %v330
      %v443 = vunpack.c.h.b16 %v330
      %v444 = vunpack.c.l.b16 %v331
      %v445 = vunpack.c.h.b16 %v331
      %v446 = vunpack.c.l.b16 %v332
      %v447 = vunpack.c.h.b16 %v332
      %v448 = vunpack.c.l.b16 %v333
      %v449 = vunpack.c.h.b16 %v333
      %v450 = vunpack.c.l.b16 %v334
      %v451 = vunpack.c.h.b16 %v334
      %v452 = vunpack.c.l.b16 %v335
      %v453 = vunpack.c.h.b16 %v335
      %v454 = vunpack.c.l.b16 %v336
      %v455 = vunpack.c.h.b16 %v336
      %v456 = vunpack.c.l.b16 %v337
      %v457 = vunpack.c.h.b16 %v337
      %v458 = vunpack.c.l.b16 %v338
      %v459 = vunpack.c.h.b16 %v338
      %v460 = vpack.c.b16 %v396, %v394
      %v461 = vpack.c.b16 %v397, %v395
      %v462 = vpack.c.b16 %v400, %v398
      %v463 = vpack.c.b16 %v401, %v399
      %v464 = vpack.c.b16 %v404, %v402
      %v465 = vpack.c.b16 %v405, %v403
      %v466 = vpack.c.b16 %v408, %v406
      %v467 = vpack.c.b16 %v409, %v407
      %v468 = vpack.c.b16 %v412, %v410
      %v469 = vpack.c.b16 %v413, %v411
      %v470 = vpack.c.b16 %v416, %v414
      %v471 = vpack.c.b16 %v417, %v415
      %v472 = vpack.c.b16 %v420, %v418
      %v473 = vpack.c.b16 %v421, %v419
      %v474 = vpack.c.b16 %v424, %v422
      %v475 = vpack.c.b16 %v425, %v423
      %v476 = vpack.c.b16 %v428, %v426
      %v477 = vpack.c.b16 %v429, %v427
      %v478 = vpack.c.b16 %v432, %v430
      %v479 = vpack.c.b16 %v433, %v431
      %v480 = vpack.c.b16 %v436, %v434
      %v481 = vpack.c.b16 %v437, %v435
      %v482 = vpack.c.b16 %v440, %v438
      %v483 = vpack.c.b16 %v441, %v439
      %v484 = vpack.c.b16 %v444, %v442
      %v485 = vpack.c.b16 %v445, %v443
      %v486 = vpack.c.b16 %v448, %v446
      %v487 = vpack.c.b16 %v449, %v447
      %v488 = vpack.c.b16 %v452, %v450
      %v489 = vpack.c.b16 %v453, %v451
      %v490 = vpack.c.b16 %v456, %v454
      %v491 = vpack.c.b16 %v457, %v455
      %v492 = vpack.c.b16 %v458, %v458
      %v493 = vpack.c.b16 %v459, %v459
      %vm526 = vcmask 23552
      %v528 = vsel %vm526, %v358, 0
      %vm530 = vcmask 1040384
      %vm531 = vcmask 1041408
      %v532 = vsel %vm530, 4294967295, 65535
      %v533 = vsel %vm531, %v532, 0
      %v535 = vand.u32 %v492, %v533
      %v538 = vand.u32 %v493, %v533
      %540 = vmatprep.subr.bf16.mxu0 %v475
      %541 = vmatpush1.bf16.msra.mxu0 %v474
      %542 = vmatprep.subr.bf16.mxu0 %v473
      %543 = vmatpush1.bf16.msra.mxu0 %v472
      %544 = vmatprep.subr.bf16.mxu0 %v471
      %545 = vmatpush1.bf16.msra.mxu0 %v470
      %546 = vmatprep.subr.bf16.mxu0 %v469
      %547 = vmatpush1.bf16.msra.mxu0 %v468
      %548 = vmatprep.subr.bf16.mxu0 %v467
      %549 = vmatpush1.bf16.msra.mxu0 %v466
      %550 = vmatprep.subr.bf16.mxu0 %v465
      %551 = vmatpush1.bf16.msra.mxu0 %v464
      %552 = vmatprep.subr.bf16.mxu0 %v463
      %553 = vmatpush1.bf16.msra.mxu0 %v462
      %554 = vmatprep.subr.bf16.mxu0 %v461
      %555 = vmatpush1.bf16.msra.mxu0 %v460
      %556 = vmatprep.subr.bf16.mxu0 %v491
      %557 = vmatpush2.bf16.msra.mxu0 %v490
      %558 = vmatprep.subr.bf16.mxu0 %v489
      %559 = vmatpush2.bf16.msra.mxu0 %v488
      %560 = vmatprep.subr.bf16.mxu0 %v487
      %561 = vmatpush2.bf16.msra.mxu0 %v486
      %562 = vmatprep.subr.bf16.mxu0 %v485
      %563 = vmatpush2.bf16.msra.mxu0 %v484
      %564 = vmatprep.subr.bf16.mxu0 %v483
      %565 = vmatpush2.bf16.msra.mxu0 %v482
      %566 = vmatprep.subr.bf16.mxu0 %v481
      %567 = vmatpush2.bf16.msra.mxu0 %v480
      %568 = vmatprep.subr.bf16.mxu0 %v479
      %569 = vmatpush2.bf16.msra.mxu0 %v478
      %570 = vmatprep.subr.bf16.mxu0 %v477
      %571 = vmatpush2.bf16.msra.mxu0 %v476
      %572 = vmatprep.mubr.bf16.mxu0 %v357
      %573 = vmatmul.mubr.bf16.gmra.mxu0 %v356
      %v574 = vpop.f32.mrf.mxu0
      %v575 = vadd.f32 %v344, %v574
      %v576 = vpop.f32.mrf.mxu0
      %v577 = vadd.f32 %v348, %v576
      %v578 = vpop.f32.mrf.mxu0
      %v579 = vpop.f32.mrf.mxu0
      %580 = vdwg.mxu0
      %581 = vmatprep.subr.bf16.mxu0 0
      %582 = vmatpush1.bf16.msra.mxu0 0
      %583 = vmatprep.subr.bf16.mxu0 0
      %584 = vmatpush1.bf16.msra.mxu0 0
      %585 = vmatprep.subr.bf16.mxu0 0
      %586 = vmatpush1.bf16.msra.mxu0 0
      %587 = vmatprep.subr.bf16.mxu0 0
      %588 = vmatpush1.bf16.msra.mxu0 0
      %589 = vmatprep.subr.bf16.mxu0 0
      %590 = vmatpush1.bf16.msra.mxu0 0
      %591 = vmatprep.subr.bf16.mxu0 0
      %592 = vmatpush1.bf16.msra.mxu0 0
      %593 = vmatprep.subr.bf16.mxu0 0
      %594 = vmatpush1.bf16.msra.mxu0 0
      %595 = vmatprep.subr.bf16.mxu0 %v538
      %596 = vmatpush1.bf16.msra.mxu0 %v535
      %597 = vmatprep.subr.bf16.mxu0 0
      %598 = vmatpush2.bf16.msra.mxu0 0
      %599 = vmatprep.subr.bf16.mxu0 0
      %600 = vmatpush2.bf16.msra.mxu0 0
      %601 = vmatprep.subr.bf16.mxu0 0
      %602 = vmatpush2.bf16.msra.mxu0 0
      %603 = vmatprep.subr.bf16.mxu0 0
      %604 = vmatpush2.bf16.msra.mxu0 0
      %605 = vmatprep.subr.bf16.mxu0 0
      %606 = vmatpush2.bf16.msra.mxu0 0
      %607 = vmatprep.subr.bf16.mxu0 0
      %608 = vmatpush2.bf16.msra.mxu0 0
      %609 = vmatprep.subr.bf16.mxu0 0
      %610 = vmatpush2.bf16.msra.mxu0 0
      %611 = vmatprep.subr.bf16.mxu0 0
      %612 = vmatpush2.bf16.msra.mxu0 0
      %613 = vmatprep.mubr.bf16.mxu0 0
      %614 = vmatmul.mubr.bf16.gmra.mxu0 %v528
      %v615 = vpop.f32.mrf.mxu0
      %v616 = vadd.f32 %v575, %v615
      %v617 = vpop.f32.mrf.mxu0
      %v618 = vadd.f32 %v577, %v617
      %v619 = vpop.f32.mrf.mxu0
      %v620 = vpop.f32.mrf.mxu0
      %621 = vdwg.mxu0
      %v622 = vmax.f32 %v616, 0.0
      %v623 = vmax.f32 %v618, 0.0
      %v624 = vpack.c.bf16 %v622, %v622
      %v625 = vpack.c.bf16 %v623, %v623
      %v626 = vld [vmem:[%s3] sm:$0xff]
      %v627 = vld [vmem:[%s3 + $0x8] sm:$0xff]
      %v628 = vld [vmem:[%s3 + $0x10] sm:$0xff]
      %v629 = vld [vmem:[%s3 + $0x18] sm:$0xff]
      %v630 = vld [vmem:[%s3 + $0x20] sm:$0xff]
      %v631 = vld [vmem:[%s3 + $0x28] sm:$0xff]
      %v632 = vld [vmem:[%s3 + $0x30] sm:$0xff]
      %v633 = vld [vmem:[%s3 + $0x38] sm:$0xff]
      %v634 = vld [vmem:[%s3 + $0x40] sm:$0xff]
      %v635 = vld [vmem:[%s3 + $0x48] sm:$0xff]
      %v636 = vld [vmem:[%s3 + $0x50] sm:$0xff]
      %v637 = vld [vmem:[%s3 + $0x58] sm:$0xff]
      %v638 = vld [vmem:[%s3 + $0x60] sm:$0xff]
      %v639 = vld [vmem:[%s3 + $0x68] sm:$0xff]
      %v640 = vld [vmem:[%s3 + $0x70] sm:$0xff]
      %v641 = vld [vmem:[%s3 + $0x78] sm:$0xff]
      %v642 = vld [vmem:[%s3 + $0x80] sm:$0xff]
      %v643 = vld [vmem:[%s3 + $0x88] sm:$0xff]
      %v644 = vld [vmem:[%s3 + $0x90] sm:$0xff]
      %v645 = vld [vmem:[%s3 + $0x98] sm:$0xff]
      %v646 = vld [vmem:[%s3 + $0xa0] sm:$0xff]
      %v647 = vld [vmem:[%s3 + $0xa8] sm:$0xff]
      %v648 = vld [vmem:[%s3 + $0xb0] sm:$0xff]
      %v649 = vld [vmem:[%s3 + $0xb8] sm:$0xff]
      %v650 = vld [vmem:[%s3 + $0xc0] sm:$0xff]
      %v651 = vld [vmem:[%s3 + $0xc8] sm:$0xff]
      %v652 = vld [vmem:[%s3 + $0xd0] sm:$0xff]
      %v653 = vld [vmem:[%s3 + $0xd8] sm:$0xff]
      %v654 = vld [vmem:[%s3 + $0xe0] sm:$0xff]
      %v655 = vld [vmem:[%s3 + $0xe8] sm:$0xff]
      %v656 = vld [vmem:[%s3 + $0xf0] sm:$0xff]
      %v657 = vld [vmem:[%s3 + $0xf8] sm:$0xff]
      %v658 = vld [vmem:[%s3 + $0x100] sm:$0xff]
      %v659 = vld [vmem:[%s3 + $0x108] sm:$0xff]
      %v660 = vld [vmem:[%s3 + $0x110] sm:$0xff]
      %v661 = vld [vmem:[%s3 + $0x118] sm:$0xff]
      %v662 = vld [vmem:[%s3 + $0x120] sm:$0xff]
      %v663 = vld [vmem:[%s3 + $0x128] sm:$0xff]
      %v664 = vld [vmem:[%s3 + $0x130] sm:$0xff]
      %v665 = vld [vmem:[%s3 + $0x138] sm:$0xff]
      %v666 = vld [vmem:[%s3 + $0x140] sm:$0xff]
      %v667 = vld [vmem:[%s3 + $0x148] sm:$0xff]
      %v668 = vld [vmem:[%s3 + $0x150] sm:$0xff]
      %v669 = vld [vmem:[%s3 + $0x158] sm:$0xff]
      %v670 = vld [vmem:[%s3 + $0x160] sm:$0xff]
      %v671 = vld [vmem:[%s3 + $0x168] sm:$0xff]
      %v672 = vld [vmem:[%s3 + $0x170] sm:$0xff]
      %v673 = vld [vmem:[%s3 + $0x178] sm:$0xff]
      %v674 = vld [vmem:[%s3 + $0x180] sm:$0xff]
      %v675 = vld [vmem:[%s3 + $0x188] sm:$0xff]
      %v676 = vld [vmem:[%s3 + $0x190] sm:$0xff]
      %v677 = vld [vmem:[%s3 + $0x198] sm:$0xff]
      %v678 = vld [vmem:[%s3 + $0x1a0] sm:$0xff]
      %v679 = vld [vmem:[%s3 + $0x1a8] sm:$0xff]
      %v680 = vld [vmem:[%s3 + $0x1b0] sm:$0xff]
      %v681 = vld [vmem:[%s3 + $0x1b8] sm:$0xff]
      %v682 = vld [vmem:[%s3 + $0x1c0] sm:$0xff]
      %v683 = vld [vmem:[%s3 + $0x1c8] sm:$0xff]
      %v684 = vld [vmem:[%s3 + $0x1d0] sm:$0xff]
      %v685 = vld [vmem:[%s3 + $0x1d8] sm:$0xff]
      %v686 = vld [vmem:[%s3 + $0x1e0] sm:$0xff]
      %v687 = vld [vmem:[%s3 + $0x1e8] sm:$0xff]
      %v688 = vld [vmem:[%s3 + $0x1f0] sm:$0xff]
      %v689 = vld [vmem:[%s3 + $0x1f8] sm:$0xff]
      %v690 = vld [vmem:[%s4] sm:$0xf]
      %v692 = vlaneseq
      %v693 = vshrl.u32 %v692, 7
      %v694 = vsub.s32 0, %v693
      %v695 = vrot.slane %v690, %v694
      %v696 = vlaneseq
      %v697 = vshrl.u32 %v696, 7
      %v698 = vsub.s32 1, %v697
      %v699 = vrot.slane %v690, %v698
      %v700 = vlaneseq
      %v701 = vshrl.u32 %v700, 7
      %v702 = vsub.s32 2, %v701
      %v703 = vrot.slane %v690, %v702
      %v704 = vlaneseq
      %v705 = vshrl.u32 %v704, 7
      %v706 = vsub.s32 3, %v705
      %v707 = vrot.slane %v690, %v706
      %v776 = vunpack.c.l.b16 %v626
      %v777 = vunpack.c.h.b16 %v626
      %v778 = vunpack.c.l.b16 %v627
      %v779 = vunpack.c.h.b16 %v627
      %v780 = vunpack.c.l.b16 %v628
      %v781 = vunpack.c.h.b16 %v628
      %v782 = vunpack.c.l.b16 %v629
      %v783 = vunpack.c.h.b16 %v629
      %v784 = vunpack.c.l.b16 %v630
      %v785 = vunpack.c.h.b16 %v630
      %v786 = vunpack.c.l.b16 %v631
      %v787 = vunpack.c.h.b16 %v631
      %v788 = vunpack.c.l.b16 %v632
      %v789 = vunpack.c.h.b16 %v632
      %v790 = vunpack.c.l.b16 %v633
      %v791 = vunpack.c.h.b16 %v633
      %v792 = vunpack.c.l.b16 %v634
      %v793 = vunpack.c.h.b16 %v634
      %v794 = vunpack.c.l.b16 %v635
      %v795 = vunpack.c.h.b16 %v635
      %v796 = vunpack.c.l.b16 %v636
      %v797 = vunpack.c.h.b16 %v636
      %v798 = vunpack.c.l.b16 %v637
      %v799 = vunpack.c.h.b16 %v637
      %v800 = vunpack.c.l.b16 %v638
      %v801 = vunpack.c.h.b16 %v638
      %v802 = vunpack.c.l.b16 %v639
      %v803 = vunpack.c.h.b16 %v639
      %v804 = vunpack.c.l.b16 %v640
      %v805 = vunpack.c.h.b16 %v640
      %v806 = vunpack.c.l.b16 %v641
      %v807 = vunpack.c.h.b16 %v641
      %v808 = vunpack.c.l.b16 %v642
      %v809 = vunpack.c.h.b16 %v642
      %v810 = vunpack.c.l.b16 %v643
      %v811 = vunpack.c.h.b16 %v643
      %v812 = vunpack.c.l.b16 %v644
      %v813 = vunpack.c.h.b16 %v644
      %v814 = vunpack.c.l.b16 %v645
      %v815 = vunpack.c.h.b16 %v645
      %v816 = vunpack.c.l.b16 %v646
      %v817 = vunpack.c.h.b16 %v646
      %v818 = vunpack.c.l.b16 %v647
      %v819 = vunpack.c.h.b16 %v647
      %v820 = vunpack.c.l.b16 %v648
      %v821 = vunpack.c.h.b16 %v648
      %v822 = vunpack.c.l.b16 %v649
      %v823 = vunpack.c.h.b16 %v649
      %v824 = vunpack.c.l.b16 %v650
      %v825 = vunpack.c.h.b16 %v650
      %v826 = vunpack.c.l.b16 %v651
      %v827 = vunpack.c.h.b16 %v651
      %v828 = vunpack.c.l.b16 %v652
      %v829 = vunpack.c.h.b16 %v652
      %v830 = vunpack.c.l.b16 %v653
      %v831 = vunpack.c.h.b16 %v653
      %v832 = vunpack.c.l.b16 %v654
      %v833 = vunpack.c.h.b16 %v654
      %v834 = vunpack.c.l.b16 %v655
      %v835 = vunpack.c.h.b16 %v655
      %v836 = vunpack.c.l.b16 %v656
      %v837 = vunpack.c.h.b16 %v656
      %v838 = vunpack.c.l.b16 %v657
      %v839 = vunpack.c.h.b16 %v657
      %v840 = vunpack.c.l.b16 %v658
      %v841 = vunpack.c.h.b16 %v658
      %v842 = vunpack.c.l.b16 %v659
      %v843 = vunpack.c.h.b16 %v659
      %v844 = vunpack.c.l.b16 %v660
      %v845 = vunpack.c.h.b16 %v660
      %v846 = vunpack.c.l.b16 %v661
      %v847 = vunpack.c.h.b16 %v661
      %v848 = vunpack.c.l.b16 %v662
      %v849 = vunpack.c.h.b16 %v662
      %v850 = vunpack.c.l.b16 %v663
      %v851 = vunpack.c.h.b16 %v663
      %v852 = vunpack.c.l.b16 %v664
      %v853 = vunpack.c.h.b16 %v664
      %v854 = vunpack.c.l.b16 %v665
      %v855 = vunpack.c.h.b16 %v665
      %v856 = vunpack.c.l.b16 %v666
      %v857 = vunpack.c.h.b16 %v666
      %v858 = vunpack.c.l.b16 %v667
      %v859 = vunpack.c.h.b16 %v667
      %v860 = vunpack.c.l.b16 %v668
      %v861 = vunpack.c.h.b16 %v668
      %v862 = vunpack.c.l.b16 %v669
      %v863 = vunpack.c.h.b16 %v669
      %v864 = vunpack.c.l.b16 %v670
      %v865 = vunpack.c.h.b16 %v670
      %v866 = vunpack.c.l.b16 %v671
      %v867 = vunpack.c.h.b16 %v671
      %v868 = vunpack.c.l.b16 %v672
      %v869 = vunpack.c.h.b16 %v672
      %v870 = vunpack.c.l.b16 %v673
      %v871 = vunpack.c.h.b16 %v673
      %v872 = vunpack.c.l.b16 %v674
      %v873 = vunpack.c.h.b16 %v674
      %v874 = vunpack.c.l.b16 %v675
      %v875 = vunpack.c.h.b16 %v675
      %v876 = vunpack.c.l.b16 %v676
      %v877 = vunpack.c.h.b16 %v676
      %v878 = vunpack.c.l.b16 %v677
      %v879 = vunpack.c.h.b16 %v677
      %v880 = vunpack.c.l.b16 %v678
      %v881 = vunpack.c.h.b16 %v678
      %v882 = vunpack.c.l.b16 %v679
      %v883 = vunpack.c.h.b16 %v679
      %v884 = vunpack.c.l.b16 %v680
      %v885 = vunpack.c.h.b16 %v680
      %v886 = vunpack.c.l.b16 %v681
      %v887 = vunpack.c.h.b16 %v681
      %v888 = vunpack.c.l.b16 %v682
      %v889 = vunpack.c.h.b16 %v682
      %v890 = vunpack.c.l.b16 %v683
      %v891 = vunpack.c.h.b16 %v683
      %v892 = vunpack.c.l.b16 %v684
      %v893 = vunpack.c.h.b16 %v684
      %v894 = vunpack.c.l.b16 %v685
      %v895 = vunpack.c.h.b16 %v685
      %v896 = vunpack.c.l.b16 %v686
      %v897 = vunpack.c.h.b16 %v686
      %v898 = vunpack.c.l.b16 %v687
      %v899 = vunpack.c.h.b16 %v687
      %v900 = vunpack.c.l.b16 %v688
      %v901 = vunpack.c.h.b16 %v688
      %v902 = vunpack.c.l.b16 %v689
      %v903 = vunpack.c.h.b16 %v689
      %v904 = vpack.c.b16 %v780, %v776
      %v905 = vpack.c.b16 %v781, %v777
      %v906 = vpack.c.b16 %v782, %v778
      %v907 = vpack.c.b16 %v783, %v779
      %v908 = vpack.c.b16 %v788, %v784
      %v909 = vpack.c.b16 %v789, %v785
      %v910 = vpack.c.b16 %v790, %v786
      %v911 = vpack.c.b16 %v791, %v787
      %v912 = vpack.c.b16 %v796, %v792
      %v913 = vpack.c.b16 %v797, %v793
      %v914 = vpack.c.b16 %v798, %v794
      %v915 = vpack.c.b16 %v799, %v795
      %v916 = vpack.c.b16 %v804, %v800
      %v917 = vpack.c.b16 %v805, %v801
      %v918 = vpack.c.b16 %v806, %v802
      %v919 = vpack.c.b16 %v807, %v803
      %v920 = vpack.c.b16 %v812, %v808
      %v921 = vpack.c.b16 %v813, %v809
      %v922 = vpack.c.b16 %v814, %v810
      %v923 = vpack.c.b16 %v815, %v811
      %v924 = vpack.c.b16 %v820, %v816
      %v925 = vpack.c.b16 %v821, %v817
      %v926 = vpack.c.b16 %v822, %v818
      %v927 = vpack.c.b16 %v823, %v819
      %v928 = vpack.c.b16 %v828, %v824
      %v929 = vpack.c.b16 %v829, %v825
      %v930 = vpack.c.b16 %v830, %v826
      %v931 = vpack.c.b16 %v831, %v827
      %v932 = vpack.c.b16 %v836, %v832
      %v933 = vpack.c.b16 %v837, %v833
      %v934 = vpack.c.b16 %v838, %v834
      %v935 = vpack.c.b16 %v839, %v835
      %v936 = vpack.c.b16 %v844, %v840
      %v937 = vpack.c.b16 %v845, %v841
      %v938 = vpack.c.b16 %v846, %v842
      %v939 = vpack.c.b16 %v847, %v843
      %v940 = vpack.c.b16 %v852, %v848
      %v941 = vpack.c.b16 %v853, %v849
      %v942 = vpack.c.b16 %v854, %v850
      %v943 = vpack.c.b16 %v855, %v851
      %v944 = vpack.c.b16 %v860, %v856
      %v945 = vpack.c.b16 %v861, %v857
      %v946 = vpack.c.b16 %v862, %v858
      %v947 = vpack.c.b16 %v863, %v859
      %v948 = vpack.c.b16 %v868, %v864
      %v949 = vpack.c.b16 %v869, %v865
      %v950 = vpack.c.b16 %v870, %v866
      %v951 = vpack.c.b16 %v871, %v867
      %v952 = vpack.c.b16 %v876, %v872
      %v953 = vpack.c.b16 %v877, %v873
      %v954 = vpack.c.b16 %v878, %v874
      %v955 = vpack.c.b16 %v879, %v875
      %v956 = vpack.c.b16 %v884, %v880
      %v957 = vpack.c.b16 %v885, %v881
      %v958 = vpack.c.b16 %v886, %v882
      %v959 = vpack.c.b16 %v887, %v883
      %v960 = vpack.c.b16 %v892, %v888
      %v961 = vpack.c.b16 %v893, %v889
      %v962 = vpack.c.b16 %v894, %v890
      %v963 = vpack.c.b16 %v895, %v891
      %v964 = vpack.c.b16 %v900, %v896
      %v965 = vpack.c.b16 %v901, %v897
      %v966 = vpack.c.b16 %v902, %v898
      %v967 = vpack.c.b16 %v903, %v899
      %1032 = vmatprep.subr.bf16.mxu0 %v933
      %1033 = vmatpush1.bf16.msra.mxu0 %v932
      %1034 = vmatprep.subr.bf16.mxu0 %v929
      %1035 = vmatpush1.bf16.msra.mxu0 %v928
      %1036 = vmatprep.subr.bf16.mxu0 %v925
      %1037 = vmatpush1.bf16.msra.mxu0 %v924
      %1038 = vmatprep.subr.bf16.mxu0 %v921
      %1039 = vmatpush1.bf16.msra.mxu0 %v920
      %1040 = vmatprep.subr.bf16.mxu0 %v917
      %1041 = vmatpush1.bf16.msra.mxu0 %v916
      %1042 = vmatprep.subr.bf16.mxu0 %v913
      %1043 = vmatpush1.bf16.msra.mxu0 %v912
      %1044 = vmatprep.subr.bf16.mxu0 %v909
      %1045 = vmatpush1.bf16.msra.mxu0 %v908
      %1046 = vmatprep.subr.bf16.mxu0 %v905
      %1047 = vmatpush1.bf16.msra.mxu0 %v904
      %1048 = vmatprep.subr.bf16.mxu0 %v965
      %1049 = vmatpush2.bf16.msra.mxu0 %v964
      %1050 = vmatprep.subr.bf16.mxu0 %v961
      %1051 = vmatpush2.bf16.msra.mxu0 %v960
      %1052 = vmatprep.subr.bf16.mxu0 %v957
      %1053 = vmatpush2.bf16.msra.mxu0 %v956
      %1054 = vmatprep.subr.bf16.mxu0 %v953
      %1055 = vmatpush2.bf16.msra.mxu0 %v952
      %1056 = vmatprep.subr.bf16.mxu0 %v949
      %1057 = vmatpush2.bf16.msra.mxu0 %v948
      %1058 = vmatprep.subr.bf16.mxu0 %v945
      %1059 = vmatpush2.bf16.msra.mxu0 %v944
      %1060 = vmatprep.subr.bf16.mxu0 %v941
      %1061 = vmatpush2.bf16.msra.mxu0 %v940
      %1062 = vmatprep.subr.bf16.mxu0 %v937
      %1063 = vmatpush2.bf16.msra.mxu0 %v936
      %1064 = vmatprep.mubr.bf16.mxu0 %v625
      %1065 = vmatmul.mubr.bf16.gmra.mxu0 %v624
      %v1066 = vpop.f32.mrf.mxu0
      %v1067 = vadd.f32 %v695, %v1066
      %v1068 = vpop.f32.mrf.mxu0
      %v1069 = vadd.f32 %v699, %v1068
      %v1070 = vpop.f32.mrf.mxu0
      %v1071 = vpop.f32.mrf.mxu0
      %1072 = vdwg.mxu0
      %1073 = vmatprep.subr.bf16.mxu0 %v935
      %1074 = vmatpush1.bf16.msra.mxu0 %v934
      %1075 = vmatprep.subr.bf16.mxu0 %v931
      %1076 = vmatpush1.bf16.msra.mxu0 %v930
      %1077 = vmatprep.subr.bf16.mxu0 %v927
      %1078 = vmatpush1.bf16.msra.mxu0 %v926
      %1079 = vmatprep.subr.bf16.mxu0 %v923
      %1080 = vmatpush1.bf16.msra.mxu0 %v922
      %1081 = vmatprep.subr.bf16.mxu0 %v919
      %1082 = vmatpush1.bf16.msra.mxu0 %v918
      %1083 = vmatprep.subr.bf16.mxu0 %v915
      %1084 = vmatpush1.bf16.msra.mxu0 %v914
      %1085 = vmatprep.subr.bf16.mxu0 %v911
      %1086 = vmatpush1.bf16.msra.mxu0 %v910
      %1087 = vmatprep.subr.bf16.mxu0 %v907
      %1088 = vmatpush1.bf16.msra.mxu0 %v906
      %1089 = vmatprep.subr.bf16.mxu0 %v967
      %1090 = vmatpush2.bf16.msra.mxu0 %v966
      %1091 = vmatprep.subr.bf16.mxu0 %v963
      %1092 = vmatpush2.bf16.msra.mxu0 %v962
      %1093 = vmatprep.subr.bf16.mxu0 %v959
      %1094 = vmatpush2.bf16.msra.mxu0 %v958
      %1095 = vmatprep.subr.bf16.mxu0 %v955
      %1096 = vmatpush2.bf16.msra.mxu0 %v954
      %1097 = vmatprep.subr.bf16.mxu0 %v951
      %1098 = vmatpush2.bf16.msra.mxu0 %v950
      %1099 = vmatprep.subr.bf16.mxu0 %v947
      %1100 = vmatpush2.bf16.msra.mxu0 %v946
      %1101 = vmatprep.subr.bf16.mxu0 %v943
      %1102 = vmatpush2.bf16.msra.mxu0 %v942
      %1103 = vmatprep.subr.bf16.mxu0 %v939
      %1104 = vmatpush2.bf16.msra.mxu0 %v938
      %1105 = vmatprep.mubr.bf16.mxu0 %v625
      %1106 = vmatmul.mubr.bf16.gmra.mxu0 %v624
      %v1107 = vpop.f32.mrf.mxu0
      %v1108 = vadd.f32 %v703, %v1107
      %v1109 = vpop.f32.mrf.mxu0
      %v1110 = vadd.f32 %v707, %v1109
      %v1111 = vpop.f32.mrf.mxu0
      %v1112 = vpop.f32.mrf.mxu0
      %1113 = vdwg.mxu0
      %v1114 = vmax.f32 %v1067, 0.0
      %v1115 = vmax.f32 %v1069, 0.0
      %v1116 = vmax.f32 %v1108, 0.0
      %v1117 = vmax.f32 %v1110, 0.0
      %v1118 = vpack.c.bf16 %v1114, %v1114
      %v1119 = vpack.c.bf16 %v1115, %v1115
      %v1120 = vpack.c.bf16 %v1116, %v1116
      %v1121 = vpack.c.bf16 %v1117, %v1117
      %v1122 = vld [vmem:[%s5] sm:$0xff]
      %v1123 = vld [vmem:[%s5 + $0x8] sm:$0xff]
      %v1124 = vld [vmem:[%s5 + $0x10] sm:$0xff]
      %v1125 = vld [vmem:[%s5 + $0x18] sm:$0xff]
      %v1126 = vld [vmem:[%s5 + $0x20] sm:$0xff]
      %v1127 = vld [vmem:[%s5 + $0x28] sm:$0xff]
      %v1128 = vld [vmem:[%s5 + $0x30] sm:$0xff]
      %v1129 = vld [vmem:[%s5 + $0x38] sm:$0xff]
      %v1130 = vld [vmem:[%s5 + $0x40] sm:$0xff]
      %v1131 = vld [vmem:[%s5 + $0x48] sm:$0xff]
      %v1132 = vld [vmem:[%s5 + $0x50] sm:$0xff]
      %v1133 = vld [vmem:[%s5 + $0x58] sm:$0xff]
      %v1134 = vld [vmem:[%s5 + $0x60] sm:$0xff]
      %v1135 = vld [vmem:[%s5 + $0x68] sm:$0xff]
      %v1136 = vld [vmem:[%s5 + $0x70] sm:$0xff]
      %v1137 = vld [vmem:[%s5 + $0x78] sm:$0xff]
      %v1138 = vld [vmem:[%s5 + $0x80] sm:$0xff]
      %v1139 = vld [vmem:[%s5 + $0x88] sm:$0xff]
      %v1140 = vld [vmem:[%s5 + $0x90] sm:$0xff]
      %v1141 = vld [vmem:[%s5 + $0x98] sm:$0xff]
      %v1142 = vld [vmem:[%s5 + $0xa0] sm:$0xff]
      %v1143 = vld [vmem:[%s5 + $0xa8] sm:$0xff]
      %v1144 = vld [vmem:[%s5 + $0xb0] sm:$0xff]
      %v1145 = vld [vmem:[%s5 + $0xb8] sm:$0xff]
      %v1146 = vld [vmem:[%s5 + $0xc0] sm:$0xff]
      %v1147 = vld [vmem:[%s5 + $0xc8] sm:$0xff]
      %v1148 = vld [vmem:[%s5 + $0xd0] sm:$0xff]
      %v1149 = vld [vmem:[%s5 + $0xd8] sm:$0xff]
      %v1150 = vld [vmem:[%s5 + $0xe0] sm:$0xff]
      %v1151 = vld [vmem:[%s5 + $0xe8] sm:$0xff]
      %v1152 = vld [vmem:[%s5 + $0xf0] sm:$0xff]
      %v1153 = vld [vmem:[%s5 + $0xf8] sm:$0xff]
      %v1154 = vld [vmem:[%s5 + $0x100] sm:$0xff]
      %v1155 = vld [vmem:[%s5 + $0x108] sm:$0xff]
      %v1156 = vld [vmem:[%s5 + $0x110] sm:$0xff]
      %v1157 = vld [vmem:[%s5 + $0x118] sm:$0xff]
      %v1158 = vld [vmem:[%s5 + $0x120] sm:$0xff]
      %v1159 = vld [vmem:[%s5 + $0x128] sm:$0xff]
      %v1160 = vld [vmem:[%s5 + $0x130] sm:$0xff]
      %v1161 = vld [vmem:[%s5 + $0x138] sm:$0xff]
      %v1162 = vld [vmem:[%s5 + $0x140] sm:$0xff]
      %v1163 = vld [vmem:[%s5 + $0x148] sm:$0xff]
      %v1164 = vld [vmem:[%s5 + $0x150] sm:$0xff]
      %v1165 = vld [vmem:[%s5 + $0x158] sm:$0xff]
      %v1166 = vld [vmem:[%s5 + $0x160] sm:$0xff]
      %v1167 = vld [vmem:[%s5 + $0x168] sm:$0xff]
      %v1168 = vld [vmem:[%s5 + $0x170] sm:$0xff]
      %v1169 = vld [vmem:[%s5 + $0x178] sm:$0xff]
      %v1170 = vld [vmem:[%s5 + $0x180] sm:$0xff]
      %v1171 = vld [vmem:[%s5 + $0x188] sm:$0xff]
      %v1172 = vld [vmem:[%s5 + $0x190] sm:$0xff]
      %v1173 = vld [vmem:[%s5 + $0x198] sm:$0xff]
      %v1174 = vld [vmem:[%s5 + $0x1a0] sm:$0xff]
      %v1175 = vld [vmem:[%s5 + $0x1a8] sm:$0xff]
      %v1176 = vld [vmem:[%s5 + $0x1b0] sm:$0xff]
      %v1177 = vld [vmem:[%s5 + $0x1b8] sm:$0xff]
      %v1178 = vld [vmem:[%s5 + $0x1c0] sm:$0xff]
      %v1179 = vld [vmem:[%s5 + $0x1c8] sm:$0xff]
      %v1180 = vld [vmem:[%s5 + $0x1d0] sm:$0xff]
      %v1181 = vld [vmem:[%s5 + $0x1d8] sm:$0xff]
      %v1182 = vld [vmem:[%s5 + $0x1e0] sm:$0xff]
      %v1183 = vld [vmem:[%s5 + $0x1e8] sm:$0xff]
      %v1184 = vld [vmem:[%s5 + $0x1f0] sm:$0xff]
      %v1185 = vld [vmem:[%s5 + $0x1f8] sm:$0xff]
      %v1186 = vld [vmem:[%s5 + $0x200] sm:$0xff]
      %v1187 = vld [vmem:[%s5 + $0x208] sm:$0xff]
      %v1188 = vld [vmem:[%s5 + $0x210] sm:$0xff]
      %v1189 = vld [vmem:[%s5 + $0x218] sm:$0xff]
      %v1190 = vld [vmem:[%s5 + $0x220] sm:$0xff]
      %v1191 = vld [vmem:[%s5 + $0x228] sm:$0xff]
      %v1192 = vld [vmem:[%s5 + $0x230] sm:$0xff]
      %v1193 = vld [vmem:[%s5 + $0x238] sm:$0xff]
      %v1194 = vld [vmem:[%s5 + $0x240] sm:$0xff]
      %v1195 = vld [vmem:[%s5 + $0x248] sm:$0xff]
      %v1196 = vld [vmem:[%s5 + $0x250] sm:$0xff]
      %v1197 = vld [vmem:[%s5 + $0x258] sm:$0xff]
      %v1198 = vld [vmem:[%s5 + $0x260] sm:$0xff]
      %v1199 = vld [vmem:[%s5 + $0x268] sm:$0xff]
      %v1200 = vld [vmem:[%s5 + $0x270] sm:$0xff]
      %v1201 = vld [vmem:[%s5 + $0x278] sm:$0xff]
      %v1202 = vld [vmem:[%s5 + $0x280] sm:$0xff]
      %v1203 = vld [vmem:[%s5 + $0x288] sm:$0xff]
      %v1204 = vld [vmem:[%s5 + $0x290] sm:$0xff]
      %v1205 = vld [vmem:[%s5 + $0x298] sm:$0xff]
      %v1206 = vld [vmem:[%s5 + $0x2a0] sm:$0xff]
      %v1207 = vld [vmem:[%s5 + $0x2a8] sm:$0xff]
      %v1208 = vld [vmem:[%s5 + $0x2b0] sm:$0xff]
      %v1209 = vld [vmem:[%s5 + $0x2b8] sm:$0xff]
      %v1210 = vld [vmem:[%s5 + $0x2c0] sm:$0xff]
      %v1211 = vld [vmem:[%s5 + $0x2c8] sm:$0xff]
      %v1212 = vld [vmem:[%s5 + $0x2d0] sm:$0xff]
      %v1213 = vld [vmem:[%s5 + $0x2d8] sm:$0xff]
      %v1214 = vld [vmem:[%s5 + $0x2e0] sm:$0xff]
      %v1215 = vld [vmem:[%s5 + $0x2e8] sm:$0xff]
      %v1216 = vld [vmem:[%s5 + $0x2f0] sm:$0xff]
      %v1217 = vld [vmem:[%s5 + $0x2f8] sm:$0xff]
      %v1218 = vld [vmem:[%s5 + $0x300] sm:$0xff]
      %v1219 = vld [vmem:[%s5 + $0x308] sm:$0xff]
      %v1220 = vld [vmem:[%s5 + $0x310] sm:$0xff]
      %v1221 = vld [vmem:[%s5 + $0x318] sm:$0xff]
      %v1222 = vld [vmem:[%s5 + $0x320] sm:$0xff]
      %v1223 = vld [vmem:[%s5 + $0x328] sm:$0xff]
      %v1224 = vld [vmem:[%s5 + $0x330] sm:$0xff]
      %v1225 = vld [vmem:[%s5 + $0x338] sm:$0xff]
      %v1226 = vld [vmem:[%s5 + $0x340] sm:$0xff]
      %v1227 = vld [vmem:[%s5 + $0x348] sm:$0xff]
      %v1228 = vld [vmem:[%s5 + $0x350] sm:$0xff]
      %v1229 = vld [vmem:[%s5 + $0x358] sm:$0xff]
      %v1230 = vld [vmem:[%s5 + $0x360] sm:$0xff]
      %v1231 = vld [vmem:[%s5 + $0x368] sm:$0xff]
      %v1232 = vld [vmem:[%s5 + $0x370] sm:$0xff]
      %v1233 = vld [vmem:[%s5 + $0x378] sm:$0xff]
      %v1234 = vld [vmem:[%s5 + $0x380] sm:$0xff]
      %v1235 = vld [vmem:[%s5 + $0x388] sm:$0xff]
      %v1236 = vld [vmem:[%s5 + $0x390] sm:$0xff]
      %v1237 = vld [vmem:[%s5 + $0x398] sm:$0xff]
      %v1238 = vld [vmem:[%s5 + $0x3a0] sm:$0xff]
      %v1239 = vld [vmem:[%s5 + $0x3a8] sm:$0xff]
      %v1240 = vld [vmem:[%s5 + $0x3b0] sm:$0xff]
      %v1241 = vld [vmem:[%s5 + $0x3b8] sm:$0xff]
      %v1242 = vld [vmem:[%s5 + $0x3c0] sm:$0xff]
      %v1243 = vld [vmem:[%s5 + $0x3c8] sm:$0xff]
      %v1244 = vld [vmem:[%s5 + $0x3d0] sm:$0xff]
      %v1245 = vld [vmem:[%s5 + $0x3d8] sm:$0xff]
      %v1246 = vld [vmem:[%s5 + $0x3e0] sm:$0xff]
      %v1247 = vld [vmem:[%s5 + $0x3e8] sm:$0xff]
      %v1248 = vld [vmem:[%s5 + $0x3f0] sm:$0xff]
      %v1249 = vld [vmem:[%s5 + $0x3f8] sm:$0xff]
      %v1250 = vld [vmem:[%s5 + $0x400] sm:$0xff]
      %v1251 = vld [vmem:[%s5 + $0x408] sm:$0xff]
      %v1252 = vld [vmem:[%s5 + $0x410] sm:$0xff]
      %v1253 = vld [vmem:[%s5 + $0x418] sm:$0xff]
      %v1254 = vld [vmem:[%s5 + $0x420] sm:$0xff]
      %v1255 = vld [vmem:[%s5 + $0x428] sm:$0xff]
      %v1256 = vld [vmem:[%s5 + $0x430] sm:$0xff]
      %v1257 = vld [vmem:[%s5 + $0x438] sm:$0xff]
      %v1258 = vld [vmem:[%s5 + $0x440] sm:$0xff]
      %v1259 = vld [vmem:[%s5 + $0x448] sm:$0xff]
      %v1260 = vld [vmem:[%s5 + $0x450] sm:$0xff]
      %v1261 = vld [vmem:[%s5 + $0x458] sm:$0xff]
      %v1262 = vld [vmem:[%s5 + $0x460] sm:$0xff]
      %v1263 = vld [vmem:[%s5 + $0x468] sm:$0xff]
      %v1264 = vld [vmem:[%s5 + $0x470] sm:$0xff]
      %v1265 = vld [vmem:[%s5 + $0x478] sm:$0xff]
      %v1266 = vld [vmem:[%s5 + $0x480] sm:$0xff]
      %v1267 = vld [vmem:[%s5 + $0x488] sm:$0xff]
      %v1268 = vld [vmem:[%s5 + $0x490] sm:$0xff]
      %v1269 = vld [vmem:[%s5 + $0x498] sm:$0xff]
      %v1270 = vld [vmem:[%s5 + $0x4a0] sm:$0xff]
      %v1271 = vld [vmem:[%s5 + $0x4a8] sm:$0xff]
      %v1272 = vld [vmem:[%s5 + $0x4b0] sm:$0xff]
      %v1273 = vld [vmem:[%s5 + $0x4b8] sm:$0xff]
      %v1274 = vld [vmem:[%s5 + $0x4c0] sm:$0xff]
      %v1275 = vld [vmem:[%s5 + $0x4c8] sm:$0xff]
      %v1276 = vld [vmem:[%s5 + $0x4d0] sm:$0xff]
      %v1277 = vld [vmem:[%s5 + $0x4d8] sm:$0xff]
      %v1278 = vld [vmem:[%s5 + $0x4e0] sm:$0xff]
      %v1279 = vld [vmem:[%s5 + $0x4e8] sm:$0xff]
      %v1280 = vld [vmem:[%s5 + $0x4f0] sm:$0xff]
      %v1281 = vld [vmem:[%s5 + $0x4f8] sm:$0xff]
      %v1282 = vld [vmem:[%s5 + $0x500] sm:$0xff]
      %v1283 = vld [vmem:[%s5 + $0x508] sm:$0xff]
      %v1284 = vld [vmem:[%s5 + $0x510] sm:$0xff]
      %v1285 = vld [vmem:[%s5 + $0x518] sm:$0xff]
      %v1286 = vld [vmem:[%s5 + $0x520] sm:$0xff]
      %v1287 = vld [vmem:[%s5 + $0x528] sm:$0xff]
      %v1288 = vld [vmem:[%s5 + $0x530] sm:$0xff]
      %v1289 = vld [vmem:[%s5 + $0x538] sm:$0xff]
      %v1290 = vld [vmem:[%s5 + $0x540] sm:$0xff]
      %v1291 = vld [vmem:[%s5 + $0x548] sm:$0xff]
      %v1292 = vld [vmem:[%s5 + $0x550] sm:$0xff]
      %v1293 = vld [vmem:[%s5 + $0x558] sm:$0xff]
      %v1294 = vld [vmem:[%s5 + $0x560] sm:$0xff]
      %v1295 = vld [vmem:[%s5 + $0x568] sm:$0xff]
      %v1296 = vld [vmem:[%s5 + $0x570] sm:$0xff]
      %v1297 = vld [vmem:[%s5 + $0x578] sm:$0xff]
      %v1298 = vld [vmem:[%s5 + $0x580] sm:$0xff]
      %v1299 = vld [vmem:[%s5 + $0x588] sm:$0xff]
      %v1300 = vld [vmem:[%s5 + $0x590] sm:$0xff]
      %v1301 = vld [vmem:[%s5 + $0x598] sm:$0xff]
      %v1302 = vld [vmem:[%s5 + $0x5a0] sm:$0xff]
      %v1303 = vld [vmem:[%s5 + $0x5a8] sm:$0xff]
      %v1304 = vld [vmem:[%s5 + $0x5b0] sm:$0xff]
      %v1305 = vld [vmem:[%s5 + $0x5b8] sm:$0xff]
      %v1306 = vld [vmem:[%s5 + $0x5c0] sm:$0xff]
      %v1307 = vld [vmem:[%s5 + $0x5c8] sm:$0xff]
      %v1308 = vld [vmem:[%s5 + $0x5d0] sm:$0xff]
      %v1309 = vld [vmem:[%s5 + $0x5d8] sm:$0xff]
      %v1310 = vld [vmem:[%s5 + $0x5e0] sm:$0xff]
      %v1311 = vld [vmem:[%s5 + $0x5e8] sm:$0xff]
      %v1312 = vld [vmem:[%s5 + $0x5f0] sm:$0xff]
      %v1313 = vld [vmem:[%s5 + $0x5f8] sm:$0xff]
      %v1314 = vld [vmem:[%s5 + $0x600] sm:$0xff]
      %v1315 = vld [vmem:[%s5 + $0x608] sm:$0xff]
      %v1316 = vld [vmem:[%s5 + $0x610] sm:$0xff]
      %v1317 = vld [vmem:[%s5 + $0x618] sm:$0xff]
      %v1318 = vld [vmem:[%s5 + $0x620] sm:$0xff]
      %v1319 = vld [vmem:[%s5 + $0x628] sm:$0xff]
      %v1320 = vld [vmem:[%s5 + $0x630] sm:$0xff]
      %v1321 = vld [vmem:[%s5 + $0x638] sm:$0xff]
      %v1322 = vld [vmem:[%s5 + $0x640] sm:$0xff]
      %v1323 = vld [vmem:[%s5 + $0x648] sm:$0xff]
      %v1324 = vld [vmem:[%s5 + $0x650] sm:$0xff]
      %v1325 = vld [vmem:[%s5 + $0x658] sm:$0xff]
      %v1326 = vld [vmem:[%s5 + $0x660] sm:$0xff]
      %v1327 = vld [vmem:[%s5 + $0x668] sm:$0xff]
      %v1328 = vld [vmem:[%s5 + $0x670] sm:$0xff]
      %v1329 = vld [vmem:[%s5 + $0x678] sm:$0xff]
      %v1330 = vld [vmem:[%s5 + $0x680] sm:$0xff]
      %v1331 = vld [vmem:[%s5 + $0x688] sm:$0xff]
      %v1332 = vld [vmem:[%s5 + $0x690] sm:$0xff]
      %v1333 = vld [vmem:[%s5 + $0x698] sm:$0xff]
      %v1334 = vld [vmem:[%s5 + $0x6a0] sm:$0xff]
      %v1335 = vld [vmem:[%s5 + $0x6a8] sm:$0xff]
      %v1336 = vld [vmem:[%s5 + $0x6b0] sm:$0xff]
      %v1337 = vld [vmem:[%s5 + $0x6b8] sm:$0xff]
      %v1338 = vld [vmem:[%s5 + $0x6c0] sm:$0xff]
      %v1339 = vld [vmem:[%s5 + $0x6c8] sm:$0xff]
      %v1340 = vld [vmem:[%s5 + $0x6d0] sm:$0xff]
      %v1341 = vld [vmem:[%s5 + $0x6d8] sm:$0xff]
      %v1342 = vld [vmem:[%s5 + $0x6e0] sm:$0xff]
      %v1343 = vld [vmem:[%s5 + $0x6e8] sm:$0xff]
      %v1344 = vld [vmem:[%s5 + $0x6f0] sm:$0xff]
      %v1345 = vld [vmem:[%s5 + $0x6f8] sm:$0xff]
      %v1346 = vld [vmem:[%s5 + $0x700] sm:$0xff]
      %v1347 = vld [vmem:[%s5 + $0x708] sm:$0xff]
      %v1348 = vld [vmem:[%s5 + $0x710] sm:$0xff]
      %v1349 = vld [vmem:[%s5 + $0x718] sm:$0xff]
      %v1350 = vld [vmem:[%s5 + $0x720] sm:$0xff]
      %v1351 = vld [vmem:[%s5 + $0x728] sm:$0xff]
      %v1352 = vld [vmem:[%s5 + $0x730] sm:$0xff]
      %v1353 = vld [vmem:[%s5 + $0x738] sm:$0xff]
      %v1354 = vld [vmem:[%s5 + $0x740] sm:$0xff]
      %v1355 = vld [vmem:[%s5 + $0x748] sm:$0xff]
      %v1356 = vld [vmem:[%s5 + $0x750] sm:$0xff]
      %v1357 = vld [vmem:[%s5 + $0x758] sm:$0xff]
      %v1358 = vld [vmem:[%s5 + $0x760] sm:$0xff]
      %v1359 = vld [vmem:[%s5 + $0x768] sm:$0xff]
      %v1360 = vld [vmem:[%s5 + $0x770] sm:$0xff]
      %v1361 = vld [vmem:[%s5 + $0x778] sm:$0xff]
      %v1362 = vld [vmem:[%s5 + $0x780] sm:$0xff]
      %v1363 = vld [vmem:[%s5 + $0x788] sm:$0xff]
      %v1364 = vld [vmem:[%s5 + $0x790] sm:$0xff]
      %v1365 = vld [vmem:[%s5 + $0x798] sm:$0xff]
      %v1366 = vld [vmem:[%s5 + $0x7a0] sm:$0xff]
      %v1367 = vld [vmem:[%s5 + $0x7a8] sm:$0xff]
      %v1368 = vld [vmem:[%s5 + $0x7b0] sm:$0xff]
      %v1369 = vld [vmem:[%s5 + $0x7b8] sm:$0xff]
      %v1370 = vld [vmem:[%s5 + $0x7c0] sm:$0xff]
      %v1371 = vld [vmem:[%s5 + $0x7c8] sm:$0xff]
      %v1372 = vld [vmem:[%s5 + $0x7d0] sm:$0xff]
      %v1373 = vld [vmem:[%s5 + $0x7d8] sm:$0xff]
      %v1374 = vld [vmem:[%s5 + $0x7e0] sm:$0xff]
      %v1375 = vld [vmem:[%s5 + $0x7e8] sm:$0xff]
      %v1376 = vld [vmem:[%s5 + $0x7f0] sm:$0xff]
      %v1377 = vld [vmem:[%s5 + $0x7f8] sm:$0xff]
      %v1378 = vld [vmem:[%s6] sm:$0xff]
      %v1380 = vlaneseq
      %v1381 = vshrl.u32 %v1380, 7
      %v1382 = vsub.s32 0, %v1381
      %v1383 = vrot.slane %v1378, %v1382
      %v1384 = vlaneseq
      %v1385 = vshrl.u32 %v1384, 7
      %v1386 = vsub.s32 1, %v1385
      %v1387 = vrot.slane %v1378, %v1386
      %v1388 = vlaneseq
      %v1389 = vshrl.u32 %v1388, 7
      %v1390 = vsub.s32 2, %v1389
      %v1391 = vrot.slane %v1378, %v1390
      %v1392 = vlaneseq
      %v1393 = vshrl.u32 %v1392, 7
      %v1394 = vsub.s32 3, %v1393
      %v1395 = vrot.slane %v1378, %v1394
      %v1396 = vlaneseq
      %v1397 = vshrl.u32 %v1396, 7
      %v1398 = vsub.s32 4, %v1397
      %v1399 = vrot.slane %v1378, %v1398
      %v1400 = vlaneseq
      %v1401 = vshrl.u32 %v1400, 7
      %v1402 = vsub.s32 5, %v1401
      %v1403 = vrot.slane %v1378, %v1402
      %v1404 = vlaneseq
      %v1405 = vshrl.u32 %v1404, 7
      %v1406 = vsub.s32 6, %v1405
      %v1407 = vrot.slane %v1378, %v1406
      %v1408 = vlaneseq
      %v1409 = vshrl.u32 %v1408, 7
      %v1410 = vsub.s32 7, %v1409
      %v1411 = vrot.slane %v1378, %v1410
      %v1676 = vunpack.c.l.b16 %v1122
      %v1677 = vunpack.c.h.b16 %v1122
      %v1678 = vunpack.c.l.b16 %v1123
      %v1679 = vunpack.c.h.b16 %v1123
      %v1680 = vunpack.c.l.b16 %v1124
      %v1681 = vunpack.c.h.b16 %v1124
      %v1682 = vunpack.c.l.b16 %v1125
      %v1683 = vunpack.c.h.b16 %v1125
      %v1684 = vunpack.c.l.b16 %v1126
      %v1685 = vunpack.c.h.b16 %v1126
      %v1686 = vunpack.c.l.b16 %v1127
      %v1687 = vunpack.c.h.b16 %v1127
      %v1688 = vunpack.c.l.b16 %v1128
      %v1689 = vunpack.c.h.b16 %v1128
      %v1690 = vunpack.c.l.b16 %v1129
      %v1691 = vunpack.c.h.b16 %v1129
      %v1692 = vunpack.c.l.b16 %v1130
      %v1693 = vunpack.c.h.b16 %v1130
      %v1694 = vunpack.c.l.b16 %v1131
      %v1695 = vunpack.c.h.b16 %v1131
      %v1696 = vunpack.c.l.b16 %v1132
      %v1697 = vunpack.c.h.b16 %v1132
      %v1698 = vunpack.c.l.b16 %v1133
      %v1699 = vunpack.c.h.b16 %v1133
      %v1700 = vunpack.c.l.b16 %v1134
      %v1701 = vunpack.c.h.b16 %v1134
      %v1702 = vunpack.c.l.b16 %v1135
      %v1703 = vunpack.c.h.b16 %v1135
      %v1704 = vunpack.c.l.b16 %v1136
      %v1705 = vunpack.c.h.b16 %v1136
      %v1706 = vunpack.c.l.b16 %v1137
      %v1707 = vunpack.c.h.b16 %v1137
      %v1708 = vunpack.c.l.b16 %v1138
      %v1709 = vunpack.c.h.b16 %v1138
      %v1710 = vunpack.c.l.b16 %v1139
      %v1711 = vunpack.c.h.b16 %v1139
      %v1712 = vunpack.c.l.b16 %v1140
      %v1713 = vunpack.c.h.b16 %v1140
      %v1714 = vunpack.c.l.b16 %v1141
      %v1715 = vunpack.c.h.b16 %v1141
      %v1716 = vunpack.c.l.b16 %v1142
      %v1717 = vunpack.c.h.b16 %v1142
      %v1718 = vunpack.c.l.b16 %v1143
      %v1719 = vunpack.c.h.b16 %v1143
      %v1720 = vunpack.c.l.b16 %v1144
      %v1721 = vunpack.c.h.b16 %v1144
      %v1722 = vunpack.c.l.b16 %v1145
      %v1723 = vunpack.c.h.b16 %v1145
      %v1724 = vunpack.c.l.b16 %v1146
      %v1725 = vunpack.c.h.b16 %v1146
      %v1726 = vunpack.c.l.b16 %v1147
      %v1727 = vunpack.c.h.b16 %v1147
      %v1728 = vunpack.c.l.b16 %v1148
      %v1729 = vunpack.c.h.b16 %v1148
      %v1730 = vunpack.c.l.b16 %v1149
      %v1731 = vunpack.c.h.b16 %v1149
      %v1732 = vunpack.c.l.b16 %v1150
      %v1733 = vunpack.c.h.b16 %v1150
      %v1734 = vunpack.c.l.b16 %v1151
      %v1735 = vunpack.c.h.b16 %v1151
      %v1736 = vunpack.c.l.b16 %v1152
      %v1737 = vunpack.c.h.b16 %v1152
      %v1738 = vunpack.c.l.b16 %v1153
      %v1739 = vunpack.c.h.b16 %v1153
      %v1740 = vunpack.c.l.b16 %v1154
      %v1741 = vunpack.c.h.b16 %v1154
      %v1742 = vunpack.c.l.b16 %v1155
      %v1743 = vunpack.c.h.b16 %v1155
      %v1744 = vunpack.c.l.b16 %v1156
      %v1745 = vunpack.c.h.b16 %v1156
      %v1746 = vunpack.c.l.b16 %v1157
      %v1747 = vunpack.c.h.b16 %v1157
      %v1748 = vunpack.c.l.b16 %v1158
      %v1749 = vunpack.c.h.b16 %v1158
      %v1750 = vunpack.c.l.b16 %v1159
      %v1751 = vunpack.c.h.b16 %v1159
      %v1752 = vunpack.c.l.b16 %v1160
      %v1753 = vunpack.c.h.b16 %v1160
      %v1754 = vunpack.c.l.b16 %v1161
      %v1755 = vunpack.c.h.b16 %v1161
      %v1756 = vunpack.c.l.b16 %v1162
      %v1757 = vunpack.c.h.b16 %v1162
      %v1758 = vunpack.c.l.b16 %v1163
      %v1759 = vunpack.c.h.b16 %v1163
      %v1760 = vunpack.c.l.b16 %v1164
      %v1761 = vunpack.c.h.b16 %v1164
      %v1762 = vunpack.c.l.b16 %v1165
      %v1763 = vunpack.c.h.b16 %v1165
      %v1764 = vunpack.c.l.b16 %v1166
      %v1765 = vunpack.c.h.b16 %v1166
      %v1766 = vunpack.c.l.b16 %v1167
      %v1767 = vunpack.c.h.b16 %v1167
      %v1768 = vunpack.c.l.b16 %v1168
      %v1769 = vunpack.c.h.b16 %v1168
      %v1770 = vunpack.c.l.b16 %v1169
      %v1771 = vunpack.c.h.b16 %v1169
      %v1772 = vunpack.c.l.b16 %v1170
      %v1773 = vunpack.c.h.b16 %v1170
      %v1774 = vunpack.c.l.b16 %v1171
      %v1775 = vunpack.c.h.b16 %v1171
      %v1776 = vunpack.c.l.b16 %v1172
      %v1777 = vunpack.c.h.b16 %v1172
      %v1778 = vunpack.c.l.b16 %v1173
      %v1779 = vunpack.c.h.b16 %v1173
      %v1780 = vunpack.c.l.b16 %v1174
      %v1781 = vunpack.c.h.b16 %v1174
      %v1782 = vunpack.c.l.b16 %v1175
      %v1783 = vunpack.c.h.b16 %v1175
      %v1784 = vunpack.c.l.b16 %v1176
      %v1785 = vunpack.c.h.b16 %v1176
      %v1786 = vunpack.c.l.b16 %v1177
      %v1787 = vunpack.c.h.b16 %v1177
      %v1788 = vunpack.c.l.b16 %v1178
      %v1789 = vunpack.c.h.b16 %v1178
      %v1790 = vunpack.c.l.b16 %v1179
      %v1791 = vunpack.c.h.b16 %v1179
      %v1792 = vunpack.c.l.b16 %v1180
      %v1793 = vunpack.c.h.b16 %v1180
      %v1794 = vunpack.c.l.b16 %v1181
      %v1795 = vunpack.c.h.b16 %v1181
      %v1796 = vunpack.c.l.b16 %v1182
      %v1797 = vunpack.c.h.b16 %v1182
      %v1798 = vunpack.c.l.b16 %v1183
      %v1799 = vunpack.c.h.b16 %v1183
      %v1800 = vunpack.c.l.b16 %v1184
      %v1801 = vunpack.c.h.b16 %v1184
      %v1802 = vunpack.c.l.b16 %v1185
      %v1803 = vunpack.c.h.b16 %v1185
      %v1804 = vunpack.c.l.b16 %v1186
      %v1805 = vunpack.c.h.b16 %v1186
      %v1806 = vunpack.c.l.b16 %v1187
      %v1807 = vunpack.c.h.b16 %v1187
      %v1808 = vunpack.c.l.b16 %v1188
      %v1809 = vunpack.c.h.b16 %v1188
      %v1810 = vunpack.c.l.b16 %v1189
      %v1811 = vunpack.c.h.b16 %v1189
      %v1812 = vunpack.c.l.b16 %v1190
      %v1813 = vunpack.c.h.b16 %v1190
      %v1814 = vunpack.c.l.b16 %v1191
      %v1815 = vunpack.c.h.b16 %v1191
      %v1816 = vunpack.c.l.b16 %v1192
      %v1817 = vunpack.c.h.b16 %v1192
      %v1818 = vunpack.c.l.b16 %v1193
      %v1819 = vunpack.c.h.b16 %v1193
      %v1820 = vunpack.c.l.b16 %v1194
      %v1821 = vunpack.c.h.b16 %v1194
      %v1822 = vunpack.c.l.b16 %v1195
      %v1823 = vunpack.c.h.b16 %v1195
      %v1824 = vunpack.c.l.b16 %v1196
      %v1825 = vunpack.c.h.b16 %v1196
      %v1826 = vunpack.c.l.b16 %v1197
      %v1827 = vunpack.c.h.b16 %v1197
      %v1828 = vunpack.c.l.b16 %v1198
      %v1829 = vunpack.c.h.b16 %v1198
      %v1830 = vunpack.c.l.b16 %v1199
      %v1831 = vunpack.c.h.b16 %v1199
      %v1832 = vunpack.c.l.b16 %v1200
      %v1833 = vunpack.c.h.b16 %v1200
      %v1834 = vunpack.c.l.b16 %v1201
      %v1835 = vunpack.c.h.b16 %v1201
      %v1836 = vunpack.c.l.b16 %v1202
      %v1837 = vunpack.c.h.b16 %v1202
      %v1838 = vunpack.c.l.b16 %v1203
      %v1839 = vunpack.c.h.b16 %v1203
      %v1840 = vunpack.c.l.b16 %v1204
      %v1841 = vunpack.c.h.b16 %v1204
      %v1842 = vunpack.c.l.b16 %v1205
      %v1843 = vunpack.c.h.b16 %v1205
      %v1844 = vunpack.c.l.b16 %v1206
      %v1845 = vunpack.c.h.b16 %v1206
      %v1846 = vunpack.c.l.b16 %v1207
      %v1847 = vunpack.c.h.b16 %v1207
      %v1848 = vunpack.c.l.b16 %v1208
      %v1849 = vunpack.c.h.b16 %v1208
      %v1850 = vunpack.c.l.b16 %v1209
      %v1851 = vunpack.c.h.b16 %v1209
      %v1852 = vunpack.c.l.b16 %v1210
      %v1853 = vunpack.c.h.b16 %v1210
      %v1854 = vunpack.c.l.b16 %v1211
      %v1855 = vunpack.c.h.b16 %v1211
      %v1856 = vunpack.c.l.b16 %v1212
      %v1857 = vunpack.c.h.b16 %v1212
      %v1858 = vunpack.c.l.b16 %v1213
      %v1859 = vunpack.c.h.b16 %v1213
      %v1860 = vunpack.c.l.b16 %v1214
      %v1861 = vunpack.c.h.b16 %v1214
      %v1862 = vunpack.c.l.b16 %v1215
      %v1863 = vunpack.c.h.b16 %v1215
      %v1864 = vunpack.c.l.b16 %v1216
      %v1865 = vunpack.c.h.b16 %v1216
      %v1866 = vunpack.c.l.b16 %v1217
      %v1867 = vunpack.c.h.b16 %v1217
      %v1868 = vunpack.c.l.b16 %v1218
      %v1869 = vunpack.c.h.b16 %v1218
      %v1870 = vunpack.c.l.b16 %v1219
      %v1871 = vunpack.c.h.b16 %v1219
      %v1872 = vunpack.c.l.b16 %v1220
      %v1873 = vunpack.c.h.b16 %v1220
      %v1874 = vunpack.c.l.b16 %v1221
      %v1875 = vunpack.c.h.b16 %v1221
      %v1876 = vunpack.c.l.b16 %v1222
      %v1877 = vunpack.c.h.b16 %v1222
      %v1878 = vunpack.c.l.b16 %v1223
      %v1879 = vunpack.c.h.b16 %v1223
      %v1880 = vunpack.c.l.b16 %v1224
      %v1881 = vunpack.c.h.b16 %v1224
      %v1882 = vunpack.c.l.b16 %v1225
      %v1883 = vunpack.c.h.b16 %v1225
      %v1884 = vunpack.c.l.b16 %v1226
      %v1885 = vunpack.c.h.b16 %v1226
      %v1886 = vunpack.c.l.b16 %v1227
      %v1887 = vunpack.c.h.b16 %v1227
      %v1888 = vunpack.c.l.b16 %v1228
      %v1889 = vunpack.c.h.b16 %v1228
      %v1890 = vunpack.c.l.b16 %v1229
      %v1891 = vunpack.c.h.b16 %v1229
      %v1892 = vunpack.c.l.b16 %v1230
      %v1893 = vunpack.c.h.b16 %v1230
      %v1894 = vunpack.c.l.b16 %v1231
      %v1895 = vunpack.c.h.b16 %v1231
      %v1896 = vunpack.c.l.b16 %v1232
      %v1897 = vunpack.c.h.b16 %v1232
      %v1898 = vunpack.c.l.b16 %v1233
      %v1899 = vunpack.c.h.b16 %v1233
      %v1900 = vunpack.c.l.b16 %v1234
      %v1901 = vunpack.c.h.b16 %v1234
      %v1902 = vunpack.c.l.b16 %v1235
      %v1903 = vunpack.c.h.b16 %v1235
      %v1904 = vunpack.c.l.b16 %v1236
      %v1905 = vunpack.c.h.b16 %v1236
      %v1906 = vunpack.c.l.b16 %v1237
      %v1907 = vunpack.c.h.b16 %v1237
      %v1908 = vunpack.c.l.b16 %v1238
      %v1909 = vunpack.c.h.b16 %v1238
      %v1910 = vunpack.c.l.b16 %v1239
      %v1911 = vunpack.c.h.b16 %v1239
      %v1912 = vunpack.c.l.b16 %v1240
      %v1913 = vunpack.c.h.b16 %v1240
      %v1914 = vunpack.c.l.b16 %v1241
      %v1915 = vunpack.c.h.b16 %v1241
      %v1916 = vunpack.c.l.b16 %v1242
      %v1917 = vunpack.c.h.b16 %v1242
      %v1918 = vunpack.c.l.b16 %v1243
      %v1919 = vunpack.c.h.b16 %v1243
      %v1920 = vunpack.c.l.b16 %v1244
      %v1921 = vunpack.c.h.b16 %v1244
      %v1922 = vunpack.c.l.b16 %v1245
      %v1923 = vunpack.c.h.b16 %v1245
      %v1924 = vunpack.c.l.b16 %v1246
      %v1925 = vunpack.c.h.b16 %v1246
      %v1926 = vunpack.c.l.b16 %v1247
      %v1927 = vunpack.c.h.b16 %v1247
      %v1928 = vunpack.c.l.b16 %v1248
      %v1929 = vunpack.c.h.b16 %v1248
      %v1930 = vunpack.c.l.b16 %v1249
      %v1931 = vunpack.c.h.b16 %v1249
      %v1932 = vunpack.c.l.b16 %v1250
      %v1933 = vunpack.c.h.b16 %v1250
      %v1934 = vunpack.c.l.b16 %v1251
      %v1935 = vunpack.c.h.b16 %v1251
      %v1936 = vunpack.c.l.b16 %v1252
      %v1937 = vunpack.c.h.b16 %v1252
      %v1938 = vunpack.c.l.b16 %v1253
      %v1939 = vunpack.c.h.b16 %v1253
      %v1940 = vunpack.c.l.b16 %v1254
      %v1941 = vunpack.c.h.b16 %v1254
      %v1942 = vunpack.c.l.b16 %v1255
      %v1943 = vunpack.c.h.b16 %v1255
      %v1944 = vunpack.c.l.b16 %v1256
      %v1945 = vunpack.c.h.b16 %v1256
      %v1946 = vunpack.c.l.b16 %v1257
      %v1947 = vunpack.c.h.b16 %v1257
      %v1948 = vunpack.c.l.b16 %v1258
      %v1949 = vunpack.c.h.b16 %v1258
      %v1950 = vunpack.c.l.b16 %v1259
      %v1951 = vunpack.c.h.b16 %v1259
      %v1952 = vunpack.c.l.b16 %v1260
      %v1953 = vunpack.c.h.b16 %v1260
      %v1954 = vunpack.c.l.b16 %v1261
      %v1955 = vunpack.c.h.b16 %v1261
      %v1956 = vunpack.c.l.b16 %v1262
      %v1957 = vunpack.c.h.b16 %v1262
      %v1958 = vunpack.c.l.b16 %v1263
      %v1959 = vunpack.c.h.b16 %v1263
      %v1960 = vunpack.c.l.b16 %v1264
      %v1961 = vunpack.c.h.b16 %v1264
      %v1962 = vunpack.c.l.b16 %v1265
      %v1963 = vunpack.c.h.b16 %v1265
      %v1964 = vunpack.c.l.b16 %v1266
      %v1965 = vunpack.c.h.b16 %v1266
      %v1966 = vunpack.c.l.b16 %v1267
      %v1967 = vunpack.c.h.b16 %v1267
      %v1968 = vunpack.c.l.b16 %v1268
      %v1969 = vunpack.c.h.b16 %v1268
      %v1970 = vunpack.c.l.b16 %v1269
      %v1971 = vunpack.c.h.b16 %v1269
      %v1972 = vunpack.c.l.b16 %v1270
      %v1973 = vunpack.c.h.b16 %v1270
      %v1974 = vunpack.c.l.b16 %v1271
      %v1975 = vunpack.c.h.b16 %v1271
      %v1976 = vunpack.c.l.b16 %v1272
      %v1977 = vunpack.c.h.b16 %v1272
      %v1978 = vunpack.c.l.b16 %v1273
      %v1979 = vunpack.c.h.b16 %v1273
      %v1980 = vunpack.c.l.b16 %v1274
      %v1981 = vunpack.c.h.b16 %v1274
      %v1982 = vunpack.c.l.b16 %v1275
      %v1983 = vunpack.c.h.b16 %v1275
      %v1984 = vunpack.c.l.b16 %v1276
      %v1985 = vunpack.c.h.b16 %v1276
      %v1986 = vunpack.c.l.b16 %v1277
      %v1987 = vunpack.c.h.b16 %v1277
      %v1988 = vunpack.c.l.b16 %v1278
      %v1989 = vunpack.c.h.b16 %v1278
      %v1990 = vunpack.c.l.b16 %v1279
      %v1991 = vunpack.c.h.b16 %v1279
      %v1992 = vunpack.c.l.b16 %v1280
      %v1993 = vunpack.c.h.b16 %v1280
      %v1994 = vunpack.c.l.b16 %v1281
      %v1995 = vunpack.c.h.b16 %v1281
      %v1996 = vunpack.c.l.b16 %v1282
      %v1997 = vunpack.c.h.b16 %v1282
      %v1998 = vunpack.c.l.b16 %v1283
      %v1999 = vunpack.c.h.b16 %v1283
      %v2000 = vunpack.c.l.b16 %v1284
      %v2001 = vunpack.c.h.b16 %v1284
      %v2002 = vunpack.c.l.b16 %v1285
      %v2003 = vunpack.c.h.b16 %v1285
      %v2004 = vunpack.c.l.b16 %v1286
      %v2005 = vunpack.c.h.b16 %v1286
      %v2006 = vunpack.c.l.b16 %v1287
      %v2007 = vunpack.c.h.b16 %v1287
      %v2008 = vunpack.c.l.b16 %v1288
      %v2009 = vunpack.c.h.b16 %v1288
      %v2010 = vunpack.c.l.b16 %v1289
      %v2011 = vunpack.c.h.b16 %v1289
      %v2012 = vunpack.c.l.b16 %v1290
      %v2013 = vunpack.c.h.b16 %v1290
      %v2014 = vunpack.c.l.b16 %v1291
      %v2015 = vunpack.c.h.b16 %v1291
      %v2016 = vunpack.c.l.b16 %v1292
      %v2017 = vunpack.c.h.b16 %v1292
      %v2018 = vunpack.c.l.b16 %v1293
      %v2019 = vunpack.c.h.b16 %v1293
      %v2020 = vunpack.c.l.b16 %v1294
      %v2021 = vunpack.c.h.b16 %v1294
      %v2022 = vunpack.c.l.b16 %v1295
      %v2023 = vunpack.c.h.b16 %v1295
      %v2024 = vunpack.c.l.b16 %v1296
      %v2025 = vunpack.c.h.b16 %v1296
      %v2026 = vunpack.c.l.b16 %v1297
      %v2027 = vunpack.c.h.b16 %v1297
      %v2028 = vunpack.c.l.b16 %v1298
      %v2029 = vunpack.c.h.b16 %v1298
      %v2030 = vunpack.c.l.b16 %v1299
      %v2031 = vunpack.c.h.b16 %v1299
      %v2032 = vunpack.c.l.b16 %v1300
      %v2033 = vunpack.c.h.b16 %v1300
      %v2034 = vunpack.c.l.b16 %v1301
      %v2035 = vunpack.c.h.b16 %v1301
      %v2036 = vunpack.c.l.b16 %v1302
      %v2037 = vunpack.c.h.b16 %v1302
      %v2038 = vunpack.c.l.b16 %v1303
      %v2039 = vunpack.c.h.b16 %v1303
      %v2040 = vunpack.c.l.b16 %v1304
      %v2041 = vunpack.c.h.b16 %v1304
      %v2042 = vunpack.c.l.b16 %v1305
      %v2043 = vunpack.c.h.b16 %v1305
      %v2044 = vunpack.c.l.b16 %v1306
      %v2045 = vunpack.c.h.b16 %v1306
      %v2046 = vunpack.c.l.b16 %v1307
      %v2047 = vunpack.c.h.b16 %v1307
      %v2048 = vunpack.c.l.b16 %v1308
      %v2049 = vunpack.c.h.b16 %v1308
      %v2050 = vunpack.c.l.b16 %v1309
      %v2051 = vunpack.c.h.b16 %v1309
      %v2052 = vunpack.c.l.b16 %v1310
      %v2053 = vunpack.c.h.b16 %v1310
      %v2054 = vunpack.c.l.b16 %v1311
      %v2055 = vunpack.c.h.b16 %v1311
      %v2056 = vunpack.c.l.b16 %v1312
      %v2057 = vunpack.c.h.b16 %v1312
      %v2058 = vunpack.c.l.b16 %v1313
      %v2059 = vunpack.c.h.b16 %v1313
      %v2060 = vunpack.c.l.b16 %v1314
      %v2061 = vunpack.c.h.b16 %v1314
      %v2062 = vunpack.c.l.b16 %v1315
      %v2063 = vunpack.c.h.b16 %v1315
      %v2064 = vunpack.c.l.b16 %v1316
      %v2065 = vunpack.c.h.b16 %v1316
      %v2066 = vunpack.c.l.b16 %v1317
      %v2067 = vunpack.c.h.b16 %v1317
      %v2068 = vunpack.c.l.b16 %v1318
      %v2069 = vunpack.c.h.b16 %v1318
      %v2070 = vunpack.c.l.b16 %v1319
      %v2071 = vunpack.c.h.b16 %v1319
      %v2072 = vunpack.c.l.b16 %v1320
      %v2073 = vunpack.c.h.b16 %v1320
      %v2074 = vunpack.c.l.b16 %v1321
      %v2075 = vunpack.c.h.b16 %v1321
      %v2076 = vunpack.c.l.b16 %v1322
      %v2077 = vunpack.c.h.b16 %v1322
      %v2078 = vunpack.c.l.b16 %v1323
      %v2079 = vunpack.c.h.b16 %v1323
      %v2080 = vunpack.c.l.b16 %v1324
      %v2081 = vunpack.c.h.b16 %v1324
      %v2082 = vunpack.c.l.b16 %v1325
      %v2083 = vunpack.c.h.b16 %v1325
      %v2084 = vunpack.c.l.b16 %v1326
      %v2085 = vunpack.c.h.b16 %v1326
      %v2086 = vunpack.c.l.b16 %v1327
      %v2087 = vunpack.c.h.b16 %v1327
      %v2088 = vunpack.c.l.b16 %v1328
      %v2089 = vunpack.c.h.b16 %v1328
      %v2090 = vunpack.c.l.b16 %v1329
      %v2091 = vunpack.c.h.b16 %v1329
      %v2092 = vunpack.c.l.b16 %v1330
      %v2093 = vunpack.c.h.b16 %v1330
      %v2094 = vunpack.c.l.b16 %v1331
      %v2095 = vunpack.c.h.b16 %v1331
      %v2096 = vunpack.c.l.b16 %v1332
      %v2097 = vunpack.c.h.b16 %v1332
      %v2098 = vunpack.c.l.b16 %v1333
      %v2099 = vunpack.c.h.b16 %v1333
      %v2100 = vunpack.c.l.b16 %v1334
      %v2101 = vunpack.c.h.b16 %v1334
      %v2102 = vunpack.c.l.b16 %v1335
      %v2103 = vunpack.c.h.b16 %v1335
      %v2104 = vunpack.c.l.b16 %v1336
      %v2105 = vunpack.c.h.b16 %v1336
      %v2106 = vunpack.c.l.b16 %v1337
      %v2107 = vunpack.c.h.b16 %v1337
      %v2108 = vunpack.c.l.b16 %v1338
      %v2109 = vunpack.c.h.b16 %v1338
      %v2110 = vunpack.c.l.b16 %v1339
      %v2111 = vunpack.c.h.b16 %v1339
      %v2112 = vunpack.c.l.b16 %v1340
      %v2113 = vunpack.c.h.b16 %v1340
      %v2114 = vunpack.c.l.b16 %v1341
      %v2115 = vunpack.c.h.b16 %v1341
      %v2116 = vunpack.c.l.b16 %v1342
      %v2117 = vunpack.c.h.b16 %v1342
      %v2118 = vunpack.c.l.b16 %v1343
      %v2119 = vunpack.c.h.b16 %v1343
      %v2120 = vunpack.c.l.b16 %v1344
      %v2121 = vunpack.c.h.b16 %v1344
      %v2122 = vunpack.c.l.b16 %v1345
      %v2123 = vunpack.c.h.b16 %v1345
      %v2124 = vunpack.c.l.b16 %v1346
      %v2125 = vunpack.c.h.b16 %v1346
      %v2126 = vunpack.c.l.b16 %v1347
      %v2127 = vunpack.c.h.b16 %v1347
      %v2128 = vunpack.c.l.b16 %v1348
      %v2129 = vunpack.c.h.b16 %v1348
      %v2130 = vunpack.c.l.b16 %v1349
      %v2131 = vunpack.c.h.b16 %v1349
      %v2132 = vunpack.c.l.b16 %v1350
      %v2133 = vunpack.c.h.b16 %v1350
      %v2134 = vunpack.c.l.b16 %v1351
      %v2135 = vunpack.c.h.b16 %v1351
      %v2136 = vunpack.c.l.b16 %v1352
      %v2137 = vunpack.c.h.b16 %v1352
      %v2138 = vunpack.c.l.b16 %v1353
      %v2139 = vunpack.c.h.b16 %v1353
      %v2140 = vunpack.c.l.b16 %v1354
      %v2141 = vunpack.c.h.b16 %v1354
      %v2142 = vunpack.c.l.b16 %v1355
      %v2143 = vunpack.c.h.b16 %v1355
      %v2144 = vunpack.c.l.b16 %v1356
      %v2145 = vunpack.c.h.b16 %v1356
      %v2146 = vunpack.c.l.b16 %v1357
      %v2147 = vunpack.c.h.b16 %v1357
      %v2148 = vunpack.c.l.b16 %v1358
      %v2149 = vunpack.c.h.b16 %v1358
      %v2150 = vunpack.c.l.b16 %v1359
      %v2151 = vunpack.c.h.b16 %v1359
      %v2152 = vunpack.c.l.b16 %v1360
      %v2153 = vunpack.c.h.b16 %v1360
      %v2154 = vunpack.c.l.b16 %v1361
      %v2155 = vunpack.c.h.b16 %v1361
      %v2156 = vunpack.c.l.b16 %v1362
      %v2157 = vunpack.c.h.b16 %v1362
      %v2158 = vunpack.c.l.b16 %v1363
      %v2159 = vunpack.c.h.b16 %v1363
      %v2160 = vunpack.c.l.b16 %v1364
      %v2161 = vunpack.c.h.b16 %v1364
      %v2162 = vunpack.c.l.b16 %v1365
      %v2163 = vunpack.c.h.b16 %v1365
      %v2164 = vunpack.c.l.b16 %v1366
      %v2165 = vunpack.c.h.b16 %v1366
      %v2166 = vunpack.c.l.b16 %v1367
      %v2167 = vunpack.c.h.b16 %v1367
      %v2168 = vunpack.c.l.b16 %v1368
      %v2169 = vunpack.c.h.b16 %v1368
      %v2170 = vunpack.c.l.b16 %v1369
      %v2171 = vunpack.c.h.b16 %v1369
      %v2172 = vunpack.c.l.b16 %v1370
      %v2173 = vunpack.c.h.b16 %v1370
      %v2174 = vunpack.c.l.b16 %v1371
      %v2175 = vunpack.c.h.b16 %v1371
      %v2176 = vunpack.c.l.b16 %v1372
      %v2177 = vunpack.c.h.b16 %v1372
      %v2178 = vunpack.c.l.b16 %v1373
      %v2179 = vunpack.c.h.b16 %v1373
      %v2180 = vunpack.c.l.b16 %v1374
      %v2181 = vunpack.c.h.b16 %v1374
      %v2182 = vunpack.c.l.b16 %v1375
      %v2183 = vunpack.c.h.b16 %v1375
      %v2184 = vunpack.c.l.b16 %v1376
      %v2185 = vunpack.c.h.b16 %v1376
      %v2186 = vunpack.c.l.b16 %v1377
      %v2187 = vunpack.c.h.b16 %v1377
      %v2188 = vpack.c.b16 %v1684, %v1676
      %v2189 = vpack.c.b16 %v1685, %v1677
      %v2190 = vpack.c.b16 %v1686, %v1678
      %v2191 = vpack.c.b16 %v1687, %v1679
      %v2192 = vpack.c.b16 %v1688, %v1680
      %v2193 = vpack.c.b16 %v1689, %v1681
      %v2194 = vpack.c.b16 %v1690, %v1682
      %v2195 = vpack.c.b16 %v1691, %v1683
      %v2196 = vpack.c.b16 %v1700, %v1692
      %v2197 = vpack.c.b16 %v1701, %v1693
      %v2198 = vpack.c.b16 %v1702, %v1694
      %v2199 = vpack.c.b16 %v1703, %v1695
      %v2200 = vpack.c.b16 %v1704, %v1696
      %v2201 = vpack.c.b16 %v1705, %v1697
      %v2202 = vpack.c.b16 %v1706, %v1698
      %v2203 = vpack.c.b16 %v1707, %v1699
      %v2204 = vpack.c.b16 %v1716, %v1708
      %v2205 = vpack.c.b16 %v1717, %v1709
      %v2206 = vpack.c.b16 %v1718, %v1710
      %v2207 = vpack.c.b16 %v1719, %v1711
      %v2208 = vpack.c.b16 %v1720, %v1712
      %v2209 = vpack.c.b16 %v1721, %v1713
      %v2210 = vpack.c.b16 %v1722, %v1714
      %v2211 = vpack.c.b16 %v1723, %v1715
      %v2212 = vpack.c.b16 %v1732, %v1724
      %v2213 = vpack.c.b16 %v1733, %v1725
      %v2214 = vpack.c.b16 %v1734, %v1726
      %v2215 = vpack.c.b16 %v1735, %v1727
      %v2216 = vpack.c.b16 %v1736, %v1728
      %v2217 = vpack.c.b16 %v1737, %v1729
      %v2218 = vpack.c.b16 %v1738, %v1730
      %v2219 = vpack.c.b16 %v1739, %v1731
      %v2220 = vpack.c.b16 %v1748, %v1740
      %v2221 = vpack.c.b16 %v1749, %v1741
      %v2222 = vpack.c.b16 %v1750, %v1742
      %v2223 = vpack.c.b16 %v1751, %v1743
      %v2224 = vpack.c.b16 %v1752, %v1744
      %v2225 = vpack.c.b16 %v1753, %v1745
      %v2226 = vpack.c.b16 %v1754, %v1746
      %v2227 = vpack.c.b16 %v1755, %v1747
      %v2228 = vpack.c.b16 %v1764, %v1756
      %v2229 = vpack.c.b16 %v1765, %v1757
      %v2230 = vpack.c.b16 %v1766, %v1758
      %v2231 = vpack.c.b16 %v1767, %v1759
      %v2232 = vpack.c.b16 %v1768, %v1760
      %v2233 = vpack.c.b16 %v1769, %v1761
      %v2234 = vpack.c.b16 %v1770, %v1762
      %v2235 = vpack.c.b16 %v1771, %v1763
      %v2236 = vpack.c.b16 %v1780, %v1772
      %v2237 = vpack.c.b16 %v1781, %v1773
      %v2238 = vpack.c.b16 %v1782, %v1774
      %v2239 = vpack.c.b16 %v1783, %v1775
      %v2240 = vpack.c.b16 %v1784, %v1776
      %v2241 = vpack.c.b16 %v1785, %v1777
      %v2242 = vpack.c.b16 %v1786, %v1778
      %v2243 = vpack.c.b16 %v1787, %v1779
      %v2244 = vpack.c.b16 %v1796, %v1788
      %v2245 = vpack.c.b16 %v1797, %v1789
      %v2246 = vpack.c.b16 %v1798, %v1790
      %v2247 = vpack.c.b16 %v1799, %v1791
      %v2248 = vpack.c.b16 %v1800, %v1792
      %v2249 = vpack.c.b16 %v1801, %v1793
      %v2250 = vpack.c.b16 %v1802, %v1794
      %v2251 = vpack.c.b16 %v1803, %v1795
      %v2252 = vpack.c.b16 %v1812, %v1804
      %v2253 = vpack.c.b16 %v1813, %v1805
      %v2254 = vpack.c.b16 %v1814, %v1806
      %v2255 = vpack.c.b16 %v1815, %v1807
      %v2256 = vpack.c.b16 %v1816, %v1808
      %v2257 = vpack.c.b16 %v1817, %v1809
      %v2258 = vpack.c.b16 %v1818, %v1810
      %v2259 = vpack.c.b16 %v1819, %v1811
      %v2260 = vpack.c.b16 %v1828, %v1820
      %v2261 = vpack.c.b16 %v1829, %v1821
      %v2262 = vpack.c.b16 %v1830, %v1822
      %v2263 = vpack.c.b16 %v1831, %v1823
      %v2264 = vpack.c.b16 %v1832, %v1824
      %v2265 = vpack.c.b16 %v1833, %v1825
      %v2266 = vpack.c.b16 %v1834, %v1826
      %v2267 = vpack.c.b16 %v1835, %v1827
      %v2268 = vpack.c.b16 %v1844, %v1836
      %v2269 = vpack.c.b16 %v1845, %v1837
      %v2270 = vpack.c.b16 %v1846, %v1838
      %v2271 = vpack.c.b16 %v1847, %v1839
      %v2272 = vpack.c.b16 %v1848, %v1840
      %v2273 = vpack.c.b16 %v1849, %v1841
      %v2274 = vpack.c.b16 %v1850, %v1842
      %v2275 = vpack.c.b16 %v1851, %v1843
      %v2276 = vpack.c.b16 %v1860, %v1852
      %v2277 = vpack.c.b16 %v1861, %v1853
      %v2278 = vpack.c.b16 %v1862, %v1854
      %v2279 = vpack.c.b16 %v1863, %v1855
      %v2280 = vpack.c.b16 %v1864, %v1856
      %v2281 = vpack.c.b16 %v1865, %v1857
      %v2282 = vpack.c.b16 %v1866, %v1858
      %v2283 = vpack.c.b16 %v1867, %v1859
      %v2284 = vpack.c.b16 %v1876, %v1868
      %v2285 = vpack.c.b16 %v1877, %v1869
      %v2286 = vpack.c.b16 %v1878, %v1870
      %v2287 = vpack.c.b16 %v1879, %v1871
      %v2288 = vpack.c.b16 %v1880, %v1872
      %v2289 = vpack.c.b16 %v1881, %v1873
      %v2290 = vpack.c.b16 %v1882, %v1874
      %v2291 = vpack.c.b16 %v1883, %v1875
      %v2292 = vpack.c.b16 %v1892, %v1884
      %v2293 = vpack.c.b16 %v1893, %v1885
      %v2294 = vpack.c.b16 %v1894, %v1886
      %v2295 = vpack.c.b16 %v1895, %v1887
      %v2296 = vpack.c.b16 %v1896, %v1888
      %v2297 = vpack.c.b16 %v1897, %v1889
      %v2298 = vpack.c.b16 %v1898, %v1890
      %v2299 = vpack.c.b16 %v1899, %v1891
      %v2300 = vpack.c.b16 %v1908, %v1900
      %v2301 = vpack.c.b16 %v1909, %v1901
      %v2302 = vpack.c.b16 %v1910, %v1902
      %v2303 = vpack.c.b16 %v1911, %v1903
      %v2304 = vpack.c.b16 %v1912, %v1904
      %v2305 = vpack.c.b16 %v1913, %v1905
      %v2306 = vpack.c.b16 %v1914, %v1906
      %v2307 = vpack.c.b16 %v1915, %v1907
      %v2308 = vpack.c.b16 %v1924, %v1916
      %v2309 = vpack.c.b16 %v1925, %v1917
      %v2310 = vpack.c.b16 %v1926, %v1918
      %v2311 = vpack.c.b16 %v1927, %v1919
      %v2312 = vpack.c.b16 %v1928, %v1920
      %v2313 = vpack.c.b16 %v1929, %v1921
      %v2314 = vpack.c.b16 %v1930, %v1922
      %v2315 = vpack.c.b16 %v1931, %v1923
      %v2316 = vpack.c.b16 %v1940, %v1932
      %v2317 = vpack.c.b16 %v1941, %v1933
      %v2318 = vpack.c.b16 %v1942, %v1934
      %v2319 = vpack.c.b16 %v1943, %v1935
      %v2320 = vpack.c.b16 %v1944, %v1936
      %v2321 = vpack.c.b16 %v1945, %v1937
      %v2322 = vpack.c.b16 %v1946, %v1938
      %v2323 = vpack.c.b16 %v1947, %v1939
      %v2324 = vpack.c.b16 %v1956, %v1948
      %v2325 = vpack.c.b16 %v1957, %v1949
      %v2326 = vpack.c.b16 %v1958, %v1950
      %v2327 = vpack.c.b16 %v1959, %v1951
      %v2328 = vpack.c.b16 %v1960, %v1952
      %v2329 = vpack.c.b16 %v1961, %v1953
      %v2330 = vpack.c.b16 %v1962, %v1954
      %v2331 = vpack.c.b16 %v1963, %v1955
      %v2332 = vpack.c.b16 %v1972, %v1964
      %v2333 = vpack.c.b16 %v1973, %v1965
      %v2334 = vpack.c.b16 %v1974, %v1966
      %v2335 = vpack.c.b16 %v1975, %v1967
      %v2336 = vpack.c.b16 %v1976, %v1968
      %v2337 = vpack.c.b16 %v1977, %v1969
      %v2338 = vpack.c.b16 %v1978, %v1970
      %v2339 = vpack.c.b16 %v1979, %v1971
      %v2340 = vpack.c.b16 %v1988, %v1980
      %v2341 = vpack.c.b16 %v1989, %v1981
      %v2342 = vpack.c.b16 %v1990, %v1982
      %v2343 = vpack.c.b16 %v1991, %v1983
      %v2344 = vpack.c.b16 %v1992, %v1984
      %v2345 = vpack.c.b16 %v1993, %v1985
      %v2346 = vpack.c.b16 %v1994, %v1986
      %v2347 = vpack.c.b16 %v1995, %v1987
      %v2348 = vpack.c.b16 %v2004, %v1996
      %v2349 = vpack.c.b16 %v2005, %v1997
      %v2350 = vpack.c.b16 %v2006, %v1998
      %v2351 = vpack.c.b16 %v2007, %v1999
      %v2352 = vpack.c.b16 %v2008, %v2000
      %v2353 = vpack.c.b16 %v2009, %v2001
      %v2354 = vpack.c.b16 %v2010, %v2002
      %v2355 = vpack.c.b16 %v2011, %v2003
      %v2356 = vpack.c.b16 %v2020, %v2012
      %v2357 = vpack.c.b16 %v2021, %v2013
      %v2358 = vpack.c.b16 %v2022, %v2014
      %v2359 = vpack.c.b16 %v2023, %v2015
      %v2360 = vpack.c.b16 %v2024, %v2016
      %v2361 = vpack.c.b16 %v2025, %v2017
      %v2362 = vpack.c.b16 %v2026, %v2018
      %v2363 = vpack.c.b16 %v2027, %v2019
      %v2364 = vpack.c.b16 %v2036, %v2028
      %v2365 = vpack.c.b16 %v2037, %v2029
      %v2366 = vpack.c.b16 %v2038, %v2030
      %v2367 = vpack.c.b16 %v2039, %v2031
      %v2368 = vpack.c.b16 %v2040, %v2032
      %v2369 = vpack.c.b16 %v2041, %v2033
      %v2370 = vpack.c.b16 %v2042, %v2034
      %v2371 = vpack.c.b16 %v2043, %v2035
      %v2372 = vpack.c.b16 %v2052, %v2044
      %v2373 = vpack.c.b16 %v2053, %v2045
      %v2374 = vpack.c.b16 %v2054, %v2046
      %v2375 = vpack.c.b16 %v2055, %v2047
      %v2376 = vpack.c.b16 %v2056, %v2048
      %v2377 = vpack.c.b16 %v2057, %v2049
      %v2378 = vpack.c.b16 %v2058, %v2050
      %v2379 = vpack.c.b16 %v2059, %v2051
      %v2380 = vpack.c.b16 %v2068, %v2060
      %v2381 = vpack.c.b16 %v2069, %v2061
      %v2382 = vpack.c.b16 %v2070, %v2062
      %v2383 = vpack.c.b16 %v2071, %v2063
      %v2384 = vpack.c.b16 %v2072, %v2064
      %v2385 = vpack.c.b16 %v2073, %v2065
      %v2386 = vpack.c.b16 %v2074, %v2066
      %v2387 = vpack.c.b16 %v2075, %v2067
      %v2388 = vpack.c.b16 %v2084, %v2076
      %v2389 = vpack.c.b16 %v2085, %v2077
      %v2390 = vpack.c.b16 %v2086, %v2078
      %v2391 = vpack.c.b16 %v2087, %v2079
      %v2392 = vpack.c.b16 %v2088, %v2080
      %v2393 = vpack.c.b16 %v2089, %v2081
      %v2394 = vpack.c.b16 %v2090, %v2082
      %v2395 = vpack.c.b16 %v2091, %v2083
      %v2396 = vpack.c.b16 %v2100, %v2092
      %v2397 = vpack.c.b16 %v2101, %v2093
      %v2398 = vpack.c.b16 %v2102, %v2094
      %v2399 = vpack.c.b16 %v2103, %v2095
      %v2400 = vpack.c.b16 %v2104, %v2096
      %v2401 = vpack.c.b16 %v2105, %v2097
      %v2402 = vpack.c.b16 %v2106, %v2098
      %v2403 = vpack.c.b16 %v2107, %v2099
      %v2404 = vpack.c.b16 %v2116, %v2108
      %v2405 = vpack.c.b16 %v2117, %v2109
      %v2406 = vpack.c.b16 %v2118, %v2110
      %v2407 = vpack.c.b16 %v2119, %v2111
      %v2408 = vpack.c.b16 %v2120, %v2112
      %v2409 = vpack.c.b16 %v2121, %v2113
      %v2410 = vpack.c.b16 %v2122, %v2114
      %v2411 = vpack.c.b16 %v2123, %v2115
      %v2412 = vpack.c.b16 %v2132, %v2124
      %v2413 = vpack.c.b16 %v2133, %v2125
      %v2414 = vpack.c.b16 %v2134, %v2126
      %v2415 = vpack.c.b16 %v2135, %v2127
      %v2416 = vpack.c.b16 %v2136, %v2128
      %v2417 = vpack.c.b16 %v2137, %v2129
      %v2418 = vpack.c.b16 %v2138, %v2130
      %v2419 = vpack.c.b16 %v2139, %v2131
      %v2420 = vpack.c.b16 %v2148, %v2140
      %v2421 = vpack.c.b16 %v2149, %v2141
      %v2422 = vpack.c.b16 %v2150, %v2142
      %v2423 = vpack.c.b16 %v2151, %v2143
      %v2424 = vpack.c.b16 %v2152, %v2144
      %v2425 = vpack.c.b16 %v2153, %v2145
      %v2426 = vpack.c.b16 %v2154, %v2146
      %v2427 = vpack.c.b16 %v2155, %v2147
      %v2428 = vpack.c.b16 %v2164, %v2156
      %v2429 = vpack.c.b16 %v2165, %v2157
      %v2430 = vpack.c.b16 %v2166, %v2158
      %v2431 = vpack.c.b16 %v2167, %v2159
      %v2432 = vpack.c.b16 %v2168, %v2160
      %v2433 = vpack.c.b16 %v2169, %v2161
      %v2434 = vpack.c.b16 %v2170, %v2162
      %v2435 = vpack.c.b16 %v2171, %v2163
      %v2436 = vpack.c.b16 %v2180, %v2172
      %v2437 = vpack.c.b16 %v2181, %v2173
      %v2438 = vpack.c.b16 %v2182, %v2174
      %v2439 = vpack.c.b16 %v2183, %v2175
      %v2440 = vpack.c.b16 %v2184, %v2176
      %v2441 = vpack.c.b16 %v2185, %v2177
      %v2442 = vpack.c.b16 %v2186, %v2178
      %v2443 = vpack.c.b16 %v2187, %v2179
      %2700 = vmatprep.subr.bf16.mxu0 %v2245
      %2701 = vmatpush1.bf16.msra.mxu0 %v2244
      %2702 = vmatprep.subr.bf16.mxu0 %v2237
      %2703 = vmatpush1.bf16.msra.mxu0 %v2236
      %2704 = vmatprep.subr.bf16.mxu0 %v2229
      %2705 = vmatpush1.bf16.msra.mxu0 %v2228
      %2706 = vmatprep.subr.bf16.mxu0 %v2221
      %2707 = vmatpush1.bf16.msra.mxu0 %v2220
      %2708 = vmatprep.subr.bf16.mxu0 %v2213
      %2709 = vmatpush1.bf16.msra.mxu0 %v2212
      %2710 = vmatprep.subr.bf16.mxu0 %v2205
      %2711 = vmatpush1.bf16.msra.mxu0 %v2204
      %2712 = vmatprep.subr.bf16.mxu0 %v2197
      %2713 = vmatpush1.bf16.msra.mxu0 %v2196
      %2714 = vmatprep.subr.bf16.mxu0 %v2189
      %2715 = vmatpush1.bf16.msra.mxu0 %v2188
      %2716 = vmatprep.subr.bf16.mxu0 %v2309
      %2717 = vmatpush2.bf16.msra.mxu0 %v2308
      %2718 = vmatprep.subr.bf16.mxu0 %v2301
      %2719 = vmatpush2.bf16.msra.mxu0 %v2300
      %2720 = vmatprep.subr.bf16.mxu0 %v2293
      %2721 = vmatpush2.bf16.msra.mxu0 %v2292
      %2722 = vmatprep.subr.bf16.mxu0 %v2285
      %2723 = vmatpush2.bf16.msra.mxu0 %v2284
      %2724 = vmatprep.subr.bf16.mxu0 %v2277
      %2725 = vmatpush2.bf16.msra.mxu0 %v2276
      %2726 = vmatprep.subr.bf16.mxu0 %v2269
      %2727 = vmatpush2.bf16.msra.mxu0 %v2268
      %2728 = vmatprep.subr.bf16.mxu0 %v2261
      %2729 = vmatpush2.bf16.msra.mxu0 %v2260
      %2730 = vmatprep.subr.bf16.mxu0 %v2253
      %2731 = vmatpush2.bf16.msra.mxu0 %v2252
      %2732 = vmatprep.mubr.bf16.mxu0 %v1119
      %2733 = vmatmul.mubr.bf16.gmra.mxu0 %v1118
      %v2734 = vpop.f32.mrf.mxu0
      %v2735 = vadd.f32 %v1383, %v2734
      %v2736 = vpop.f32.mrf.mxu0
      %v2737 = vadd.f32 %v1387, %v2736
      %v2738 = vpop.f32.mrf.mxu0
      %v2739 = vpop.f32.mrf.mxu0
      %2740 = vdwg.mxu0
      %2741 = vmatprep.subr.bf16.mxu0 %v2373
      %2742 = vmatpush1.bf16.msra.mxu0 %v2372
      %2743 = vmatprep.subr.bf16.mxu0 %v2365
      %2744 = vmatpush1.bf16.msra.mxu0 %v2364
      %2745 = vmatprep.subr.bf16.mxu0 %v2357
      %2746 = vmatpush1.bf16.msra.mxu0 %v2356
      %2747 = vmatprep.subr.bf16.mxu0 %v2349
      %2748 = vmatpush1.bf16.msra.mxu0 %v2348
      %2749 = vmatprep.subr.bf16.mxu0 %v2341
      %2750 = vmatpush1.bf16.msra.mxu0 %v2340
      %2751 = vmatprep.subr.bf16.mxu0 %v2333
      %2752 = vmatpush1.bf16.msra.mxu0 %v2332
      %2753 = vmatprep.subr.bf16.mxu0 %v2325
      %2754 = vmatpush1.bf16.msra.mxu0 %v2324
      %2755 = vmatprep.subr.bf16.mxu0 %v2317
      %2756 = vmatpush1.bf16.msra.mxu0 %v2316
      %2757 = vmatprep.subr.bf16.mxu0 %v2437
      %2758 = vmatpush2.bf16.msra.mxu0 %v2436
      %2759 = vmatprep.subr.bf16.mxu0 %v2429
      %2760 = vmatpush2.bf16.msra.mxu0 %v2428
      %2761 = vmatprep.subr.bf16.mxu0 %v2421
      %2762 = vmatpush2.bf16.msra.mxu0 %v2420
      %2763 = vmatprep.subr.bf16.mxu0 %v2413
      %2764 = vmatpush2.bf16.msra.mxu0 %v2412
      %2765 = vmatprep.subr.bf16.mxu0 %v2405
      %2766 = vmatpush2.bf16.msra.mxu0 %v2404
      %2767 = vmatprep.subr.bf16.mxu0 %v2397
      %2768 = vmatpush2.bf16.msra.mxu0 %v2396
      %2769 = vmatprep.subr.bf16.mxu0 %v2389
      %2770 = vmatpush2.bf16.msra.mxu0 %v2388
      %2771 = vmatprep.subr.bf16.mxu0 %v2381
      %2772 = vmatpush2.bf16.msra.mxu0 %v2380
      %2773 = vmatprep.mubr.bf16.mxu0 %v1121
      %2774 = vmatmul.mubr.bf16.gmra.mxu0 %v1120
      %v2775 = vpop.f32.mrf.mxu0
      %v2776 = vadd.f32 %v2735, %v2775
      %v2777 = vpop.f32.mrf.mxu0
      %v2778 = vadd.f32 %v2737, %v2777
      %v2779 = vpop.f32.mrf.mxu0
      %v2780 = vpop.f32.mrf.mxu0
      %2781 = vdwg.mxu0
      %2782 = vmatprep.subr.bf16.mxu0 %v2247
      %2783 = vmatpush1.bf16.msra.mxu0 %v2246
      %2784 = vmatprep.subr.bf16.mxu0 %v2239
      %2785 = vmatpush1.bf16.msra.mxu0 %v2238
      %2786 = vmatprep.subr.bf16.mxu0 %v2231
      %2787 = vmatpush1.bf16.msra.mxu0 %v2230
      %2788 = vmatprep.subr.bf16.mxu0 %v2223
      %2789 = vmatpush1.bf16.msra.mxu0 %v2222
      %2790 = vmatprep.subr.bf16.mxu0 %v2215
      %2791 = vmatpush1.bf16.msra.mxu0 %v2214
      %2792 = vmatprep.subr.bf16.mxu0 %v2207
      %2793 = vmatpush1.bf16.msra.mxu0 %v2206
      %2794 = vmatprep.subr.bf16.mxu0 %v2199
      %2795 = vmatpush1.bf16.msra.mxu0 %v2198
      %2796 = vmatprep.subr.bf16.mxu0 %v2191
      %2797 = vmatpush1.bf16.msra.mxu0 %v2190
      %2798 = vmatprep.subr.bf16.mxu0 %v2311
      %2799 = vmatpush2.bf16.msra.mxu0 %v2310
      %2800 = vmatprep.subr.bf16.mxu0 %v2303
      %2801 = vmatpush2.bf16.msra.mxu0 %v2302
      %2802 = vmatprep.subr.bf16.mxu0 %v2295
      %2803 = vmatpush2.bf16.msra.mxu0 %v2294
      %2804 = vmatprep.subr.bf16.mxu0 %v2287
      %2805 = vmatpush2.bf16.msra.mxu0 %v2286
      %2806 = vmatprep.subr.bf16.mxu0 %v2279
      %2807 = vmatpush2.bf16.msra.mxu0 %v2278
      %2808 = vmatprep.subr.bf16.mxu0 %v2271
      %2809 = vmatpush2.bf16.msra.mxu0 %v2270
      %2810 = vmatprep.subr.bf16.mxu0 %v2263
      %2811 = vmatpush2.bf16.msra.mxu0 %v2262
      %2812 = vmatprep.subr.bf16.mxu0 %v2255
      %2813 = vmatpush2.bf16.msra.mxu0 %v2254
      %2814 = vmatprep.mubr.bf16.mxu0 %v1119
      %2815 = vmatmul.mubr.bf16.gmra.mxu0 %v1118
      %v2816 = vpop.f32.mrf.mxu0
      %v2817 = vadd.f32 %v1391, %v2816
      %v2818 = vpop.f32.mrf.mxu0
      %v2819 = vadd.f32 %v1395, %v2818
      %v2820 = vpop.f32.mrf.mxu0
      %v2821 = vpop.f32.mrf.mxu0
      %2822 = vdwg.mxu0
      %2823 = vmatprep.subr.bf16.mxu0 %v2375
      %2824 = vmatpush1.bf16.msra.mxu0 %v2374
      %2825 = vmatprep.subr.bf16.mxu0 %v2367
      %2826 = vmatpush1.bf16.msra.mxu0 %v2366
      %2827 = vmatprep.subr.bf16.mxu0 %v2359
      %2828 = vmatpush1.bf16.msra.mxu0 %v2358
      %2829 = vmatprep.subr.bf16.mxu0 %v2351
      %2830 = vmatpush1.bf16.msra.mxu0 %v2350
      %2831 = vmatprep.subr.bf16.mxu0 %v2343
      %2832 = vmatpush1.bf16.msra.mxu0 %v2342
      %2833 = vmatprep.subr.bf16.mxu0 %v2335
      %2834 = vmatpush1.bf16.msra.mxu0 %v2334
      %2835 = vmatprep.subr.bf16.mxu0 %v2327
      %2836 = vmatpush1.bf16.msra.mxu0 %v2326
      %2837 = vmatprep.subr.bf16.mxu0 %v2319
      %2838 = vmatpush1.bf16.msra.mxu0 %v2318
      %2839 = vmatprep.subr.bf16.mxu0 %v2439
      %2840 = vmatpush2.bf16.msra.mxu0 %v2438
      %2841 = vmatprep.subr.bf16.mxu0 %v2431
      %2842 = vmatpush2.bf16.msra.mxu0 %v2430
      %2843 = vmatprep.subr.bf16.mxu0 %v2423
      %2844 = vmatpush2.bf16.msra.mxu0 %v2422
      %2845 = vmatprep.subr.bf16.mxu0 %v2415
      %2846 = vmatpush2.bf16.msra.mxu0 %v2414
      %2847 = vmatprep.subr.bf16.mxu0 %v2407
      %2848 = vmatpush2.bf16.msra.mxu0 %v2406
      %2849 = vmatprep.subr.bf16.mxu0 %v2399
      %2850 = vmatpush2.bf16.msra.mxu0 %v2398
      %2851 = vmatprep.subr.bf16.mxu0 %v2391
      %2852 = vmatpush2.bf16.msra.mxu0 %v2390
      %2853 = vmatprep.subr.bf16.mxu0 %v2383
      %2854 = vmatpush2.bf16.msra.mxu0 %v2382
      %2855 = vmatprep.mubr.bf16.mxu0 %v1121
      %2856 = vmatmul.mubr.bf16.gmra.mxu0 %v1120
      %v2857 = vpop.f32.mrf.mxu0
      %v2858 = vadd.f32 %v2817, %v2857
      %v2859 = vpop.f32.mrf.mxu0
      %v2860 = vadd.f32 %v2819, %v2859
      %v2861 = vpop.f32.mrf.mxu0
      %v2862 = vpop.f32.mrf.mxu0
      %2863 = vdwg.mxu0
      %2864 = vmatprep.subr.bf16.mxu0 %v2249
      %2865 = vmatpush1.bf16.msra.mxu0 %v2248
      %2866 = vmatprep.subr.bf16.mxu0 %v2241
      %2867 = vmatpush1.bf16.msra.mxu0 %v2240
      %2868 = vmatprep.subr.bf16.mxu0 %v2233
      %2869 = vmatpush1.bf16.msra.mxu0 %v2232
      %2870 = vmatprep.subr.bf16.mxu0 %v2225
      %2871 = vmatpush1.bf16.msra.mxu0 %v2224
      %2872 = vmatprep.subr.bf16.mxu0 %v2217
      %2873 = vmatpush1.bf16.msra.mxu0 %v2216
      %2874 = vmatprep.subr.bf16.mxu0 %v2209
      %2875 = vmatpush1.bf16.msra.mxu0 %v2208
      %2876 = vmatprep.subr.bf16.mxu0 %v2201
      %2877 = vmatpush1.bf16.msra.mxu0 %v2200
      %2878 = vmatprep.subr.bf16.mxu0 %v2193
      %2879 = vmatpush1.bf16.msra.mxu0 %v2192
      %2880 = vmatprep.subr.bf16.mxu0 %v2313
      %2881 = vmatpush2.bf16.msra.mxu0 %v2312
      %2882 = vmatprep.subr.bf16.mxu0 %v2305
      %2883 = vmatpush2.bf16.msra.mxu0 %v2304
      %2884 = vmatprep.subr.bf16.mxu0 %v2297
      %2885 = vmatpush2.bf16.msra.mxu0 %v2296
      %2886 = vmatprep.subr.bf16.mxu0 %v2289
      %2887 = vmatpush2.bf16.msra.mxu0 %v2288
      %2888 = vmatprep.subr.bf16.mxu0 %v2281
      %2889 = vmatpush2.bf16.msra.mxu0 %v2280
      %2890 = vmatprep.subr.bf16.mxu0 %v2273
      %2891 = vmatpush2.bf16.msra.mxu0 %v2272
      %2892 = vmatprep.subr.bf16.mxu0 %v2265
      %2893 = vmatpush2.bf16.msra.mxu0 %v2264
      %2894 = vmatprep.subr.bf16.mxu0 %v2257
      %2895 = vmatpush2.bf16.msra.mxu0 %v2256
      %2896 = vmatprep.mubr.bf16.mxu0 %v1119
      %2897 = vmatmul.mubr.bf16.gmra.mxu0 %v1118
      %v2898 = vpop.f32.mrf.mxu0
      %v2899 = vadd.f32 %v1399, %v2898
      %v2900 = vpop.f32.mrf.mxu0
      %v2901 = vadd.f32 %v1403, %v2900
      %v2902 = vpop.f32.mrf.mxu0
      %v2903 = vpop.f32.mrf.mxu0
      %2904 = vdwg.mxu0
      %2905 = vmatprep.subr.bf16.mxu0 %v2377
      %2906 = vmatpush1.bf16.msra.mxu0 %v2376
      %2907 = vmatprep.subr.bf16.mxu0 %v2369
      %2908 = vmatpush1.bf16.msra.mxu0 %v2368
      %2909 = vmatprep.subr.bf16.mxu0 %v2361
      %2910 = vmatpush1.bf16.msra.mxu0 %v2360
      %2911 = vmatprep.subr.bf16.mxu0 %v2353
      %2912 = vmatpush1.bf16.msra.mxu0 %v2352
      %2913 = vmatprep.subr.bf16.mxu0 %v2345
      %2914 = vmatpush1.bf16.msra.mxu0 %v2344
      %2915 = vmatprep.subr.bf16.mxu0 %v2337
      %2916 = vmatpush1.bf16.msra.mxu0 %v2336
      %2917 = vmatprep.subr.bf16.mxu0 %v2329
      %2918 = vmatpush1.bf16.msra.mxu0 %v2328
      %2919 = vmatprep.subr.bf16.mxu0 %v2321
      %2920 = vmatpush1.bf16.msra.mxu0 %v2320
      %2921 = vmatprep.subr.bf16.mxu0 %v2441
      %2922 = vmatpush2.bf16.msra.mxu0 %v2440
      %2923 = vmatprep.subr.bf16.mxu0 %v2433
      %2924 = vmatpush2.bf16.msra.mxu0 %v2432
      %2925 = vmatprep.subr.bf16.mxu0 %v2425
      %2926 = vmatpush2.bf16.msra.mxu0 %v2424
      %2927 = vmatprep.subr.bf16.mxu0 %v2417
      %2928 = vmatpush2.bf16.msra.mxu0 %v2416
      %2929 = vmatprep.subr.bf16.mxu0 %v2409
      %2930 = vmatpush2.bf16.msra.mxu0 %v2408
      %2931 = vmatprep.subr.bf16.mxu0 %v2401
      %2932 = vmatpush2.bf16.msra.mxu0 %v2400
      %2933 = vmatprep.subr.bf16.mxu0 %v2393
      %2934 = vmatpush2.bf16.msra.mxu0 %v2392
      %2935 = vmatprep.subr.bf16.mxu0 %v2385
      %2936 = vmatpush2.bf16.msra.mxu0 %v2384
      %2937 = vmatprep.mubr.bf16.mxu0 %v1121
      %2938 = vmatmul.mubr.bf16.gmra.mxu0 %v1120
      %v2939 = vpop.f32.mrf.mxu0
      %v2940 = vadd.f32 %v2899, %v2939
      %v2941 = vpop.f32.mrf.mxu0
      %v2942 = vadd.f32 %v2901, %v2941
      %v2943 = vpop.f32.mrf.mxu0
      %v2944 = vpop.f32.mrf.mxu0
      %2945 = vdwg.mxu0
      %2946 = vmatprep.subr.bf16.mxu0 %v2251
      %2947 = vmatpush1.bf16.msra.mxu0 %v2250
      %2948 = vmatprep.subr.bf16.mxu0 %v2243
      %2949 = vmatpush1.bf16.msra.mxu0 %v2242
      %2950 = vmatprep.subr.bf16.mxu0 %v2235
      %2951 = vmatpush1.bf16.msra.mxu0 %v2234
      %2952 = vmatprep.subr.bf16.mxu0 %v2227
      %2953 = vmatpush1.bf16.msra.mxu0 %v2226
      %2954 = vmatprep.subr.bf16.mxu0 %v2219
      %2955 = vmatpush1.bf16.msra.mxu0 %v2218
      %2956 = vmatprep.subr.bf16.mxu0 %v2211
      %2957 = vmatpush1.bf16.msra.mxu0 %v2210
      %2958 = vmatprep.subr.bf16.mxu0 %v2203
      %2959 = vmatpush1.bf16.msra.mxu0 %v2202
      %2960 = vmatprep.subr.bf16.mxu0 %v2195
      %2961 = vmatpush1.bf16.msra.mxu0 %v2194
      %2962 = vmatprep.subr.bf16.mxu0 %v2315
      %2963 = vmatpush2.bf16.msra.mxu0 %v2314
      %2964 = vmatprep.subr.bf16.mxu0 %v2307
      %2965 = vmatpush2.bf16.msra.mxu0 %v2306
      %2966 = vmatprep.subr.bf16.mxu0 %v2299
      %2967 = vmatpush2.bf16.msra.mxu0 %v2298
      %2968 = vmatprep.subr.bf16.mxu0 %v2291
      %2969 = vmatpush2.bf16.msra.mxu0 %v2290
      %2970 = vmatprep.subr.bf16.mxu0 %v2283
      %2971 = vmatpush2.bf16.msra.mxu0 %v2282
      %2972 = vmatprep.subr.bf16.mxu0 %v2275
      %2973 = vmatpush2.bf16.msra.mxu0 %v2274
      %2974 = vmatprep.subr.bf16.mxu0 %v2267
      %2975 = vmatpush2.bf16.msra.mxu0 %v2266
      %2976 = vmatprep.subr.bf16.mxu0 %v2259
      %2977 = vmatpush2.bf16.msra.mxu0 %v2258
      %2978 = vmatprep.mubr.bf16.mxu0 %v1119
      %2979 = vmatmul.mubr.bf16.gmra.mxu0 %v1118
      %v2980 = vpop.f32.mrf.mxu0
      %v2981 = vadd.f32 %v1407, %v2980
      %v2982 = vpop.f32.mrf.mxu0
      %v2983 = vadd.f32 %v1411, %v2982
      %v2984 = vpop.f32.mrf.mxu0
      %v2985 = vpop.f32.mrf.mxu0
      %2986 = vdwg.mxu0
      %2987 = vmatprep.subr.bf16.mxu0 %v2379
      %2988 = vmatpush1.bf16.msra.mxu0 %v2378
      %2989 = vmatprep.subr.bf16.mxu0 %v2371
      %2990 = vmatpush1.bf16.msra.mxu0 %v2370
      %2991 = vmatprep.subr.bf16.mxu0 %v2363
      %2992 = vmatpush1.bf16.msra.mxu0 %v2362
      %2993 = vmatprep.subr.bf16.mxu0 %v2355
      %2994 = vmatpush1.bf16.msra.mxu0 %v2354
      %2995 = vmatprep.subr.bf16.mxu0 %v2347
      %2996 = vmatpush1.bf16.msra.mxu0 %v2346
      %2997 = vmatprep.subr.bf16.mxu0 %v2339
      %2998 = vmatpush1.bf16.msra.mxu0 %v2338
      %2999 = vmatprep.subr.bf16.mxu0 %v2331
      %3000 = vmatpush1.bf16.msra.mxu0 %v2330
      %3001 = vmatprep.subr.bf16.mxu0 %v2323
      %3002 = vmatpush1.bf16.msra.mxu0 %v2322
      %3003 = vmatprep.subr.bf16.mxu0 %v2443
      %3004 = vmatpush2.bf16.msra.mxu0 %v2442
      %3005 = vmatprep.subr.bf16.mxu0 %v2435
      %3006 = vmatpush2.bf16.msra.mxu0 %v2434
      %3007 = vmatprep.subr.bf16.mxu0 %v2427
      %3008 = vmatpush2.bf16.msra.mxu0 %v2426
      %3009 = vmatprep.subr.bf16.mxu0 %v2419
      %3010 = vmatpush2.bf16.msra.mxu0 %v2418
      %3011 = vmatprep.subr.bf16.mxu0 %v2411
      %3012 = vmatpush2.bf16.msra.mxu0 %v2410
      %3013 = vmatprep.subr.bf16.mxu0 %v2403
      %3014 = vmatpush2.bf16.msra.mxu0 %v2402
      %3015 = vmatprep.subr.bf16.mxu0 %v2395
      %3016 = vmatpush2.bf16.msra.mxu0 %v2394
      %3017 = vmatprep.subr.bf16.mxu0 %v2387
      %3018 = vmatpush2.bf16.msra.mxu0 %v2386
      %3019 = vmatprep.mubr.bf16.mxu0 %v1121
      %3020 = vmatmul.mubr.bf16.gmra.mxu0 %v1120
      %v3021 = vpop.f32.mrf.mxu0
      %v3022 = vadd.f32 %v2981, %v3021
      %v3023 = vpop.f32.mrf.mxu0
      %v3024 = vadd.f32 %v2983, %v3023
      %v3025 = vpop.f32.mrf.mxu0
      %v3026 = vpop.f32.mrf.mxu0
      %3027 = vdwg.mxu0
      %v3028 = vrot.slane %v2776, 4
      %v3029 = vmax.f32 %v2776, %v3028
      %v3030 = vrot.slane %v3029, 2
      %v3031 = vmax.f32 %v3029, %v3030
      %v3032 = vrot.slane %v3031, 1
      %v3033 = vmax.f32 %v3031, %v3032
      %v3034 = vrot.slane %v2778, 4
      %v3035 = vmax.f32 %v2778, %v3034
      %v3036 = vrot.slane %v3035, 2
      %v3037 = vmax.f32 %v3035, %v3036
      %v3038 = vrot.slane %v3037, 1
      %v3039 = vmax.f32 %v3037, %v3038
      %v3040 = vrot.slane %v2858, 4
      %v3041 = vmax.f32 %v2858, %v3040
      %v3042 = vrot.slane %v3041, 2
      %v3043 = vmax.f32 %v3041, %v3042
      %v3044 = vrot.slane %v3043, 1
      %v3045 = vmax.f32 %v3043, %v3044
      %v3046 = vrot.slane %v2860, 4
      %v3047 = vmax.f32 %v2860, %v3046
      %v3048 = vrot.slane %v3047, 2
      %v3049 = vmax.f32 %v3047, %v3048
      %v3050 = vrot.slane %v3049, 1
      %v3051 = vmax.f32 %v3049, %v3050
      %v3052 = vrot.slane %v2940, 4
      %v3053 = vmax.f32 %v2940, %v3052
      %v3054 = vrot.slane %v3053, 2
      %v3055 = vmax.f32 %v3053, %v3054
      %v3056 = vrot.slane %v3055, 1
      %v3057 = vmax.f32 %v3055, %v3056
      %v3058 = vrot.slane %v2942, 4
      %v3059 = vmax.f32 %v2942, %v3058
      %v3060 = vrot.slane %v3059, 2
      %v3061 = vmax.f32 %v3059, %v3060
      %v3062 = vrot.slane %v3061, 1
      %v3063 = vmax.f32 %v3061, %v3062
      %v3064 = vrot.slane %v3022, 4
      %v3065 = vmax.f32 %v3022, %v3064
      %v3066 = vrot.slane %v3065, 2
      %v3067 = vmax.f32 %v3065, %v3066
      %v3068 = vrot.slane %v3067, 1
      %v3069 = vmax.f32 %v3067, %v3068
      %v3070 = vrot.slane %v3024, 4
      %v3071 = vmax.f32 %v3024, %v3070
      %v3072 = vrot.slane %v3071, 2
      %v3073 = vmax.f32 %v3071, %v3072
      %v3074 = vrot.slane %v3073, 1
      %v3075 = vmax.f32 %v3073, %v3074
      %p3076 = scmp.eq.s32.totalorder %s23, 0
      // Predicated region
      $region49: #{pointnet_pp_forward.6} parent=47 // pred_check
        %p3077 = pneg %p3076
      $region50: #{pointnet_pp_forward.6} parent=47 // pred_check_branch
        %3079 = sbr.rel (%p3077) target = $region52
      $region51: #{pointnet_pp_forward.6} parent=47 // pred_region
        %3080 = vst [vmem:[#allocation2] sm:$0xff] -1e+30
      $region52: #{pointnet_pp_forward.6} parent=47 // pred_fallthru
        _
      %v3081 = vld [vmem:[#allocation2] sm:$0xff]
      %v3090 = vcombine.low %v3033, %v3039
      %v3091 = vcombine.low %v3045, %v3051
      %v3092 = vcombine.low %v3057, %v3063
      %v3093 = vcombine.low %v3069, %v3075
      %v3095 = vunpack.c.l.s4 1966171168
      %v3096 = vunpack.c.0.s8 %v3095
      %v3097 = vlaneseq
      %v3098 = vshrl.u32 %v3097, 7
      %v3099 = vsub.s32 %v3096, %v3098
      %v3100 = vrot.slane %v3090, %v3099
      %v3102 = vunpack.c.l.s4 1966171168
      %v3103 = vunpack.c.0.s8 %v3102
      %v3104 = vlaneseq
      %v3105 = vshrl.u32 %v3104, 7
      %v3106 = vsub.s32 %v3103, %v3105
      %v3107 = vrot.slane %v3091, %v3106
      %v3109 = vunpack.c.l.s4 1966171168
      %v3110 = vunpack.c.0.s8 %v3109
      %v3111 = vlaneseq
      %v3112 = vshrl.u32 %v3111, 7
      %v3113 = vsub.s32 %v3110, %v3112
      %v3114 = vrot.slane %v3092, %v3113
      %v3116 = vunpack.c.l.s4 1966171168
      %v3117 = vunpack.c.0.s8 %v3116
      %v3118 = vlaneseq
      %v3119 = vshrl.u32 %v3118, 7
      %v3120 = vsub.s32 %v3117, %v3119
      %v3121 = vrot.slane %v3093, %v3120
      %v3122 = vcombine.low %v3100, %v3107
      %v3123 = vcombine.low %v3114, %v3121
      %v3125 = vunpack.c.l.s4 1966171168
      %v3126 = vunpack.c.0.s8 %v3125
      %v3127 = vlaneseq
      %v3128 = vshrl.u32 %v3127, 7
      %v3129 = vsub.s32 %v3126, %v3128
      %v3130 = vrot.slane %v3122, %v3129
      %v3132 = vunpack.c.l.s4 1966171168
      %v3133 = vunpack.c.0.s8 %v3132
      %v3134 = vlaneseq
      %v3135 = vshrl.u32 %v3134, 7
      %v3136 = vsub.s32 %v3133, %v3135
      %v3137 = vrot.slane %v3123, %v3136
      %v3138 = vcombine.low %v3130, %v3137
      %v3140 = vmax.f32 %v3081, %v3138
      %3141 = vst [vmem:[#allocation2] sm:$0xff] %v3140
      // Predicated region
      $region53: #{pointnet_pp_forward.6} parent=47 // pred_check
        %p3142 = pneg %p3076
      $region54: #{pointnet_pp_forward.6} parent=47 // pred_check_branch
        %3144 = sbr.rel (%p3142) target = $region56
      $region55: #{pointnet_pp_forward.6} parent=47 // pred_region
        %v3145 = vld [vmem:[#allocation2] sm:$0xff]
        %v3147 = vlaneseq
        %v3148 = vshrl.u32 %v3147, 7
        %v3149 = vsub.s32 0, %v3148
        %v3150 = vrot.slane %v3145, %v3149
        %v3151 = vlaneseq
        %v3152 = vshrl.u32 %v3151, 7
        %v3153 = vsub.s32 1, %v3152
        %v3154 = vrot.slane %v3145, %v3153
        %v3155 = vlaneseq
        %v3156 = vshrl.u32 %v3155, 7
        %v3157 = vsub.s32 2, %v3156
        %v3158 = vrot.slane %v3145, %v3157
        %v3159 = vlaneseq
        %v3160 = vshrl.u32 %v3159, 7
        %v3161 = vsub.s32 3, %v3160
        %v3162 = vrot.slane %v3145, %v3161
        %v3163 = vlaneseq
        %v3164 = vshrl.u32 %v3163, 7
        %v3165 = vsub.s32 4, %v3164
        %v3166 = vrot.slane %v3145, %v3165
        %v3167 = vlaneseq
        %v3168 = vshrl.u32 %v3167, 7
        %v3169 = vsub.s32 5, %v3168
        %v3170 = vrot.slane %v3145, %v3169
        %v3171 = vlaneseq
        %v3172 = vshrl.u32 %v3171, 7
        %v3173 = vsub.s32 6, %v3172
        %v3174 = vrot.slane %v3145, %v3173
        %v3175 = vlaneseq
        %v3176 = vshrl.u32 %v3175, 7
        %v3177 = vsub.s32 7, %v3176
        %v3178 = vrot.slane %v3145, %v3177
        %v3187 = vpack.c.bf16 %v3150, %v3150
        %v3188 = vpack.c.bf16 %v3154, %v3154
        %v3189 = vpack.c.bf16 %v3158, %v3158
        %v3190 = vpack.c.bf16 %v3162, %v3162
        %v3191 = vpack.c.bf16 %v3166, %v3166
        %v3192 = vpack.c.bf16 %v3170, %v3170
        %v3193 = vpack.c.bf16 %v3174, %v3174
        %v3194 = vpack.c.bf16 %v3178, %v3178
        %v3203 = vcombine.low %v3187, %v3188
        %v3204 = vcombine.low %v3189, %v3190
        %v3205 = vcombine.low %v3191, %v3192
        %v3206 = vcombine.low %v3193, %v3194
        %v3208 = vunpack.c.l.s4 1966171168
        %v3209 = vunpack.c.0.s8 %v3208
        %v3210 = vlaneseq
        %v3211 = vshrl.u32 %v3210, 7
        %v3212 = vsub.s32 %v3209, %v3211
        %v3213 = vrot.slane %v3203, %v3212
        %v3215 = vunpack.c.l.s4 1966171168
        %v3216 = vunpack.c.0.s8 %v3215
        %v3217 = vlaneseq
        %v3218 = vshrl.u32 %v3217, 7
        %v3219 = vsub.s32 %v3216, %v3218
        %v3220 = vrot.slane %v3204, %v3219
        %v3222 = vunpack.c.l.s4 1966171168
        %v3223 = vunpack.c.0.s8 %v3222
        %v3224 = vlaneseq
        %v3225 = vshrl.u32 %v3224, 7
        %v3226 = vsub.s32 %v3223, %v3225
        %v3227 = vrot.slane %v3205, %v3226
        %v3229 = vunpack.c.l.s4 1966171168
        %v3230 = vunpack.c.0.s8 %v3229
        %v3231 = vlaneseq
        %v3232 = vshrl.u32 %v3231, 7
        %v3233 = vsub.s32 %v3230, %v3232
        %v3234 = vrot.slane %v3206, %v3233
        %v3235 = vcombine.low %v3213, %v3220
        %v3236 = vcombine.low %v3227, %v3234
        %v3238 = vunpack.c.l.s4 1966171168
        %v3239 = vunpack.c.0.s8 %v3238
        %v3240 = vlaneseq
        %v3241 = vshrl.u32 %v3240, 7
        %v3242 = vsub.s32 %v3239, %v3241
        %v3243 = vrot.slane %v3235, %v3242
        %v3245 = vunpack.c.l.s4 1966171168
        %v3246 = vunpack.c.0.s8 %v3245
        %v3247 = vlaneseq
        %v3248 = vshrl.u32 %v3247, 7
        %v3249 = vsub.s32 %v3246, %v3248
        %v3250 = vrot.slane %v3236, %v3249
        %v3251 = vcombine.low %v3243, %v3250
        %vm3253 = vcmask 1040384
        %vm3254 = vsmask.f32 256
        %vm3255 = vmand %vm3253, %vm3254
        %vm3256 = vcmask 1041409
        %vm3257 = vsmask.f32 1280
        %vm3258 = vmand %vm3256, %vm3257
        %vm3259 = vmor %vm3258, %vm3255
        %vm3260 = vcmask 1042434
        %vm3261 = vsmask.f32 2304
        %vm3262 = vmand %vm3260, %vm3261
        %vm3263 = vmor %vm3262, %vm3259
        %vm3264 = vcmask 1043459
        %vm3265 = vsmask.f32 3328
        %vm3266 = vmand %vm3264, %vm3265
        %vm3267 = vmor %vm3266, %vm3263
        %vm3268 = vcmask 1044484
        %vm3269 = vsmask.f32 4352
        %vm3270 = vmand %vm3268, %vm3269
        %vm3271 = vmor %vm3270, %vm3267
        %vm3272 = vcmask 1045509
        %vm3273 = vsmask.f32 5376
        %vm3274 = vmand %vm3272, %vm3273
        %vm3275 = vmor %vm3274, %vm3271
        %vm3276 = vcmask 1046534
        %vm3277 = vsmask.f32 6400
        %vm3278 = vmand %vm3276, %vm3277
        %vm3279 = vmor %vm3278, %vm3275
        %vm3280 = vcmask 1047559
        %vm3281 = vsmask.f32 7424
        %vm3282 = vmand %vm3280, %vm3281
        %vm3283 = vmor %vm3282, %vm3279
        %v3284 = vld [vmem:[%s302] sm:$0xff]
        %v3285 = vsel %vm3283, %v3251, %v3284
        %3286 = vst [vmem:[%s302] sm:$0xff] %v3285
      $region56: #{pointnet_pp_forward.6} parent=47 // pred_fallthru
        _
      %p3287 = scmp.lt.s32.totalorder %s22, 1
      %s3288 = scalar_select %p3287, %s22, 1
      %s3289 = smul.addr %s3288, 8
      %s3290 = scalar_lea.vmem %s7, %s3289
      // Predicated region
      $region57: #{pointnet_pp_forward.6} parent=47 // pred_check
        %p3291 = pneg %p202
      $region58: #{pointnet_pp_forward.6} parent=47 // pred_check_branch
        %3293 = sbr.rel (%p3291) target = $region60
      $region59: #{pointnet_pp_forward.6} parent=47 // pred_region
        _
      $region60: #{pointnet_pp_forward.6} parent=47 // pred_fallthru
        _
    $region48: #{pointnet_pp_forward.6} parent=5 // pred_fallthru
      _
    %p3294 = scmp.le.s32.totalorder 2, %s13
    // Predicated region
    $region61: #{pointnet_pp_forward.6} parent=5 // pred_check
      %p3295 = pneg %p3294
    $region62: #{pointnet_pp_forward.6} parent=5 // pred_check_branch
      %3297 = sbr.rel (%p3295) target = $region64
    $region63: #{pointnet_pp_forward.6} parent=5 // pred_region
      %s3298 = ssub.s32 %s13, 2
      // Predicated region
      $region65: #{pointnet_pp_forward.6} parent=63 // pred_check
        %p3299 = pneg %p208
      $region66: #{pointnet_pp_forward.6} parent=63 // pred_check_branch
        %3301 = sbr.rel (%p3299) target = $region68
      $region67: #{pointnet_pp_forward.6} parent=63 // pred_region
        %p3302 = scmp.lt.s32.totalorder %s24, 1
        %s3303 = scalar_select %p3302, %s24, 1
        %s3304 = smul.addr %s3303, 8
        %s3305 = scalar_lea.vmem %s7, %s3304
      $region68: #{pointnet_pp_forward.6} parent=63 // pred_fallthru
        _
    $region64: #{pointnet_pp_forward.6} parent=5 // pred_fallthru
      _
  $region6: #{pointnet_pp_forward.6} parent=0 // loop_footer
    %s17 = sadd.s32 1, %s13
  $region7: #{pointnet_pp_forward.6} parent=0 // loop_footer_branch
    %12 = sbr.rel target = $region3
  $region8: #{pointnet_pp_forward.6} parent=0 // loop_exit
    _

// kernel: pointnet_pp_forward.7
$region0: #{pointnet_pp_forward.7}
  #allocation0 [shape = 'u32[]', space=smem, size = 0x4, offset = 0x4, fixed_abs, tag = 'smem constant byte address 0x4 - core index']
  #allocation1 [shape = 'u32[144,128]{1,0:T(1,128)}', space=vmem, size = 0x12000, scoped, tag = 'internal scratch']
  %s0 = inlined_call_operand.vmem [shape: bf16[2,1024], index: 0, kind: input, shape index: {}]
  %s1 = inlined_call_operand.vmem [shape: bf16[1024,512], index: 1, kind: input, shape index: {}]
  %s2 = inlined_call_operand.vmem [shape: f32[1,512], index: 2, kind: input, shape index: {}]
  %s3 = inlined_call_operand.vmem [shape: bf16[512,256], index: 3, kind: input, shape index: {}]
  %s4 = inlined_call_operand.vmem [shape: f32[1,256], index: 4, kind: input, shape index: {}]
  %s5 = inlined_call_operand.vmem [shape: bf16[256,10], index: 5, kind: input, shape index: {}]
  %s6 = inlined_call_operand.vmem [shape: f32[1,10], index: 6, kind: input, shape index: {}]
  %s7 = inlined_call_operand.hbm [shape: f32[2,10], index: 7, kind: output, shape index: {}]
  %s8 = sld [smem:[#allocation0]]
  $region38: #{pointnet_pp_forward.7} parent=0
    _
  %s10 = ssub.s32 1, %s8
  %s11 = scalar_select 0, %s10, %s8
  $region1: #{pointnet_pp_forward.7} parent=0
    #allocation2 [shape = 'u8[1024]{0}', space=vmem, size = 0x400, scoped, tag = 'output window, operand 0, single buffered']
    #allocation3 [shape = 's32[1]{0}', space=sflag, size = 0x4, scoped, tag = 'scoped memory for pointnet_pp_forward.7']
    %12 = vsyncpa [#allocation3], 0
    // Predicated region
    $region2: #{pointnet_pp_forward.7} parent=1 // pred_check
      _
    $region3: #{pointnet_pp_forward.7} parent=1 // pred_check_branch
      %14 = sbr.rel (0) target = $region5
    $region4: #{pointnet_pp_forward.7} parent=1 // pred_region
      _
    $region5: #{pointnet_pp_forward.7} parent=1 // pred_fallthru
      _
    // Predicated region
    $region6: #{pointnet_pp_forward.7} parent=1 // pred_check
      _
    $region7: #{pointnet_pp_forward.7} parent=1 // pred_check_branch
      %16 = sbr.rel (0) target = $region9
    $region8: #{pointnet_pp_forward.7} parent=1 // pred_region
      _
    $region9: #{pointnet_pp_forward.7} parent=1 // pred_fallthru
      _
    // Predicated region
    $region10: #{pointnet_pp_forward.7} parent=1 // pred_check
      _
    $region11: #{pointnet_pp_forward.7} parent=1 // pred_check_branch
      %18 = sbr.rel (0) target = $region13
    $region12: #{pointnet_pp_forward.7} parent=1 // pred_region
      _
    $region13: #{pointnet_pp_forward.7} parent=1 // pred_fallthru
      _
    // Predicated region
    $region14: #{pointnet_pp_forward.7} parent=1 // pred_check
      _
    $region15: #{pointnet_pp_forward.7} parent=1 // pred_check_branch
      %20 = sbr.rel (0) target = $region17
    $region16: #{pointnet_pp_forward.7} parent=1 // pred_region
      _
    $region17: #{pointnet_pp_forward.7} parent=1 // pred_fallthru
      _
    // Predicated region
    $region18: #{pointnet_pp_forward.7} parent=1 // pred_check
      _
    $region19: #{pointnet_pp_forward.7} parent=1 // pred_check_branch
      %22 = sbr.rel (0) target = $region21
    $region20: #{pointnet_pp_forward.7} parent=1 // pred_region
      _
    $region21: #{pointnet_pp_forward.7} parent=1 // pred_fallthru
      _
    // Predicated region
    $region22: #{pointnet_pp_forward.7} parent=1 // pred_check
      _
    $region23: #{pointnet_pp_forward.7} parent=1 // pred_check_branch
      %24 = sbr.rel (0) target = $region25
    $region24: #{pointnet_pp_forward.7} parent=1 // pred_region
      _
    $region25: #{pointnet_pp_forward.7} parent=1 // pred_fallthru
      _
    // Predicated region
    $region26: #{pointnet_pp_forward.7} parent=1 // pred_check
      _
    $region27: #{pointnet_pp_forward.7} parent=1 // pred_check_branch
      %26 = sbr.rel (0) target = $region29
    $region28: #{pointnet_pp_forward.7} parent=1 // pred_region
      _
    $region29: #{pointnet_pp_forward.7} parent=1 // pred_fallthru
      _
    %v28 = vld [vmem:[%s0] sm:$0xff]
    %v29 = vld [vmem:[%s1] sm:$0xff]
    %v30 = vld [vmem:[%s1 + $0x8] sm:$0xff]
    %v31 = vld [vmem:[%s1 + $0x10] sm:$0xff]
    %v32 = vld [vmem:[%s1 + $0x18] sm:$0xff]
    %v33 = vld [vmem:[%s1 + $0x20] sm:$0xff]
    %v34 = vld [vmem:[%s1 + $0x28] sm:$0xff]
    %v35 = vld [vmem:[%s1 + $0x30] sm:$0xff]
    %v36 = vld [vmem:[%s1 + $0x38] sm:$0xff]
    %v37 = vld [vmem:[%s1 + $0x40] sm:$0xff]
    %v38 = vld [vmem:[%s1 + $0x48] sm:$0xff]
    %v39 = vld [vmem:[%s1 + $0x50] sm:$0xff]
    %v40 = vld [vmem:[%s1 + $0x58] sm:$0xff]
    %v41 = vld [vmem:[%s1 + $0x60] sm:$0xff]
    %v42 = vld [vmem:[%s1 + $0x68] sm:$0xff]
    %v43 = vld [vmem:[%s1 + $0x70] sm:$0xff]
    %v44 = vld [vmem:[%s1 + $0x78] sm:$0xff]
    %v45 = vld [vmem:[%s1 + $0x80] sm:$0xff]
    %v46 = vld [vmem:[%s1 + $0x88] sm:$0xff]
    %v47 = vld [vmem:[%s1 + $0x90] sm:$0xff]
    %v48 = vld [vmem:[%s1 + $0x98] sm:$0xff]
    %v49 = vld [vmem:[%s1 + $0xa0] sm:$0xff]
    %v50 = vld [vmem:[%s1 + $0xa8] sm:$0xff]
    %v51 = vld [vmem:[%s1 + $0xb0] sm:$0xff]
    %v52 = vld [vmem:[%s1 + $0xb8] sm:$0xff]
    %v53 = vld [vmem:[%s1 + $0xc0] sm:$0xff]
    %v54 = vld [vmem:[%s1 + $0xc8] sm:$0xff]
    %v55 = vld [vmem:[%s1 + $0xd0] sm:$0xff]
    %v56 = vld [vmem:[%s1 + $0xd8] sm:$0xff]
    %v57 = vld [vmem:[%s1 + $0xe0] sm:$0xff]
    %v58 = vld [vmem:[%s1 + $0xe8] sm:$0xff]
    %v59 = vld [vmem:[%s1 + $0xf0] sm:$0xff]
    %v60 = vld [vmem:[%s1 + $0xf8] sm:$0xff]
    %v61 = vld [vmem:[%s1 + $0x100] sm:$0xff]
    %v62 = vld [vmem:[%s1 + $0x108] sm:$0xff]
    %v63 = vld [vmem:[%s1 + $0x110] sm:$0xff]
    %v64 = vld [vmem:[%s1 + $0x118] sm:$0xff]
    %v65 = vld [vmem:[%s1 + $0x120] sm:$0xff]
    %v66 = vld [vmem:[%s1 + $0x128] sm:$0xff]
    %v67 = vld [vmem:[%s1 + $0x130] sm:$0xff]
    %v68 = vld [vmem:[%s1 + $0x138] sm:$0xff]
    %v69 = vld [vmem:[%s1 + $0x140] sm:$0xff]
    %v70 = vld [vmem:[%s1 + $0x148] sm:$0xff]
    %v71 = vld [vmem:[%s1 + $0x150] sm:$0xff]
    %v72 = vld [vmem:[%s1 + $0x158] sm:$0xff]
    %v73 = vld [vmem:[%s1 + $0x160] sm:$0xff]
    %v74 = vld [vmem:[%s1 + $0x168] sm:$0xff]
    %v75 = vld [vmem:[%s1 + $0x170] sm:$0xff]
    %v76 = vld [vmem:[%s1 + $0x178] sm:$0xff]
    %v77 = vld [vmem:[%s1 + $0x180] sm:$0xff]
    %v78 = vld [vmem:[%s1 + $0x188] sm:$0xff]
    %v79 = vld [vmem:[%s1 + $0x190] sm:$0xff]
    %v80 = vld [vmem:[%s1 + $0x198] sm:$0xff]
    %v81 = vld [vmem:[%s1 + $0x1a0] sm:$0xff]
    %v82 = vld [vmem:[%s1 + $0x1a8] sm:$0xff]
    %v83 = vld [vmem:[%s1 + $0x1b0] sm:$0xff]
    %v84 = vld [vmem:[%s1 + $0x1b8] sm:$0xff]
    %v85 = vld [vmem:[%s1 + $0x1c0] sm:$0xff]
    %v86 = vld [vmem:[%s1 + $0x1c8] sm:$0xff]
    %v87 = vld [vmem:[%s1 + $0x1d0] sm:$0xff]
    %v88 = vld [vmem:[%s1 + $0x1d8] sm:$0xff]
    %v89 = vld [vmem:[%s1 + $0x1e0] sm:$0xff]
    %v90 = vld [vmem:[%s1 + $0x1e8] sm:$0xff]
    %v91 = vld [vmem:[%s1 + $0x1f0] sm:$0xff]
    %v92 = vld [vmem:[%s1 + $0x1f8] sm:$0xff]
    %v93 = vld [vmem:[%s1 + $0x200] sm:$0xff]
    %v94 = vld [vmem:[%s1 + $0x208] sm:$0xff]
    %v95 = vld [vmem:[%s1 + $0x210] sm:$0xff]
    %v96 = vld [vmem:[%s1 + $0x218] sm:$0xff]
    %v97 = vld [vmem:[%s1 + $0x220] sm:$0xff]
    %v98 = vld [vmem:[%s1 + $0x228] sm:$0xff]
    %v99 = vld [vmem:[%s1 + $0x230] sm:$0xff]
    %v100 = vld [vmem:[%s1 + $0x238] sm:$0xff]
    %v101 = vld [vmem:[%s1 + $0x240] sm:$0xff]
    %v102 = vld [vmem:[%s1 + $0x248] sm:$0xff]
    %v103 = vld [vmem:[%s1 + $0x250] sm:$0xff]
    %v104 = vld [vmem:[%s1 + $0x258] sm:$0xff]
    %v105 = vld [vmem:[%s1 + $0x260] sm:$0xff]
    %v106 = vld [vmem:[%s1 + $0x268] sm:$0xff]
    %v107 = vld [vmem:[%s1 + $0x270] sm:$0xff]
    %v108 = vld [vmem:[%s1 + $0x278] sm:$0xff]
    %v109 = vld [vmem:[%s1 + $0x280] sm:$0xff]
    %v110 = vld [vmem:[%s1 + $0x288] sm:$0xff]
    %v111 = vld [vmem:[%s1 + $0x290] sm:$0xff]
    %v112 = vld [vmem:[%s1 + $0x298] sm:$0xff]
    %v113 = vld [vmem:[%s1 + $0x2a0] sm:$0xff]
    %v114 = vld [vmem:[%s1 + $0x2a8] sm:$0xff]
    %v115 = vld [vmem:[%s1 + $0x2b0] sm:$0xff]
    %v116 = vld [vmem:[%s1 + $0x2b8] sm:$0xff]
    %v117 = vld [vmem:[%s1 + $0x2c0] sm:$0xff]
    %v118 = vld [vmem:[%s1 + $0x2c8] sm:$0xff]
    %v119 = vld [vmem:[%s1 + $0x2d0] sm:$0xff]
    %v120 = vld [vmem:[%s1 + $0x2d8] sm:$0xff]
    %v121 = vld [vmem:[%s1 + $0x2e0] sm:$0xff]
    %v122 = vld [vmem:[%s1 + $0x2e8] sm:$0xff]
    %v123 = vld [vmem:[%s1 + $0x2f0] sm:$0xff]
    %v124 = vld [vmem:[%s1 + $0x2f8] sm:$0xff]
    %v125 = vld [vmem:[%s1 + $0x300] sm:$0xff]
    %v126 = vld [vmem:[%s1 + $0x308] sm:$0xff]
    %v127 = vld [vmem:[%s1 + $0x310] sm:$0xff]
    %v128 = vld [vmem:[%s1 + $0x318] sm:$0xff]
    %v129 = vld [vmem:[%s1 + $0x320] sm:$0xff]
    %v130 = vld [vmem:[%s1 + $0x328] sm:$0xff]
    %v131 = vld [vmem:[%s1 + $0x330] sm:$0xff]
    %v132 = vld [vmem:[%s1 + $0x338] sm:$0xff]
    %v133 = vld [vmem:[%s1 + $0x340] sm:$0xff]
    %v134 = vld [vmem:[%s1 + $0x348] sm:$0xff]
    %v135 = vld [vmem:[%s1 + $0x350] sm:$0xff]
    %v136 = vld [vmem:[%s1 + $0x358] sm:$0xff]
    %v137 = vld [vmem:[%s1 + $0x360] sm:$0xff]
    %v138 = vld [vmem:[%s1 + $0x368] sm:$0xff]
    %v139 = vld [vmem:[%s1 + $0x370] sm:$0xff]
    %v140 = vld [vmem:[%s1 + $0x378] sm:$0xff]
    %v141 = vld [vmem:[%s1 + $0x380] sm:$0xff]
    %v142 = vld [vmem:[%s1 + $0x388] sm:$0xff]
    %v143 = vld [vmem:[%s1 + $0x390] sm:$0xff]
    %v144 = vld [vmem:[%s1 + $0x398] sm:$0xff]
    %v145 = vld [vmem:[%s1 + $0x3a0] sm:$0xff]
    %v146 = vld [vmem:[%s1 + $0x3a8] sm:$0xff]
    %v147 = vld [vmem:[%s1 + $0x3b0] sm:$0xff]
    %v148 = vld [vmem:[%s1 + $0x3b8] sm:$0xff]
    %v149 = vld [vmem:[%s1 + $0x3c0] sm:$0xff]
    %v150 = vld [vmem:[%s1 + $0x3c8] sm:$0xff]
    %v151 = vld [vmem:[%s1 + $0x3d0] sm:$0xff]
    %v152 = vld [vmem:[%s1 + $0x3d8] sm:$0xff]
    %v153 = vld [vmem:[%s1 + $0x3e0] sm:$0xff]
    %v154 = vld [vmem:[%s1 + $0x3e8] sm:$0xff]
    %v155 = vld [vmem:[%s1 + $0x3f0] sm:$0xff]
    %v156 = vld [vmem:[%s1 + $0x3f8] sm:$0xff]
    %v157 = vld [vmem:[%s1 + $0x400] sm:$0xff]
    %v158 = vld [vmem:[%s1 + $0x408] sm:$0xff]
    %v159 = vld [vmem:[%s1 + $0x410] sm:$0xff]
    %v160 = vld [vmem:[%s1 + $0x418] sm:$0xff]
    %v161 = vld [vmem:[%s1 + $0x420] sm:$0xff]
    %v162 = vld [vmem:[%s1 + $0x428] sm:$0xff]
    %v163 = vld [vmem:[%s1 + $0x430] sm:$0xff]
    %v164 = vld [vmem:[%s1 + $0x438] sm:$0xff]
    %v165 = vld [vmem:[%s1 + $0x440] sm:$0xff]
    %v166 = vld [vmem:[%s1 + $0x448] sm:$0xff]
    %v167 = vld [vmem:[%s1 + $0x450] sm:$0xff]
    %v168 = vld [vmem:[%s1 + $0x458] sm:$0xff]
    %v169 = vld [vmem:[%s1 + $0x460] sm:$0xff]
    %v170 = vld [vmem:[%s1 + $0x468] sm:$0xff]
    %v171 = vld [vmem:[%s1 + $0x470] sm:$0xff]
    %v172 = vld [vmem:[%s1 + $0x478] sm:$0xff]
    %v173 = vld [vmem:[%s1 + $0x480] sm:$0xff]
    %v174 = vld [vmem:[%s1 + $0x488] sm:$0xff]
    %v175 = vld [vmem:[%s1 + $0x490] sm:$0xff]
    %v176 = vld [vmem:[%s1 + $0x498] sm:$0xff]
    %v177 = vld [vmem:[%s1 + $0x4a0] sm:$0xff]
    %v178 = vld [vmem:[%s1 + $0x4a8] sm:$0xff]
    %v179 = vld [vmem:[%s1 + $0x4b0] sm:$0xff]
    %v180 = vld [vmem:[%s1 + $0x4b8] sm:$0xff]
    %v181 = vld [vmem:[%s1 + $0x4c0] sm:$0xff]
    %v182 = vld [vmem:[%s1 + $0x4c8] sm:$0xff]
    %v183 = vld [vmem:[%s1 + $0x4d0] sm:$0xff]
    %v184 = vld [vmem:[%s1 + $0x4d8] sm:$0xff]
    %v185 = vld [vmem:[%s1 + $0x4e0] sm:$0xff]
    %v186 = vld [vmem:[%s1 + $0x4e8] sm:$0xff]
    %v187 = vld [vmem:[%s1 + $0x4f0] sm:$0xff]
    %v188 = vld [vmem:[%s1 + $0x4f8] sm:$0xff]
    %v189 = vld [vmem:[%s1 + $0x500] sm:$0xff]
    %v190 = vld [vmem:[%s1 + $0x508] sm:$0xff]
    %v191 = vld [vmem:[%s1 + $0x510] sm:$0xff]
    %v192 = vld [vmem:[%s1 + $0x518] sm:$0xff]
    %v193 = vld [vmem:[%s1 + $0x520] sm:$0xff]
    %v194 = vld [vmem:[%s1 + $0x528] sm:$0xff]
    %v195 = vld [vmem:[%s1 + $0x530] sm:$0xff]
    %v196 = vld [vmem:[%s1 + $0x538] sm:$0xff]
    %v197 = vld [vmem:[%s1 + $0x540] sm:$0xff]
    %v198 = vld [vmem:[%s1 + $0x548] sm:$0xff]
    %v199 = vld [vmem:[%s1 + $0x550] sm:$0xff]
    %v200 = vld [vmem:[%s1 + $0x558] sm:$0xff]
    %v201 = vld [vmem:[%s1 + $0x560] sm:$0xff]
    %v202 = vld [vmem:[%s1 + $0x568] sm:$0xff]
    %v203 = vld [vmem:[%s1 + $0x570] sm:$0xff]
    %v204 = vld [vmem:[%s1 + $0x578] sm:$0xff]
    %v205 = vld [vmem:[%s1 + $0x580] sm:$0xff]
    %v206 = vld [vmem:[%s1 + $0x588] sm:$0xff]
    %v207 = vld [vmem:[%s1 + $0x590] sm:$0xff]
    %v208 = vld [vmem:[%s1 + $0x598] sm:$0xff]
    %v209 = vld [vmem:[%s1 + $0x5a0] sm:$0xff]
    %v210 = vld [vmem:[%s1 + $0x5a8] sm:$0xff]
    %v211 = vld [vmem:[%s1 + $0x5b0] sm:$0xff]
    %v212 = vld [vmem:[%s1 + $0x5b8] sm:$0xff]
    %v213 = vld [vmem:[%s1 + $0x5c0] sm:$0xff]
    %v214 = vld [vmem:[%s1 + $0x5c8] sm:$0xff]
    %v215 = vld [vmem:[%s1 + $0x5d0] sm:$0xff]
    %v216 = vld [vmem:[%s1 + $0x5d8] sm:$0xff]
    %v217 = vld [vmem:[%s1 + $0x5e0] sm:$0xff]
    %v218 = vld [vmem:[%s1 + $0x5e8] sm:$0xff]
    %v219 = vld [vmem:[%s1 + $0x5f0] sm:$0xff]
    %v220 = vld [vmem:[%s1 + $0x5f8] sm:$0xff]
    %v221 = vld [vmem:[%s1 + $0x600] sm:$0xff]
    %v222 = vld [vmem:[%s1 + $0x608] sm:$0xff]
    %v223 = vld [vmem:[%s1 + $0x610] sm:$0xff]
    %v224 = vld [vmem:[%s1 + $0x618] sm:$0xff]
    %v225 = vld [vmem:[%s1 + $0x620] sm:$0xff]
    %v226 = vld [vmem:[%s1 + $0x628] sm:$0xff]
    %v227 = vld [vmem:[%s1 + $0x630] sm:$0xff]
    %v228 = vld [vmem:[%s1 + $0x638] sm:$0xff]
    %v229 = vld [vmem:[%s1 + $0x640] sm:$0xff]
    %v230 = vld [vmem:[%s1 + $0x648] sm:$0xff]
    %v231 = vld [vmem:[%s1 + $0x650] sm:$0xff]
    %v232 = vld [vmem:[%s1 + $0x658] sm:$0xff]
    %v233 = vld [vmem:[%s1 + $0x660] sm:$0xff]
    %v234 = vld [vmem:[%s1 + $0x668] sm:$0xff]
    %v235 = vld [vmem:[%s1 + $0x670] sm:$0xff]
    %v236 = vld [vmem:[%s1 + $0x678] sm:$0xff]
    %v237 = vld [vmem:[%s1 + $0x680] sm:$0xff]
    %v238 = vld [vmem:[%s1 + $0x688] sm:$0xff]
    %v239 = vld [vmem:[%s1 + $0x690] sm:$0xff]
    %v240 = vld [vmem:[%s1 + $0x698] sm:$0xff]
    %v241 = vld [vmem:[%s1 + $0x6a0] sm:$0xff]
    %v242 = vld [vmem:[%s1 + $0x6a8] sm:$0xff]
    %v243 = vld [vmem:[%s1 + $0x6b0] sm:$0xff]
    %v244 = vld [vmem:[%s1 + $0x6b8] sm:$0xff]
    %v245 = vld [vmem:[%s1 + $0x6c0] sm:$0xff]
    %v246 = vld [vmem:[%s1 + $0x6c8] sm:$0xff]
    %v247 = vld [vmem:[%s1 + $0x6d0] sm:$0xff]
    %v248 = vld [vmem:[%s1 + $0x6d8] sm:$0xff]
    %v249 = vld [vmem:[%s1 + $0x6e0] sm:$0xff]
    %v250 = vld [vmem:[%s1 + $0x6e8] sm:$0xff]
    %v251 = vld [vmem:[%s1 + $0x6f0] sm:$0xff]
    %v252 = vld [vmem:[%s1 + $0x6f8] sm:$0xff]
    %v253 = vld [vmem:[%s1 + $0x700] sm:$0xff]
    %v254 = vld [vmem:[%s1 + $0x708] sm:$0xff]
    %v255 = vld [vmem:[%s1 + $0x710] sm:$0xff]
    %v256 = vld [vmem:[%s1 + $0x718] sm:$0xff]
    %v257 = vld [vmem:[%s1 + $0x720] sm:$0xff]
    %v258 = vld [vmem:[%s1 + $0x728] sm:$0xff]
    %v259 = vld [vmem:[%s1 + $0x730] sm:$0xff]
    %v260 = vld [vmem:[%s1 + $0x738] sm:$0xff]
    %v261 = vld [vmem:[%s1 + $0x740] sm:$0xff]
    %v262 = vld [vmem:[%s1 + $0x748] sm:$0xff]
    %v263 = vld [vmem:[%s1 + $0x750] sm:$0xff]
    %v264 = vld [vmem:[%s1 + $0x758] sm:$0xff]
    %v265 = vld [vmem:[%s1 + $0x760] sm:$0xff]
    %v266 = vld [vmem:[%s1 + $0x768] sm:$0xff]
    %v267 = vld [vmem:[%s1 + $0x770] sm:$0xff]
    %v268 = vld [vmem:[%s1 + $0x778] sm:$0xff]
    %v269 = vld [vmem:[%s1 + $0x780] sm:$0xff]
    %v270 = vld [vmem:[%s1 + $0x788] sm:$0xff]
    %v271 = vld [vmem:[%s1 + $0x790] sm:$0xff]
    %v272 = vld [vmem:[%s1 + $0x798] sm:$0xff]
    %v273 = vld [vmem:[%s1 + $0x7a0] sm:$0xff]
    %v274 = vld [vmem:[%s1 + $0x7a8] sm:$0xff]
    %v275 = vld [vmem:[%s1 + $0x7b0] sm:$0xff]
    %v276 = vld [vmem:[%s1 + $0x7b8] sm:$0xff]
    %v277 = vld [vmem:[%s1 + $0x7c0] sm:$0xff]
    %v278 = vld [vmem:[%s1 + $0x7c8] sm:$0xff]
    %v279 = vld [vmem:[%s1 + $0x7d0] sm:$0xff]
    %v280 = vld [vmem:[%s1 + $0x7d8] sm:$0xff]
    %v281 = vld [vmem:[%s1 + $0x7e0] sm:$0xff]
    %v282 = vld [vmem:[%s1 + $0x7e8] sm:$0xff]
    %v283 = vld [vmem:[%s1 + $0x7f0] sm:$0xff]
    %v284 = vld [vmem:[%s1 + $0x7f8] sm:$0xff]
    %v285 = vld [vmem:[%s2] sm:$0xf]
    %v287 = vlaneseq
    %v288 = vshrl.u32 %v287, 7
    %v289 = vsub.s32 0, %v288
    %v290 = vrot.slane %v285, %v289
    %v291 = vlaneseq
    %v292 = vshrl.u32 %v291, 7
    %v293 = vsub.s32 1, %v292
    %v294 = vrot.slane %v285, %v293
    %v295 = vlaneseq
    %v296 = vshrl.u32 %v295, 7
    %v297 = vsub.s32 2, %v296
    %v298 = vrot.slane %v285, %v297
    %v299 = vlaneseq
    %v300 = vshrl.u32 %v299, 7
    %v301 = vsub.s32 3, %v300
    %v302 = vrot.slane %v285, %v301
    %v308 = vcombine.high %v28, %v28
    %v310 = vunpack.c.l.s4 1966171168
    %v311 = vunpack.c.0.s8 %v310
    %v312 = vlaneseq
    %v313 = vshrl.u32 %v312, 7
    %v314 = vsub.s32 %v311, %v313
    %v315 = vrot.slane %v28, %v314
    %v317 = vunpack.c.l.s4 1966171168
    %v318 = vunpack.c.0.s8 %v317
    %v319 = vlaneseq
    %v320 = vshrl.u32 %v319, 7
    %v321 = vsub.s32 %v318, %v320
    %v322 = vrot.slane %v308, %v321
    %v323 = vcombine.high %v315, %v315
    %v324 = vcombine.high %v322, %v322
    %v326 = vunpack.c.l.s4 1966171168
    %v327 = vunpack.c.0.s8 %v326
    %v328 = vlaneseq
    %v329 = vshrl.u32 %v328, 7
    %v330 = vsub.s32 %v327, %v329
    %v331 = vrot.slane %v315, %v330
    %v333 = vunpack.c.l.s4 1966171168
    %v334 = vunpack.c.0.s8 %v333
    %v335 = vlaneseq
    %v336 = vshrl.u32 %v335, 7
    %v337 = vsub.s32 %v334, %v336
    %v338 = vrot.slane %v322, %v337
    %v340 = vunpack.c.l.s4 1966171168
    %v341 = vunpack.c.0.s8 %v340
    %v342 = vlaneseq
    %v343 = vshrl.u32 %v342, 7
    %v344 = vsub.s32 %v341, %v343
    %v345 = vrot.slane %v323, %v344
    %v347 = vunpack.c.l.s4 1966171168
    %v348 = vunpack.c.0.s8 %v347
    %v349 = vlaneseq
    %v350 = vshrl.u32 %v349, 7
    %v351 = vsub.s32 %v348, %v350
    %v352 = vrot.slane %v324, %v351
    %v353 = vcombine.high %v331, %v331
    %v354 = vcombine.high %v338, %v338
    %v355 = vcombine.high %v345, %v345
    %v356 = vcombine.high %v352, %v352
    %v621 = vunpack.c.l.b16 %v29
    %v622 = vunpack.c.h.b16 %v29
    %v623 = vunpack.c.l.b16 %v30
    %v624 = vunpack.c.h.b16 %v30
    %v625 = vunpack.c.l.b16 %v31
    %v626 = vunpack.c.h.b16 %v31
    %v627 = vunpack.c.l.b16 %v32
    %v628 = vunpack.c.h.b16 %v32
    %v629 = vunpack.c.l.b16 %v33
    %v630 = vunpack.c.h.b16 %v33
    %v631 = vunpack.c.l.b16 %v34
    %v632 = vunpack.c.h.b16 %v34
    %v633 = vunpack.c.l.b16 %v35
    %v634 = vunpack.c.h.b16 %v35
    %v635 = vunpack.c.l.b16 %v36
    %v636 = vunpack.c.h.b16 %v36
    %v637 = vunpack.c.l.b16 %v37
    %v638 = vunpack.c.h.b16 %v37
    %v639 = vunpack.c.l.b16 %v38
    %v640 = vunpack.c.h.b16 %v38
    %v641 = vunpack.c.l.b16 %v39
    %v642 = vunpack.c.h.b16 %v39
    %v643 = vunpack.c.l.b16 %v40
    %v644 = vunpack.c.h.b16 %v40
    %v645 = vunpack.c.l.b16 %v41
    %v646 = vunpack.c.h.b16 %v41
    %v647 = vunpack.c.l.b16 %v42
    %v648 = vunpack.c.h.b16 %v42
    %v649 = vunpack.c.l.b16 %v43
    %v650 = vunpack.c.h.b16 %v43
    %v651 = vunpack.c.l.b16 %v44
    %v652 = vunpack.c.h.b16 %v44
    %v653 = vunpack.c.l.b16 %v45
    %v654 = vunpack.c.h.b16 %v45
    %v655 = vunpack.c.l.b16 %v46
    %v656 = vunpack.c.h.b16 %v46
    %v657 = vunpack.c.l.b16 %v47
    %v658 = vunpack.c.h.b16 %v47
    %v659 = vunpack.c.l.b16 %v48
    %v660 = vunpack.c.h.b16 %v48
    %v661 = vunpack.c.l.b16 %v49
    %v662 = vunpack.c.h.b16 %v49
    %v663 = vunpack.c.l.b16 %v50
    %v664 = vunpack.c.h.b16 %v50
    %v665 = vunpack.c.l.b16 %v51
    %v666 = vunpack.c.h.b16 %v51
    %v667 = vunpack.c.l.b16 %v52
    %v668 = vunpack.c.h.b16 %v52
    %v669 = vunpack.c.l.b16 %v53
    %v670 = vunpack.c.h.b16 %v53
    %v671 = vunpack.c.l.b16 %v54
    %v672 = vunpack.c.h.b16 %v54
    %v673 = vunpack.c.l.b16 %v55
    %v674 = vunpack.c.h.b16 %v55
    %v675 = vunpack.c.l.b16 %v56
    %v676 = vunpack.c.h.b16 %v56
    %v677 = vunpack.c.l.b16 %v57
    %v678 = vunpack.c.h.b16 %v57
    %v679 = vunpack.c.l.b16 %v58
    %v680 = vunpack.c.h.b16 %v58
    %v681 = vunpack.c.l.b16 %v59
    %v682 = vunpack.c.h.b16 %v59
    %v683 = vunpack.c.l.b16 %v60
    %v684 = vunpack.c.h.b16 %v60
    %v685 = vunpack.c.l.b16 %v61
    %v686 = vunpack.c.h.b16 %v61
    %v687 = vunpack.c.l.b16 %v62
    %v688 = vunpack.c.h.b16 %v62
    %v689 = vunpack.c.l.b16 %v63
    %v690 = vunpack.c.h.b16 %v63
    %v691 = vunpack.c.l.b16 %v64
    %v692 = vunpack.c.h.b16 %v64
    %v693 = vunpack.c.l.b16 %v65
    %v694 = vunpack.c.h.b16 %v65
    %v695 = vunpack.c.l.b16 %v66
    %v696 = vunpack.c.h.b16 %v66
    %v697 = vunpack.c.l.b16 %v67
    %v698 = vunpack.c.h.b16 %v67
    %v699 = vunpack.c.l.b16 %v68
    %v700 = vunpack.c.h.b16 %v68
    %v701 = vunpack.c.l.b16 %v69
    %v702 = vunpack.c.h.b16 %v69
    %v703 = vunpack.c.l.b16 %v70
    %v704 = vunpack.c.h.b16 %v70
    %v705 = vunpack.c.l.b16 %v71
    %v706 = vunpack.c.h.b16 %v71
    %v707 = vunpack.c.l.b16 %v72
    %v708 = vunpack.c.h.b16 %v72
    %v709 = vunpack.c.l.b16 %v73
    %v710 = vunpack.c.h.b16 %v73
    %v711 = vunpack.c.l.b16 %v74
    %v712 = vunpack.c.h.b16 %v74
    %v713 = vunpack.c.l.b16 %v75
    %v714 = vunpack.c.h.b16 %v75
    %v715 = vunpack.c.l.b16 %v76
    %v716 = vunpack.c.h.b16 %v76
    %v717 = vunpack.c.l.b16 %v77
    %v718 = vunpack.c.h.b16 %v77
    %v719 = vunpack.c.l.b16 %v78
    %v720 = vunpack.c.h.b16 %v78
    %v721 = vunpack.c.l.b16 %v79
    %v722 = vunpack.c.h.b16 %v79
    %v723 = vunpack.c.l.b16 %v80
    %v724 = vunpack.c.h.b16 %v80
    %v725 = vunpack.c.l.b16 %v81
    %v726 = vunpack.c.h.b16 %v81
    %v727 = vunpack.c.l.b16 %v82
    %v728 = vunpack.c.h.b16 %v82
    %v729 = vunpack.c.l.b16 %v83
    %v730 = vunpack.c.h.b16 %v83
    %v731 = vunpack.c.l.b16 %v84
    %v732 = vunpack.c.h.b16 %v84
    %v733 = vunpack.c.l.b16 %v85
    %v734 = vunpack.c.h.b16 %v85
    %v735 = vunpack.c.l.b16 %v86
    %v736 = vunpack.c.h.b16 %v86
    %v737 = vunpack.c.l.b16 %v87
    %v738 = vunpack.c.h.b16 %v87
    %v739 = vunpack.c.l.b16 %v88
    %v740 = vunpack.c.h.b16 %v88
    %v741 = vunpack.c.l.b16 %v89
    %v742 = vunpack.c.h.b16 %v89
    %v743 = vunpack.c.l.b16 %v90
    %v744 = vunpack.c.h.b16 %v90
    %v745 = vunpack.c.l.b16 %v91
    %v746 = vunpack.c.h.b16 %v91
    %v747 = vunpack.c.l.b16 %v92
    %v748 = vunpack.c.h.b16 %v92
    %v749 = vunpack.c.l.b16 %v93
    %v750 = vunpack.c.h.b16 %v93
    %v751 = vunpack.c.l.b16 %v94
    %v752 = vunpack.c.h.b16 %v94
    %v753 = vunpack.c.l.b16 %v95
    %v754 = vunpack.c.h.b16 %v95
    %v755 = vunpack.c.l.b16 %v96
    %v756 = vunpack.c.h.b16 %v96
    %v757 = vunpack.c.l.b16 %v97
    %v758 = vunpack.c.h.b16 %v97
    %v759 = vunpack.c.l.b16 %v98
    %v760 = vunpack.c.h.b16 %v98
    %v761 = vunpack.c.l.b16 %v99
    %v762 = vunpack.c.h.b16 %v99
    %v763 = vunpack.c.l.b16 %v100
    %v764 = vunpack.c.h.b16 %v100
    %v765 = vunpack.c.l.b16 %v101
    %v766 = vunpack.c.h.b16 %v101
    %v767 = vunpack.c.l.b16 %v102
    %v768 = vunpack.c.h.b16 %v102
    %v769 = vunpack.c.l.b16 %v103
    %v770 = vunpack.c.h.b16 %v103
    %v771 = vunpack.c.l.b16 %v104
    %v772 = vunpack.c.h.b16 %v104
    %v773 = vunpack.c.l.b16 %v105
    %v774 = vunpack.c.h.b16 %v105
    %v775 = vunpack.c.l.b16 %v106
    %v776 = vunpack.c.h.b16 %v106
    %v777 = vunpack.c.l.b16 %v107
    %v778 = vunpack.c.h.b16 %v107
    %v779 = vunpack.c.l.b16 %v108
    %v780 = vunpack.c.h.b16 %v108
    %v781 = vunpack.c.l.b16 %v109
    %v782 = vunpack.c.h.b16 %v109
    %v783 = vunpack.c.l.b16 %v110
    %v784 = vunpack.c.h.b16 %v110
    %v785 = vunpack.c.l.b16 %v111
    %v786 = vunpack.c.h.b16 %v111
    %v787 = vunpack.c.l.b16 %v112
    %v788 = vunpack.c.h.b16 %v112
    %v789 = vunpack.c.l.b16 %v113
    %v790 = vunpack.c.h.b16 %v113
    %v791 = vunpack.c.l.b16 %v114
    %v792 = vunpack.c.h.b16 %v114
    %v793 = vunpack.c.l.b16 %v115
    %v794 = vunpack.c.h.b16 %v115
    %v795 = vunpack.c.l.b16 %v116
    %v796 = vunpack.c.h.b16 %v116
    %v797 = vunpack.c.l.b16 %v117
    %v798 = vunpack.c.h.b16 %v117
    %v799 = vunpack.c.l.b16 %v118
    %v800 = vunpack.c.h.b16 %v118
    %v801 = vunpack.c.l.b16 %v119
    %v802 = vunpack.c.h.b16 %v119
    %v803 = vunpack.c.l.b16 %v120
    %v804 = vunpack.c.h.b16 %v120
    %v805 = vunpack.c.l.b16 %v121
    %v806 = vunpack.c.h.b16 %v121
    %v807 = vunpack.c.l.b16 %v122
    %v808 = vunpack.c.h.b16 %v122
    %v809 = vunpack.c.l.b16 %v123
    %v810 = vunpack.c.h.b16 %v123
    %v811 = vunpack.c.l.b16 %v124
    %v812 = vunpack.c.h.b16 %v124
    %v813 = vunpack.c.l.b16 %v125
    %v814 = vunpack.c.h.b16 %v125
    %v815 = vunpack.c.l.b16 %v126
    %v816 = vunpack.c.h.b16 %v126
    %v817 = vunpack.c.l.b16 %v127
    %v818 = vunpack.c.h.b16 %v127
    %v819 = vunpack.c.l.b16 %v128
    %v820 = vunpack.c.h.b16 %v128
    %v821 = vunpack.c.l.b16 %v129
    %v822 = vunpack.c.h.b16 %v129
    %v823 = vunpack.c.l.b16 %v130
    %v824 = vunpack.c.h.b16 %v130
    %v825 = vunpack.c.l.b16 %v131
    %v826 = vunpack.c.h.b16 %v131
    %v827 = vunpack.c.l.b16 %v132
    %v828 = vunpack.c.h.b16 %v132
    %v829 = vunpack.c.l.b16 %v133
    %v830 = vunpack.c.h.b16 %v133
    %v831 = vunpack.c.l.b16 %v134
    %v832 = vunpack.c.h.b16 %v134
    %v833 = vunpack.c.l.b16 %v135
    %v834 = vunpack.c.h.b16 %v135
    %v835 = vunpack.c.l.b16 %v136
    %v836 = vunpack.c.h.b16 %v136
    %v837 = vunpack.c.l.b16 %v137
    %v838 = vunpack.c.h.b16 %v137
    %v839 = vunpack.c.l.b16 %v138
    %v840 = vunpack.c.h.b16 %v138
    %v841 = vunpack.c.l.b16 %v139
    %v842 = vunpack.c.h.b16 %v139
    %v843 = vunpack.c.l.b16 %v140
    %v844 = vunpack.c.h.b16 %v140
    %v845 = vunpack.c.l.b16 %v141
    %v846 = vunpack.c.h.b16 %v141
    %v847 = vunpack.c.l.b16 %v142
    %v848 = vunpack.c.h.b16 %v142
    %v849 = vunpack.c.l.b16 %v143
    %v850 = vunpack.c.h.b16 %v143
    %v851 = vunpack.c.l.b16 %v144
    %v852 = vunpack.c.h.b16 %v144
    %v853 = vunpack.c.l.b16 %v145
    %v854 = vunpack.c.h.b16 %v145
    %v855 = vunpack.c.l.b16 %v146
    %v856 = vunpack.c.h.b16 %v146
    %v857 = vunpack.c.l.b16 %v147
    %v858 = vunpack.c.h.b16 %v147
    %v859 = vunpack.c.l.b16 %v148
    %v860 = vunpack.c.h.b16 %v148
    %v861 = vunpack.c.l.b16 %v149
    %v862 = vunpack.c.h.b16 %v149
    %v863 = vunpack.c.l.b16 %v150
    %v864 = vunpack.c.h.b16 %v150
    %v865 = vunpack.c.l.b16 %v151
    %v866 = vunpack.c.h.b16 %v151
    %v867 = vunpack.c.l.b16 %v152
    %v868 = vunpack.c.h.b16 %v152
    %v869 = vunpack.c.l.b16 %v153
    %v870 = vunpack.c.h.b16 %v153
    %v871 = vunpack.c.l.b16 %v154
    %v872 = vunpack.c.h.b16 %v154
    %v873 = vunpack.c.l.b16 %v155
    %v874 = vunpack.c.h.b16 %v155
    %v875 = vunpack.c.l.b16 %v156
    %v876 = vunpack.c.h.b16 %v156
    %v877 = vunpack.c.l.b16 %v157
    %v878 = vunpack.c.h.b16 %v157
    %v879 = vunpack.c.l.b16 %v158
    %v880 = vunpack.c.h.b16 %v158
    %v881 = vunpack.c.l.b16 %v159
    %v882 = vunpack.c.h.b16 %v159
    %v883 = vunpack.c.l.b16 %v160
    %v884 = vunpack.c.h.b16 %v160
    %v885 = vunpack.c.l.b16 %v161
    %v886 = vunpack.c.h.b16 %v161
    %v887 = vunpack.c.l.b16 %v162
    %v888 = vunpack.c.h.b16 %v162
    %v889 = vunpack.c.l.b16 %v163
    %v890 = vunpack.c.h.b16 %v163
    %v891 = vunpack.c.l.b16 %v164
    %v892 = vunpack.c.h.b16 %v164
    %v893 = vunpack.c.l.b16 %v165
    %v894 = vunpack.c.h.b16 %v165
    %v895 = vunpack.c.l.b16 %v166
    %v896 = vunpack.c.h.b16 %v166
    %v897 = vunpack.c.l.b16 %v167
    %v898 = vunpack.c.h.b16 %v167
    %v899 = vunpack.c.l.b16 %v168
    %v900 = vunpack.c.h.b16 %v168
    %v901 = vunpack.c.l.b16 %v169
    %v902 = vunpack.c.h.b16 %v169
    %v903 = vunpack.c.l.b16 %v170
    %v904 = vunpack.c.h.b16 %v170
    %v905 = vunpack.c.l.b16 %v171
    %v906 = vunpack.c.h.b16 %v171
    %v907 = vunpack.c.l.b16 %v172
    %v908 = vunpack.c.h.b16 %v172
    %v909 = vunpack.c.l.b16 %v173
    %v910 = vunpack.c.h.b16 %v173
    %v911 = vunpack.c.l.b16 %v174
    %v912 = vunpack.c.h.b16 %v174
    %v913 = vunpack.c.l.b16 %v175
    %v914 = vunpack.c.h.b16 %v175
    %v915 = vunpack.c.l.b16 %v176
    %v916 = vunpack.c.h.b16 %v176
    %v917 = vunpack.c.l.b16 %v177
    %v918 = vunpack.c.h.b16 %v177
    %v919 = vunpack.c.l.b16 %v178
    %v920 = vunpack.c.h.b16 %v178
    %v921 = vunpack.c.l.b16 %v179
    %v922 = vunpack.c.h.b16 %v179
    %v923 = vunpack.c.l.b16 %v180
    %v924 = vunpack.c.h.b16 %v180
    %v925 = vunpack.c.l.b16 %v181
    %v926 = vunpack.c.h.b16 %v181
    %v927 = vunpack.c.l.b16 %v182
    %v928 = vunpack.c.h.b16 %v182
    %v929 = vunpack.c.l.b16 %v183
    %v930 = vunpack.c.h.b16 %v183
    %v931 = vunpack.c.l.b16 %v184
    %v932 = vunpack.c.h.b16 %v184
    %v933 = vunpack.c.l.b16 %v185
    %v934 = vunpack.c.h.b16 %v185
    %v935 = vunpack.c.l.b16 %v186
    %v936 = vunpack.c.h.b16 %v186
    %v937 = vunpack.c.l.b16 %v187
    %v938 = vunpack.c.h.b16 %v187
    %v939 = vunpack.c.l.b16 %v188
    %v940 = vunpack.c.h.b16 %v188
    %v941 = vunpack.c.l.b16 %v189
    %v942 = vunpack.c.h.b16 %v189
    %v943 = vunpack.c.l.b16 %v190
    %v944 = vunpack.c.h.b16 %v190
    %v945 = vunpack.c.l.b16 %v191
    %v946 = vunpack.c.h.b16 %v191
    %v947 = vunpack.c.l.b16 %v192
    %v948 = vunpack.c.h.b16 %v192
    %v949 = vunpack.c.l.b16 %v193
    %v950 = vunpack.c.h.b16 %v193
    %v951 = vunpack.c.l.b16 %v194
    %v952 = vunpack.c.h.b16 %v194
    %v953 = vunpack.c.l.b16 %v195
    %v954 = vunpack.c.h.b16 %v195
    %v955 = vunpack.c.l.b16 %v196
    %v956 = vunpack.c.h.b16 %v196
    %v957 = vunpack.c.l.b16 %v197
    %v958 = vunpack.c.h.b16 %v197
    %v959 = vunpack.c.l.b16 %v198
    %v960 = vunpack.c.h.b16 %v198
    %v961 = vunpack.c.l.b16 %v199
    %v962 = vunpack.c.h.b16 %v199
    %v963 = vunpack.c.l.b16 %v200
    %v964 = vunpack.c.h.b16 %v200
    %v965 = vunpack.c.l.b16 %v201
    %v966 = vunpack.c.h.b16 %v201
    %v967 = vunpack.c.l.b16 %v202
    %v968 = vunpack.c.h.b16 %v202
    %v969 = vunpack.c.l.b16 %v203
    %v970 = vunpack.c.h.b16 %v203
    %v971 = vunpack.c.l.b16 %v204
    %v972 = vunpack.c.h.b16 %v204
    %v973 = vunpack.c.l.b16 %v205
    %v974 = vunpack.c.h.b16 %v205
    %v975 = vunpack.c.l.b16 %v206
    %v976 = vunpack.c.h.b16 %v206
    %v977 = vunpack.c.l.b16 %v207
    %v978 = vunpack.c.h.b16 %v207
    %v979 = vunpack.c.l.b16 %v208
    %v980 = vunpack.c.h.b16 %v208
    %v981 = vunpack.c.l.b16 %v209
    %v982 = vunpack.c.h.b16 %v209
    %v983 = vunpack.c.l.b16 %v210
    %v984 = vunpack.c.h.b16 %v210
    %v985 = vunpack.c.l.b16 %v211
    %v986 = vunpack.c.h.b16 %v211
    %v987 = vunpack.c.l.b16 %v212
    %v988 = vunpack.c.h.b16 %v212
    %v989 = vunpack.c.l.b16 %v213
    %v990 = vunpack.c.h.b16 %v213
    %v991 = vunpack.c.l.b16 %v214
    %v992 = vunpack.c.h.b16 %v214
    %v993 = vunpack.c.l.b16 %v215
    %v994 = vunpack.c.h.b16 %v215
    %v995 = vunpack.c.l.b16 %v216
    %v996 = vunpack.c.h.b16 %v216
    %v997 = vunpack.c.l.b16 %v217
    %v998 = vunpack.c.h.b16 %v217
    %v999 = vunpack.c.l.b16 %v218
    %v1000 = vunpack.c.h.b16 %v218
    %v1001 = vunpack.c.l.b16 %v219
    %v1002 = vunpack.c.h.b16 %v219
    %v1003 = vunpack.c.l.b16 %v220
    %v1004 = vunpack.c.h.b16 %v220
    %v1005 = vunpack.c.l.b16 %v221
    %v1006 = vunpack.c.h.b16 %v221
    %v1007 = vunpack.c.l.b16 %v222
    %v1008 = vunpack.c.h.b16 %v222
    %v1009 = vunpack.c.l.b16 %v223
    %v1010 = vunpack.c.h.b16 %v223
    %v1011 = vunpack.c.l.b16 %v224
    %v1012 = vunpack.c.h.b16 %v224
    %v1013 = vunpack.c.l.b16 %v225
    %v1014 = vunpack.c.h.b16 %v225
    %v1015 = vunpack.c.l.b16 %v226
    %v1016 = vunpack.c.h.b16 %v226
    %v1017 = vunpack.c.l.b16 %v227
    %v1018 = vunpack.c.h.b16 %v227
    %v1019 = vunpack.c.l.b16 %v228
    %v1020 = vunpack.c.h.b16 %v228
    %v1021 = vunpack.c.l.b16 %v229
    %v1022 = vunpack.c.h.b16 %v229
    %v1023 = vunpack.c.l.b16 %v230
    %v1024 = vunpack.c.h.b16 %v230
    %v1025 = vunpack.c.l.b16 %v231
    %v1026 = vunpack.c.h.b16 %v231
    %v1027 = vunpack.c.l.b16 %v232
    %v1028 = vunpack.c.h.b16 %v232
    %v1029 = vunpack.c.l.b16 %v233
    %v1030 = vunpack.c.h.b16 %v233
    %v1031 = vunpack.c.l.b16 %v234
    %v1032 = vunpack.c.h.b16 %v234
    %v1033 = vunpack.c.l.b16 %v235
    %v1034 = vunpack.c.h.b16 %v235
    %v1035 = vunpack.c.l.b16 %v236
    %v1036 = vunpack.c.h.b16 %v236
    %v1037 = vunpack.c.l.b16 %v237
    %v1038 = vunpack.c.h.b16 %v237
    %v1039 = vunpack.c.l.b16 %v238
    %v1040 = vunpack.c.h.b16 %v238
    %v1041 = vunpack.c.l.b16 %v239
    %v1042 = vunpack.c.h.b16 %v239
    %v1043 = vunpack.c.l.b16 %v240
    %v1044 = vunpack.c.h.b16 %v240
    %v1045 = vunpack.c.l.b16 %v241
    %v1046 = vunpack.c.h.b16 %v241
    %v1047 = vunpack.c.l.b16 %v242
    %v1048 = vunpack.c.h.b16 %v242
    %v1049 = vunpack.c.l.b16 %v243
    %v1050 = vunpack.c.h.b16 %v243
    %v1051 = vunpack.c.l.b16 %v244
    %v1052 = vunpack.c.h.b16 %v244
    %v1053 = vunpack.c.l.b16 %v245
    %v1054 = vunpack.c.h.b16 %v245
    %v1055 = vunpack.c.l.b16 %v246
    %v1056 = vunpack.c.h.b16 %v246
    %v1057 = vunpack.c.l.b16 %v247
    %v1058 = vunpack.c.h.b16 %v247
    %v1059 = vunpack.c.l.b16 %v248
    %v1060 = vunpack.c.h.b16 %v248
    %v1061 = vunpack.c.l.b16 %v249
    %v1062 = vunpack.c.h.b16 %v249
    %v1063 = vunpack.c.l.b16 %v250
    %v1064 = vunpack.c.h.b16 %v250
    %v1065 = vunpack.c.l.b16 %v251
    %v1066 = vunpack.c.h.b16 %v251
    %v1067 = vunpack.c.l.b16 %v252
    %v1068 = vunpack.c.h.b16 %v252
    %v1069 = vunpack.c.l.b16 %v253
    %v1070 = vunpack.c.h.b16 %v253
    %v1071 = vunpack.c.l.b16 %v254
    %v1072 = vunpack.c.h.b16 %v254
    %v1073 = vunpack.c.l.b16 %v255
    %v1074 = vunpack.c.h.b16 %v255
    %v1075 = vunpack.c.l.b16 %v256
    %v1076 = vunpack.c.h.b16 %v256
    %v1077 = vunpack.c.l.b16 %v257
    %v1078 = vunpack.c.h.b16 %v257
    %v1079 = vunpack.c.l.b16 %v258
    %v1080 = vunpack.c.h.b16 %v258
    %v1081 = vunpack.c.l.b16 %v259
    %v1082 = vunpack.c.h.b16 %v259
    %v1083 = vunpack.c.l.b16 %v260
    %v1084 = vunpack.c.h.b16 %v260
    %v1085 = vunpack.c.l.b16 %v261
    %v1086 = vunpack.c.h.b16 %v261
    %v1087 = vunpack.c.l.b16 %v262
    %v1088 = vunpack.c.h.b16 %v262
    %v1089 = vunpack.c.l.b16 %v263
    %v1090 = vunpack.c.h.b16 %v263
    %v1091 = vunpack.c.l.b16 %v264
    %v1092 = vunpack.c.h.b16 %v264
    %v1093 = vunpack.c.l.b16 %v265
    %v1094 = vunpack.c.h.b16 %v265
    %v1095 = vunpack.c.l.b16 %v266
    %v1096 = vunpack.c.h.b16 %v266
    %v1097 = vunpack.c.l.b16 %v267
    %v1098 = vunpack.c.h.b16 %v267
    %v1099 = vunpack.c.l.b16 %v268
    %v1100 = vunpack.c.h.b16 %v268
    %v1101 = vunpack.c.l.b16 %v269
    %v1102 = vunpack.c.h.b16 %v269
    %v1103 = vunpack.c.l.b16 %v270
    %v1104 = vunpack.c.h.b16 %v270
    %v1105 = vunpack.c.l.b16 %v271
    %v1106 = vunpack.c.h.b16 %v271
    %v1107 = vunpack.c.l.b16 %v272
    %v1108 = vunpack.c.h.b16 %v272
    %v1109 = vunpack.c.l.b16 %v273
    %v1110 = vunpack.c.h.b16 %v273
    %v1111 = vunpack.c.l.b16 %v274
    %v1112 = vunpack.c.h.b16 %v274
    %v1113 = vunpack.c.l.b16 %v275
    %v1114 = vunpack.c.h.b16 %v275
    %v1115 = vunpack.c.l.b16 %v276
    %v1116 = vunpack.c.h.b16 %v276
    %v1117 = vunpack.c.l.b16 %v277
    %v1118 = vunpack.c.h.b16 %v277
    %v1119 = vunpack.c.l.b16 %v278
    %v1120 = vunpack.c.h.b16 %v278
    %v1121 = vunpack.c.l.b16 %v279
    %v1122 = vunpack.c.h.b16 %v279
    %v1123 = vunpack.c.l.b16 %v280
    %v1124 = vunpack.c.h.b16 %v280
    %v1125 = vunpack.c.l.b16 %v281
    %v1126 = vunpack.c.h.b16 %v281
    %v1127 = vunpack.c.l.b16 %v282
    %v1128 = vunpack.c.h.b16 %v282
    %v1129 = vunpack.c.l.b16 %v283
    %v1130 = vunpack.c.h.b16 %v283
    %v1131 = vunpack.c.l.b16 %v284
    %v1132 = vunpack.c.h.b16 %v284
    %v1133 = vpack.c.b16 %v625, %v621
    %v1134 = vpack.c.b16 %v626, %v622
    %v1135 = vpack.c.b16 %v627, %v623
    %v1136 = vpack.c.b16 %v628, %v624
    %v1137 = vpack.c.b16 %v633, %v629
    %v1138 = vpack.c.b16 %v634, %v630
    %v1139 = vpack.c.b16 %v635, %v631
    %v1140 = vpack.c.b16 %v636, %v632
    %v1141 = vpack.c.b16 %v641, %v637
    %v1142 = vpack.c.b16 %v642, %v638
    %v1143 = vpack.c.b16 %v643, %v639
    %v1144 = vpack.c.b16 %v644, %v640
    %v1145 = vpack.c.b16 %v649, %v645
    %v1146 = vpack.c.b16 %v650, %v646
    %v1147 = vpack.c.b16 %v651, %v647
    %v1148 = vpack.c.b16 %v652, %v648
    %v1149 = vpack.c.b16 %v657, %v653
    %v1150 = vpack.c.b16 %v658, %v654
    %v1151 = vpack.c.b16 %v659, %v655
    %v1152 = vpack.c.b16 %v660, %v656
    %v1153 = vpack.c.b16 %v665, %v661
    %v1154 = vpack.c.b16 %v666, %v662
    %v1155 = vpack.c.b16 %v667, %v663
    %v1156 = vpack.c.b16 %v668, %v664
    %v1157 = vpack.c.b16 %v673, %v669
    %v1158 = vpack.c.b16 %v674, %v670
    %v1159 = vpack.c.b16 %v675, %v671
    %v1160 = vpack.c.b16 %v676, %v672
    %v1161 = vpack.c.b16 %v681, %v677
    %v1162 = vpack.c.b16 %v682, %v678
    %v1163 = vpack.c.b16 %v683, %v679
    %v1164 = vpack.c.b16 %v684, %v680
    %v1165 = vpack.c.b16 %v689, %v685
    %v1166 = vpack.c.b16 %v690, %v686
    %v1167 = vpack.c.b16 %v691, %v687
    %v1168 = vpack.c.b16 %v692, %v688
    %v1169 = vpack.c.b16 %v697, %v693
    %v1170 = vpack.c.b16 %v698, %v694
    %v1171 = vpack.c.b16 %v699, %v695
    %v1172 = vpack.c.b16 %v700, %v696
    %v1173 = vpack.c.b16 %v705, %v701
    %v1174 = vpack.c.b16 %v706, %v702
    %v1175 = vpack.c.b16 %v707, %v703
    %v1176 = vpack.c.b16 %v708, %v704
    %v1177 = vpack.c.b16 %v713, %v709
    %v1178 = vpack.c.b16 %v714, %v710
    %v1179 = vpack.c.b16 %v715, %v711
    %v1180 = vpack.c.b16 %v716, %v712
    %v1181 = vpack.c.b16 %v721, %v717
    %v1182 = vpack.c.b16 %v722, %v718
    %v1183 = vpack.c.b16 %v723, %v719
    %v1184 = vpack.c.b16 %v724, %v720
    %v1185 = vpack.c.b16 %v729, %v725
    %v1186 = vpack.c.b16 %v730, %v726
    %v1187 = vpack.c.b16 %v731, %v727
    %v1188 = vpack.c.b16 %v732, %v728
    %v1189 = vpack.c.b16 %v737, %v733
    %v1190 = vpack.c.b16 %v738, %v734
    %v1191 = vpack.c.b16 %v739, %v735
    %v1192 = vpack.c.b16 %v740, %v736
    %v1193 = vpack.c.b16 %v745, %v741
    %v1194 = vpack.c.b16 %v746, %v742
    %v1195 = vpack.c.b16 %v747, %v743
    %v1196 = vpack.c.b16 %v748, %v744
    %v1197 = vpack.c.b16 %v753, %v749
    %v1198 = vpack.c.b16 %v754, %v750
    %v1199 = vpack.c.b16 %v755, %v751
    %v1200 = vpack.c.b16 %v756, %v752
    %v1201 = vpack.c.b16 %v761, %v757
    %v1202 = vpack.c.b16 %v762, %v758
    %v1203 = vpack.c.b16 %v763, %v759
    %v1204 = vpack.c.b16 %v764, %v760
    %v1205 = vpack.c.b16 %v769, %v765
    %v1206 = vpack.c.b16 %v770, %v766
    %v1207 = vpack.c.b16 %v771, %v767
    %v1208 = vpack.c.b16 %v772, %v768
    %v1209 = vpack.c.b16 %v777, %v773
    %v1210 = vpack.c.b16 %v778, %v774
    %v1211 = vpack.c.b16 %v779, %v775
    %v1212 = vpack.c.b16 %v780, %v776
    %v1213 = vpack.c.b16 %v785, %v781
    %v1214 = vpack.c.b16 %v786, %v782
    %v1215 = vpack.c.b16 %v787, %v783
    %v1216 = vpack.c.b16 %v788, %v784
    %v1217 = vpack.c.b16 %v793, %v789
    %v1218 = vpack.c.b16 %v794, %v790
    %v1219 = vpack.c.b16 %v795, %v791
    %v1220 = vpack.c.b16 %v796, %v792
    %v1221 = vpack.c.b16 %v801, %v797
    %v1222 = vpack.c.b16 %v802, %v798
    %v1223 = vpack.c.b16 %v803, %v799
    %v1224 = vpack.c.b16 %v804, %v800
    %v1225 = vpack.c.b16 %v809, %v805
    %v1226 = vpack.c.b16 %v810, %v806
    %v1227 = vpack.c.b16 %v811, %v807
    %v1228 = vpack.c.b16 %v812, %v808
    %v1229 = vpack.c.b16 %v817, %v813
    %v1230 = vpack.c.b16 %v818, %v814
    %v1231 = vpack.c.b16 %v819, %v815
    %v1232 = vpack.c.b16 %v820, %v816
    %v1233 = vpack.c.b16 %v825, %v821
    %v1234 = vpack.c.b16 %v826, %v822
    %v1235 = vpack.c.b16 %v827, %v823
    %v1236 = vpack.c.b16 %v828, %v824
    %v1237 = vpack.c.b16 %v833, %v829
    %v1238 = vpack.c.b16 %v834, %v830
    %v1239 = vpack.c.b16 %v835, %v831
    %v1240 = vpack.c.b16 %v836, %v832
    %v1241 = vpack.c.b16 %v841, %v837
    %v1242 = vpack.c.b16 %v842, %v838
    %v1243 = vpack.c.b16 %v843, %v839
    %v1244 = vpack.c.b16 %v844, %v840
    %v1245 = vpack.c.b16 %v849, %v845
    %v1246 = vpack.c.b16 %v850, %v846
    %v1247 = vpack.c.b16 %v851, %v847
    %v1248 = vpack.c.b16 %v852, %v848
    %v1249 = vpack.c.b16 %v857, %v853
    %v1250 = vpack.c.b16 %v858, %v854
    %v1251 = vpack.c.b16 %v859, %v855
    %v1252 = vpack.c.b16 %v860, %v856
    %v1253 = vpack.c.b16 %v865, %v861
    %v1254 = vpack.c.b16 %v866, %v862
    %v1255 = vpack.c.b16 %v867, %v863
    %v1256 = vpack.c.b16 %v868, %v864
    %v1257 = vpack.c.b16 %v873, %v869
    %v1258 = vpack.c.b16 %v874, %v870
    %v1259 = vpack.c.b16 %v875, %v871
    %v1260 = vpack.c.b16 %v876, %v872
    %v1261 = vpack.c.b16 %v881, %v877
    %v1262 = vpack.c.b16 %v882, %v878
    %v1263 = vpack.c.b16 %v883, %v879
    %v1264 = vpack.c.b16 %v884, %v880
    %v1265 = vpack.c.b16 %v889, %v885
    %v1266 = vpack.c.b16 %v890, %v886
    %v1267 = vpack.c.b16 %v891, %v887
    %v1268 = vpack.c.b16 %v892, %v888
    %v1269 = vpack.c.b16 %v897, %v893
    %v1270 = vpack.c.b16 %v898, %v894
    %v1271 = vpack.c.b16 %v899, %v895
    %v1272 = vpack.c.b16 %v900, %v896
    %v1273 = vpack.c.b16 %v905, %v901
    %v1274 = vpack.c.b16 %v906, %v902
    %v1275 = vpack.c.b16 %v907, %v903
    %v1276 = vpack.c.b16 %v908, %v904
    %v1277 = vpack.c.b16 %v913, %v909
    %v1278 = vpack.c.b16 %v914, %v910
    %v1279 = vpack.c.b16 %v915, %v911
    %v1280 = vpack.c.b16 %v916, %v912
    %v1281 = vpack.c.b16 %v921, %v917
    %v1282 = vpack.c.b16 %v922, %v918
    %v1283 = vpack.c.b16 %v923, %v919
    %v1284 = vpack.c.b16 %v924, %v920
    %v1285 = vpack.c.b16 %v929, %v925
    %v1286 = vpack.c.b16 %v930, %v926
    %v1287 = vpack.c.b16 %v931, %v927
    %v1288 = vpack.c.b16 %v932, %v928
    %v1289 = vpack.c.b16 %v937, %v933
    %v1290 = vpack.c.b16 %v938, %v934
    %v1291 = vpack.c.b16 %v939, %v935
    %v1292 = vpack.c.b16 %v940, %v936
    %v1293 = vpack.c.b16 %v945, %v941
    %v1294 = vpack.c.b16 %v946, %v942
    %v1295 = vpack.c.b16 %v947, %v943
    %v1296 = vpack.c.b16 %v948, %v944
    %v1297 = vpack.c.b16 %v953, %v949
    %v1298 = vpack.c.b16 %v954, %v950
    %v1299 = vpack.c.b16 %v955, %v951
    %v1300 = vpack.c.b16 %v956, %v952
    %v1301 = vpack.c.b16 %v961, %v957
    %v1302 = vpack.c.b16 %v962, %v958
    %v1303 = vpack.c.b16 %v963, %v959
    %v1304 = vpack.c.b16 %v964, %v960
    %v1305 = vpack.c.b16 %v969, %v965
    %v1306 = vpack.c.b16 %v970, %v966
    %v1307 = vpack.c.b16 %v971, %v967
    %v1308 = vpack.c.b16 %v972, %v968
    %v1309 = vpack.c.b16 %v977, %v973
    %v1310 = vpack.c.b16 %v978, %v974
    %v1311 = vpack.c.b16 %v979, %v975
    %v1312 = vpack.c.b16 %v980, %v976
    %v1313 = vpack.c.b16 %v985, %v981
    %v1314 = vpack.c.b16 %v986, %v982
    %v1315 = vpack.c.b16 %v987, %v983
    %v1316 = vpack.c.b16 %v988, %v984
    %v1317 = vpack.c.b16 %v993, %v989
    %v1318 = vpack.c.b16 %v994, %v990
    %v1319 = vpack.c.b16 %v995, %v991
    %v1320 = vpack.c.b16 %v996, %v992
    %v1321 = vpack.c.b16 %v1001, %v997
    %v1322 = vpack.c.b16 %v1002, %v998
    %v1323 = vpack.c.b16 %v1003, %v999
    %v1324 = vpack.c.b16 %v1004, %v1000
    %v1325 = vpack.c.b16 %v1009, %v1005
    %v1326 = vpack.c.b16 %v1010, %v1006
    %v1327 = vpack.c.b16 %v1011, %v1007
    %v1328 = vpack.c.b16 %v1012, %v1008
    %v1329 = vpack.c.b16 %v1017, %v1013
    %v1330 = vpack.c.b16 %v1018, %v1014
    %v1331 = vpack.c.b16 %v1019, %v1015
    %v1332 = vpack.c.b16 %v1020, %v1016
    %v1333 = vpack.c.b16 %v1025, %v1021
    %v1334 = vpack.c.b16 %v1026, %v1022
    %v1335 = vpack.c.b16 %v1027, %v1023
    %v1336 = vpack.c.b16 %v1028, %v1024
    %v1337 = vpack.c.b16 %v1033, %v1029
    %v1338 = vpack.c.b16 %v1034, %v1030
    %v1339 = vpack.c.b16 %v1035, %v1031
    %v1340 = vpack.c.b16 %v1036, %v1032
    %v1341 = vpack.c.b16 %v1041, %v1037
    %v1342 = vpack.c.b16 %v1042, %v1038
    %v1343 = vpack.c.b16 %v1043, %v1039
    %v1344 = vpack.c.b16 %v1044, %v1040
    %v1345 = vpack.c.b16 %v1049, %v1045
    %v1346 = vpack.c.b16 %v1050, %v1046
    %v1347 = vpack.c.b16 %v1051, %v1047
    %v1348 = vpack.c.b16 %v1052, %v1048
    %v1349 = vpack.c.b16 %v1057, %v1053
    %v1350 = vpack.c.b16 %v1058, %v1054
    %v1351 = vpack.c.b16 %v1059, %v1055
    %v1352 = vpack.c.b16 %v1060, %v1056
    %v1353 = vpack.c.b16 %v1065, %v1061
    %v1354 = vpack.c.b16 %v1066, %v1062
    %v1355 = vpack.c.b16 %v1067, %v1063
    %v1356 = vpack.c.b16 %v1068, %v1064
    %v1357 = vpack.c.b16 %v1073, %v1069
    %v1358 = vpack.c.b16 %v1074, %v1070
    %v1359 = vpack.c.b16 %v1075, %v1071
    %v1360 = vpack.c.b16 %v1076, %v1072
    %v1361 = vpack.c.b16 %v1081, %v1077
    %v1362 = vpack.c.b16 %v1082, %v1078
    %v1363 = vpack.c.b16 %v1083, %v1079
    %v1364 = vpack.c.b16 %v1084, %v1080
    %v1365 = vpack.c.b16 %v1089, %v1085
    %v1366 = vpack.c.b16 %v1090, %v1086
    %v1367 = vpack.c.b16 %v1091, %v1087
    %v1368 = vpack.c.b16 %v1092, %v1088
    %v1369 = vpack.c.b16 %v1097, %v1093
    %v1370 = vpack.c.b16 %v1098, %v1094
    %v1371 = vpack.c.b16 %v1099, %v1095
    %v1372 = vpack.c.b16 %v1100, %v1096
    %v1373 = vpack.c.b16 %v1105, %v1101
    %v1374 = vpack.c.b16 %v1106, %v1102
    %v1375 = vpack.c.b16 %v1107, %v1103
    %v1376 = vpack.c.b16 %v1108, %v1104
    %v1377 = vpack.c.b16 %v1113, %v1109
    %v1378 = vpack.c.b16 %v1114, %v1110
    %v1379 = vpack.c.b16 %v1115, %v1111
    %v1380 = vpack.c.b16 %v1116, %v1112
    %v1381 = vpack.c.b16 %v1121, %v1117
    %v1382 = vpack.c.b16 %v1122, %v1118
    %v1383 = vpack.c.b16 %v1123, %v1119
    %v1384 = vpack.c.b16 %v1124, %v1120
    %v1385 = vpack.c.b16 %v1129, %v1125
    %v1386 = vpack.c.b16 %v1130, %v1126
    %v1387 = vpack.c.b16 %v1131, %v1127
    %v1388 = vpack.c.b16 %v1132, %v1128
    %1645 = vmatprep.subr.bf16.mxu0 %v1162
    %1646 = vmatpush1.bf16.msra.mxu0 %v1161
    %1647 = vmatprep.subr.bf16.mxu0 %v1158
    %1648 = vmatpush1.bf16.msra.mxu0 %v1157
    %1649 = vmatprep.subr.bf16.mxu0 %v1154
    %1650 = vmatpush1.bf16.msra.mxu0 %v1153
    %1651 = vmatprep.subr.bf16.mxu0 %v1150
    %1652 = vmatpush1.bf16.msra.mxu0 %v1149
    %1653 = vmatprep.subr.bf16.mxu0 %v1146
    %1654 = vmatpush1.bf16.msra.mxu0 %v1145
    %1655 = vmatprep.subr.bf16.mxu0 %v1142
    %1656 = vmatpush1.bf16.msra.mxu0 %v1141
    %1657 = vmatprep.subr.bf16.mxu0 %v1138
    %1658 = vmatpush1.bf16.msra.mxu0 %v1137
    %1659 = vmatprep.subr.bf16.mxu0 %v1134
    %1660 = vmatpush1.bf16.msra.mxu0 %v1133
    %1661 = vmatprep.subr.bf16.mxu0 %v1194
    %1662 = vmatpush2.bf16.msra.mxu0 %v1193
    %1663 = vmatprep.subr.bf16.mxu0 %v1190
    %1664 = vmatpush2.bf16.msra.mxu0 %v1189
    %1665 = vmatprep.subr.bf16.mxu0 %v1186
    %1666 = vmatpush2.bf16.msra.mxu0 %v1185
    %1667 = vmatprep.subr.bf16.mxu0 %v1182
    %1668 = vmatpush2.bf16.msra.mxu0 %v1181
    %1669 = vmatprep.subr.bf16.mxu0 %v1178
    %1670 = vmatpush2.bf16.msra.mxu0 %v1177
    %1671 = vmatprep.subr.bf16.mxu0 %v1174
    %1672 = vmatpush2.bf16.msra.mxu0 %v1173
    %1673 = vmatprep.subr.bf16.mxu0 %v1170
    %1674 = vmatpush2.bf16.msra.mxu0 %v1169
    %1675 = vmatprep.subr.bf16.mxu0 %v1166
    %1676 = vmatpush2.bf16.msra.mxu0 %v1165
    %1677 = vmatprep.mubr.bf16.mxu0 %v345
    %1678 = vmatmul.mubr.bf16.gmra.mxu0 %v331
    %v1679 = vpop.f32.mrf.mxu0
    %v1680 = vadd.f32 %v290, %v1679
    %v1681 = vpop.f32.mrf.mxu0
    %v1682 = vadd.f32 %v294, %v1681
    %v1683 = vpop.f32.mrf.mxu0
    %v1684 = vpop.f32.mrf.mxu0
    %1685 = vdwg.mxu0
    %1686 = vmatprep.subr.bf16.mxu0 %v1226
    %1687 = vmatpush1.bf16.msra.mxu0 %v1225
    %1688 = vmatprep.subr.bf16.mxu0 %v1222
    %1689 = vmatpush1.bf16.msra.mxu0 %v1221
    %1690 = vmatprep.subr.bf16.mxu0 %v1218
    %1691 = vmatpush1.bf16.msra.mxu0 %v1217
    %1692 = vmatprep.subr.bf16.mxu0 %v1214
    %1693 = vmatpush1.bf16.msra.mxu0 %v1213
    %1694 = vmatprep.subr.bf16.mxu0 %v1210
    %1695 = vmatpush1.bf16.msra.mxu0 %v1209
    %1696 = vmatprep.subr.bf16.mxu0 %v1206
    %1697 = vmatpush1.bf16.msra.mxu0 %v1205
    %1698 = vmatprep.subr.bf16.mxu0 %v1202
    %1699 = vmatpush1.bf16.msra.mxu0 %v1201
    %1700 = vmatprep.subr.bf16.mxu0 %v1198
    %1701 = vmatpush1.bf16.msra.mxu0 %v1197
    %1702 = vmatprep.subr.bf16.mxu0 %v1258
    %1703 = vmatpush2.bf16.msra.mxu0 %v1257
    %1704 = vmatprep.subr.bf16.mxu0 %v1254
    %1705 = vmatpush2.bf16.msra.mxu0 %v1253
    %1706 = vmatprep.subr.bf16.mxu0 %v1250
    %1707 = vmatpush2.bf16.msra.mxu0 %v1249
    %1708 = vmatprep.subr.bf16.mxu0 %v1246
    %1709 = vmatpush2.bf16.msra.mxu0 %v1245
    %1710 = vmatprep.subr.bf16.mxu0 %v1242
    %1711 = vmatpush2.bf16.msra.mxu0 %v1241
    %1712 = vmatprep.subr.bf16.mxu0 %v1238
    %1713 = vmatpush2.bf16.msra.mxu0 %v1237
    %1714 = vmatprep.subr.bf16.mxu0 %v1234
    %1715 = vmatpush2.bf16.msra.mxu0 %v1233
    %1716 = vmatprep.subr.bf16.mxu0 %v1230
    %1717 = vmatpush2.bf16.msra.mxu0 %v1229
    %1718 = vmatprep.mubr.bf16.mxu0 %v355
    %1719 = vmatmul.mubr.bf16.gmra.mxu0 %v353
    %v1720 = vpop.f32.mrf.mxu0
    %v1721 = vadd.f32 %v1680, %v1720
    %v1722 = vpop.f32.mrf.mxu0
    %v1723 = vadd.f32 %v1682, %v1722
    %v1724 = vpop.f32.mrf.mxu0
    %v1725 = vpop.f32.mrf.mxu0
    %1726 = vdwg.mxu0
    %1727 = vmatprep.subr.bf16.mxu0 %v1290
    %1728 = vmatpush1.bf16.msra.mxu0 %v1289
    %1729 = vmatprep.subr.bf16.mxu0 %v1286
    %1730 = vmatpush1.bf16.msra.mxu0 %v1285
    %1731 = vmatprep.subr.bf16.mxu0 %v1282
    %1732 = vmatpush1.bf16.msra.mxu0 %v1281
    %1733 = vmatprep.subr.bf16.mxu0 %v1278
    %1734 = vmatpush1.bf16.msra.mxu0 %v1277
    %1735 = vmatprep.subr.bf16.mxu0 %v1274
    %1736 = vmatpush1.bf16.msra.mxu0 %v1273
    %1737 = vmatprep.subr.bf16.mxu0 %v1270
    %1738 = vmatpush1.bf16.msra.mxu0 %v1269
    %1739 = vmatprep.subr.bf16.mxu0 %v1266
    %1740 = vmatpush1.bf16.msra.mxu0 %v1265
    %1741 = vmatprep.subr.bf16.mxu0 %v1262
    %1742 = vmatpush1.bf16.msra.mxu0 %v1261
    %1743 = vmatprep.subr.bf16.mxu0 %v1322
    %1744 = vmatpush2.bf16.msra.mxu0 %v1321
    %1745 = vmatprep.subr.bf16.mxu0 %v1318
    %1746 = vmatpush2.bf16.msra.mxu0 %v1317
    %1747 = vmatprep.subr.bf16.mxu0 %v1314
    %1748 = vmatpush2.bf16.msra.mxu0 %v1313
    %1749 = vmatprep.subr.bf16.mxu0 %v1310
    %1750 = vmatpush2.bf16.msra.mxu0 %v1309
    %1751 = vmatprep.subr.bf16.mxu0 %v1306
    %1752 = vmatpush2.bf16.msra.mxu0 %v1305
    %1753 = vmatprep.subr.bf16.mxu0 %v1302
    %1754 = vmatpush2.bf16.msra.mxu0 %v1301
    %1755 = vmatprep.subr.bf16.mxu0 %v1298
    %1756 = vmatpush2.bf16.msra.mxu0 %v1297
    %1757 = vmatprep.subr.bf16.mxu0 %v1294
    %1758 = vmatpush2.bf16.msra.mxu0 %v1293
    %1759 = vmatprep.mubr.bf16.mxu0 %v352
    %1760 = vmatmul.mubr.bf16.gmra.mxu0 %v338
    %v1761 = vpop.f32.mrf.mxu0
    %v1762 = vadd.f32 %v1721, %v1761
    %v1763 = vpop.f32.mrf.mxu0
    %v1764 = vadd.f32 %v1723, %v1763
    %v1765 = vpop.f32.mrf.mxu0
    %v1766 = vpop.f32.mrf.mxu0
    %1767 = vdwg.mxu0
    %1768 = vmatprep.subr.bf16.mxu0 %v1354
    %1769 = vmatpush1.bf16.msra.mxu0 %v1353
    %1770 = vmatprep.subr.bf16.mxu0 %v1350
    %1771 = vmatpush1.bf16.msra.mxu0 %v1349
    %1772 = vmatprep.subr.bf16.mxu0 %v1346
    %1773 = vmatpush1.bf16.msra.mxu0 %v1345
    %1774 = vmatprep.subr.bf16.mxu0 %v1342
    %1775 = vmatpush1.bf16.msra.mxu0 %v1341
    %1776 = vmatprep.subr.bf16.mxu0 %v1338
    %1777 = vmatpush1.bf16.msra.mxu0 %v1337
    %1778 = vmatprep.subr.bf16.mxu0 %v1334
    %1779 = vmatpush1.bf16.msra.mxu0 %v1333
    %1780 = vmatprep.subr.bf16.mxu0 %v1330
    %1781 = vmatpush1.bf16.msra.mxu0 %v1329
    %1782 = vmatprep.subr.bf16.mxu0 %v1326
    %1783 = vmatpush1.bf16.msra.mxu0 %v1325
    %1784 = vmatprep.subr.bf16.mxu0 %v1386
    %1785 = vmatpush2.bf16.msra.mxu0 %v1385
    %1786 = vmatprep.subr.bf16.mxu0 %v1382
    %1787 = vmatpush2.bf16.msra.mxu0 %v1381
    %1788 = vmatprep.subr.bf16.mxu0 %v1378
    %1789 = vmatpush2.bf16.msra.mxu0 %v1377
    %1790 = vmatprep.subr.bf16.mxu0 %v1374
    %1791 = vmatpush2.bf16.msra.mxu0 %v1373
    %1792 = vmatprep.subr.bf16.mxu0 %v1370
    %1793 = vmatpush2.bf16.msra.mxu0 %v1369
    %1794 = vmatprep.subr.bf16.mxu0 %v1366
    %1795 = vmatpush2.bf16.msra.mxu0 %v1365
    %1796 = vmatprep.subr.bf16.mxu0 %v1362
    %1797 = vmatpush2.bf16.msra.mxu0 %v1361
    %1798 = vmatprep.subr.bf16.mxu0 %v1358
    %1799 = vmatpush2.bf16.msra.mxu0 %v1357
    %1800 = vmatprep.mubr.bf16.mxu0 %v356
    %1801 = vmatmul.mubr.bf16.gmra.mxu0 %v354
    %v1802 = vpop.f32.mrf.mxu0
    %v1803 = vadd.f32 %v1762, %v1802
    %v1804 = vpop.f32.mrf.mxu0
    %v1805 = vadd.f32 %v1764, %v1804
    %v1806 = vpop.f32.mrf.mxu0
    %v1807 = vpop.f32.mrf.mxu0
    %1808 = vdwg.mxu0
    %1809 = vmatprep.subr.bf16.mxu0 %v1164
    %1810 = vmatpush1.bf16.msra.mxu0 %v1163
    %1811 = vmatprep.subr.bf16.mxu0 %v1160
    %1812 = vmatpush1.bf16.msra.mxu0 %v1159
    %1813 = vmatprep.subr.bf16.mxu0 %v1156
    %1814 = vmatpush1.bf16.msra.mxu0 %v1155
    %1815 = vmatprep.subr.bf16.mxu0 %v1152
    %1816 = vmatpush1.bf16.msra.mxu0 %v1151
    %1817 = vmatprep.subr.bf16.mxu0 %v1148
    %1818 = vmatpush1.bf16.msra.mxu0 %v1147
    %1819 = vmatprep.subr.bf16.mxu0 %v1144
    %1820 = vmatpush1.bf16.msra.mxu0 %v1143
    %1821 = vmatprep.subr.bf16.mxu0 %v1140
    %1822 = vmatpush1.bf16.msra.mxu0 %v1139
    %1823 = vmatprep.subr.bf16.mxu0 %v1136
    %1824 = vmatpush1.bf16.msra.mxu0 %v1135
    %1825 = vmatprep.subr.bf16.mxu0 %v1196
    %1826 = vmatpush2.bf16.msra.mxu0 %v1195
    %1827 = vmatprep.subr.bf16.mxu0 %v1192
    %1828 = vmatpush2.bf16.msra.mxu0 %v1191
    %1829 = vmatprep.subr.bf16.mxu0 %v1188
    %1830 = vmatpush2.bf16.msra.mxu0 %v1187
    %1831 = vmatprep.subr.bf16.mxu0 %v1184
    %1832 = vmatpush2.bf16.msra.mxu0 %v1183
    %1833 = vmatprep.subr.bf16.mxu0 %v1180
    %1834 = vmatpush2.bf16.msra.mxu0 %v1179
    %1835 = vmatprep.subr.bf16.mxu0 %v1176
    %1836 = vmatpush2.bf16.msra.mxu0 %v1175
    %1837 = vmatprep.subr.bf16.mxu0 %v1172
    %1838 = vmatpush2.bf16.msra.mxu0 %v1171
    %1839 = vmatprep.subr.bf16.mxu0 %v1168
    %1840 = vmatpush2.bf16.msra.mxu0 %v1167
    %1841 = vmatprep.mubr.bf16.mxu0 %v345
    %1842 = vmatmul.mubr.bf16.gmra.mxu0 %v331
    %v1843 = vpop.f32.mrf.mxu0
    %v1844 = vadd.f32 %v298, %v1843
    %v1845 = vpop.f32.mrf.mxu0
    %v1846 = vadd.f32 %v302, %v1845
    %v1847 = vpop.f32.mrf.mxu0
    %v1848 = vpop.f32.mrf.mxu0
    %1849 = vdwg.mxu0
    %1850 = vmatprep.subr.bf16.mxu0 %v1228
    %1851 = vmatpush1.bf16.msra.mxu0 %v1227
    %1852 = vmatprep.subr.bf16.mxu0 %v1224
    %1853 = vmatpush1.bf16.msra.mxu0 %v1223
    %1854 = vmatprep.subr.bf16.mxu0 %v1220
    %1855 = vmatpush1.bf16.msra.mxu0 %v1219
    %1856 = vmatprep.subr.bf16.mxu0 %v1216
    %1857 = vmatpush1.bf16.msra.mxu0 %v1215
    %1858 = vmatprep.subr.bf16.mxu0 %v1212
    %1859 = vmatpush1.bf16.msra.mxu0 %v1211
    %1860 = vmatprep.subr.bf16.mxu0 %v1208
    %1861 = vmatpush1.bf16.msra.mxu0 %v1207
    %1862 = vmatprep.subr.bf16.mxu0 %v1204
    %1863 = vmatpush1.bf16.msra.mxu0 %v1203
    %1864 = vmatprep.subr.bf16.mxu0 %v1200
    %1865 = vmatpush1.bf16.msra.mxu0 %v1199
    %1866 = vmatprep.subr.bf16.mxu0 %v1260
    %1867 = vmatpush2.bf16.msra.mxu0 %v1259
    %1868 = vmatprep.subr.bf16.mxu0 %v1256
    %1869 = vmatpush2.bf16.msra.mxu0 %v1255
    %1870 = vmatprep.subr.bf16.mxu0 %v1252
    %1871 = vmatpush2.bf16.msra.mxu0 %v1251
    %1872 = vmatprep.subr.bf16.mxu0 %v1248
    %1873 = vmatpush2.bf16.msra.mxu0 %v1247
    %1874 = vmatprep.subr.bf16.mxu0 %v1244
    %1875 = vmatpush2.bf16.msra.mxu0 %v1243
    %1876 = vmatprep.subr.bf16.mxu0 %v1240
    %1877 = vmatpush2.bf16.msra.mxu0 %v1239
    %1878 = vmatprep.subr.bf16.mxu0 %v1236
    %1879 = vmatpush2.bf16.msra.mxu0 %v1235
    %1880 = vmatprep.subr.bf16.mxu0 %v1232
    %1881 = vmatpush2.bf16.msra.mxu0 %v1231
    %1882 = vmatprep.mubr.bf16.mxu0 %v355
    %1883 = vmatmul.mubr.bf16.gmra.mxu0 %v353
    %v1884 = vpop.f32.mrf.mxu0
    %v1885 = vadd.f32 %v1844, %v1884
    %v1886 = vpop.f32.mrf.mxu0
    %v1887 = vadd.f32 %v1846, %v1886
    %v1888 = vpop.f32.mrf.mxu0
    %v1889 = vpop.f32.mrf.mxu0
    %1890 = vdwg.mxu0
    %1891 = vmatprep.subr.bf16.mxu0 %v1292
    %1892 = vmatpush1.bf16.msra.mxu0 %v1291
    %1893 = vmatprep.subr.bf16.mxu0 %v1288
    %1894 = vmatpush1.bf16.msra.mxu0 %v1287
    %1895 = vmatprep.subr.bf16.mxu0 %v1284
    %1896 = vmatpush1.bf16.msra.mxu0 %v1283
    %1897 = vmatprep.subr.bf16.mxu0 %v1280
    %1898 = vmatpush1.bf16.msra.mxu0 %v1279
    %1899 = vmatprep.subr.bf16.mxu0 %v1276
    %1900 = vmatpush1.bf16.msra.mxu0 %v1275
    %1901 = vmatprep.subr.bf16.mxu0 %v1272
    %1902 = vmatpush1.bf16.msra.mxu0 %v1271
    %1903 = vmatprep.subr.bf16.mxu0 %v1268
    %1904 = vmatpush1.bf16.msra.mxu0 %v1267
    %1905 = vmatprep.subr.bf16.mxu0 %v1264
    %1906 = vmatpush1.bf16.msra.mxu0 %v1263
    %1907 = vmatprep.subr.bf16.mxu0 %v1324
    %1908 = vmatpush2.bf16.msra.mxu0 %v1323
    %1909 = vmatprep.subr.bf16.mxu0 %v1320
    %1910 = vmatpush2.bf16.msra.mxu0 %v1319
    %1911 = vmatprep.subr.bf16.mxu0 %v1316
    %1912 = vmatpush2.bf16.msra.mxu0 %v1315
    %1913 = vmatprep.subr.bf16.mxu0 %v1312
    %1914 = vmatpush2.bf16.msra.mxu0 %v1311
    %1915 = vmatprep.subr.bf16.mxu0 %v1308
    %1916 = vmatpush2.bf16.msra.mxu0 %v1307
    %1917 = vmatprep.subr.bf16.mxu0 %v1304
    %1918 = vmatpush2.bf16.msra.mxu0 %v1303
    %1919 = vmatprep.subr.bf16.mxu0 %v1300
    %1920 = vmatpush2.bf16.msra.mxu0 %v1299
    %1921 = vmatprep.subr.bf16.mxu0 %v1296
    %1922 = vmatpush2.bf16.msra.mxu0 %v1295
    %1923 = vmatprep.mubr.bf16.mxu0 %v352
    %1924 = vmatmul.mubr.bf16.gmra.mxu0 %v338
    %v1925 = vpop.f32.mrf.mxu0
    %v1926 = vadd.f32 %v1885, %v1925
    %v1927 = vpop.f32.mrf.mxu0
    %v1928 = vadd.f32 %v1887, %v1927
    %v1929 = vpop.f32.mrf.mxu0
    %v1930 = vpop.f32.mrf.mxu0
    %1931 = vdwg.mxu0
    %1932 = vmatprep.subr.bf16.mxu0 %v1356
    %1933 = vmatpush1.bf16.msra.mxu0 %v1355
    %1934 = vmatprep.subr.bf16.mxu0 %v1352
    %1935 = vmatpush1.bf16.msra.mxu0 %v1351
    %1936 = vmatprep.subr.bf16.mxu0 %v1348
    %1937 = vmatpush1.bf16.msra.mxu0 %v1347
    %1938 = vmatprep.subr.bf16.mxu0 %v1344
    %1939 = vmatpush1.bf16.msra.mxu0 %v1343
    %1940 = vmatprep.subr.bf16.mxu0 %v1340
    %1941 = vmatpush1.bf16.msra.mxu0 %v1339
    %1942 = vmatprep.subr.bf16.mxu0 %v1336
    %1943 = vmatpush1.bf16.msra.mxu0 %v1335
    %1944 = vmatprep.subr.bf16.mxu0 %v1332
    %1945 = vmatpush1.bf16.msra.mxu0 %v1331
    %1946 = vmatprep.subr.bf16.mxu0 %v1328
    %1947 = vmatpush1.bf16.msra.mxu0 %v1327
    %1948 = vmatprep.subr.bf16.mxu0 %v1388
    %1949 = vmatpush2.bf16.msra.mxu0 %v1387
    %1950 = vmatprep.subr.bf16.mxu0 %v1384
    %1951 = vmatpush2.bf16.msra.mxu0 %v1383
    %1952 = vmatprep.subr.bf16.mxu0 %v1380
    %1953 = vmatpush2.bf16.msra.mxu0 %v1379
    %1954 = vmatprep.subr.bf16.mxu0 %v1376
    %1955 = vmatpush2.bf16.msra.mxu0 %v1375
    %1956 = vmatprep.subr.bf16.mxu0 %v1372
    %1957 = vmatpush2.bf16.msra.mxu0 %v1371
    %1958 = vmatprep.subr.bf16.mxu0 %v1368
    %1959 = vmatpush2.bf16.msra.mxu0 %v1367
    %1960 = vmatprep.subr.bf16.mxu0 %v1364
    %1961 = vmatpush2.bf16.msra.mxu0 %v1363
    %1962 = vmatprep.subr.bf16.mxu0 %v1360
    %1963 = vmatpush2.bf16.msra.mxu0 %v1359
    %1964 = vmatprep.mubr.bf16.mxu0 %v356
    %1965 = vmatmul.mubr.bf16.gmra.mxu0 %v354
    %v1966 = vpop.f32.mrf.mxu0
    %v1967 = vadd.f32 %v1926, %v1966
    %v1968 = vpop.f32.mrf.mxu0
    %v1969 = vadd.f32 %v1928, %v1968
    %v1970 = vpop.f32.mrf.mxu0
    %v1971 = vpop.f32.mrf.mxu0
    %1972 = vdwg.mxu0
    %v1973 = vmax.f32 %v1803, 0.0
    %v1974 = vmax.f32 %v1805, 0.0
    %v1975 = vmax.f32 %v1967, 0.0
    %v1976 = vmax.f32 %v1969, 0.0
    %v1977 = vpack.c.bf16 %v1973, %v1973
    %v1978 = vpack.c.bf16 %v1974, %v1974
    %v1979 = vpack.c.bf16 %v1975, %v1975
    %v1980 = vpack.c.bf16 %v1976, %v1976
    %v1981 = vld [vmem:[%s3] sm:$0xff]
    %v1982 = vld [vmem:[%s3 + $0x8] sm:$0xff]
    %v1983 = vld [vmem:[%s3 + $0x10] sm:$0xff]
    %v1984 = vld [vmem:[%s3 + $0x18] sm:$0xff]
    %v1985 = vld [vmem:[%s3 + $0x20] sm:$0xff]
    %v1986 = vld [vmem:[%s3 + $0x28] sm:$0xff]
    %v1987 = vld [vmem:[%s3 + $0x30] sm:$0xff]
    %v1988 = vld [vmem:[%s3 + $0x38] sm:$0xff]
    %v1989 = vld [vmem:[%s3 + $0x40] sm:$0xff]
    %v1990 = vld [vmem:[%s3 + $0x48] sm:$0xff]
    %v1991 = vld [vmem:[%s3 + $0x50] sm:$0xff]
    %v1992 = vld [vmem:[%s3 + $0x58] sm:$0xff]
    %v1993 = vld [vmem:[%s3 + $0x60] sm:$0xff]
    %v1994 = vld [vmem:[%s3 + $0x68] sm:$0xff]
    %v1995 = vld [vmem:[%s3 + $0x70] sm:$0xff]
    %v1996 = vld [vmem:[%s3 + $0x78] sm:$0xff]
    %v1997 = vld [vmem:[%s3 + $0x80] sm:$0xff]
    %v1998 = vld [vmem:[%s3 + $0x88] sm:$0xff]
    %v1999 = vld [vmem:[%s3 + $0x90] sm:$0xff]
    %v2000 = vld [vmem:[%s3 + $0x98] sm:$0xff]
    %v2001 = vld [vmem:[%s3 + $0xa0] sm:$0xff]
    %v2002 = vld [vmem:[%s3 + $0xa8] sm:$0xff]
    %v2003 = vld [vmem:[%s3 + $0xb0] sm:$0xff]
    %v2004 = vld [vmem:[%s3 + $0xb8] sm:$0xff]
    %v2005 = vld [vmem:[%s3 + $0xc0] sm:$0xff]
    %v2006 = vld [vmem:[%s3 + $0xc8] sm:$0xff]
    %v2007 = vld [vmem:[%s3 + $0xd0] sm:$0xff]
    %v2008 = vld [vmem:[%s3 + $0xd8] sm:$0xff]
    %v2009 = vld [vmem:[%s3 + $0xe0] sm:$0xff]
    %v2010 = vld [vmem:[%s3 + $0xe8] sm:$0xff]
    %v2011 = vld [vmem:[%s3 + $0xf0] sm:$0xff]
    %v2012 = vld [vmem:[%s3 + $0xf8] sm:$0xff]
    %v2013 = vld [vmem:[%s3 + $0x100] sm:$0xff]
    %v2014 = vld [vmem:[%s3 + $0x108] sm:$0xff]
    %v2015 = vld [vmem:[%s3 + $0x110] sm:$0xff]
    %v2016 = vld [vmem:[%s3 + $0x118] sm:$0xff]
    %v2017 = vld [vmem:[%s3 + $0x120] sm:$0xff]
    %v2018 = vld [vmem:[%s3 + $0x128] sm:$0xff]
    %v2019 = vld [vmem:[%s3 + $0x130] sm:$0xff]
    %v2020 = vld [vmem:[%s3 + $0x138] sm:$0xff]
    %v2021 = vld [vmem:[%s3 + $0x140] sm:$0xff]
    %v2022 = vld [vmem:[%s3 + $0x148] sm:$0xff]
    %v2023 = vld [vmem:[%s3 + $0x150] sm:$0xff]
    %v2024 = vld [vmem:[%s3 + $0x158] sm:$0xff]
    %v2025 = vld [vmem:[%s3 + $0x160] sm:$0xff]
    %v2026 = vld [vmem:[%s3 + $0x168] sm:$0xff]
    %v2027 = vld [vmem:[%s3 + $0x170] sm:$0xff]
    %v2028 = vld [vmem:[%s3 + $0x178] sm:$0xff]
    %v2029 = vld [vmem:[%s3 + $0x180] sm:$0xff]
    %v2030 = vld [vmem:[%s3 + $0x188] sm:$0xff]
    %v2031 = vld [vmem:[%s3 + $0x190] sm:$0xff]
    %v2032 = vld [vmem:[%s3 + $0x198] sm:$0xff]
    %v2033 = vld [vmem:[%s3 + $0x1a0] sm:$0xff]
    %v2034 = vld [vmem:[%s3 + $0x1a8] sm:$0xff]
    %v2035 = vld [vmem:[%s3 + $0x1b0] sm:$0xff]
    %v2036 = vld [vmem:[%s3 + $0x1b8] sm:$0xff]
    %v2037 = vld [vmem:[%s3 + $0x1c0] sm:$0xff]
    %v2038 = vld [vmem:[%s3 + $0x1c8] sm:$0xff]
    %v2039 = vld [vmem:[%s3 + $0x1d0] sm:$0xff]
    %v2040 = vld [vmem:[%s3 + $0x1d8] sm:$0xff]
    %v2041 = vld [vmem:[%s3 + $0x1e0] sm:$0xff]
    %v2042 = vld [vmem:[%s3 + $0x1e8] sm:$0xff]
    %v2043 = vld [vmem:[%s3 + $0x1f0] sm:$0xff]
    %v2044 = vld [vmem:[%s3 + $0x1f8] sm:$0xff]
    %v2045 = vld [vmem:[%s4] sm:$0x3]
    %v2047 = vlaneseq
    %v2048 = vshrl.u32 %v2047, 7
    %v2049 = vsub.s32 0, %v2048
    %v2050 = vrot.slane %v2045, %v2049
    %v2051 = vlaneseq
    %v2052 = vshrl.u32 %v2051, 7
    %v2053 = vsub.s32 1, %v2052
    %v2054 = vrot.slane %v2045, %v2053
    %v2121 = vunpack.c.l.b16 %v1981
    %v2122 = vunpack.c.h.b16 %v1981
    %v2123 = vunpack.c.l.b16 %v1982
    %v2124 = vunpack.c.h.b16 %v1982
    %v2125 = vunpack.c.l.b16 %v1983
    %v2126 = vunpack.c.h.b16 %v1983
    %v2127 = vunpack.c.l.b16 %v1984
    %v2128 = vunpack.c.h.b16 %v1984
    %v2129 = vunpack.c.l.b16 %v1985
    %v2130 = vunpack.c.h.b16 %v1985
    %v2131 = vunpack.c.l.b16 %v1986
    %v2132 = vunpack.c.h.b16 %v1986
    %v2133 = vunpack.c.l.b16 %v1987
    %v2134 = vunpack.c.h.b16 %v1987
    %v2135 = vunpack.c.l.b16 %v1988
    %v2136 = vunpack.c.h.b16 %v1988
    %v2137 = vunpack.c.l.b16 %v1989
    %v2138 = vunpack.c.h.b16 %v1989
    %v2139 = vunpack.c.l.b16 %v1990
    %v2140 = vunpack.c.h.b16 %v1990
    %v2141 = vunpack.c.l.b16 %v1991
    %v2142 = vunpack.c.h.b16 %v1991
    %v2143 = vunpack.c.l.b16 %v1992
    %v2144 = vunpack.c.h.b16 %v1992
    %v2145 = vunpack.c.l.b16 %v1993
    %v2146 = vunpack.c.h.b16 %v1993
    %v2147 = vunpack.c.l.b16 %v1994
    %v2148 = vunpack.c.h.b16 %v1994
    %v2149 = vunpack.c.l.b16 %v1995
    %v2150 = vunpack.c.h.b16 %v1995
    %v2151 = vunpack.c.l.b16 %v1996
    %v2152 = vunpack.c.h.b16 %v1996
    %v2153 = vunpack.c.l.b16 %v1997
    %v2154 = vunpack.c.h.b16 %v1997
    %v2155 = vunpack.c.l.b16 %v1998
    %v2156 = vunpack.c.h.b16 %v1998
    %v2157 = vunpack.c.l.b16 %v1999
    %v2158 = vunpack.c.h.b16 %v1999
    %v2159 = vunpack.c.l.b16 %v2000
    %v2160 = vunpack.c.h.b16 %v2000
    %v2161 = vunpack.c.l.b16 %v2001
    %v2162 = vunpack.c.h.b16 %v2001
    %v2163 = vunpack.c.l.b16 %v2002
    %v2164 = vunpack.c.h.b16 %v2002
    %v2165 = vunpack.c.l.b16 %v2003
    %v2166 = vunpack.c.h.b16 %v2003
    %v2167 = vunpack.c.l.b16 %v2004
    %v2168 = vunpack.c.h.b16 %v2004
    %v2169 = vunpack.c.l.b16 %v2005
    %v2170 = vunpack.c.h.b16 %v2005
    %v2171 = vunpack.c.l.b16 %v2006
    %v2172 = vunpack.c.h.b16 %v2006
    %v2173 = vunpack.c.l.b16 %v2007
    %v2174 = vunpack.c.h.b16 %v2007
    %v2175 = vunpack.c.l.b16 %v2008
    %v2176 = vunpack.c.h.b16 %v2008
    %v2177 = vunpack.c.l.b16 %v2009
    %v2178 = vunpack.c.h.b16 %v2009
    %v2179 = vunpack.c.l.b16 %v2010
    %v2180 = vunpack.c.h.b16 %v2010
    %v2181 = vunpack.c.l.b16 %v2011
    %v2182 = vunpack.c.h.b16 %v2011
    %v2183 = vunpack.c.l.b16 %v2012
    %v2184 = vunpack.c.h.b16 %v2012
    %v2185 = vunpack.c.l.b16 %v2013
    %v2186 = vunpack.c.h.b16 %v2013
    %v2187 = vunpack.c.l.b16 %v2014
    %v2188 = vunpack.c.h.b16 %v2014
    %v2189 = vunpack.c.l.b16 %v2015
    %v2190 = vunpack.c.h.b16 %v2015
    %v2191 = vunpack.c.l.b16 %v2016
    %v2192 = vunpack.c.h.b16 %v2016
    %v2193 = vunpack.c.l.b16 %v2017
    %v2194 = vunpack.c.h.b16 %v2017
    %v2195 = vunpack.c.l.b16 %v2018
    %v2196 = vunpack.c.h.b16 %v2018
    %v2197 = vunpack.c.l.b16 %v2019
    %v2198 = vunpack.c.h.b16 %v2019
    %v2199 = vunpack.c.l.b16 %v2020
    %v2200 = vunpack.c.h.b16 %v2020
    %v2201 = vunpack.c.l.b16 %v2021
    %v2202 = vunpack.c.h.b16 %v2021
    %v2203 = vunpack.c.l.b16 %v2022
    %v2204 = vunpack.c.h.b16 %v2022
    %v2205 = vunpack.c.l.b16 %v2023
    %v2206 = vunpack.c.h.b16 %v2023
    %v2207 = vunpack.c.l.b16 %v2024
    %v2208 = vunpack.c.h.b16 %v2024
    %v2209 = vunpack.c.l.b16 %v2025
    %v2210 = vunpack.c.h.b16 %v2025
    %v2211 = vunpack.c.l.b16 %v2026
    %v2212 = vunpack.c.h.b16 %v2026
    %v2213 = vunpack.c.l.b16 %v2027
    %v2214 = vunpack.c.h.b16 %v2027
    %v2215 = vunpack.c.l.b16 %v2028
    %v2216 = vunpack.c.h.b16 %v2028
    %v2217 = vunpack.c.l.b16 %v2029
    %v2218 = vunpack.c.h.b16 %v2029
    %v2219 = vunpack.c.l.b16 %v2030
    %v2220 = vunpack.c.h.b16 %v2030
    %v2221 = vunpack.c.l.b16 %v2031
    %v2222 = vunpack.c.h.b16 %v2031
    %v2223 = vunpack.c.l.b16 %v2032
    %v2224 = vunpack.c.h.b16 %v2032
    %v2225 = vunpack.c.l.b16 %v2033
    %v2226 = vunpack.c.h.b16 %v2033
    %v2227 = vunpack.c.l.b16 %v2034
    %v2228 = vunpack.c.h.b16 %v2034
    %v2229 = vunpack.c.l.b16 %v2035
    %v2230 = vunpack.c.h.b16 %v2035
    %v2231 = vunpack.c.l.b16 %v2036
    %v2232 = vunpack.c.h.b16 %v2036
    %v2233 = vunpack.c.l.b16 %v2037
    %v2234 = vunpack.c.h.b16 %v2037
    %v2235 = vunpack.c.l.b16 %v2038
    %v2236 = vunpack.c.h.b16 %v2038
    %v2237 = vunpack.c.l.b16 %v2039
    %v2238 = vunpack.c.h.b16 %v2039
    %v2239 = vunpack.c.l.b16 %v2040
    %v2240 = vunpack.c.h.b16 %v2040
    %v2241 = vunpack.c.l.b16 %v2041
    %v2242 = vunpack.c.h.b16 %v2041
    %v2243 = vunpack.c.l.b16 %v2042
    %v2244 = vunpack.c.h.b16 %v2042
    %v2245 = vunpack.c.l.b16 %v2043
    %v2246 = vunpack.c.h.b16 %v2043
    %v2247 = vunpack.c.l.b16 %v2044
    %v2248 = vunpack.c.h.b16 %v2044
    %v2249 = vpack.c.b16 %v2123, %v2121
    %v2250 = vpack.c.b16 %v2124, %v2122
    %v2251 = vpack.c.b16 %v2127, %v2125
    %v2252 = vpack.c.b16 %v2128, %v2126
    %v2253 = vpack.c.b16 %v2131, %v2129
    %v2254 = vpack.c.b16 %v2132, %v2130
    %v2255 = vpack.c.b16 %v2135, %v2133
    %v2256 = vpack.c.b16 %v2136, %v2134
    %v2257 = vpack.c.b16 %v2139, %v2137
    %v2258 = vpack.c.b16 %v2140, %v2138
    %v2259 = vpack.c.b16 %v2143, %v2141
    %v2260 = vpack.c.b16 %v2144, %v2142
    %v2261 = vpack.c.b16 %v2147, %v2145
    %v2262 = vpack.c.b16 %v2148, %v2146
    %v2263 = vpack.c.b16 %v2151, %v2149
    %v2264 = vpack.c.b16 %v2152, %v2150
    %v2265 = vpack.c.b16 %v2155, %v2153
    %v2266 = vpack.c.b16 %v2156, %v2154
    %v2267 = vpack.c.b16 %v2159, %v2157
    %v2268 = vpack.c.b16 %v2160, %v2158
    %v2269 = vpack.c.b16 %v2163, %v2161
    %v2270 = vpack.c.b16 %v2164, %v2162
    %v2271 = vpack.c.b16 %v2167, %v2165
    %v2272 = vpack.c.b16 %v2168, %v2166
    %v2273 = vpack.c.b16 %v2171, %v2169
    %v2274 = vpack.c.b16 %v2172, %v2170
    %v2275 = vpack.c.b16 %v2175, %v2173
    %v2276 = vpack.c.b16 %v2176, %v2174
    %v2277 = vpack.c.b16 %v2179, %v2177
    %v2278 = vpack.c.b16 %v2180, %v2178
    %v2279 = vpack.c.b16 %v2183, %v2181
    %v2280 = vpack.c.b16 %v2184, %v2182
    %v2281 = vpack.c.b16 %v2187, %v2185
    %v2282 = vpack.c.b16 %v2188, %v2186
    %v2283 = vpack.c.b16 %v2191, %v2189
    %v2284 = vpack.c.b16 %v2192, %v2190
    %v2285 = vpack.c.b16 %v2195, %v2193
    %v2286 = vpack.c.b16 %v2196, %v2194
    %v2287 = vpack.c.b16 %v2199, %v2197
    %v2288 = vpack.c.b16 %v2200, %v2198
    %v2289 = vpack.c.b16 %v2203, %v2201
    %v2290 = vpack.c.b16 %v2204, %v2202
    %v2291 = vpack.c.b16 %v2207, %v2205
    %v2292 = vpack.c.b16 %v2208, %v2206
    %v2293 = vpack.c.b16 %v2211, %v2209
    %v2294 = vpack.c.b16 %v2212, %v2210
    %v2295 = vpack.c.b16 %v2215, %v2213
    %v2296 = vpack.c.b16 %v2216, %v2214
    %v2297 = vpack.c.b16 %v2219, %v2217
    %v2298 = vpack.c.b16 %v2220, %v2218
    %v2299 = vpack.c.b16 %v2223, %v2221
    %v2300 = vpack.c.b16 %v2224, %v2222
    %v2301 = vpack.c.b16 %v2227, %v2225
    %v2302 = vpack.c.b16 %v2228, %v2226
    %v2303 = vpack.c.b16 %v2231, %v2229
    %v2304 = vpack.c.b16 %v2232, %v2230
    %v2305 = vpack.c.b16 %v2235, %v2233
    %v2306 = vpack.c.b16 %v2236, %v2234
    %v2307 = vpack.c.b16 %v2239, %v2237
    %v2308 = vpack.c.b16 %v2240, %v2238
    %v2309 = vpack.c.b16 %v2243, %v2241
    %v2310 = vpack.c.b16 %v2244, %v2242
    %v2311 = vpack.c.b16 %v2247, %v2245
    %v2312 = vpack.c.b16 %v2248, %v2246
    %2377 = vmatprep.subr.bf16.mxu0 %v2264
    %2378 = vmatpush1.bf16.msra.mxu0 %v2263
    %2379 = vmatprep.subr.bf16.mxu0 %v2262
    %2380 = vmatpush1.bf16.msra.mxu0 %v2261
    %2381 = vmatprep.subr.bf16.mxu0 %v2260
    %2382 = vmatpush1.bf16.msra.mxu0 %v2259
    %2383 = vmatprep.subr.bf16.mxu0 %v2258
    %2384 = vmatpush1.bf16.msra.mxu0 %v2257
    %2385 = vmatprep.subr.bf16.mxu0 %v2256
    %2386 = vmatpush1.bf16.msra.mxu0 %v2255
    %2387 = vmatprep.subr.bf16.mxu0 %v2254
    %2388 = vmatpush1.bf16.msra.mxu0 %v2253
    %2389 = vmatprep.subr.bf16.mxu0 %v2252
    %2390 = vmatpush1.bf16.msra.mxu0 %v2251
    %2391 = vmatprep.subr.bf16.mxu0 %v2250
    %2392 = vmatpush1.bf16.msra.mxu0 %v2249
    %2393 = vmatprep.subr.bf16.mxu0 %v2280
    %2394 = vmatpush2.bf16.msra.mxu0 %v2279
    %2395 = vmatprep.subr.bf16.mxu0 %v2278
    %2396 = vmatpush2.bf16.msra.mxu0 %v2277
    %2397 = vmatprep.subr.bf16.mxu0 %v2276
    %2398 = vmatpush2.bf16.msra.mxu0 %v2275
    %2399 = vmatprep.subr.bf16.mxu0 %v2274
    %2400 = vmatpush2.bf16.msra.mxu0 %v2273
    %2401 = vmatprep.subr.bf16.mxu0 %v2272
    %2402 = vmatpush2.bf16.msra.mxu0 %v2271
    %2403 = vmatprep.subr.bf16.mxu0 %v2270
    %2404 = vmatpush2.bf16.msra.mxu0 %v2269
    %2405 = vmatprep.subr.bf16.mxu0 %v2268
    %2406 = vmatpush2.bf16.msra.mxu0 %v2267
    %2407 = vmatprep.subr.bf16.mxu0 %v2266
    %2408 = vmatpush2.bf16.msra.mxu0 %v2265
    %2409 = vmatprep.mubr.bf16.mxu0 %v1978
    %2410 = vmatmul.mubr.bf16.gmra.mxu0 %v1977
    %v2411 = vpop.f32.mrf.mxu0
    %v2412 = vadd.f32 %v2050, %v2411
    %v2413 = vpop.f32.mrf.mxu0
    %v2414 = vadd.f32 %v2054, %v2413
    %v2415 = vpop.f32.mrf.mxu0
    %v2416 = vpop.f32.mrf.mxu0
    %2417 = vdwg.mxu0
    %2418 = vmatprep.subr.bf16.mxu0 %v2296
    %2419 = vmatpush1.bf16.msra.mxu0 %v2295
    %2420 = vmatprep.subr.bf16.mxu0 %v2294
    %2421 = vmatpush1.bf16.msra.mxu0 %v2293
    %2422 = vmatprep.subr.bf16.mxu0 %v2292
    %2423 = vmatpush1.bf16.msra.mxu0 %v2291
    %2424 = vmatprep.subr.bf16.mxu0 %v2290
    %2425 = vmatpush1.bf16.msra.mxu0 %v2289
    %2426 = vmatprep.subr.bf16.mxu0 %v2288
    %2427 = vmatpush1.bf16.msra.mxu0 %v2287
    %2428 = vmatprep.subr.bf16.mxu0 %v2286
    %2429 = vmatpush1.bf16.msra.mxu0 %v2285
    %2430 = vmatprep.subr.bf16.mxu0 %v2284
    %2431 = vmatpush1.bf16.msra.mxu0 %v2283
    %2432 = vmatprep.subr.bf16.mxu0 %v2282
    %2433 = vmatpush1.bf16.msra.mxu0 %v2281
    %2434 = vmatprep.subr.bf16.mxu0 %v2312
    %2435 = vmatpush2.bf16.msra.mxu0 %v2311
    %2436 = vmatprep.subr.bf16.mxu0 %v2310
    %2437 = vmatpush2.bf16.msra.mxu0 %v2309
    %2438 = vmatprep.subr.bf16.mxu0 %v2308
    %2439 = vmatpush2.bf16.msra.mxu0 %v2307
    %2440 = vmatprep.subr.bf16.mxu0 %v2306
    %2441 = vmatpush2.bf16.msra.mxu0 %v2305
    %2442 = vmatprep.subr.bf16.mxu0 %v2304
    %2443 = vmatpush2.bf16.msra.mxu0 %v2303
    %2444 = vmatprep.subr.bf16.mxu0 %v2302
    %2445 = vmatpush2.bf16.msra.mxu0 %v2301
    %2446 = vmatprep.subr.bf16.mxu0 %v2300
    %2447 = vmatpush2.bf16.msra.mxu0 %v2299
    %2448 = vmatprep.subr.bf16.mxu0 %v2298
    %2449 = vmatpush2.bf16.msra.mxu0 %v2297
    %2450 = vmatprep.mubr.bf16.mxu0 %v1980
    %2451 = vmatmul.mubr.bf16.gmra.mxu0 %v1979
    %v2452 = vpop.f32.mrf.mxu0
    %v2453 = vadd.f32 %v2412, %v2452
    %v2454 = vpop.f32.mrf.mxu0
    %v2455 = vadd.f32 %v2414, %v2454
    %v2456 = vpop.f32.mrf.mxu0
    %v2457 = vpop.f32.mrf.mxu0
    %2458 = vdwg.mxu0
    %v2459 = vmax.f32 %v2453, 0.0
    %v2460 = vmax.f32 %v2455, 0.0
    %v2461 = vpack.c.bf16 %v2459, %v2459
    %v2462 = vpack.c.bf16 %v2460, %v2460
    %v2463 = vld [vmem:[%s5] sm:$0xf]
    %v2464 = vld [vmem:[%s5 + $0x4] sm:$0xf]
    %v2465 = vld [vmem:[%s5 + $0x8] sm:$0xf]
    %v2466 = vld [vmem:[%s5 + $0xc] sm:$0xf]
    %v2467 = vld [vmem:[%s5 + $0x10] sm:$0xf]
    %v2468 = vld [vmem:[%s5 + $0x14] sm:$0xf]
    %v2469 = vld [vmem:[%s5 + $0x18] sm:$0xf]
    %v2470 = vld [vmem:[%s5 + $0x1c] sm:$0xf]
    %v2471 = vld [vmem:[%s5 + $0x20] sm:$0xf]
    %v2472 = vld [vmem:[%s5 + $0x24] sm:$0xf]
    %v2473 = vld [vmem:[%s5 + $0x28] sm:$0xf]
    %v2474 = vld [vmem:[%s5 + $0x2c] sm:$0xf]
    %v2475 = vld [vmem:[%s5 + $0x30] sm:$0xf]
    %v2476 = vld [vmem:[%s5 + $0x34] sm:$0xf]
    %v2477 = vld [vmem:[%s5 + $0x38] sm:$0xf]
    %v2478 = vld [vmem:[%s5 + $0x3c] sm:$0xf]
    %v2479 = vld [vmem:[%s5 + $0x40] sm:$0xf]
    %v2480 = vld [vmem:[%s5 + $0x44] sm:$0xf]
    %v2481 = vld [vmem:[%s5 + $0x48] sm:$0xf]
    %v2482 = vld [vmem:[%s5 + $0x4c] sm:$0xf]
    %v2483 = vld [vmem:[%s5 + $0x50] sm:$0xf]
    %v2484 = vld [vmem:[%s5 + $0x54] sm:$0xf]
    %v2485 = vld [vmem:[%s5 + $0x58] sm:$0xf]
    %v2486 = vld [vmem:[%s5 + $0x5c] sm:$0xf]
    %v2487 = vld [vmem:[%s5 + $0x60] sm:$0xf]
    %v2488 = vld [vmem:[%s5 + $0x64] sm:$0xf]
    %v2489 = vld [vmem:[%s5 + $0x68] sm:$0xf]
    %v2490 = vld [vmem:[%s5 + $0x6c] sm:$0xf]
    %v2491 = vld [vmem:[%s5 + $0x70] sm:$0xf]
    %v2492 = vld [vmem:[%s5 + $0x74] sm:$0xf]
    %v2493 = vld [vmem:[%s5 + $0x78] sm:$0xf]
    %v2494 = vld [vmem:[%s5 + $0x7c] sm:$0xf]
    %v2495 = vld [vmem:[%s6] sm:$0x1]
    %v2497 = vlaneseq
    %v2498 = vshrl.u32 %v2497, 7
    %v2499 = vsub.s32 0, %v2498
    %v2500 = vrot.slane %v2495, %v2499
    %v2534 = vunpack.c.l.b16 %v2463
    %v2535 = vunpack.c.l.b16 %v2464
    %v2536 = vunpack.c.l.b16 %v2465
    %v2537 = vunpack.c.l.b16 %v2466
    %v2538 = vunpack.c.l.b16 %v2467
    %v2539 = vunpack.c.l.b16 %v2468
    %v2540 = vunpack.c.l.b16 %v2469
    %v2541 = vunpack.c.l.b16 %v2470
    %v2542 = vunpack.c.l.b16 %v2471
    %v2543 = vunpack.c.l.b16 %v2472
    %v2544 = vunpack.c.l.b16 %v2473
    %v2545 = vunpack.c.l.b16 %v2474
    %v2546 = vunpack.c.l.b16 %v2475
    %v2547 = vunpack.c.l.b16 %v2476
    %v2548 = vunpack.c.l.b16 %v2477
    %v2549 = vunpack.c.l.b16 %v2478
    %v2550 = vunpack.c.l.b16 %v2479
    %v2551 = vunpack.c.l.b16 %v2480
    %v2552 = vunpack.c.l.b16 %v2481
    %v2553 = vunpack.c.l.b16 %v2482
    %v2554 = vunpack.c.l.b16 %v2483
    %v2555 = vunpack.c.l.b16 %v2484
    %v2556 = vunpack.c.l.b16 %v2485
    %v2557 = vunpack.c.l.b16 %v2486
    %v2558 = vunpack.c.l.b16 %v2487
    %v2559 = vunpack.c.l.b16 %v2488
    %v2560 = vunpack.c.l.b16 %v2489
    %v2561 = vunpack.c.l.b16 %v2490
    %v2562 = vunpack.c.l.b16 %v2491
    %v2563 = vunpack.c.l.b16 %v2492
    %v2564 = vunpack.c.l.b16 %v2493
    %v2565 = vunpack.c.l.b16 %v2494
    %v2566 = vpack.c.b16 %v2535, %v2534
    %v2567 = vpack.c.b16 %v2537, %v2536
    %v2568 = vpack.c.b16 %v2539, %v2538
    %v2569 = vpack.c.b16 %v2541, %v2540
    %v2570 = vpack.c.b16 %v2543, %v2542
    %v2571 = vpack.c.b16 %v2545, %v2544
    %v2572 = vpack.c.b16 %v2547, %v2546
    %v2573 = vpack.c.b16 %v2549, %v2548
    %v2574 = vpack.c.b16 %v2551, %v2550
    %v2575 = vpack.c.b16 %v2553, %v2552
    %v2576 = vpack.c.b16 %v2555, %v2554
    %v2577 = vpack.c.b16 %v2557, %v2556
    %v2578 = vpack.c.b16 %v2559, %v2558
    %v2579 = vpack.c.b16 %v2561, %v2560
    %v2580 = vpack.c.b16 %v2563, %v2562
    %v2581 = vpack.c.b16 %v2565, %v2564
    %2598 = vmatprep.subr.bf16.mxu0 0
    %2599 = vmatpush1.bf16.msra.mxu0 %v2573
    %2600 = vmatprep.subr.bf16.mxu0 0
    %2601 = vmatpush1.bf16.msra.mxu0 %v2572
    %2602 = vmatprep.subr.bf16.mxu0 0
    %2603 = vmatpush1.bf16.msra.mxu0 %v2571
    %2604 = vmatprep.subr.bf16.mxu0 0
    %2605 = vmatpush1.bf16.msra.mxu0 %v2570
    %2606 = vmatprep.subr.bf16.mxu0 0
    %2607 = vmatpush1.bf16.msra.mxu0 %v2569
    %2608 = vmatprep.subr.bf16.mxu0 0
    %2609 = vmatpush1.bf16.msra.mxu0 %v2568
    %2610 = vmatprep.subr.bf16.mxu0 0
    %2611 = vmatpush1.bf16.msra.mxu0 %v2567
    %2612 = vmatprep.subr.bf16.mxu0 0
    %2613 = vmatpush1.bf16.msra.mxu0 %v2566
    %2614 = vmatprep.subr.bf16.mxu0 0
    %2615 = vmatpush2.bf16.msra.mxu0 %v2581
    %2616 = vmatprep.subr.bf16.mxu0 0
    %2617 = vmatpush2.bf16.msra.mxu0 %v2580
    %2618 = vmatprep.subr.bf16.mxu0 0
    %2619 = vmatpush2.bf16.msra.mxu0 %v2579
    %2620 = vmatprep.subr.bf16.mxu0 0
    %2621 = vmatpush2.bf16.msra.mxu0 %v2578
    %2622 = vmatprep.subr.bf16.mxu0 0
    %2623 = vmatpush2.bf16.msra.mxu0 %v2577
    %2624 = vmatprep.subr.bf16.mxu0 0
    %2625 = vmatpush2.bf16.msra.mxu0 %v2576
    %2626 = vmatprep.subr.bf16.mxu0 0
    %2627 = vmatpush2.bf16.msra.mxu0 %v2575
    %2628 = vmatprep.subr.bf16.mxu0 0
    %2629 = vmatpush2.bf16.msra.mxu0 %v2574
    %2630 = vmatprep.mubr.bf16.mxu0 %v2462
    %2631 = vmatmul.mubr.bf16.gmra.mxu0 %v2461
    %v2632 = vpop.f32.mrf.mxu0
    %v2633 = vadd.f32 %v2500, %v2632
    %v2634 = vpop.f32.mrf.mxu0
    %v2635 = vpop.f32.mrf.mxu0
    %v2636 = vpop.f32.mrf.mxu0
    %2637 = vdwg.mxu0
    %vm2638 = vcmask 74752
    %v2639 = vsel %vm2638, %v2633, -inf
    %2640 = vmax.xlane.f32.xlu0 %v2639
    %v2641 = vpop.xlane.xlu0 %2640
    %v2642 = vsub.f32 %v2633, %v2641
    %v2643 = vmul.f32 %v2642, 1.442695
    %v2644 = vpow.pop %v2643
    %v2645 = vsel %vm2638, %v2644, 0.0
    %2646 = vadd.xlane.f32.xlu0 %v2645
    %v2647 = vpop.xlane.xlu0 %2646
    %v2648 = vlog2.pop %v2647
    %v2649 = vmul.f32 %v2648, 0.6931472
    %v2650 = vadd.f32 %v2641, %v2649
    %v2651 = vsub.f32 %v2633, %v2650
    %2652 = vst.msk [vmem:[#allocation2] sm:$0x3] %vm2638, %v2651
    // Predicated region
    $region30: #{pointnet_pp_forward.7} parent=1 // pred_check
      _
    $region31: #{pointnet_pp_forward.7} parent=1 // pred_check_branch
      %2654 = sbr.rel (0) target = $region33
    $region32: #{pointnet_pp_forward.7} parent=1 // pred_region
      %s2656 = ssub.s32 32, 32
      %2657 = vsyncadd [#allocation3], %s2656
      %s2659 = sshll.u32 [#allocation2], 4
      %s2660 = int_to_ptr.vmem [resolvable:$true] %s2659
      %2662 = dma.vmem_to_hbm [thread:$0]  %s2660, 32, %s7, [#allocation3]
    $region33: #{pointnet_pp_forward.7} parent=1 // pred_fallthru
      _
    // Predicated region
    $region34: #{pointnet_pp_forward.7} parent=1 // pred_check
      _
    $region35: #{pointnet_pp_forward.7} parent=1 // pred_check_branch
      %2664 = sbr.rel (0) target = $region37
    $region36: #{pointnet_pp_forward.7} parent=1 // pred_region
      %2665 = dma.done [#allocation3], 32
    $region37: #{pointnet_pp_forward.7} parent=1 // pred_fallthru
      _
    %2666 = vsyncpa [#allocation3], 1

</llo_original>
